<compile_context>
chip_gen: v7x
topology: tpu7x:2x2x1
jax: 0.10.0
libtpu: 0.0.40
codegen_flags: <defaults>
</compile_context>

<pallas_src>
import functools

import jax
import jax.numpy as jnp
from jax import lax
from jax.experimental import pallas as pl
from jax.experimental.pallas import tpu as pltpu


# ----------------------------------------------------------------------------
# Fused kernel: one batch element per grid step, everything in VMEM.
# ----------------------------------------------------------------------------
def cbam_cross_kernel(rgb_ref, depth_ref, pc_ref, gp_ref, w3g_ref, w1_ref, w2_ref,
                      w7_ref, out_ref, xpad_ref, mpad_ref, *, g, H, W, K, PAD):
    f32 = jnp.float32
    HW = H * W
    HIGH = lax.Precision.HIGHEST

    # --- stage 1: interleaved grouped 1x1 conv (groups=C) + folded BN + ReLU -----
    rgb = rgb_ref[0]                           # (C, HW)
    depth = depth_ref[0]                       # (C, HW)
    pc = pc_ref[...]                           # (C, 4) = [w_rgb, w_depth, bn_a, bn_b]
    x = pc[:, 0:1] * rgb + pc[:, 1:2] * depth
    x = jnp.maximum(pc[:, 2:3] * x + pc[:, 3:4], 0.0)           # (C, HW)

    # --- per-column validity masks for lane-shifted taps on the flat H*W axis ---
    col = lax.broadcasted_iota(jnp.int32, (1, HW), 1) % W
    hmask = {}
    for t in range(-(K // 2), K // 2 + 1):
        ct = col + t
        hmask[t] = ((ct >= 0) & (ct < W)).astype(f32)           # (1, HW)

    # --- stage 2a: grouped 3x3 conv (groups=g) via shifted slices + small dots ---
    xpad_ref[...] = jnp.zeros(xpad_ref.shape, f32)
    xpad_ref[:, PAD:PAD + HW] = x
    z = jnp.zeros((g, HW), f32)
    for dy in range(3):
        for dx in range(3):
            tap = dy * 3 + dx
            start = PAD + (dy - 1) * W + (dx - 1)
            xs = xpad_ref[:, start:start + HW]                  # (C, HW)
            w3t = w3g_ref[tap * g:(tap + 1) * g, :]             # (g, C) block-diag weights
            z = z + jnp.dot(w3t, xs, precision=HIGH,
                            preferred_element_type=f32) * hmask[dx - 1]
    gp = gp_ref[...]                                            # (g, 2) = [bn_a, bn_b]
    z = jnp.maximum(gp[:, 0:1] * z + gp[:, 1:2], 0.0)

    # --- stage 2b: GAP -> fc1 -> ReLU -> fc2 -> sigmoid (channel attention) -----
    p = jnp.mean(z, axis=1, keepdims=True)                      # (g, 1)
    p_w = jnp.broadcast_to(p, (g, HW))                          # keep dot N lane-wide
    h = jnp.maximum(jnp.dot(w1_ref[...], p_w, precision=HIGH,
                            preferred_element_type=f32), 0.0)   # (g, HW)
    ca = jax.nn.sigmoid(jnp.dot(w2_ref[...], h, precision=HIGH,
                                preferred_element_type=f32))    # (C, HW)
    u = ca * x                                                  # channel-attended features

    # --- stage 3: spatial attention (KxK conv on [mean_c, max_c]) + residual ----
    mpad_ref[...] = jnp.zeros(mpad_ref.shape, f32)
    mpad_ref[0:1, PAD:PAD + HW] = jnp.mean(u, axis=0, keepdims=True)
    mpad_ref[1:2, PAD:PAD + HW] = jnp.max(u, axis=0, keepdims=True)
    r = K // 2
    s = jnp.zeros((1, HW), f32)
    for dy in range(K):
        for dx in range(K):
            tap = dy * K + dx
            start = PAD + (dy - r) * W + (dx - r)
            msl = mpad_ref[:, start:start + HW]                 # (2, HW)
            s = s + (w7_ref[0, tap] * msl[0:1, :]
                     + w7_ref[1, tap] * msl[1:2, :]) * hmask[dx - r]
    sa = jax.nn.sigmoid(s)                                      # (1, HW)
    out_ref[0] = x + sa * u


# ----------------------------------------------------------------------------
# Wrapper
# ----------------------------------------------------------------------------
def cbam_cross_our(rgb, depth, params, *, ratio=16, kernel_size=7):
    T, C, H, W = rgb.shape
    assert C % ratio == 0, "in_planes must be divisible by ratio"
    g = C // ratio
    K = kernel_size
    r = K // 2
    assert W > r + 1, "flat-shift conv trick requires W > kernel_size//2 + 1"
    HW = H * W
    halo = max(W + 1, r * (W + 1))
    PAD = ((halo + 127) // 128) * 128          # 128-aligned halo pad in the flat buffer
    L = PAD + HW + PAD
    f32 = jnp.float32

    P = params
    # compact 2-D weight layouts (no (N,1,1) padded-tile blowup)
    pc = jnp.stack([P["wf"][:, 0], P["wf"][:, 1], P["a1"], P["b1"]], axis=1).astype(f32)  # (C,4)
    gp = jnp.stack([P["a2"], P["b2"]], axis=1).astype(f32)                                 # (g,2)
    cidx = jnp.arange(C)
    gsel = (cidx[None, :] // ratio == jnp.arange(g)[:, None]).astype(f32)                  # (g,C)
    w3_full = P["w3"][:, cidx % ratio, :, :] * gsel[:, :, None, None]                      # (g,C,3,3) block-diag
    w3g = jnp.transpose(w3_full, (2, 3, 0, 1)).reshape(9 * g, C).astype(f32)               # rows = tap*g + gi
    w1 = P["w1"].astype(f32)                                                               # (g,g)
    w2 = P["w2"].astype(f32)                                                               # (C,g)
    w7 = P["w7"][0].reshape(2, K * K).astype(f32)                                          # (2,K*K) -> SMEM

    # lane-dense views: last dim H*W on lanes (free reshape at XLA level)
    rgb_f = rgb.reshape(T, C, HW)
    depth_f = depth.reshape(T, C, HW)

    io_spec = pl.BlockSpec((1, C, HW), lambda t: (t, 0, 0))

    def full_spec(shape):
        zeros = (0,) * len(shape)
        return pl.BlockSpec(shape, lambda t, zeros=zeros: zeros)

    smem_spec = pl.BlockSpec(memory_space=pltpu.MemorySpace.SMEM)

    kernel = functools.partial(cbam_cross_kernel, g=g, H=H, W=W, K=K, PAD=PAD)

    out_flat = pl.pallas_call(
        kernel,
        out_shape=jax.ShapeDtypeStruct((T, C, HW), f32),
        grid=(T,),
        in_specs=[
            io_spec,                      # rgb
            io_spec,                      # depth
            full_spec((C, 4)),            # per-channel [w_rgb, w_depth, bn_a, bn_b]
            full_spec((g, 2)),            # per-group   [bn_a, bn_b]
            full_spec((9 * g, C)),        # grouped 3x3 conv weights (block-diag per tap)
            full_spec((g, g)),            # fc1
            full_spec((C, g)),            # fc2
            smem_spec,                    # KxK spatial-conv taps (scalars)
        ],
        out_specs=io_spec,
        scratch_shapes=[
            pltpu.VMEM((C, L), f32),      # flat zero-padded x
            pltpu.VMEM((2, L), f32),      # flat zero-padded [mean_c, max_c]
        ],
        compiler_params=pltpu.CompilerParams(
            dimension_semantics=("parallel",),
            vmem_limit_bytes=32 * 1024 * 1024,
        ),
    )(rgb_f, depth_f, pc, gp, w3g, w1, w2, w7)
    return out_flat.reshape(T, C, H, W)


# ----------------------------------------------------------------------------
# Deterministic parameter init (shapes from the module's __init__) + reference
# ----------------------------------------------------------------------------
def init_params(key, C, ratio):
    g = C // ratio
    ks = jax.random.split(key, 13)
    eps = 1e-5
    wf = 0.5 * jax.random.normal(ks[0], (C, 2), jnp.float32)            # Conv2d(2C,C,1,groups=C)
    gamma1 = 1.0 + 0.1 * jax.random.normal(ks[1], (C,), jnp.float32)    # BatchNorm2d(C)
    beta1 = 0.1 * jax.random.normal(ks[2], (C,), jnp.float32)
    mean1 = 0.1 * jax.random.normal(ks[3], (C,), jnp.float32)
    var1 = 1.0 + 0.2 * jnp.abs(jax.random.normal(ks[4], (C,), jnp.float32))
    w3 = 0.2 * jax.random.normal(ks[5], (g, ratio, 3, 3), jnp.float32)  # Conv2d(C,g,3,groups=g)
    gamma2 = 1.0 + 0.1 * jax.random.normal(ks[6], (g,), jnp.float32)    # BatchNorm2d(g)
    beta2 = 0.1 * jax.random.normal(ks[7], (g,), jnp.float32)
    mean2 = 0.1 * jax.random.normal(ks[8], (g,), jnp.float32)
    var2 = 1.0 + 0.2 * jnp.abs(jax.random.normal(ks[9], (g,), jnp.float32))
    w1 = 0.5 * jax.random.normal(ks[10], (g, g), jnp.float32)           # fc1
    w2 = 0.5 * jax.random.normal(ks[11], (C, g), jnp.float32)           # fc2
    w7 = 0.2 * jax.random.normal(ks[12], (1, 2, 7, 7), jnp.float32)     # spatial conv
    a1 = gamma1 / jnp.sqrt(var1 + eps)
    b1 = beta1 - mean1 * a1
    a2 = gamma2 / jnp.sqrt(var2 + eps)
    b2 = beta2 - mean2 * a2
    return dict(wf=wf, a1=a1, b1=b1, w3=w3, a2=a2, b2=b2, w1=w1, w2=w2, w7=w7)


def reference_forward(rgb, depth, P, *, ratio=16):
    T, C, H, W = rgb.shape
    g = C // ratio
    hi = lax.Precision.HIGHEST
    x = (P["wf"][None, :, 0, None, None] * rgb
         + P["wf"][None, :, 1, None, None] * depth)
    x = jnp.maximum(P["a1"][None, :, None, None] * x + P["b1"][None, :, None, None], 0.0)
    z = lax.conv_general_dilated(
        x, P["w3"], (1, 1), ((1, 1), (1, 1)),
        dimension_numbers=("NCHW", "OIHW", "NCHW"),
        feature_group_count=g, precision=hi)
    z = jnp.maximum(P["a2"][None, :, None, None] * z + P["b2"][None, :, None, None], 0.0)
    p = z.mean(axis=(2, 3))
    h = jnp.maximum(jnp.einsum("oi,ti->to", P["w1"], p, precision=hi), 0.0)
    ca = jax.nn.sigmoid(jnp.einsum("oi,ti->to", P["w2"], h, precision=hi))
    u = ca[:, :, None, None] * x
    m = jnp.concatenate([u.mean(axis=1, keepdims=True),
                         u.max(axis=1, keepdims=True)], axis=1)
    s = lax.conv_general_dilated(
        m, P["w7"], (1, 1), ((3, 3), (3, 3)),
        dimension_numbers=("NCHW", "OIHW", "NCHW"), precision=hi)
    return x + jax.nn.sigmoid(s) * u


if __name__ == "__main__":
    T, C, H, W = 2, 32, 16, 16
    ratio, ksize = 16, 7

    key = jax.random.PRNGKey(0)
    k_in, k_p = jax.random.split(key)
    k_rgb, k_depth = jax.random.split(k_in)
    rgb = jax.random.normal(k_rgb, (T, C, H, W), jnp.float32)
    depth = jax.random.normal(k_depth, (T, C, H, W), jnp.float32)
    params = init_params(k_p, C, ratio)

    fn = jax.jit(functools.partial(cbam_cross_our, ratio=ratio, kernel_size=ksize))
    out = jax.block_until_ready(fn(rgb, depth, params))

    ref = reference_forward(rgb, depth, params, ratio=ratio)
    err = float(jnp.max(jnp.abs(out - ref)))
    assert out.shape == (T, C, H, W)
    assert err < 2e-3, f"max abs error too large: {err}"
    print("KERNEL_OK")
</pallas_src>

<mosaic_0001>
module attributes {stable_mosaic.version = 11 : i64} {
  func.func @cbam_cross_kernel(%arg0: i32, %arg1: memref<1x32x256xf32, #tpu.memory_space<vmem>>, %arg2: memref<1x32x256xf32, #tpu.memory_space<vmem>>, %arg3: memref<32x4xf32, #tpu.memory_space<vmem>>, %arg4: memref<2x2xf32, #tpu.memory_space<vmem>>, %arg5: memref<18x32xf32, #tpu.memory_space<vmem>>, %arg6: memref<2x2xf32, #tpu.memory_space<vmem>>, %arg7: memref<32x2xf32, #tpu.memory_space<vmem>>, %arg8: memref<2x49xf32, #tpu.memory_space<smem>>, %arg9: memref<1x32x256xf32, #tpu.memory_space<vmem>>, %arg10: memref<32x512xf32, #tpu.memory_space<vmem>>, %arg11: memref<2x512xf32, #tpu.memory_space<vmem>>) attributes {dimension_semantics = [#tpu.dimension_semantics<parallel>], iteration_bounds = array<i64: 2>, scalar_prefetch = 0 : i64, scratch_operands = 2 : i64, tpu.core_type = #tpu.core_type<tc>, window_params = [{transform_indices = @transform_0, window_bounds = array<i64: 1, 32, 256>}, {transform_indices = @transform_1, window_bounds = array<i64: 1, 32, 256>}, {pipeline_mode = #tpu.pipeline_mode<synchronous>, transform_indices = @transform_2, window_bounds = array<i64: 32, 4>}, {pipeline_mode = #tpu.pipeline_mode<synchronous>, transform_indices = @transform_3, window_bounds = array<i64: 2, 2>}, {pipeline_mode = #tpu.pipeline_mode<synchronous>, transform_indices = @transform_4, window_bounds = array<i64: 18, 32>}, {pipeline_mode = #tpu.pipeline_mode<synchronous>, transform_indices = @transform_5, window_bounds = array<i64: 2, 2>}, {pipeline_mode = #tpu.pipeline_mode<synchronous>, transform_indices = @transform_6, window_bounds = array<i64: 32, 2>}, {transform_indices = @transform_7, window_bounds = array<i64: 2, 49>}, {transform_indices = @transform_8, window_bounds = array<i64: 1, 32, 256>}]} {
    %c0 = arith.constant 0 : index
    %c0_0 = arith.constant 0 : index
    %c0_1 = arith.constant 0 : index
    %0 = vector.load %arg1[%c0, %c0_0, %c0_1] : memref<1x32x256xf32, #tpu.memory_space<vmem>>, vector<1x32x256xf32>
    %1 = vector.shape_cast %0 : vector<1x32x256xf32> to vector<32x256xf32>
    %c0_2 = arith.constant 0 : index
    %c0_3 = arith.constant 0 : index
    %c0_4 = arith.constant 0 : index
    %2 = vector.load %arg2[%c0_2, %c0_3, %c0_4] : memref<1x32x256xf32, #tpu.memory_space<vmem>>, vector<1x32x256xf32>
    %3 = vector.shape_cast %2 : vector<1x32x256xf32> to vector<32x256xf32>
    %c0_5 = arith.constant 0 : index
    %c0_6 = arith.constant 0 : index
    %4 = vector.load %arg3[%c0_5, %c0_6] : memref<32x4xf32, #tpu.memory_space<vmem>>, vector<32x4xf32>
    %5 = vector.extract_strided_slice %4 {offsets = [0, 0], sizes = [32, 1], strides = [1, 1]} : vector<32x4xf32> to vector<32x1xf32>
    %6 = vector.broadcast %5 : vector<32x1xf32> to vector<32x256xf32>
    %7 = arith.mulf %6, %1 : vector<32x256xf32>
    %8 = vector.extract_strided_slice %4 {offsets = [0, 1], sizes = [32, 1], strides = [1, 1]} : vector<32x4xf32> to vector<32x1xf32>
    %9 = vector.broadcast %8 : vector<32x1xf32> to vector<32x256xf32>
    %10 = arith.mulf %9, %3 : vector<32x256xf32>
    %11 = arith.addf %7, %10 : vector<32x256xf32>
    %12 = vector.extract_strided_slice %4 {offsets = [0, 2], sizes = [32, 1], strides = [1, 1]} : vector<32x4xf32> to vector<32x1xf32>
    %13 = vector.broadcast %12 : vector<32x1xf32> to vector<32x256xf32>
    %14 = arith.mulf %13, %11 : vector<32x256xf32>
    %15 = vector.extract_strided_slice %4 {offsets = [0, 3], sizes = [32, 1], strides = [1, 1]} : vector<32x4xf32> to vector<32x1xf32>
    %16 = vector.broadcast %15 : vector<32x1xf32> to vector<32x256xf32>
    %17 = arith.addf %14, %16 : vector<32x256xf32>
    %cst = arith.constant 0.000000e+00 : f32
    %18 = vector.broadcast %cst : f32 to vector<32x256xf32>
    %19 = arith.maximumf %17, %18 : vector<32x256xf32>
    %20 = tpu.iota {dimensions = array<i32: 1>} : vector<1x256xi32>
    %c16_i32 = arith.constant 16 : i32
    %c0_i32 = arith.constant 0 : i32
    %21 = arith.cmpi eq, %c16_i32, %c0_i32 : i32
    %c1_i32 = arith.constant 1 : i32
    %22 = arith.select %21, %c1_i32, %c16_i32 : i32
    %23 = vector.broadcast %22 : i32 to vector<1x256xi32>
    %24 = arith.remsi %20, %23 : vector<1x256xi32>
    %c0_i32_7 = arith.constant 0 : i32
    %25 = vector.broadcast %c0_i32_7 : i32 to vector<1x256xi32>
    %26 = arith.cmpi ne, %24, %25 : vector<1x256xi32>
    %c0_i32_8 = arith.constant 0 : i32
    %27 = vector.broadcast %c0_i32_8 : i32 to vector<1x256xi32>
    %28 = arith.cmpi slt, %24, %27 : vector<1x256xi32>
    %c0_i32_9 = arith.constant 0 : i32
    %29 = arith.cmpi slt, %22, %c0_i32_9 : i32
    %30 = vector.broadcast %29 : i1 to vector<1x256xi1>
    %31 = vector.broadcast %30 : vector<1x256xi1> to vector<1x256xi1>
    %32 = arith.xori %28, %31 : vector<1x256xi1>
    %33 = arith.andi %32, %26 : vector<1x256xi1>
    %34 = vector.broadcast %22 : i32 to vector<1x256xi32>
    %35 = arith.addi %24, %34 : vector<1x256xi32>
    %36 = arith.select %33, %35, %24 : vector<1x256xi1>, vector<1x256xi32>
    %c-3_i32 = arith.constant -3 : i32
    %37 = vector.broadcast %c-3_i32 : i32 to vector<1x256xi32>
    %38 = arith.addi %36, %37 : vector<1x256xi32>
    %c0_i32_10 = arith.constant 0 : i32
    %39 = vector.broadcast %c0_i32_10 : i32 to vector<1x256xi32>
    %40 = arith.cmpi sge, %38, %39 : vector<1x256xi32>
    %c16_i32_11 = arith.constant 16 : i32
    %41 = vector.broadcast %c16_i32_11 : i32 to vector<1x256xi32>
    %42 = arith.cmpi slt, %38, %41 : vector<1x256xi32>
    %43 = arith.andi %40, %42 : vector<1x256xi1>
    %44 = arith.extui %43 : vector<1x256xi1> to vector<1x256xi32>
    %45 = arith.sitofp %44 : vector<1x256xi32> to vector<1x256xf32>
    %c-2_i32 = arith.constant -2 : i32
    %46 = vector.broadcast %c-2_i32 : i32 to vector<1x256xi32>
    %47 = arith.addi %36, %46 : vector<1x256xi32>
    %c0_i32_12 = arith.constant 0 : i32
    %48 = vector.broadcast %c0_i32_12 : i32 to vector<1x256xi32>
    %49 = arith.cmpi sge, %47, %48 : vector<1x256xi32>
    %c16_i32_13 = arith.constant 16 : i32
    %50 = vector.broadcast %c16_i32_13 : i32 to vector<1x256xi32>
    %51 = arith.cmpi slt, %47, %50 : vector<1x256xi32>
    %52 = arith.andi %49, %51 : vector<1x256xi1>
    %53 = arith.extui %52 : vector<1x256xi1> to vector<1x256xi32>
    %54 = arith.sitofp %53 : vector<1x256xi32> to vector<1x256xf32>
    %c-1_i32 = arith.constant -1 : i32
    %55 = vector.broadcast %c-1_i32 : i32 to vector<1x256xi32>
    %56 = arith.addi %36, %55 : vector<1x256xi32>
    %c0_i32_14 = arith.constant 0 : i32
    %57 = vector.broadcast %c0_i32_14 : i32 to vector<1x256xi32>
    %58 = arith.cmpi sge, %56, %57 : vector<1x256xi32>
    %c16_i32_15 = arith.constant 16 : i32
    %59 = vector.broadcast %c16_i32_15 : i32 to vector<1x256xi32>
    %60 = arith.cmpi slt, %56, %59 : vector<1x256xi32>
    %61 = arith.andi %58, %60 : vector<1x256xi1>
    %62 = arith.extui %61 : vector<1x256xi1> to vector<1x256xi32>
    %63 = arith.sitofp %62 : vector<1x256xi32> to vector<1x256xf32>
    %c0_i32_16 = arith.constant 0 : i32
    %64 = vector.broadcast %c0_i32_16 : i32 to vector<1x256xi32>
    %65 = arith.addi %36, %64 : vector<1x256xi32>
    %c0_i32_17 = arith.constant 0 : i32
    %66 = vector.broadcast %c0_i32_17 : i32 to vector<1x256xi32>
    %67 = arith.cmpi sge, %65, %66 : vector<1x256xi32>
    %c16_i32_18 = arith.constant 16 : i32
    %68 = vector.broadcast %c16_i32_18 : i32 to vector<1x256xi32>
    %69 = arith.cmpi slt, %65, %68 : vector<1x256xi32>
    %70 = arith.andi %67, %69 : vector<1x256xi1>
    %71 = arith.extui %70 : vector<1x256xi1> to vector<1x256xi32>
    %72 = arith.sitofp %71 : vector<1x256xi32> to vector<1x256xf32>
    %c1_i32_19 = arith.constant 1 : i32
    %73 = vector.broadcast %c1_i32_19 : i32 to vector<1x256xi32>
    %74 = arith.addi %36, %73 : vector<1x256xi32>
    %c0_i32_20 = arith.constant 0 : i32
    %75 = vector.broadcast %c0_i32_20 : i32 to vector<1x256xi32>
    %76 = arith.cmpi sge, %74, %75 : vector<1x256xi32>
    %c16_i32_21 = arith.constant 16 : i32
    %77 = vector.broadcast %c16_i32_21 : i32 to vector<1x256xi32>
    %78 = arith.cmpi slt, %74, %77 : vector<1x256xi32>
    %79 = arith.andi %76, %78 : vector<1x256xi1>
    %80 = arith.extui %79 : vector<1x256xi1> to vector<1x256xi32>
    %81 = arith.sitofp %80 : vector<1x256xi32> to vector<1x256xf32>
    %c2_i32 = arith.constant 2 : i32
    %82 = vector.broadcast %c2_i32 : i32 to vector<1x256xi32>
    %83 = arith.addi %36, %82 : vector<1x256xi32>
    %c0_i32_22 = arith.constant 0 : i32
    %84 = vector.broadcast %c0_i32_22 : i32 to vector<1x256xi32>
    %85 = arith.cmpi sge, %83, %84 : vector<1x256xi32>
    %c16_i32_23 = arith.constant 16 : i32
    %86 = vector.broadcast %c16_i32_23 : i32 to vector<1x256xi32>
    %87 = arith.cmpi slt, %83, %86 : vector<1x256xi32>
    %88 = arith.andi %85, %87 : vector<1x256xi1>
    %89 = arith.extui %88 : vector<1x256xi1> to vector<1x256xi32>
    %90 = arith.sitofp %89 : vector<1x256xi32> to vector<1x256xf32>
    %c3_i32 = arith.constant 3 : i32
    %91 = vector.broadcast %c3_i32 : i32 to vector<1x256xi32>
    %92 = arith.addi %36, %91 : vector<1x256xi32>
    %c0_i32_24 = arith.constant 0 : i32
    %93 = vector.broadcast %c0_i32_24 : i32 to vector<1x256xi32>
    %94 = arith.cmpi sge, %92, %93 : vector<1x256xi32>
    %c16_i32_25 = arith.constant 16 : i32
    %95 = vector.broadcast %c16_i32_25 : i32 to vector<1x256xi32>
    %96 = arith.cmpi slt, %92, %95 : vector<1x256xi32>
    %97 = arith.andi %94, %96 : vector<1x256xi1>
    %98 = arith.extui %97 : vector<1x256xi1> to vector<1x256xi32>
    %99 = arith.sitofp %98 : vector<1x256xi32> to vector<1x256xf32>
    %cst_26 = arith.constant 0.000000e+00 : f32
    %100 = vector.broadcast %cst_26 : f32 to vector<32x512xf32>
    %c0_27 = arith.constant 0 : index
    %c0_28 = arith.constant 0 : index
    %101 = vector.load %arg10[%c0_27, %c0_28] : memref<32x512xf32, #tpu.memory_space<vmem>>, vector<32x512xf32>
    tpu.vector_store %arg10[%c0_27, %c0_28], %100 {strides = array<i32>} : memref<32x512xf32, #tpu.memory_space<vmem>>, vector<32x512xf32>,
    %c0_29 = arith.constant 0 : index
    %c128 = arith.constant 128 : index
    %102 = vector.load %arg10[%c0_29, %c128] : memref<32x512xf32, #tpu.memory_space<vmem>>, vector<32x256xf32>
    tpu.vector_store %arg10[%c0_29, %c128], %19 {strides = array<i32>} : memref<32x512xf32, #tpu.memory_space<vmem>>, vector<32x256xf32>,
    %cst_30 = arith.constant 0.000000e+00 : f32
    %103 = vector.broadcast %cst_30 : f32 to vector<2x256xf32>
    %c0_31 = arith.constant 0 : index
    %c111 = arith.constant 111 : index
    %104 = vector.load %arg10[%c0_31, %c111] : memref<32x512xf32, #tpu.memory_space<vmem>>, vector<32x256xf32>
    %c0_32 = arith.constant 0 : index
    %c0_33 = arith.constant 0 : index
    %105 = vector.load %arg5[%c0_32, %c0_33] : memref<18x32xf32, #tpu.memory_space<vmem>>, vector<2x32xf32>
    %cst_34 = arith.constant dense<0.000000e+00> : vector<2x256xf32>
    %106 = tpu.matmul %105, %104, %cst_34 {dimension_numbers = #tpu.dot_dimension_numbers<[1], [0], [0], [1], [0, 0, 1, 1], [], []>, precision = #tpu.contract_precision<fp32>} : vector<2x32xf32>, vector<32x256xf32>, vector<2x256xf32> -> vector<2x256xf32>
    %107 = vector.broadcast %63 : vector<1x256xf32> to vector<2x256xf32>
    %108 = arith.mulf %106, %107 : vector<2x256xf32>
    %109 = arith.addf %103, %108 : vector<2x256xf32>
    %c0_35 = arith.constant 0 : index
    %c112 = arith.constant 112 : index
    %110 = vector.load %arg10[%c0_35, %c112] : memref<32x512xf32, #tpu.memory_space<vmem>>, vector<32x256xf32>
    %c2 = arith.constant 2 : index
    %c0_36 = arith.constant 0 : index
    %111 = vector.load %arg5[%c2, %c0_36] : memref<18x32xf32, #tpu.memory_space<vmem>>, vector<2x32xf32>
    %cst_37 = arith.constant dense<0.000000e+00> : vector<2x256xf32>
    %112 = tpu.matmul %111, %110, %cst_37 {dimension_numbers = #tpu.dot_dimension_numbers<[1], [0], [0], [1], [0, 0, 1, 1], [], []>, precision = #tpu.contract_precision<fp32>} : vector<2x32xf32>, vector<32x256xf32>, vector<2x256xf32> -> vector<2x256xf32>
    %113 = vector.broadcast %72 : vector<1x256xf32> to vector<2x256xf32>
    %114 = arith.mulf %112, %113 : vector<2x256xf32>
    %115 = arith.addf %109, %114 : vector<2x256xf32>
    %c0_38 = arith.constant 0 : index
    %c113 = arith.constant 113 : index
    %116 = vector.load %arg10[%c0_38, %c113] : memref<32x512xf32, #tpu.memory_space<vmem>>, vector<32x256xf32>
    %c4 = arith.constant 4 : index
    %c0_39 = arith.constant 0 : index
    %117 = vector.load %arg5[%c4, %c0_39] : memref<18x32xf32, #tpu.memory_space<vmem>>, vector<2x32xf32>
    %cst_40 = arith.constant dense<0.000000e+00> : vector<2x256xf32>
    %118 = tpu.matmul %117, %116, %cst_40 {dimension_numbers = #tpu.dot_dimension_numbers<[1], [0], [0], [1], [0, 0, 1, 1], [], []>, precision = #tpu.contract_precision<fp32>} : vector<2x32xf32>, vector<32x256xf32>, vector<2x256xf32> -> vector<2x256xf32>
    %119 = vector.broadcast %81 : vector<1x256xf32> to vector<2x256xf32>
    %120 = arith.mulf %118, %119 : vector<2x256xf32>
    %121 = arith.addf %115, %120 : vector<2x256xf32>
    %c0_41 = arith.constant 0 : index
    %c127 = arith.constant 127 : index
    %122 = vector.load %arg10[%c0_41, %c127] : memref<32x512xf32, #tpu.memory_space<vmem>>, vector<32x256xf32>
    %c6 = arith.constant 6 : index
    %c0_42 = arith.constant 0 : index
    %123 = vector.load %arg5[%c6, %c0_42] : memref<18x32xf32, #tpu.memory_space<vmem>>, vector<2x32xf32>
    %cst_43 = arith.constant dense<0.000000e+00> : vector<2x256xf32>
    %124 = tpu.matmul %123, %122, %cst_43 {dimension_numbers = #tpu.dot_dimension_numbers<[1], [0], [0], [1], [0, 0, 1, 1], [], []>, precision = #tpu.contract_precision<fp32>} : vector<2x32xf32>, vector<32x256xf32>, vector<2x256xf32> -> vector<2x256xf32>
    %125 = vector.broadcast %63 : vector<1x256xf32> to vector<2x256xf32>
    %126 = arith.mulf %124, %125 : vector<2x256xf32>
    %127 = arith.addf %121, %126 : vector<2x256xf32>
    %c0_44 = arith.constant 0 : index
    %c128_45 = arith.constant 128 : index
    %128 = vector.load %arg10[%c0_44, %c128_45] : memref<32x512xf32, #tpu.memory_space<vmem>>, vector<32x256xf32>
    %c8 = arith.constant 8 : index
    %c0_46 = arith.constant 0 : index
    %129 = vector.load %arg5[%c8, %c0_46] : memref<18x32xf32, #tpu.memory_space<vmem>>, vector<2x32xf32>
    %cst_47 = arith.constant dense<0.000000e+00> : vector<2x256xf32>
    %130 = tpu.matmul %129, %128, %cst_47 {dimension_numbers = #tpu.dot_dimension_numbers<[1], [0], [0], [1], [0, 0, 1, 1], [], []>, precision = #tpu.contract_precision<fp32>} : vector<2x32xf32>, vector<32x256xf32>, vector<2x256xf32> -> vector<2x256xf32>
    %131 = vector.broadcast %72 : vector<1x256xf32> to vector<2x256xf32>
    %132 = arith.mulf %130, %131 : vector<2x256xf32>
    %133 = arith.addf %127, %132 : vector<2x256xf32>
    %c0_48 = arith.constant 0 : index
    %c129 = arith.constant 129 : index
    %134 = vector.load %arg10[%c0_48, %c129] : memref<32x512xf32, #tpu.memory_space<vmem>>, vector<32x256xf32>
    %c10 = arith.constant 10 : index
    %c0_49 = arith.constant 0 : index
    %135 = vector.load %arg5[%c10, %c0_49] : memref<18x32xf32, #tpu.memory_space<vmem>>, vector<2x32xf32>
    %cst_50 = arith.constant dense<0.000000e+00> : vector<2x256xf32>
    %136 = tpu.matmul %135, %134, %cst_50 {dimension_numbers = #tpu.dot_dimension_numbers<[1], [0], [0], [1], [0, 0, 1, 1], [], []>, precision = #tpu.contract_precision<fp32>} : vector<2x32xf32>, vector<32x256xf32>, vector<2x256xf32> -> vector<2x256xf32>
    %137 = vector.broadcast %81 : vector<1x256xf32> to vector<2x256xf32>
    %138 = arith.mulf %136, %137 : vector<2x256xf32>
    %139 = arith.addf %133, %138 : vector<2x256xf32>
    %c0_51 = arith.constant 0 : index
    %c143 = arith.constant 143 : index
    %140 = vector.load %arg10[%c0_51, %c143] : memref<32x512xf32, #tpu.memory_space<vmem>>, vector<32x256xf32>
    %c12 = arith.constant 12 : index
    %c0_52 = arith.constant 0 : index
    %141 = vector.load %arg5[%c12, %c0_52] : memref<18x32xf32, #tpu.memory_space<vmem>>, vector<2x32xf32>
    %cst_53 = arith.constant dense<0.000000e+00> : vector<2x256xf32>
    %142 = tpu.matmul %141, %140, %cst_53 {dimension_numbers = #tpu.dot_dimension_numbers<[1], [0], [0], [1], [0, 0, 1, 1], [], []>, precision = #tpu.contract_precision<fp32>} : vector<2x32xf32>, vector<32x256xf32>, vector<2x256xf32> -> vector<2x256xf32>
    %143 = vector.broadcast %63 : vector<1x256xf32> to vector<2x256xf32>
    %144 = arith.mulf %142, %143 : vector<2x256xf32>
    %145 = arith.addf %139, %144 : vector<2x256xf32>
    %c0_54 = arith.constant 0 : index
    %c144 = arith.constant 144 : index
    %146 = vector.load %arg10[%c0_54, %c144] : memref<32x512xf32, #tpu.memory_space<vmem>>, vector<32x256xf32>
    %c14 = arith.constant 14 : index
    %c0_55 = arith.constant 0 : index
    %147 = vector.load %arg5[%c14, %c0_55] : memref<18x32xf32, #tpu.memory_space<vmem>>, vector<2x32xf32>
    %cst_56 = arith.constant dense<0.000000e+00> : vector<2x256xf32>
    %148 = tpu.matmul %147, %146, %cst_56 {dimension_numbers = #tpu.dot_dimension_numbers<[1], [0], [0], [1], [0, 0, 1, 1], [], []>, precision = #tpu.contract_precision<fp32>} : vector<2x32xf32>, vector<32x256xf32>, vector<2x256xf32> -> vector<2x256xf32>
    %149 = vector.broadcast %72 : vector<1x256xf32> to vector<2x256xf32>
    %150 = arith.mulf %148, %149 : vector<2x256xf32>
    %151 = arith.addf %145, %150 : vector<2x256xf32>
    %c0_57 = arith.constant 0 : index
    %c145 = arith.constant 145 : index
    %152 = vector.load %arg10[%c0_57, %c145] : memref<32x512xf32, #tpu.memory_space<vmem>>, vector<32x256xf32>
    %c16 = arith.constant 16 : index
    %c0_58 = arith.constant 0 : index
    %153 = vector.load %arg5[%c16, %c0_58] : memref<18x32xf32, #tpu.memory_space<vmem>>, vector<2x32xf32>
    %cst_59 = arith.constant dense<0.000000e+00> : vector<2x256xf32>
    %154 = tpu.matmul %153, %152, %cst_59 {dimension_numbers = #tpu.dot_dimension_numbers<[1], [0], [0], [1], [0, 0, 1, 1], [], []>, precision = #tpu.contract_precision<fp32>} : vector<2x32xf32>, vector<32x256xf32>, vector<2x256xf32> -> vector<2x256xf32>
    %155 = vector.broadcast %81 : vector<1x256xf32> to vector<2x256xf32>
    %156 = arith.mulf %154, %155 : vector<2x256xf32>
    %157 = arith.addf %151, %156 : vector<2x256xf32>
    %c0_60 = arith.constant 0 : index
    %c0_61 = arith.constant 0 : index
    %158 = vector.load %arg4[%c0_60, %c0_61] : memref<2x2xf32, #tpu.memory_space<vmem>>, vector<2x2xf32>
    %159 = vector.extract_strided_slice %158 {offsets = [0, 0], sizes = [2, 1], strides = [1, 1]} : vector<2x2xf32> to vector<2x1xf32>
    %160 = vector.broadcast %159 : vector<2x1xf32> to vector<2x256xf32>
    %161 = arith.mulf %160, %157 : vector<2x256xf32>
    %162 = vector.extract_strided_slice %158 {offsets = [0, 1], sizes = [2, 1], strides = [1, 1]} : vector<2x2xf32> to vector<2x1xf32>
    %163 = vector.broadcast %162 : vector<2x1xf32> to vector<2x256xf32>
    %164 = arith.addf %161, %163 : vector<2x256xf32>
    %cst_62 = arith.constant 0.000000e+00 : f32
    %165 = vector.broadcast %cst_62 : f32 to vector<2x256xf32>
    %166 = arith.maximumf %164, %165 : vector<2x256xf32>
    %cst_63 = arith.constant dense<0.000000e+00> : vector<2xf32>
    %167 = vector.multi_reduction <add>, %166, %cst_63 [1] : vector<2x256xf32> to vector<2xf32>
    %168 = vector.shape_cast %167 : vector<2xf32> to vector<2x1xf32>
    %cst_64 = arith.constant 2.560000e+02 : f32
    %169 = vector.broadcast %cst_64 : f32 to vector<2x1xf32>
    %170 = arith.divf %168, %169 : vector<2x1xf32>
    %171 = vector.shape_cast %170 : vector<2x1xf32> to vector<2x1xf32>
    %172 = vector.broadcast %171 : vector<2x1xf32> to vector<2x256xf32>
    %c0_65 = arith.constant 0 : index
    %c0_66 = arith.constant 0 : index
    %173 = vector.load %arg6[%c0_65, %c0_66] : memref<2x2xf32, #tpu.memory_space<vmem>>, vector<2x2xf32>
    %cst_67 = arith.constant dense<0.000000e+00> : vector<2x256xf32>
    %174 = tpu.matmul %173, %172, %cst_67 {dimension_numbers = #tpu.dot_dimension_numbers<[1], [0], [0], [1], [0, 0, 1, 1], [], []>, precision = #tpu.contract_precision<fp32>} : vector<2x2xf32>, vector<2x256xf32>, vector<2x256xf32> -> vector<2x256xf32>
    %cst_68 = arith.constant 0.000000e+00 : f32
    %175 = vector.broadcast %cst_68 : f32 to vector<2x256xf32>
    %176 = arith.maximumf %174, %175 : vector<2x256xf32>
    %c0_69 = arith.constant 0 : index
    %c0_70 = arith.constant 0 : index
    %177 = vector.load %arg7[%c0_69, %c0_70] : memref<32x2xf32, #tpu.memory_space<vmem>>, vector<32x2xf32>
    %cst_71 = arith.constant dense<0.000000e+00> : vector<32x256xf32>
    %178 = tpu.matmul %177, %176, %cst_71 {dimension_numbers = #tpu.dot_dimension_numbers<[1], [0], [0], [1], [0, 0, 1, 1], [], []>, precision = #tpu.contract_precision<fp32>} : vector<32x2xf32>, vector<2x256xf32>, vector<32x256xf32> -> vector<32x256xf32>
    %179 = arith.negf %178 : vector<32x256xf32>
    %180 = math.exp %179 : vector<32x256xf32>
    %cst_72 = arith.constant 1.000000e+00 : f32
    %181 = vector.broadcast %cst_72 : f32 to vector<32x256xf32>
    %182 = arith.addf %181, %180 : vector<32x256xf32>
    %183 = arith.divf %181, %182 : vector<32x256xf32>
    %184 = arith.mulf %183, %19 : vector<32x256xf32>
    %cst_73 = arith.constant 0.000000e+00 : f32
    %185 = vector.broadcast %cst_73 : f32 to vector<2x512xf32>
    %c0_74 = arith.constant 0 : index
    %c0_75 = arith.constant 0 : index
    %186 = vector.load %arg11[%c0_74, %c0_75] : memref<2x512xf32, #tpu.memory_space<vmem>>, vector<2x512xf32>
    tpu.vector_store %arg11[%c0_74, %c0_75], %185 {strides = array<i32>} : memref<2x512xf32, #tpu.memory_space<vmem>>, vector<2x512xf32>,
    %cst_76 = arith.constant dense<0.000000e+00> : vector<256xf32>
    %187 = vector.multi_reduction <add>, %184, %cst_76 [0] : vector<32x256xf32> to vector<256xf32>
    %188 = vector.shape_cast %187 : vector<256xf32> to vector<1x256xf32>
    %cst_77 = arith.constant 3.200000e+01 : f32
    %189 = vector.broadcast %cst_77 : f32 to vector<1x256xf32>
    %190 = arith.divf %188, %189 : vector<1x256xf32>
    %c0_78 = arith.constant 0 : index
    %c128_79 = arith.constant 128 : index
    %191 = vector.load %arg11[%c0_78, %c128_79] : memref<2x512xf32, #tpu.memory_space<vmem>>, vector<1x256xf32>
    tpu.vector_store %arg11[%c0_78, %c128_79], %190 {strides = array<i32>} : memref<2x512xf32, #tpu.memory_space<vmem>>, vector<1x256xf32>,
    %cst_80 = arith.constant dense<0xFF800000> : vector<256xf32>
    %192 = vector.multi_reduction <maximumf>, %184, %cst_80 [0] : vector<32x256xf32> to vector<256xf32>
    %193 = vector.shape_cast %192 : vector<256xf32> to vector<1x256xf32>
    %c1 = arith.constant 1 : index
    %c128_81 = arith.constant 128 : index
    %194 = vector.load %arg11[%c1, %c128_81] : memref<2x512xf32, #tpu.memory_space<vmem>>, vector<1x256xf32>
    tpu.vector_store %arg11[%c1, %c128_81], %193 {strides = array<i32>} : memref<2x512xf32, #tpu.memory_space<vmem>>, vector<1x256xf32>,
    %cst_82 = arith.constant 0.000000e+00 : f32
    %195 = vector.broadcast %cst_82 : f32 to vector<1x256xf32>
    %c0_83 = arith.constant 0 : index
    %c77 = arith.constant 77 : index
    %196 = vector.load %arg11[%c0_83, %c77] : memref<2x512xf32, #tpu.memory_space<vmem>>, vector<2x256xf32>
    %c0_84 = arith.constant 0 : index
    %c0_85 = arith.constant 0 : index
    %197 = memref.load %arg8[%c0_84, %c0_85] : memref<2x49xf32, #tpu.memory_space<smem>>
    %198 = vector.extract_strided_slice %196 {offsets = [0, 0], sizes = [1, 256], strides = [1, 1]} : vector<2x256xf32> to vector<1x256xf32>
    %199 = vector.broadcast %197 : f32 to vector<1x256xf32>
    %200 = arith.mulf %199, %198 : vector<1x256xf32>
    %c1_86 = arith.constant 1 : index
    %c0_87 = arith.constant 0 : index
    %201 = memref.load %arg8[%c1_86, %c0_87] : memref<2x49xf32, #tpu.memory_space<smem>>
    %202 = vector.extract_strided_slice %196 {offsets = [1, 0], sizes = [1, 256], strides = [1, 1]} : vector<2x256xf32> to vector<1x256xf32>
    %203 = vector.broadcast %201 : f32 to vector<1x256xf32>
    %204 = arith.mulf %203, %202 : vector<1x256xf32>
    %205 = arith.addf %200, %204 : vector<1x256xf32>
    %206 = arith.mulf %205, %45 : vector<1x256xf32>
    %207 = arith.addf %195, %206 : vector<1x256xf32>
    %c0_88 = arith.constant 0 : index
    %c78 = arith.constant 78 : index
    %208 = vector.load %arg11[%c0_88, %c78] : memref<2x512xf32, #tpu.memory_space<vmem>>, vector<2x256xf32>
    %c0_89 = arith.constant 0 : index
    %c1_90 = arith.constant 1 : index
    %209 = memref.load %arg8[%c0_89, %c1_90] : memref<2x49xf32, #tpu.memory_space<smem>>
    %210 = vector.extract_strided_slice %208 {offsets = [0, 0], sizes = [1, 256], strides = [1, 1]} : vector<2x256xf32> to vector<1x256xf32>
    %211 = vector.broadcast %209 : f32 to vector<1x256xf32>
    %212 = arith.mulf %211, %210 : vector<1x256xf32>
    %c1_91 = arith.constant 1 : index
    %c1_92 = arith.constant 1 : index
    %213 = memref.load %arg8[%c1_91, %c1_92] : memref<2x49xf32, #tpu.memory_space<smem>>
    %214 = vector.extract_strided_slice %208 {offsets = [1, 0], sizes = [1, 256], strides = [1, 1]} : vector<2x256xf32> to vector<1x256xf32>
    %215 = vector.broadcast %213 : f32 to vector<1x256xf32>
    %216 = arith.mulf %215, %214 : vector<1x256xf32>
    %217 = arith.addf %212, %216 : vector<1x256xf32>
    %218 = arith.mulf %217, %54 : vector<1x256xf32>
    %219 = arith.addf %207, %218 : vector<1x256xf32>
    %c0_93 = arith.constant 0 : index
    %c79 = arith.constant 79 : index
    %220 = vector.load %arg11[%c0_93, %c79] : memref<2x512xf32, #tpu.memory_space<vmem>>, vector<2x256xf32>
    %c0_94 = arith.constant 0 : index
    %c2_95 = arith.constant 2 : index
    %221 = memref.load %arg8[%c0_94, %c2_95] : memref<2x49xf32, #tpu.memory_space<smem>>
    %222 = vector.extract_strided_slice %220 {offsets = [0, 0], sizes = [1, 256], strides = [1, 1]} : vector<2x256xf32> to vector<1x256xf32>
    %223 = vector.broadcast %221 : f32 to vector<1x256xf32>
    %224 = arith.mulf %223, %222 : vector<1x256xf32>
    %c1_96 = arith.constant 1 : index
    %c2_97 = arith.constant 2 : index
    %225 = memref.load %arg8[%c1_96, %c2_97] : memref<2x49xf32, #tpu.memory_space<smem>>
    %226 = vector.extract_strided_slice %220 {offsets = [1, 0], sizes = [1, 256], strides = [1, 1]} : vector<2x256xf32> to vector<1x256xf32>
    %227 = vector.broadcast %225 : f32 to vector<1x256xf32>
    %228 = arith.mulf %227, %226 : vector<1x256xf32>
    %229 = arith.addf %224, %228 : vector<1x256xf32>
    %230 = arith.mulf %229, %63 : vector<1x256xf32>
    %231 = arith.addf %219, %230 : vector<1x256xf32>
    %c0_98 = arith.constant 0 : index
    %c80 = arith.constant 80 : index
    %232 = vector.load %arg11[%c0_98, %c80] : memref<2x512xf32, #tpu.memory_space<vmem>>, vector<2x256xf32>
    %c0_99 = arith.constant 0 : index
    %c3 = arith.constant 3 : index
    %233 = memref.load %arg8[%c0_99, %c3] : memref<2x49xf32, #tpu.memory_space<smem>>
    %234 = vector.extract_strided_slice %232 {offsets = [0, 0], sizes = [1, 256], strides = [1, 1]} : vector<2x256xf32> to vector<1x256xf32>
    %235 = vector.broadcast %233 : f32 to vector<1x256xf32>
    %236 = arith.mulf %235, %234 : vector<1x256xf32>
    %c1_100 = arith.constant 1 : index
    %c3_101 = arith.constant 3 : index
    %237 = memref.load %arg8[%c1_100, %c3_101] : memref<2x49xf32, #tpu.memory_space<smem>>
    %238 = vector.extract_strided_slice %232 {offsets = [1, 0], sizes = [1, 256], strides = [1, 1]} : vector<2x256xf32> to vector<1x256xf32>
    %239 = vector.broadcast %237 : f32 to vector<1x256xf32>
    %240 = arith.mulf %239, %238 : vector<1x256xf32>
    %241 = arith.addf %236, %240 : vector<1x256xf32>
    %242 = arith.mulf %241, %72 : vector<1x256xf32>
    %243 = arith.addf %231, %242 : vector<1x256xf32>
    %c0_102 = arith.constant 0 : index
    %c81 = arith.constant 81 : index
    %244 = vector.load %arg11[%c0_102, %c81] : memref<2x512xf32, #tpu.memory_space<vmem>>, vector<2x256xf32>
    %c0_103 = arith.constant 0 : index
    %c4_104 = arith.constant 4 : index
    %245 = memref.load %arg8[%c0_103, %c4_104] : memref<2x49xf32, #tpu.memory_space<smem>>
    %246 = vector.extract_strided_slice %244 {offsets = [0, 0], sizes = [1, 256], strides = [1, 1]} : vector<2x256xf32> to vector<1x256xf32>
    %247 = vector.broadcast %245 : f32 to vector<1x256xf32>
    %248 = arith.mulf %247, %246 : vector<1x256xf32>
    %c1_105 = arith.constant 1 : index
    %c4_106 = arith.constant 4 : index
    %249 = memref.load %arg8[%c1_105, %c4_106] : memref<2x49xf32, #tpu.memory_space<smem>>
    %250 = vector.extract_strided_slice %244 {offsets = [1, 0], sizes = [1, 256], strides = [1, 1]} : vector<2x256xf32> to vector<1x256xf32>
    %251 = vector.broadcast %249 : f32 to vector<1x256xf32>
    %252 = arith.mulf %251, %250 : vector<1x256xf32>
    %253 = arith.addf %248, %252 : vector<1x256xf32>
    %254 = arith.mulf %253, %81 : vector<1x256xf32>
    %255 = arith.addf %243, %254 : vector<1x256xf32>
    %c0_107 = arith.constant 0 : index
    %c82 = arith.constant 82 : index
    %256 = vector.load %arg11[%c0_107, %c82] : memref<2x512xf32, #tpu.memory_space<vmem>>, vector<2x256xf32>
    %c0_108 = arith.constant 0 : index
    %c5 = arith.constant 5 : index
    %257 = memref.load %arg8[%c0_108, %c5] : memref<2x49xf32, #tpu.memory_space<smem>>
    %258 = vector.extract_strided_slice %256 {offsets = [0, 0], sizes = [1, 256], strides = [1, 1]} : vector<2x256xf32> to vector<1x256xf32>
    %259 = vector.broadcast %257 : f32 to vector<1x256xf32>
    %260 = arith.mulf %259, %258 : vector<1x256xf32>
    %c1_109 = arith.constant 1 : index
    %c5_110 = arith.constant 5 : index
    %261 = memref.load %arg8[%c1_109, %c5_110] : memref<2x49xf32, #tpu.memory_space<smem>>
    %262 = vector.extract_strided_slice %256 {offsets = [1, 0], sizes = [1, 256], strides = [1, 1]} : vector<2x256xf32> to vector<1x256xf32>
    %263 = vector.broadcast %261 : f32 to vector<1x256xf32>
    %264 = arith.mulf %263, %262 : vector<1x256xf32>
    %265 = arith.addf %260, %264 : vector<1x256xf32>
    %266 = arith.mulf %265, %90 : vector<1x256xf32>
    %267 = arith.addf %255, %266 : vector<1x256xf32>
    %c0_111 = arith.constant 0 : index
    %c83 = arith.constant 83 : index
    %268 = vector.load %arg11[%c0_111, %c83] : memref<2x512xf32, #tpu.memory_space<vmem>>, vector<2x256xf32>
    %c0_112 = arith.constant 0 : index
    %c6_113 = arith.constant 6 : index
    %269 = memref.load %arg8[%c0_112, %c6_113] : memref<2x49xf32, #tpu.memory_space<smem>>
    %270 = vector.extract_strided_slice %268 {offsets = [0, 0], sizes = [1, 256], strides = [1, 1]} : vector<2x256xf32> to vector<1x256xf32>
    %271 = vector.broadcast %269 : f32 to vector<1x256xf32>
    %272 = arith.mulf %271, %270 : vector<1x256xf32>
    %c1_114 = arith.constant 1 : index
    %c6_115 = arith.constant 6 : index
    %273 = memref.load %arg8[%c1_114, %c6_115] : memref<2x49xf32, #tpu.memory_space<smem>>
    %274 = vector.extract_strided_slice %268 {offsets = [1, 0], sizes = [1, 256], strides = [1, 1]} : vector<2x256xf32> to vector<1x256xf32>
    %275 = vector.broadcast %273 : f32 to vector<1x256xf32>
    %276 = arith.mulf %275, %274 : vector<1x256xf32>
    %277 = arith.addf %272, %276 : vector<1x256xf32>
    %278 = arith.mulf %277, %99 : vector<1x256xf32>
    %279 = arith.addf %267, %278 : vector<1x256xf32>
    %c0_116 = arith.constant 0 : index
    %c93 = arith.constant 93 : index
    %280 = vector.load %arg11[%c0_116, %c93] : memref<2x512xf32, #tpu.memory_space<vmem>>, vector<2x256xf32>
    %c0_117 = arith.constant 0 : index
    %c7 = arith.constant 7 : index
    %281 = memref.load %arg8[%c0_117, %c7] : memref<2x49xf32, #tpu.memory_space<smem>>
    %282 = vector.extract_strided_slice %280 {offsets = [0, 0], sizes = [1, 256], strides = [1, 1]} : vector<2x256xf32> to vector<1x256xf32>
    %283 = vector.broadcast %281 : f32 to vector<1x256xf32>
    %284 = arith.mulf %283, %282 : vector<1x256xf32>
    %c1_118 = arith.constant 1 : index
    %c7_119 = arith.constant 7 : index
    %285 = memref.load %arg8[%c1_118, %c7_119] : memref<2x49xf32, #tpu.memory_space<smem>>
    %286 = vector.extract_strided_slice %280 {offsets = [1, 0], sizes = [1, 256], strides = [1, 1]} : vector<2x256xf32> to vector<1x256xf32>
    %287 = vector.broadcast %285 : f32 to vector<1x256xf32>
    %288 = arith.mulf %287, %286 : vector<1x256xf32>
    %289 = arith.addf %284, %288 : vector<1x256xf32>
    %290 = arith.mulf %289, %45 : vector<1x256xf32>
    %291 = arith.addf %279, %290 : vector<1x256xf32>
    %c0_120 = arith.constant 0 : index
    %c94 = arith.constant 94 : index
    %292 = vector.load %arg11[%c0_120, %c94] : memref<2x512xf32, #tpu.memory_space<vmem>>, vector<2x256xf32>
    %c0_121 = arith.constant 0 : index
    %c8_122 = arith.constant 8 : index
    %293 = memref.load %arg8[%c0_121, %c8_122] : memref<2x49xf32, #tpu.memory_space<smem>>
    %294 = vector.extract_strided_slice %292 {offsets = [0, 0], sizes = [1, 256], strides = [1, 1]} : vector<2x256xf32> to vector<1x256xf32>
    %295 = vector.broadcast %293 : f32 to vector<1x256xf32>
    %296 = arith.mulf %295, %294 : vector<1x256xf32>
    %c1_123 = arith.constant 1 : index
    %c8_124 = arith.constant 8 : index
    %297 = memref.load %arg8[%c1_123, %c8_124] : memref<2x49xf32, #tpu.memory_space<smem>>
    %298 = vector.extract_strided_slice %292 {offsets = [1, 0], sizes = [1, 256], strides = [1, 1]} : vector<2x256xf32> to vector<1x256xf32>
    %299 = vector.broadcast %297 : f32 to vector<1x256xf32>
    %300 = arith.mulf %299, %298 : vector<1x256xf32>
    %301 = arith.addf %296, %300 : vector<1x256xf32>
    %302 = arith.mulf %301, %54 : vector<1x256xf32>
    %303 = arith.addf %291, %302 : vector<1x256xf32>
    %c0_125 = arith.constant 0 : index
    %c95 = arith.constant 95 : index
    %304 = vector.load %arg11[%c0_125, %c95] : memref<2x512xf32, #tpu.memory_space<vmem>>, vector<2x256xf32>
    %c0_126 = arith.constant 0 : index
    %c9 = arith.constant 9 : index
    %305 = memref.load %arg8[%c0_126, %c9] : memref<2x49xf32, #tpu.memory_space<smem>>
    %306 = vector.extract_strided_slice %304 {offsets = [0, 0], sizes = [1, 256], strides = [1, 1]} : vector<2x256xf32> to vector<1x256xf32>
    %307 = vector.broadcast %305 : f32 to vector<1x256xf32>
    %308 = arith.mulf %307, %306 : vector<1x256xf32>
    %c1_127 = arith.constant 1 : index
    %c9_128 = arith.constant 9 : index
    %309 = memref.load %arg8[%c1_127, %c9_128] : memref<2x49xf32, #tpu.memory_space<smem>>
    %310 = vector.extract_strided_slice %304 {offsets = [1, 0], sizes = [1, 256], strides = [1, 1]} : vector<2x256xf32> to vector<1x256xf32>
    %311 = vector.broadcast %309 : f32 to vector<1x256xf32>
    %312 = arith.mulf %311, %310 : vector<1x256xf32>
    %313 = arith.addf %308, %312 : vector<1x256xf32>
    %314 = arith.mulf %313, %63 : vector<1x256xf32>
    %315 = arith.addf %303, %314 : vector<1x256xf32>
    %c0_129 = arith.constant 0 : index
    %c96 = arith.constant 96 : index
    %316 = vector.load %arg11[%c0_129, %c96] : memref<2x512xf32, #tpu.memory_space<vmem>>, vector<2x256xf32>
    %c0_130 = arith.constant 0 : index
    %c10_131 = arith.constant 10 : index
    %317 = memref.load %arg8[%c0_130, %c10_131] : memref<2x49xf32, #tpu.memory_space<smem>>
    %318 = vector.extract_strided_slice %316 {offsets = [0, 0], sizes = [1, 256], strides = [1, 1]} : vector<2x256xf32> to vector<1x256xf32>
    %319 = vector.broadcast %317 : f32 to vector<1x256xf32>
    %320 = arith.mulf %319, %318 : vector<1x256xf32>
    %c1_132 = arith.constant 1 : index
    %c10_133 = arith.constant 10 : index
    %321 = memref.load %arg8[%c1_132, %c10_133] : memref<2x49xf32, #tpu.memory_space<smem>>
    %322 = vector.extract_strided_slice %316 {offsets = [1, 0], sizes = [1, 256], strides = [1, 1]} : vector<2x256xf32> to vector<1x256xf32>
    %323 = vector.broadcast %321 : f32 to vector<1x256xf32>
    %324 = arith.mulf %323, %322 : vector<1x256xf32>
    %325 = arith.addf %320, %324 : vector<1x256xf32>
    %326 = arith.mulf %325, %72 : vector<1x256xf32>
    %327 = arith.addf %315, %326 : vector<1x256xf32>
    %c0_134 = arith.constant 0 : index
    %c97 = arith.constant 97 : index
    %328 = vector.load %arg11[%c0_134, %c97] : memref<2x512xf32, #tpu.memory_space<vmem>>, vector<2x256xf32>
    %c0_135 = arith.constant 0 : index
    %c11 = arith.constant 11 : index
    %329 = memref.load %arg8[%c0_135, %c11] : memref<2x49xf32, #tpu.memory_space<smem>>
    %330 = vector.extract_strided_slice %328 {offsets = [0, 0], sizes = [1, 256], strides = [1, 1]} : vector<2x256xf32> to vector<1x256xf32>
    %331 = vector.broadcast %329 : f32 to vector<1x256xf32>
    %332 = arith.mulf %331, %330 : vector<1x256xf32>
    %c1_136 = arith.constant 1 : index
    %c11_137 = arith.constant 11 : index
    %333 = memref.load %arg8[%c1_136, %c11_137] : memref<2x49xf32, #tpu.memory_space<smem>>
    %334 = vector.extract_strided_slice %328 {offsets = [1, 0], sizes = [1, 256], strides = [1, 1]} : vector<2x256xf32> to vector<1x256xf32>
    %335 = vector.broadcast %333 : f32 to vector<1x256xf32>
    %336 = arith.mulf %335, %334 : vector<1x256xf32>
    %337 = arith.addf %332, %336 : vector<1x256xf32>
    %338 = arith.mulf %337, %81 : vector<1x256xf32>
    %339 = arith.addf %327, %338 : vector<1x256xf32>
    %c0_138 = arith.constant 0 : index
    %c98 = arith.constant 98 : index
    %340 = vector.load %arg11[%c0_138, %c98] : memref<2x512xf32, #tpu.memory_space<vmem>>, vector<2x256xf32>
    %c0_139 = arith.constant 0 : index
    %c12_140 = arith.constant 12 : index
    %341 = memref.load %arg8[%c0_139, %c12_140] : memref<2x49xf32, #tpu.memory_space<smem>>
    %342 = vector.extract_strided_slice %340 {offsets = [0, 0], sizes = [1, 256], strides = [1, 1]} : vector<2x256xf32> to vector<1x256xf32>
    %343 = vector.broadcast %341 : f32 to vector<1x256xf32>
    %344 = arith.mulf %343, %342 : vector<1x256xf32>
    %c1_141 = arith.constant 1 : index
    %c12_142 = arith.constant 12 : index
    %345 = memref.load %arg8[%c1_141, %c12_142] : memref<2x49xf32, #tpu.memory_space<smem>>
    %346 = vector.extract_strided_slice %340 {offsets = [1, 0], sizes = [1, 256], strides = [1, 1]} : vector<2x256xf32> to vector<1x256xf32>
    %347 = vector.broadcast %345 : f32 to vector<1x256xf32>
    %348 = arith.mulf %347, %346 : vector<1x256xf32>
    %349 = arith.addf %344, %348 : vector<1x256xf32>
    %350 = arith.mulf %349, %90 : vector<1x256xf32>
    %351 = arith.addf %339, %350 : vector<1x256xf32>
    %c0_143 = arith.constant 0 : index
    %c99 = arith.constant 99 : index
    %352 = vector.load %arg11[%c0_143, %c99] : memref<2x512xf32, #tpu.memory_space<vmem>>, vector<2x256xf32>
    %c0_144 = arith.constant 0 : index
    %c13 = arith.constant 13 : index
    %353 = memref.load %arg8[%c0_144, %c13] : memref<2x49xf32, #tpu.memory_space<smem>>
    %354 = vector.extract_strided_slice %352 {offsets = [0, 0], sizes = [1, 256], strides = [1, 1]} : vector<2x256xf32> to vector<1x256xf32>
    %355 = vector.broadcast %353 : f32 to vector<1x256xf32>
    %356 = arith.mulf %355, %354 : vector<1x256xf32>
    %c1_145 = arith.constant 1 : index
    %c13_146 = arith.constant 13 : index
    %357 = memref.load %arg8[%c1_145, %c13_146] : memref<2x49xf32, #tpu.memory_space<smem>>
    %358 = vector.extract_strided_slice %352 {offsets = [1, 0], sizes = [1, 256], strides = [1, 1]} : vector<2x256xf32> to vector<1x256xf32>
    %359 = vector.broadcast %357 : f32 to vector<1x256xf32>
    %360 = arith.mulf %359, %358 : vector<1x256xf32>
    %361 = arith.addf %356, %360 : vector<1x256xf32>
    %362 = arith.mulf %361, %99 : vector<1x256xf32>
    %363 = arith.addf %351, %362 : vector<1x256xf32>
    %c0_147 = arith.constant 0 : index
    %c109 = arith.constant 109 : index
    %364 = vector.load %arg11[%c0_147, %c109] : memref<2x512xf32, #tpu.memory_space<vmem>>, vector<2x256xf32>
    %c0_148 = arith.constant 0 : index
    %c14_149 = arith.constant 14 : index
    %365 = memref.load %arg8[%c0_148, %c14_149] : memref<2x49xf32, #tpu.memory_space<smem>>
    %366 = vector.extract_strided_slice %364 {offsets = [0, 0], sizes = [1, 256], strides = [1, 1]} : vector<2x256xf32> to vector<1x256xf32>
    %367 = vector.broadcast %365 : f32 to vector<1x256xf32>
    %368 = arith.mulf %367, %366 : vector<1x256xf32>
    %c1_150 = arith.constant 1 : index
    %c14_151 = arith.constant 14 : index
    %369 = memref.load %arg8[%c1_150, %c14_151] : memref<2x49xf32, #tpu.memory_space<smem>>
    %370 = vector.extract_strided_slice %364 {offsets = [1, 0], sizes = [1, 256], strides = [1, 1]} : vector<2x256xf32> to vector<1x256xf32>
    %371 = vector.broadcast %369 : f32 to vector<1x256xf32>
    %372 = arith.mulf %371, %370 : vector<1x256xf32>
    %373 = arith.addf %368, %372 : vector<1x256xf32>
    %374 = arith.mulf %373, %45 : vector<1x256xf32>
    %375 = arith.addf %363, %374 : vector<1x256xf32>
    %c0_152 = arith.constant 0 : index
    %c110 = arith.constant 110 : index
    %376 = vector.load %arg11[%c0_152, %c110] : memref<2x512xf32, #tpu.memory_space<vmem>>, vector<2x256xf32>
    %c0_153 = arith.constant 0 : index
    %c15 = arith.constant 15 : index
    %377 = memref.load %arg8[%c0_153, %c15] : memref<2x49xf32, #tpu.memory_space<smem>>
    %378 = vector.extract_strided_slice %376 {offsets = [0, 0], sizes = [1, 256], strides = [1, 1]} : vector<2x256xf32> to vector<1x256xf32>
    %379 = vector.broadcast %377 : f32 to vector<1x256xf32>
    %380 = arith.mulf %379, %378 : vector<1x256xf32>
    %c1_154 = arith.constant 1 : index
    %c15_155 = arith.constant 15 : index
    %381 = memref.load %arg8[%c1_154, %c15_155] : memref<2x49xf32, #tpu.memory_space<smem>>
    %382 = vector.extract_strided_slice %376 {offsets = [1, 0], sizes = [1, 256], strides = [1, 1]} : vector<2x256xf32> to vector<1x256xf32>
    %383 = vector.broadcast %381 : f32 to vector<1x256xf32>
    %384 = arith.mulf %383, %382 : vector<1x256xf32>
    %385 = arith.addf %380, %384 : vector<1x256xf32>
    %386 = arith.mulf %385, %54 : vector<1x256xf32>
    %387 = arith.addf %375, %386 : vector<1x256xf32>
    %c0_156 = arith.constant 0 : index
    %c111_157 = arith.constant 111 : index
    %388 = vector.load %arg11[%c0_156, %c111_157] : memref<2x512xf32, #tpu.memory_space<vmem>>, vector<2x256xf32>
    %c0_158 = arith.constant 0 : index
    %c16_159 = arith.constant 16 : index
    %389 = memref.load %arg8[%c0_158, %c16_159] : memref<2x49xf32, #tpu.memory_space<smem>>
    %390 = vector.extract_strided_slice %388 {offsets = [0, 0], sizes = [1, 256], strides = [1, 1]} : vector<2x256xf32> to vector<1x256xf32>
    %391 = vector.broadcast %389 : f32 to vector<1x256xf32>
    %392 = arith.mulf %391, %390 : vector<1x256xf32>
    %c1_160 = arith.constant 1 : index
    %c16_161 = arith.constant 16 : index
    %393 = memref.load %arg8[%c1_160, %c16_161] : memref<2x49xf32, #tpu.memory_space<smem>>
    %394 = vector.extract_strided_slice %388 {offsets = [1, 0], sizes = [1, 256], strides = [1, 1]} : vector<2x256xf32> to vector<1x256xf32>
    %395 = vector.broadcast %393 : f32 to vector<1x256xf32>
    %396 = arith.mulf %395, %394 : vector<1x256xf32>
    %397 = arith.addf %392, %396 : vector<1x256xf32>
    %398 = arith.mulf %397, %63 : vector<1x256xf32>
    %399 = arith.addf %387, %398 : vector<1x256xf32>
    %c0_162 = arith.constant 0 : index
    %c112_163 = arith.constant 112 : index
    %400 = vector.load %arg11[%c0_162, %c112_163] : memref<2x512xf32, #tpu.memory_space<vmem>>, vector<2x256xf32>
    %c0_164 = arith.constant 0 : index
    %c17 = arith.constant 17 : index
    %401 = memref.load %arg8[%c0_164, %c17] : memref<2x49xf32, #tpu.memory_space<smem>>
    %402 = vector.extract_strided_slice %400 {offsets = [0, 0], sizes = [1, 256], strides = [1, 1]} : vector<2x256xf32> to vector<1x256xf32>
    %403 = vector.broadcast %401 : f32 to vector<1x256xf32>
    %404 = arith.mulf %403, %402 : vector<1x256xf32>
    %c1_165 = arith.constant 1 : index
    %c17_166 = arith.constant 17 : index
    %405 = memref.load %arg8[%c1_165, %c17_166] : memref<2x49xf32, #tpu.memory_space<smem>>
    %406 = vector.extract_strided_slice %400 {offsets = [1, 0], sizes = [1, 256], strides = [1, 1]} : vector<2x256xf32> to vector<1x256xf32>
    %407 = vector.broadcast %405 : f32 to vector<1x256xf32>
    %408 = arith.mulf %407, %406 : vector<1x256xf32>
    %409 = arith.addf %404, %408 : vector<1x256xf32>
    %410 = arith.mulf %409, %72 : vector<1x256xf32>
    %411 = arith.addf %399, %410 : vector<1x256xf32>
    %c0_167 = arith.constant 0 : index
    %c113_168 = arith.constant 113 : index
    %412 = vector.load %arg11[%c0_167, %c113_168] : memref<2x512xf32, #tpu.memory_space<vmem>>, vector<2x256xf32>
    %c0_169 = arith.constant 0 : index
    %c18 = arith.constant 18 : index
    %413 = memref.load %arg8[%c0_169, %c18] : memref<2x49xf32, #tpu.memory_space<smem>>
    %414 = vector.extract_strided_slice %412 {offsets = [0, 0], sizes = [1, 256], strides = [1, 1]} : vector<2x256xf32> to vector<1x256xf32>
    %415 = vector.broadcast %413 : f32 to vector<1x256xf32>
    %416 = arith.mulf %415, %414 : vector<1x256xf32>
    %c1_170 = arith.constant 1 : index
    %c18_171 = arith.constant 18 : index
    %417 = memref.load %arg8[%c1_170, %c18_171] : memref<2x49xf32, #tpu.memory_space<smem>>
    %418 = vector.extract_strided_slice %412 {offsets = [1, 0], sizes = [1, 256], strides = [1, 1]} : vector<2x256xf32> to vector<1x256xf32>
    %419 = vector.broadcast %417 : f32 to vector<1x256xf32>
    %420 = arith.mulf %419, %418 : vector<1x256xf32>
    %421 = arith.addf %416, %420 : vector<1x256xf32>
    %422 = arith.mulf %421, %81 : vector<1x256xf32>
    %423 = arith.addf %411, %422 : vector<1x256xf32>
    %c0_172 = arith.constant 0 : index
    %c114 = arith.constant 114 : index
    %424 = vector.load %arg11[%c0_172, %c114] : memref<2x512xf32, #tpu.memory_space<vmem>>, vector<2x256xf32>
    %c0_173 = arith.constant 0 : index
    %c19 = arith.constant 19 : index
    %425 = memref.load %arg8[%c0_173, %c19] : memref<2x49xf32, #tpu.memory_space<smem>>
    %426 = vector.extract_strided_slice %424 {offsets = [0, 0], sizes = [1, 256], strides = [1, 1]} : vector<2x256xf32> to vector<1x256xf32>
    %427 = vector.broadcast %425 : f32 to vector<1x256xf32>
    %428 = arith.mulf %427, %426 : vector<1x256xf32>
    %c1_174 = arith.constant 1 : index
    %c19_175 = arith.constant 19 : index
    %429 = memref.load %arg8[%c1_174, %c19_175] : memref<2x49xf32, #tpu.memory_space<smem>>
    %430 = vector.extract_strided_slice %424 {offsets = [1, 0], sizes = [1, 256], strides = [1, 1]} : vector<2x256xf32> to vector<1x256xf32>
    %431 = vector.broadcast %429 : f32 to vector<1x256xf32>
    %432 = arith.mulf %431, %430 : vector<1x256xf32>
    %433 = arith.addf %428, %432 : vector<1x256xf32>
    %434 = arith.mulf %433, %90 : vector<1x256xf32>
    %435 = arith.addf %423, %434 : vector<1x256xf32>
    %c0_176 = arith.constant 0 : index
    %c115 = arith.constant 115 : index
    %436 = vector.load %arg11[%c0_176, %c115] : memref<2x512xf32, #tpu.memory_space<vmem>>, vector<2x256xf32>
    %c0_177 = arith.constant 0 : index
    %c20 = arith.constant 20 : index
    %437 = memref.load %arg8[%c0_177, %c20] : memref<2x49xf32, #tpu.memory_space<smem>>
    %438 = vector.extract_strided_slice %436 {offsets = [0, 0], sizes = [1, 256], strides = [1, 1]} : vector<2x256xf32> to vector<1x256xf32>
    %439 = vector.broadcast %437 : f32 to vector<1x256xf32>
    %440 = arith.mulf %439, %438 : vector<1x256xf32>
    %c1_178 = arith.constant 1 : index
    %c20_179 = arith.constant 20 : index
    %441 = memref.load %arg8[%c1_178, %c20_179] : memref<2x49xf32, #tpu.memory_space<smem>>
    %442 = vector.extract_strided_slice %436 {offsets = [1, 0], sizes = [1, 256], strides = [1, 1]} : vector<2x256xf32> to vector<1x256xf32>
    %443 = vector.broadcast %441 : f32 to vector<1x256xf32>
    %444 = arith.mulf %443, %442 : vector<1x256xf32>
    %445 = arith.addf %440, %444 : vector<1x256xf32>
    %446 = arith.mulf %445, %99 : vector<1x256xf32>
    %447 = arith.addf %435, %446 : vector<1x256xf32>
    %c0_180 = arith.constant 0 : index
    %c125 = arith.constant 125 : index
    %448 = vector.load %arg11[%c0_180, %c125] : memref<2x512xf32, #tpu.memory_space<vmem>>, vector<2x256xf32>
    %c0_181 = arith.constant 0 : index
    %c21 = arith.constant 21 : index
    %449 = memref.load %arg8[%c0_181, %c21] : memref<2x49xf32, #tpu.memory_space<smem>>
    %450 = vector.extract_strided_slice %448 {offsets = [0, 0], sizes = [1, 256], strides = [1, 1]} : vector<2x256xf32> to vector<1x256xf32>
    %451 = vector.broadcast %449 : f32 to vector<1x256xf32>
    %452 = arith.mulf %451, %450 : vector<1x256xf32>
    %c1_182 = arith.constant 1 : index
    %c21_183 = arith.constant 21 : index
    %453 = memref.load %arg8[%c1_182, %c21_183] : memref<2x49xf32, #tpu.memory_space<smem>>
    %454 = vector.extract_strided_slice %448 {offsets = [1, 0], sizes = [1, 256], strides = [1, 1]} : vector<2x256xf32> to vector<1x256xf32>
    %455 = vector.broadcast %453 : f32 to vector<1x256xf32>
    %456 = arith.mulf %455, %454 : vector<1x256xf32>
    %457 = arith.addf %452, %456 : vector<1x256xf32>
    %458 = arith.mulf %457, %45 : vector<1x256xf32>
    %459 = arith.addf %447, %458 : vector<1x256xf32>
    %c0_184 = arith.constant 0 : index
    %c126 = arith.constant 126 : index
    %460 = vector.load %arg11[%c0_184, %c126] : memref<2x512xf32, #tpu.memory_space<vmem>>, vector<2x256xf32>
    %c0_185 = arith.constant 0 : index
    %c22 = arith.constant 22 : index
    %461 = memref.load %arg8[%c0_185, %c22] : memref<2x49xf32, #tpu.memory_space<smem>>
    %462 = vector.extract_strided_slice %460 {offsets = [0, 0], sizes = [1, 256], strides = [1, 1]} : vector<2x256xf32> to vector<1x256xf32>
    %463 = vector.broadcast %461 : f32 to vector<1x256xf32>
    %464 = arith.mulf %463, %462 : vector<1x256xf32>
    %c1_186 = arith.constant 1 : index
    %c22_187 = arith.constant 22 : index
    %465 = memref.load %arg8[%c1_186, %c22_187] : memref<2x49xf32, #tpu.memory_space<smem>>
    %466 = vector.extract_strided_slice %460 {offsets = [1, 0], sizes = [1, 256], strides = [1, 1]} : vector<2x256xf32> to vector<1x256xf32>
    %467 = vector.broadcast %465 : f32 to vector<1x256xf32>
    %468 = arith.mulf %467, %466 : vector<1x256xf32>
    %469 = arith.addf %464, %468 : vector<1x256xf32>
    %470 = arith.mulf %469, %54 : vector<1x256xf32>
    %471 = arith.addf %459, %470 : vector<1x256xf32>
    %c0_188 = arith.constant 0 : index
    %c127_189 = arith.constant 127 : index
    %472 = vector.load %arg11[%c0_188, %c127_189] : memref<2x512xf32, #tpu.memory_space<vmem>>, vector<2x256xf32>
    %c0_190 = arith.constant 0 : index
    %c23 = arith.constant 23 : index
    %473 = memref.load %arg8[%c0_190, %c23] : memref<2x49xf32, #tpu.memory_space<smem>>
    %474 = vector.extract_strided_slice %472 {offsets = [0, 0], sizes = [1, 256], strides = [1, 1]} : vector<2x256xf32> to vector<1x256xf32>
    %475 = vector.broadcast %473 : f32 to vector<1x256xf32>
    %476 = arith.mulf %475, %474 : vector<1x256xf32>
    %c1_191 = arith.constant 1 : index
    %c23_192 = arith.constant 23 : index
    %477 = memref.load %arg8[%c1_191, %c23_192] : memref<2x49xf32, #tpu.memory_space<smem>>
    %478 = vector.extract_strided_slice %472 {offsets = [1, 0], sizes = [1, 256], strides = [1, 1]} : vector<2x256xf32> to vector<1x256xf32>
    %479 = vector.broadcast %477 : f32 to vector<1x256xf32>
    %480 = arith.mulf %479, %478 : vector<1x256xf32>
    %481 = arith.addf %476, %480 : vector<1x256xf32>
    %482 = arith.mulf %481, %63 : vector<1x256xf32>
    %483 = arith.addf %471, %482 : vector<1x256xf32>
    %c0_193 = arith.constant 0 : index
    %c128_194 = arith.constant 128 : index
    %484 = vector.load %arg11[%c0_193, %c128_194] : memref<2x512xf32, #tpu.memory_space<vmem>>, vector<2x256xf32>
    %c0_195 = arith.constant 0 : index
    %c24 = arith.constant 24 : index
    %485 = memref.load %arg8[%c0_195, %c24] : memref<2x49xf32, #tpu.memory_space<smem>>
    %486 = vector.extract_strided_slice %484 {offsets = [0, 0], sizes = [1, 256], strides = [1, 1]} : vector<2x256xf32> to vector<1x256xf32>
    %487 = vector.broadcast %485 : f32 to vector<1x256xf32>
    %488 = arith.mulf %487, %486 : vector<1x256xf32>
    %c1_196 = arith.constant 1 : index
    %c24_197 = arith.constant 24 : index
    %489 = memref.load %arg8[%c1_196, %c24_197] : memref<2x49xf32, #tpu.memory_space<smem>>
    %490 = vector.extract_strided_slice %484 {offsets = [1, 0], sizes = [1, 256], strides = [1, 1]} : vector<2x256xf32> to vector<1x256xf32>
    %491 = vector.broadcast %489 : f32 to vector<1x256xf32>
    %492 = arith.mulf %491, %490 : vector<1x256xf32>
    %493 = arith.addf %488, %492 : vector<1x256xf32>
    %494 = arith.mulf %493, %72 : vector<1x256xf32>
    %495 = arith.addf %483, %494 : vector<1x256xf32>
    %c0_198 = arith.constant 0 : index
    %c129_199 = arith.constant 129 : index
    %496 = vector.load %arg11[%c0_198, %c129_199] : memref<2x512xf32, #tpu.memory_space<vmem>>, vector<2x256xf32>
    %c0_200 = arith.constant 0 : index
    %c25 = arith.constant 25 : index
    %497 = memref.load %arg8[%c0_200, %c25] : memref<2x49xf32, #tpu.memory_space<smem>>
    %498 = vector.extract_strided_slice %496 {offsets = [0, 0], sizes = [1, 256], strides = [1, 1]} : vector<2x256xf32> to vector<1x256xf32>
    %499 = vector.broadcast %497 : f32 to vector<1x256xf32>
    %500 = arith.mulf %499, %498 : vector<1x256xf32>
    %c1_201 = arith.constant 1 : index
    %c25_202 = arith.constant 25 : index
    %501 = memref.load %arg8[%c1_201, %c25_202] : memref<2x49xf32, #tpu.memory_space<smem>>
    %502 = vector.extract_strided_slice %496 {offsets = [1, 0], sizes = [1, 256], strides = [1, 1]} : vector<2x256xf32> to vector<1x256xf32>
    %503 = vector.broadcast %501 : f32 to vector<1x256xf32>
    %504 = arith.mulf %503, %502 : vector<1x256xf32>
    %505 = arith.addf %500, %504 : vector<1x256xf32>
    %506 = arith.mulf %505, %81 : vector<1x256xf32>
    %507 = arith.addf %495, %506 : vector<1x256xf32>
    %c0_203 = arith.constant 0 : index
    %c130 = arith.constant 130 : index
    %508 = vector.load %arg11[%c0_203, %c130] : memref<2x512xf32, #tpu.memory_space<vmem>>, vector<2x256xf32>
    %c0_204 = arith.constant 0 : index
    %c26 = arith.constant 26 : index
    %509 = memref.load %arg8[%c0_204, %c26] : memref<2x49xf32, #tpu.memory_space<smem>>
    %510 = vector.extract_strided_slice %508 {offsets = [0, 0], sizes = [1, 256], strides = [1, 1]} : vector<2x256xf32> to vector<1x256xf32>
    %511 = vector.broadcast %509 : f32 to vector<1x256xf32>
    %512 = arith.mulf %511, %510 : vector<1x256xf32>
    %c1_205 = arith.constant 1 : index
    %c26_206 = arith.constant 26 : index
    %513 = memref.load %arg8[%c1_205, %c26_206] : memref<2x49xf32, #tpu.memory_space<smem>>
    %514 = vector.extract_strided_slice %508 {offsets = [1, 0], sizes = [1, 256], strides = [1, 1]} : vector<2x256xf32> to vector<1x256xf32>
    %515 = vector.broadcast %513 : f32 to vector<1x256xf32>
    %516 = arith.mulf %515, %514 : vector<1x256xf32>
    %517 = arith.addf %512, %516 : vector<1x256xf32>
    %518 = arith.mulf %517, %90 : vector<1x256xf32>
    %519 = arith.addf %507, %518 : vector<1x256xf32>
    %c0_207 = arith.constant 0 : index
    %c131 = arith.constant 131 : index
    %520 = vector.load %arg11[%c0_207, %c131] : memref<2x512xf32, #tpu.memory_space<vmem>>, vector<2x256xf32>
    %c0_208 = arith.constant 0 : index
    %c27 = arith.constant 27 : index
    %521 = memref.load %arg8[%c0_208, %c27] : memref<2x49xf32, #tpu.memory_space<smem>>
    %522 = vector.extract_strided_slice %520 {offsets = [0, 0], sizes = [1, 256], strides = [1, 1]} : vector<2x256xf32> to vector<1x256xf32>
    %523 = vector.broadcast %521 : f32 to vector<1x256xf32>
    %524 = arith.mulf %523, %522 : vector<1x256xf32>
    %c1_209 = arith.constant 1 : index
    %c27_210 = arith.constant 27 : index
    %525 = memref.load %arg8[%c1_209, %c27_210] : memref<2x49xf32, #tpu.memory_space<smem>>
    %526 = vector.extract_strided_slice %520 {offsets = [1, 0], sizes = [1, 256], strides = [1, 1]} : vector<2x256xf32> to vector<1x256xf32>
    %527 = vector.broadcast %525 : f32 to vector<1x256xf32>
    %528 = arith.mulf %527, %526 : vector<1x256xf32>
    %529 = arith.addf %524, %528 : vector<1x256xf32>
    %530 = arith.mulf %529, %99 : vector<1x256xf32>
    %531 = arith.addf %519, %530 : vector<1x256xf32>
    %c0_211 = arith.constant 0 : index
    %c141 = arith.constant 141 : index
    %532 = vector.load %arg11[%c0_211, %c141] : memref<2x512xf32, #tpu.memory_space<vmem>>, vector<2x256xf32>
    %c0_212 = arith.constant 0 : index
    %c28 = arith.constant 28 : index
    %533 = memref.load %arg8[%c0_212, %c28] : memref<2x49xf32, #tpu.memory_space<smem>>
    %534 = vector.extract_strided_slice %532 {offsets = [0, 0], sizes = [1, 256], strides = [1, 1]} : vector<2x256xf32> to vector<1x256xf32>
    %535 = vector.broadcast %533 : f32 to vector<1x256xf32>
    %536 = arith.mulf %535, %534 : vector<1x256xf32>
    %c1_213 = arith.constant 1 : index
    %c28_214 = arith.constant 28 : index
    %537 = memref.load %arg8[%c1_213, %c28_214] : memref<2x49xf32, #tpu.memory_space<smem>>
    %538 = vector.extract_strided_slice %532 {offsets = [1, 0], sizes = [1, 256], strides = [1, 1]} : vector<2x256xf32> to vector<1x256xf32>
    %539 = vector.broadcast %537 : f32 to vector<1x256xf32>
    %540 = arith.mulf %539, %538 : vector<1x256xf32>
    %541 = arith.addf %536, %540 : vector<1x256xf32>
    %542 = arith.mulf %541, %45 : vector<1x256xf32>
    %543 = arith.addf %531, %542 : vector<1x256xf32>
    %c0_215 = arith.constant 0 : index
    %c142 = arith.constant 142 : index
    %544 = vector.load %arg11[%c0_215, %c142] : memref<2x512xf32, #tpu.memory_space<vmem>>, vector<2x256xf32>
    %c0_216 = arith.constant 0 : index
    %c29 = arith.constant 29 : index
    %545 = memref.load %arg8[%c0_216, %c29] : memref<2x49xf32, #tpu.memory_space<smem>>
    %546 = vector.extract_strided_slice %544 {offsets = [0, 0], sizes = [1, 256], strides = [1, 1]} : vector<2x256xf32> to vector<1x256xf32>
    %547 = vector.broadcast %545 : f32 to vector<1x256xf32>
    %548 = arith.mulf %547, %546 : vector<1x256xf32>
    %c1_217 = arith.constant 1 : index
    %c29_218 = arith.constant 29 : index
    %549 = memref.load %arg8[%c1_217, %c29_218] : memref<2x49xf32, #tpu.memory_space<smem>>
    %550 = vector.extract_strided_slice %544 {offsets = [1, 0], sizes = [1, 256], strides = [1, 1]} : vector<2x256xf32> to vector<1x256xf32>
    %551 = vector.broadcast %549 : f32 to vector<1x256xf32>
    %552 = arith.mulf %551, %550 : vector<1x256xf32>
    %553 = arith.addf %548, %552 : vector<1x256xf32>
    %554 = arith.mulf %553, %54 : vector<1x256xf32>
    %555 = arith.addf %543, %554 : vector<1x256xf32>
    %c0_219 = arith.constant 0 : index
    %c143_220 = arith.constant 143 : index
    %556 = vector.load %arg11[%c0_219, %c143_220] : memref<2x512xf32, #tpu.memory_space<vmem>>, vector<2x256xf32>
    %c0_221 = arith.constant 0 : index
    %c30 = arith.constant 30 : index
    %557 = memref.load %arg8[%c0_221, %c30] : memref<2x49xf32, #tpu.memory_space<smem>>
    %558 = vector.extract_strided_slice %556 {offsets = [0, 0], sizes = [1, 256], strides = [1, 1]} : vector<2x256xf32> to vector<1x256xf32>
    %559 = vector.broadcast %557 : f32 to vector<1x256xf32>
    %560 = arith.mulf %559, %558 : vector<1x256xf32>
    %c1_222 = arith.constant 1 : index
    %c30_223 = arith.constant 30 : index
    %561 = memref.load %arg8[%c1_222, %c30_223] : memref<2x49xf32, #tpu.memory_space<smem>>
    %562 = vector.extract_strided_slice %556 {offsets = [1, 0], sizes = [1, 256], strides = [1, 1]} : vector<2x256xf32> to vector<1x256xf32>
    %563 = vector.broadcast %561 : f32 to vector<1x256xf32>
    %564 = arith.mulf %563, %562 : vector<1x256xf32>
    %565 = arith.addf %560, %564 : vector<1x256xf32>
    %566 = arith.mulf %565, %63 : vector<1x256xf32>
    %567 = arith.addf %555, %566 : vector<1x256xf32>
    %c0_224 = arith.constant 0 : index
    %c144_225 = arith.constant 144 : index
    %568 = vector.load %arg11[%c0_224, %c144_225] : memref<2x512xf32, #tpu.memory_space<vmem>>, vector<2x256xf32>
    %c0_226 = arith.constant 0 : index
    %c31 = arith.constant 31 : index
    %569 = memref.load %arg8[%c0_226, %c31] : memref<2x49xf32, #tpu.memory_space<smem>>
    %570 = vector.extract_strided_slice %568 {offsets = [0, 0], sizes = [1, 256], strides = [1, 1]} : vector<2x256xf32> to vector<1x256xf32>
    %571 = vector.broadcast %569 : f32 to vector<1x256xf32>
    %572 = arith.mulf %571, %570 : vector<1x256xf32>
    %c1_227 = arith.constant 1 : index
    %c31_228 = arith.constant 31 : index
    %573 = memref.load %arg8[%c1_227, %c31_228] : memref<2x49xf32, #tpu.memory_space<smem>>
    %574 = vector.extract_strided_slice %568 {offsets = [1, 0], sizes = [1, 256], strides = [1, 1]} : vector<2x256xf32> to vector<1x256xf32>
    %575 = vector.broadcast %573 : f32 to vector<1x256xf32>
    %576 = arith.mulf %575, %574 : vector<1x256xf32>
    %577 = arith.addf %572, %576 : vector<1x256xf32>
    %578 = arith.mulf %577, %72 : vector<1x256xf32>
    %579 = arith.addf %567, %578 : vector<1x256xf32>
    %c0_229 = arith.constant 0 : index
    %c145_230 = arith.constant 145 : index
    %580 = vector.load %arg11[%c0_229, %c145_230] : memref<2x512xf32, #tpu.memory_space<vmem>>, vector<2x256xf32>
    %c0_231 = arith.constant 0 : index
    %c32 = arith.constant 32 : index
    %581 = memref.load %arg8[%c0_231, %c32] : memref<2x49xf32, #tpu.memory_space<smem>>
    %582 = vector.extract_strided_slice %580 {offsets = [0, 0], sizes = [1, 256], strides = [1, 1]} : vector<2x256xf32> to vector<1x256xf32>
    %583 = vector.broadcast %581 : f32 to vector<1x256xf32>
    %584 = arith.mulf %583, %582 : vector<1x256xf32>
    %c1_232 = arith.constant 1 : index
    %c32_233 = arith.constant 32 : index
    %585 = memref.load %arg8[%c1_232, %c32_233] : memref<2x49xf32, #tpu.memory_space<smem>>
    %586 = vector.extract_strided_slice %580 {offsets = [1, 0], sizes = [1, 256], strides = [1, 1]} : vector<2x256xf32> to vector<1x256xf32>
    %587 = vector.broadcast %585 : f32 to vector<1x256xf32>
    %588 = arith.mulf %587, %586 : vector<1x256xf32>
    %589 = arith.addf %584, %588 : vector<1x256xf32>
    %590 = arith.mulf %589, %81 : vector<1x256xf32>
    %591 = arith.addf %579, %590 : vector<1x256xf32>
    %c0_234 = arith.constant 0 : index
    %c146 = arith.constant 146 : index
    %592 = vector.load %arg11[%c0_234, %c146] : memref<2x512xf32, #tpu.memory_space<vmem>>, vector<2x256xf32>
    %c0_235 = arith.constant 0 : index
    %c33 = arith.constant 33 : index
    %593 = memref.load %arg8[%c0_235, %c33] : memref<2x49xf32, #tpu.memory_space<smem>>
    %594 = vector.extract_strided_slice %592 {offsets = [0, 0], sizes = [1, 256], strides = [1, 1]} : vector<2x256xf32> to vector<1x256xf32>
    %595 = vector.broadcast %593 : f32 to vector<1x256xf32>
    %596 = arith.mulf %595, %594 : vector<1x256xf32>
    %c1_236 = arith.constant 1 : index
    %c33_237 = arith.constant 33 : index
    %597 = memref.load %arg8[%c1_236, %c33_237] : memref<2x49xf32, #tpu.memory_space<smem>>
    %598 = vector.extract_strided_slice %592 {offsets = [1, 0], sizes = [1, 256], strides = [1, 1]} : vector<2x256xf32> to vector<1x256xf32>
    %599 = vector.broadcast %597 : f32 to vector<1x256xf32>
    %600 = arith.mulf %599, %598 : vector<1x256xf32>
    %601 = arith.addf %596, %600 : vector<1x256xf32>
    %602 = arith.mulf %601, %90 : vector<1x256xf32>
    %603 = arith.addf %591, %602 : vector<1x256xf32>
    %c0_238 = arith.constant 0 : index
    %c147 = arith.constant 147 : index
    %604 = vector.load %arg11[%c0_238, %c147] : memref<2x512xf32, #tpu.memory_space<vmem>>, vector<2x256xf32>
    %c0_239 = arith.constant 0 : index
    %c34 = arith.constant 34 : index
    %605 = memref.load %arg8[%c0_239, %c34] : memref<2x49xf32, #tpu.memory_space<smem>>
    %606 = vector.extract_strided_slice %604 {offsets = [0, 0], sizes = [1, 256], strides = [1, 1]} : vector<2x256xf32> to vector<1x256xf32>
    %607 = vector.broadcast %605 : f32 to vector<1x256xf32>
    %608 = arith.mulf %607, %606 : vector<1x256xf32>
    %c1_240 = arith.constant 1 : index
    %c34_241 = arith.constant 34 : index
    %609 = memref.load %arg8[%c1_240, %c34_241] : memref<2x49xf32, #tpu.memory_space<smem>>
    %610 = vector.extract_strided_slice %604 {offsets = [1, 0], sizes = [1, 256], strides = [1, 1]} : vector<2x256xf32> to vector<1x256xf32>
    %611 = vector.broadcast %609 : f32 to vector<1x256xf32>
    %612 = arith.mulf %611, %610 : vector<1x256xf32>
    %613 = arith.addf %608, %612 : vector<1x256xf32>
    %614 = arith.mulf %613, %99 : vector<1x256xf32>
    %615 = arith.addf %603, %614 : vector<1x256xf32>
    %c0_242 = arith.constant 0 : index
    %c157 = arith.constant 157 : index
    %616 = vector.load %arg11[%c0_242, %c157] : memref<2x512xf32, #tpu.memory_space<vmem>>, vector<2x256xf32>
    %c0_243 = arith.constant 0 : index
    %c35 = arith.constant 35 : index
    %617 = memref.load %arg8[%c0_243, %c35] : memref<2x49xf32, #tpu.memory_space<smem>>
    %618 = vector.extract_strided_slice %616 {offsets = [0, 0], sizes = [1, 256], strides = [1, 1]} : vector<2x256xf32> to vector<1x256xf32>
    %619 = vector.broadcast %617 : f32 to vector<1x256xf32>
    %620 = arith.mulf %619, %618 : vector<1x256xf32>
    %c1_244 = arith.constant 1 : index
    %c35_245 = arith.constant 35 : index
    %621 = memref.load %arg8[%c1_244, %c35_245] : memref<2x49xf32, #tpu.memory_space<smem>>
    %622 = vector.extract_strided_slice %616 {offsets = [1, 0], sizes = [1, 256], strides = [1, 1]} : vector<2x256xf32> to vector<1x256xf32>
    %623 = vector.broadcast %621 : f32 to vector<1x256xf32>
    %624 = arith.mulf %623, %622 : vector<1x256xf32>
    %625 = arith.addf %620, %624 : vector<1x256xf32>
    %626 = arith.mulf %625, %45 : vector<1x256xf32>
    %627 = arith.addf %615, %626 : vector<1x256xf32>
    %c0_246 = arith.constant 0 : index
    %c158 = arith.constant 158 : index
    %628 = vector.load %arg11[%c0_246, %c158] : memref<2x512xf32, #tpu.memory_space<vmem>>, vector<2x256xf32>
    %c0_247 = arith.constant 0 : index
    %c36 = arith.constant 36 : index
    %629 = memref.load %arg8[%c0_247, %c36] : memref<2x49xf32, #tpu.memory_space<smem>>
    %630 = vector.extract_strided_slice %628 {offsets = [0, 0], sizes = [1, 256], strides = [1, 1]} : vector<2x256xf32> to vector<1x256xf32>
    %631 = vector.broadcast %629 : f32 to vector<1x256xf32>
    %632 = arith.mulf %631, %630 : vector<1x256xf32>
    %c1_248 = arith.constant 1 : index
    %c36_249 = arith.constant 36 : index
    %633 = memref.load %arg8[%c1_248, %c36_249] : memref<2x49xf32, #tpu.memory_space<smem>>
    %634 = vector.extract_strided_slice %628 {offsets = [1, 0], sizes = [1, 256], strides = [1, 1]} : vector<2x256xf32> to vector<1x256xf32>
    %635 = vector.broadcast %633 : f32 to vector<1x256xf32>
    %636 = arith.mulf %635, %634 : vector<1x256xf32>
    %637 = arith.addf %632, %636 : vector<1x256xf32>
    %638 = arith.mulf %637, %54 : vector<1x256xf32>
    %639 = arith.addf %627, %638 : vector<1x256xf32>
    %c0_250 = arith.constant 0 : index
    %c159 = arith.constant 159 : index
    %640 = vector.load %arg11[%c0_250, %c159] : memref<2x512xf32, #tpu.memory_space<vmem>>, vector<2x256xf32>
    %c0_251 = arith.constant 0 : index
    %c37 = arith.constant 37 : index
    %641 = memref.load %arg8[%c0_251, %c37] : memref<2x49xf32, #tpu.memory_space<smem>>
    %642 = vector.extract_strided_slice %640 {offsets = [0, 0], sizes = [1, 256], strides = [1, 1]} : vector<2x256xf32> to vector<1x256xf32>
    %643 = vector.broadcast %641 : f32 to vector<1x256xf32>
    %644 = arith.mulf %643, %642 : vector<1x256xf32>
    %c1_252 = arith.constant 1 : index
    %c37_253 = arith.constant 37 : index
    %645 = memref.load %arg8[%c1_252, %c37_253] : memref<2x49xf32, #tpu.memory_space<smem>>
    %646 = vector.extract_strided_slice %640 {offsets = [1, 0], sizes = [1, 256], strides = [1, 1]} : vector<2x256xf32> to vector<1x256xf32>
    %647 = vector.broadcast %645 : f32 to vector<1x256xf32>
    %648 = arith.mulf %647, %646 : vector<1x256xf32>
    %649 = arith.addf %644, %648 : vector<1x256xf32>
    %650 = arith.mulf %649, %63 : vector<1x256xf32>
    %651 = arith.addf %639, %650 : vector<1x256xf32>
    %c0_254 = arith.constant 0 : index
    %c160 = arith.constant 160 : index
    %652 = vector.load %arg11[%c0_254, %c160] : memref<2x512xf32, #tpu.memory_space<vmem>>, vector<2x256xf32>
    %c0_255 = arith.constant 0 : index
    %c38 = arith.constant 38 : index
    %653 = memref.load %arg8[%c0_255, %c38] : memref<2x49xf32, #tpu.memory_space<smem>>
    %654 = vector.extract_strided_slice %652 {offsets = [0, 0], sizes = [1, 256], strides = [1, 1]} : vector<2x256xf32> to vector<1x256xf32>
    %655 = vector.broadcast %653 : f32 to vector<1x256xf32>
    %656 = arith.mulf %655, %654 : vector<1x256xf32>
    %c1_256 = arith.constant 1 : index
    %c38_257 = arith.constant 38 : index
    %657 = memref.load %arg8[%c1_256, %c38_257] : memref<2x49xf32, #tpu.memory_space<smem>>
    %658 = vector.extract_strided_slice %652 {offsets = [1, 0], sizes = [1, 256], strides = [1, 1]} : vector<2x256xf32> to vector<1x256xf32>
    %659 = vector.broadcast %657 : f32 to vector<1x256xf32>
    %660 = arith.mulf %659, %658 : vector<1x256xf32>
    %661 = arith.addf %656, %660 : vector<1x256xf32>
    %662 = arith.mulf %661, %72 : vector<1x256xf32>
    %663 = arith.addf %651, %662 : vector<1x256xf32>
    %c0_258 = arith.constant 0 : index
    %c161 = arith.constant 161 : index
    %664 = vector.load %arg11[%c0_258, %c161] : memref<2x512xf32, #tpu.memory_space<vmem>>, vector<2x256xf32>
    %c0_259 = arith.constant 0 : index
    %c39 = arith.constant 39 : index
    %665 = memref.load %arg8[%c0_259, %c39] : memref<2x49xf32, #tpu.memory_space<smem>>
    %666 = vector.extract_strided_slice %664 {offsets = [0, 0], sizes = [1, 256], strides = [1, 1]} : vector<2x256xf32> to vector<1x256xf32>
    %667 = vector.broadcast %665 : f32 to vector<1x256xf32>
    %668 = arith.mulf %667, %666 : vector<1x256xf32>
    %c1_260 = arith.constant 1 : index
    %c39_261 = arith.constant 39 : index
    %669 = memref.load %arg8[%c1_260, %c39_261] : memref<2x49xf32, #tpu.memory_space<smem>>
    %670 = vector.extract_strided_slice %664 {offsets = [1, 0], sizes = [1, 256], strides = [1, 1]} : vector<2x256xf32> to vector<1x256xf32>
    %671 = vector.broadcast %669 : f32 to vector<1x256xf32>
    %672 = arith.mulf %671, %670 : vector<1x256xf32>
    %673 = arith.addf %668, %672 : vector<1x256xf32>
    %674 = arith.mulf %673, %81 : vector<1x256xf32>
    %675 = arith.addf %663, %674 : vector<1x256xf32>
    %c0_262 = arith.constant 0 : index
    %c162 = arith.constant 162 : index
    %676 = vector.load %arg11[%c0_262, %c162] : memref<2x512xf32, #tpu.memory_space<vmem>>, vector<2x256xf32>
    %c0_263 = arith.constant 0 : index
    %c40 = arith.constant 40 : index
    %677 = memref.load %arg8[%c0_263, %c40] : memref<2x49xf32, #tpu.memory_space<smem>>
    %678 = vector.extract_strided_slice %676 {offsets = [0, 0], sizes = [1, 256], strides = [1, 1]} : vector<2x256xf32> to vector<1x256xf32>
    %679 = vector.broadcast %677 : f32 to vector<1x256xf32>
    %680 = arith.mulf %679, %678 : vector<1x256xf32>
    %c1_264 = arith.constant 1 : index
    %c40_265 = arith.constant 40 : index
    %681 = memref.load %arg8[%c1_264, %c40_265] : memref<2x49xf32, #tpu.memory_space<smem>>
    %682 = vector.extract_strided_slice %676 {offsets = [1, 0], sizes = [1, 256], strides = [1, 1]} : vector<2x256xf32> to vector<1x256xf32>
    %683 = vector.broadcast %681 : f32 to vector<1x256xf32>
    %684 = arith.mulf %683, %682 : vector<1x256xf32>
    %685 = arith.addf %680, %684 : vector<1x256xf32>
    %686 = arith.mulf %685, %90 : vector<1x256xf32>
    %687 = arith.addf %675, %686 : vector<1x256xf32>
    %c0_266 = arith.constant 0 : index
    %c163 = arith.constant 163 : index
    %688 = vector.load %arg11[%c0_266, %c163] : memref<2x512xf32, #tpu.memory_space<vmem>>, vector<2x256xf32>
    %c0_267 = arith.constant 0 : index
    %c41 = arith.constant 41 : index
    %689 = memref.load %arg8[%c0_267, %c41] : memref<2x49xf32, #tpu.memory_space<smem>>
    %690 = vector.extract_strided_slice %688 {offsets = [0, 0], sizes = [1, 256], strides = [1, 1]} : vector<2x256xf32> to vector<1x256xf32>
    %691 = vector.broadcast %689 : f32 to vector<1x256xf32>
    %692 = arith.mulf %691, %690 : vector<1x256xf32>
    %c1_268 = arith.constant 1 : index
    %c41_269 = arith.constant 41 : index
    %693 = memref.load %arg8[%c1_268, %c41_269] : memref<2x49xf32, #tpu.memory_space<smem>>
    %694 = vector.extract_strided_slice %688 {offsets = [1, 0], sizes = [1, 256], strides = [1, 1]} : vector<2x256xf32> to vector<1x256xf32>
    %695 = vector.broadcast %693 : f32 to vector<1x256xf32>
    %696 = arith.mulf %695, %694 : vector<1x256xf32>
    %697 = arith.addf %692, %696 : vector<1x256xf32>
    %698 = arith.mulf %697, %99 : vector<1x256xf32>
    %699 = arith.addf %687, %698 : vector<1x256xf32>
    %c0_270 = arith.constant 0 : index
    %c173 = arith.constant 173 : index
    %700 = vector.load %arg11[%c0_270, %c173] : memref<2x512xf32, #tpu.memory_space<vmem>>, vector<2x256xf32>
    %c0_271 = arith.constant 0 : index
    %c42 = arith.constant 42 : index
    %701 = memref.load %arg8[%c0_271, %c42] : memref<2x49xf32, #tpu.memory_space<smem>>
    %702 = vector.extract_strided_slice %700 {offsets = [0, 0], sizes = [1, 256], strides = [1, 1]} : vector<2x256xf32> to vector<1x256xf32>
    %703 = vector.broadcast %701 : f32 to vector<1x256xf32>
    %704 = arith.mulf %703, %702 : vector<1x256xf32>
    %c1_272 = arith.constant 1 : index
    %c42_273 = arith.constant 42 : index
    %705 = memref.load %arg8[%c1_272, %c42_273] : memref<2x49xf32, #tpu.memory_space<smem>>
    %706 = vector.extract_strided_slice %700 {offsets = [1, 0], sizes = [1, 256], strides = [1, 1]} : vector<2x256xf32> to vector<1x256xf32>
    %707 = vector.broadcast %705 : f32 to vector<1x256xf32>
    %708 = arith.mulf %707, %706 : vector<1x256xf32>
    %709 = arith.addf %704, %708 : vector<1x256xf32>
    %710 = arith.mulf %709, %45 : vector<1x256xf32>
    %711 = arith.addf %699, %710 : vector<1x256xf32>
    %c0_274 = arith.constant 0 : index
    %c174 = arith.constant 174 : index
    %712 = vector.load %arg11[%c0_274, %c174] : memref<2x512xf32, #tpu.memory_space<vmem>>, vector<2x256xf32>
    %c0_275 = arith.constant 0 : index
    %c43 = arith.constant 43 : index
    %713 = memref.load %arg8[%c0_275, %c43] : memref<2x49xf32, #tpu.memory_space<smem>>
    %714 = vector.extract_strided_slice %712 {offsets = [0, 0], sizes = [1, 256], strides = [1, 1]} : vector<2x256xf32> to vector<1x256xf32>
    %715 = vector.broadcast %713 : f32 to vector<1x256xf32>
    %716 = arith.mulf %715, %714 : vector<1x256xf32>
    %c1_276 = arith.constant 1 : index
    %c43_277 = arith.constant 43 : index
    %717 = memref.load %arg8[%c1_276, %c43_277] : memref<2x49xf32, #tpu.memory_space<smem>>
    %718 = vector.extract_strided_slice %712 {offsets = [1, 0], sizes = [1, 256], strides = [1, 1]} : vector<2x256xf32> to vector<1x256xf32>
    %719 = vector.broadcast %717 : f32 to vector<1x256xf32>
    %720 = arith.mulf %719, %718 : vector<1x256xf32>
    %721 = arith.addf %716, %720 : vector<1x256xf32>
    %722 = arith.mulf %721, %54 : vector<1x256xf32>
    %723 = arith.addf %711, %722 : vector<1x256xf32>
    %c0_278 = arith.constant 0 : index
    %c175 = arith.constant 175 : index
    %724 = vector.load %arg11[%c0_278, %c175] : memref<2x512xf32, #tpu.memory_space<vmem>>, vector<2x256xf32>
    %c0_279 = arith.constant 0 : index
    %c44 = arith.constant 44 : index
    %725 = memref.load %arg8[%c0_279, %c44] : memref<2x49xf32, #tpu.memory_space<smem>>
    %726 = vector.extract_strided_slice %724 {offsets = [0, 0], sizes = [1, 256], strides = [1, 1]} : vector<2x256xf32> to vector<1x256xf32>
    %727 = vector.broadcast %725 : f32 to vector<1x256xf32>
    %728 = arith.mulf %727, %726 : vector<1x256xf32>
    %c1_280 = arith.constant 1 : index
    %c44_281 = arith.constant 44 : index
    %729 = memref.load %arg8[%c1_280, %c44_281] : memref<2x49xf32, #tpu.memory_space<smem>>
    %730 = vector.extract_strided_slice %724 {offsets = [1, 0], sizes = [1, 256], strides = [1, 1]} : vector<2x256xf32> to vector<1x256xf32>
    %731 = vector.broadcast %729 : f32 to vector<1x256xf32>
    %732 = arith.mulf %731, %730 : vector<1x256xf32>
    %733 = arith.addf %728, %732 : vector<1x256xf32>
    %734 = arith.mulf %733, %63 : vector<1x256xf32>
    %735 = arith.addf %723, %734 : vector<1x256xf32>
    %c0_282 = arith.constant 0 : index
    %c176 = arith.constant 176 : index
    %736 = vector.load %arg11[%c0_282, %c176] : memref<2x512xf32, #tpu.memory_space<vmem>>, vector<2x256xf32>
    %c0_283 = arith.constant 0 : index
    %c45 = arith.constant 45 : index
    %737 = memref.load %arg8[%c0_283, %c45] : memref<2x49xf32, #tpu.memory_space<smem>>
    %738 = vector.extract_strided_slice %736 {offsets = [0, 0], sizes = [1, 256], strides = [1, 1]} : vector<2x256xf32> to vector<1x256xf32>
    %739 = vector.broadcast %737 : f32 to vector<1x256xf32>
    %740 = arith.mulf %739, %738 : vector<1x256xf32>
    %c1_284 = arith.constant 1 : index
    %c45_285 = arith.constant 45 : index
    %741 = memref.load %arg8[%c1_284, %c45_285] : memref<2x49xf32, #tpu.memory_space<smem>>
    %742 = vector.extract_strided_slice %736 {offsets = [1, 0], sizes = [1, 256], strides = [1, 1]} : vector<2x256xf32> to vector<1x256xf32>
    %743 = vector.broadcast %741 : f32 to vector<1x256xf32>
    %744 = arith.mulf %743, %742 : vector<1x256xf32>
    %745 = arith.addf %740, %744 : vector<1x256xf32>
    %746 = arith.mulf %745, %72 : vector<1x256xf32>
    %747 = arith.addf %735, %746 : vector<1x256xf32>
    %c0_286 = arith.constant 0 : index
    %c177 = arith.constant 177 : index
    %748 = vector.load %arg11[%c0_286, %c177] : memref<2x512xf32, #tpu.memory_space<vmem>>, vector<2x256xf32>
    %c0_287 = arith.constant 0 : index
    %c46 = arith.constant 46 : index
    %749 = memref.load %arg8[%c0_287, %c46] : memref<2x49xf32, #tpu.memory_space<smem>>
    %750 = vector.extract_strided_slice %748 {offsets = [0, 0], sizes = [1, 256], strides = [1, 1]} : vector<2x256xf32> to vector<1x256xf32>
    %751 = vector.broadcast %749 : f32 to vector<1x256xf32>
    %752 = arith.mulf %751, %750 : vector<1x256xf32>
    %c1_288 = arith.constant 1 : index
    %c46_289 = arith.constant 46 : index
    %753 = memref.load %arg8[%c1_288, %c46_289] : memref<2x49xf32, #tpu.memory_space<smem>>
    %754 = vector.extract_strided_slice %748 {offsets = [1, 0], sizes = [1, 256], strides = [1, 1]} : vector<2x256xf32> to vector<1x256xf32>
    %755 = vector.broadcast %753 : f32 to vector<1x256xf32>
    %756 = arith.mulf %755, %754 : vector<1x256xf32>
    %757 = arith.addf %752, %756 : vector<1x256xf32>
    %758 = arith.mulf %757, %81 : vector<1x256xf32>
    %759 = arith.addf %747, %758 : vector<1x256xf32>
    %c0_290 = arith.constant 0 : index
    %c178 = arith.constant 178 : index
    %760 = vector.load %arg11[%c0_290, %c178] : memref<2x512xf32, #tpu.memory_space<vmem>>, vector<2x256xf32>
    %c0_291 = arith.constant 0 : index
    %c47 = arith.constant 47 : index
    %761 = memref.load %arg8[%c0_291, %c47] : memref<2x49xf32, #tpu.memory_space<smem>>
    %762 = vector.extract_strided_slice %760 {offsets = [0, 0], sizes = [1, 256], strides = [1, 1]} : vector<2x256xf32> to vector<1x256xf32>
    %763 = vector.broadcast %761 : f32 to vector<1x256xf32>
    %764 = arith.mulf %763, %762 : vector<1x256xf32>
    %c1_292 = arith.constant 1 : index
    %c47_293 = arith.constant 47 : index
    %765 = memref.load %arg8[%c1_292, %c47_293] : memref<2x49xf32, #tpu.memory_space<smem>>
    %766 = vector.extract_strided_slice %760 {offsets = [1, 0], sizes = [1, 256], strides = [1, 1]} : vector<2x256xf32> to vector<1x256xf32>
    %767 = vector.broadcast %765 : f32 to vector<1x256xf32>
    %768 = arith.mulf %767, %766 : vector<1x256xf32>
    %769 = arith.addf %764, %768 : vector<1x256xf32>
    %770 = arith.mulf %769, %90 : vector<1x256xf32>
    %771 = arith.addf %759, %770 : vector<1x256xf32>
    %c0_294 = arith.constant 0 : index
    %c179 = arith.constant 179 : index
    %772 = vector.load %arg11[%c0_294, %c179] : memref<2x512xf32, #tpu.memory_space<vmem>>, vector<2x256xf32>
    %c0_295 = arith.constant 0 : index
    %c48 = arith.constant 48 : index
    %773 = memref.load %arg8[%c0_295, %c48] : memref<2x49xf32, #tpu.memory_space<smem>>
    %774 = vector.extract_strided_slice %772 {offsets = [0, 0], sizes = [1, 256], strides = [1, 1]} : vector<2x256xf32> to vector<1x256xf32>
    %775 = vector.broadcast %773 : f32 to vector<1x256xf32>
    %776 = arith.mulf %775, %774 : vector<1x256xf32>
    %c1_296 = arith.constant 1 : index
    %c48_297 = arith.constant 48 : index
    %777 = memref.load %arg8[%c1_296, %c48_297] : memref<2x49xf32, #tpu.memory_space<smem>>
    %778 = vector.extract_strided_slice %772 {offsets = [1, 0], sizes = [1, 256], strides = [1, 1]} : vector<2x256xf32> to vector<1x256xf32>
    %779 = vector.broadcast %777 : f32 to vector<1x256xf32>
    %780 = arith.mulf %779, %778 : vector<1x256xf32>
    %781 = arith.addf %776, %780 : vector<1x256xf32>
    %782 = arith.mulf %781, %99 : vector<1x256xf32>
    %783 = arith.addf %771, %782 : vector<1x256xf32>
    %784 = arith.negf %783 : vector<1x256xf32>
    %785 = math.exp %784 : vector<1x256xf32>
    %cst_298 = arith.constant 1.000000e+00 : f32
    %786 = vector.broadcast %cst_298 : f32 to vector<1x256xf32>
    %787 = arith.addf %786, %785 : vector<1x256xf32>
    %788 = arith.divf %786, %787 : vector<1x256xf32>
    %789 = vector.broadcast %788 : vector<1x256xf32> to vector<32x256xf32>
    %790 = arith.mulf %789, %184 : vector<32x256xf32>
    %791 = arith.addf %19, %790 : vector<32x256xf32>
    %c0_299 = arith.constant 0 : index
    %c0_300 = arith.constant 0 : index
    %c0_301 = arith.constant 0 : index
    %792 = vector.load %arg9[%c0_299, %c0_300, %c0_301] : memref<1x32x256xf32, #tpu.memory_space<vmem>>, vector<1x32x256xf32>
    %793 = vector.shape_cast %792 : vector<1x32x256xf32> to vector<32x256xf32>
    %794 = vector.shape_cast %791 : vector<32x256xf32> to vector<1x32x256xf32>
    tpu.vector_store %arg9[%c0_299, %c0_300, %c0_301], %794 {strides = array<i32>} : memref<1x32x256xf32, #tpu.memory_space<vmem>>, vector<1x32x256xf32>,
    return
  }
  func.func @transform_0(%arg0: i32) -> (i32, i32, i32) {
    %c0_i32 = arith.constant 0 : i32
    %c0_i32_0 = arith.constant 0 : i32
    %c0_i32_1 = arith.constant 0 : i32
    return %arg0, %c0_i32, %c0_i32_0 : i32, i32, i32
  }
  func.func @transform_1(%arg0: i32) -> (i32, i32, i32) {
    %c0_i32 = arith.constant 0 : i32
    %c0_i32_0 = arith.constant 0 : i32
    %c0_i32_1 = arith.constant 0 : i32
    return %arg0, %c0_i32, %c0_i32_0 : i32, i32, i32
  }
  func.func @transform_2(%arg0: i32) -> (i32, i32) {
    %c0_i32 = arith.constant 0 : i32
    %c0_i32_0 = arith.constant 0 : i32
    %c0_i32_1 = arith.constant 0 : i32
    return %c0_i32, %c0_i32_0 : i32, i32
  }
  func.func @transform_3(%arg0: i32) -> (i32, i32) {
    %c0_i32 = arith.constant 0 : i32
    %c0_i32_0 = arith.constant 0 : i32
    %c0_i32_1 = arith.constant 0 : i32
    return %c0_i32, %c0_i32_0 : i32, i32
  }
  func.func @transform_4(%arg0: i32) -> (i32, i32) {
    %c0_i32 = arith.constant 0 : i32
    %c0_i32_0 = arith.constant 0 : i32
    %c0_i32_1 = arith.constant 0 : i32
    return %c0_i32, %c0_i32_0 : i32, i32
  }
  func.func @transform_5(%arg0: i32) -> (i32, i32) {
    %c0_i32 = arith.constant 0 : i32
    %c0_i32_0 = arith.constant 0 : i32
    %c0_i32_1 = arith.constant 0 : i32
    return %c0_i32, %c0_i32_0 : i32, i32
  }
  func.func @transform_6(%arg0: i32) -> (i32, i32) {
    %c0_i32 = arith.constant 0 : i32
    %c0_i32_0 = arith.constant 0 : i32
    %c0_i32_1 = arith.constant 0 : i32
    return %c0_i32, %c0_i32_0 : i32, i32
  }
  func.func @transform_7(%arg0: i32) -> (i32, i32) {
    %c0_i32 = arith.constant 0 : i32
    %c0_i32_0 = arith.constant 0 : i32
    %c0_i32_1 = arith.constant 0 : i32
    return %c0_i32, %c0_i32_0 : i32, i32
  }
  func.func @transform_8(%arg0: i32) -> (i32, i32, i32) {
    %c0_i32 = arith.constant 0 : i32
    %c0_i32_0 = arith.constant 0 : i32
    %c0_i32_1 = arith.constant 0 : i32
    return %arg0, %c0_i32, %c0_i32_0 : i32, i32, i32
  }
}

</mosaic_0001>

<llo_original>
// kernel: squeeze.1
$region0: #{squeeze.1}
  %s0 = inlined_call_operand.vmem [shape: f32[1,2,7,7], index: 0, kind: input, shape index: {}]
  %s1 = inlined_call_operand.vmem [shape: f32[2,49], index: 1, kind: output, shape index: {}]
  $region1: #{squeeze.1} parent=0
    #allocation0 [shape = 'u8[4096]{0}', space=vmem, size = 0x1000, scoped, tag = 'scoped mem for output reshape']
    %s2 = smov 3
    %v3 = vld [vmem:[%s0] ss:$8 sm:%s2]
    %vm4 = vcmask 56320
    %5 = vst.msk [vmem:[#allocation0] sm:$0x3] %vm4, %v3
    %s6 = scalar_lea.vmem %s0, 6
    %s7 = smov 3
    %v8 = vld [vmem:[%s6] ss:$8 sm:%s7]
    %9 = vrot.lane.b32.xlu0 %v8, 42
    %v10 = vpop.permute.xlu0 %9
    %vm11 = vcmask 400720
    %12 = vst.msk [vmem:[#allocation0] sm:$0x3] %vm11, %v10
    %s13 = scalar_lea.vmem %s0, 5
    %s14 = smov 3
    %v15 = vld [vmem:[%s13] ss:$8 sm:%s14]
    %16 = vrot.lane.b32.xlu0 %v15, 35
    %v17 = vpop.permute.xlu0 %16
    %vm18 = vcmask 343320
    %19 = vst.msk [vmem:[#allocation0] sm:$0x3] %vm18, %v17
    %s20 = scalar_lea.vmem %s0, 4
    %s21 = smov 3
    %v22 = vld [vmem:[%s20] ss:$8 sm:%s21]
    %23 = vrot.lane.b32.xlu0 %v22, 28
    %v24 = vpop.permute.xlu0 %23
    %vm25 = vcmask 285920
    %26 = vst.msk [vmem:[#allocation0] sm:$0x3] %vm25, %v24
    %s27 = scalar_lea.vmem %s0, 3
    %s28 = smov 3
    %v29 = vld [vmem:[%s27] ss:$8 sm:%s28]
    %30 = vrot.lane.b32.xlu0 %v29, 21
    %v31 = vpop.permute.xlu0 %30
    %vm32 = vcmask 228520
    %33 = vst.msk [vmem:[#allocation0] sm:$0x3] %vm32, %v31
    %s34 = scalar_lea.vmem %s0, 2
    %s35 = smov 3
    %v36 = vld [vmem:[%s34] ss:$8 sm:%s35]
    %37 = vrot.lane.b32.xlu0 %v36, 14
    %v38 = vpop.permute.xlu0 %37
    %vm39 = vcmask 171120
    %40 = vst.msk [vmem:[#allocation0] sm:$0x3] %vm39, %v38
    %s41 = scalar_lea.vmem %s0, 1
    %s42 = smov 3
    %v43 = vld [vmem:[%s41] ss:$8 sm:%s42]
    %44 = vrot.lane.b32.xlu0 %v43, 7
    %v45 = vpop.permute.xlu0 %44
    %vm46 = vcmask 113720
    %47 = vst.msk [vmem:[#allocation0] sm:$0x3] %vm46, %v45
    %s49 = sshllo.u32 0, 2
    %v51 = vld [vmem:[#allocation0] sm:%s49]
    %s52 = sshllo.u32 0, 2
    %53 = vst [vmem:[%s1] sm:%s52] %v51

// kernel: cbam_cross_our.1
$region0: #{cbam_cross_our.1}
  #allocation0 [shape = 'u32[]', space=smem, size = 0x4, offset = 0x4, fixed_abs, tag = 'smem constant byte address 0x4 - core index']
  #allocation1 [shape = 'u32[144,128]{1,0:T(1,128)}', space=vmem, size = 0x12000, scoped, tag = 'internal scratch']
  #allocation2 [shape = 'f32[32,512]{1,0:T(8,128)}', space=vmem, size = 0x10000, scoped, tag = 'scratch operand']
  #allocation3 [shape = 'f32[2,512]{1,0:T(2,128)}', space=vmem, size = 0x1000, scoped, tag = 'scratch operand']
  %s0 = inlined_call_operand.vmem [shape: f32[2,32,256], index: 0, kind: input, shape index: {}]
  %s1 = inlined_call_operand.vmem [shape: f32[2,32,256], index: 1, kind: input, shape index: {}]
  %s2 = inlined_call_operand.vmem [shape: f32[32,4], index: 2, kind: input, shape index: {}]
  %s3 = inlined_call_operand.vmem [shape: f32[2,2], index: 3, kind: input, shape index: {}]
  %s4 = inlined_call_operand.vmem [shape: f32[18,32], index: 4, kind: input, shape index: {}]
  %s5 = inlined_call_operand.vmem [shape: f32[2,2], index: 5, kind: input, shape index: {}]
  %s6 = inlined_call_operand.vmem [shape: f32[32,2], index: 6, kind: input, shape index: {}]
  %s7 = inlined_call_operand.vmem [shape: f32[2,49], index: 7, kind: input, shape index: {}]
  %s8 = inlined_call_operand.vmem [shape: f32[2,32,256], index: 8, kind: output, shape index: {}]
  %s9 = sld [smem:[#allocation0]]
  $region69: #{cbam_cross_our.1} parent=0
    _
  %s11 = ssub.s32 1, %s9
  %s12 = scalar_select 0, %s11, %s9
  $region1: #{cbam_cross_our.1} parent=0
    #allocation4 [shape = 'u8[1024]{0}', space=smem, size = 0x400, scoped, tag = 'input window, operand 7, single buffered']
    #allocation5 [shape = 's32[2]{0}', space=sflag, size = 0x8, scoped, tag = 'scoped memory for cbam_cross_our.1']
    %13 = vsyncpa [#allocation5], 0
    loop: start=0, step=1, limit=4
    $region2: #{cbam_cross_our.1} parent=1 // loop_pre_header
      _
    $region3: #{cbam_cross_our.1} parent=1 // loop_header
      %s15 = sphi 0, %s19
      %p16 = scmp.ge.s32.totalorder %s15, 4
      %s25 = sphi 0, %s27
      %s28 = sphi 0, %s25
      %s29 = sphi 0, %s28
      %s45 = sphi 0, %s29
      %s51 = sphi 0, %s53
      %s54 = sphi 0, %s51
      %s55 = sphi 0, %s54
      %s71 = sphi 0, %s55
      %s75 = sphi 0, %s75
      %s77 = sphi 0, %s75
      %s78 = sphi 0, %s77
      %s92 = sphi 0, %s78
      %s96 = sphi 0, %s96
      %s98 = sphi 0, %s96
      %s99 = sphi 0, %s98
      %s113 = sphi 0, %s99
      %s117 = sphi 0, %s117
      %s119 = sphi 0, %s117
      %s120 = sphi 0, %s119
      %s134 = sphi 0, %s120
      %s138 = sphi 0, %s138
      %s140 = sphi 0, %s138
      %s141 = sphi 0, %s140
      %s155 = sphi 0, %s141
      %s159 = sphi 0, %s159
      %s161 = sphi 0, %s159
      %s162 = sphi 0, %s161
      %s176 = sphi 0, %s162
      %s180 = sphi 0, %s180
      %s182 = sphi 0, %s180
      %s183 = sphi 0, %s182
      %s197 = sphi 0, %s183
      %s203 = sphi 0, %s205
      %s206 = sphi 0, %s203
      %s207 = sphi 0, %s206
      %s223 = sphi 0, %s207
    $region4: #{cbam_cross_our.1} parent=1 // loop_header_branch
      %18 = sbr.rel (%p16) target = $region8
    $region5: #{cbam_cross_our.1} parent=1 // loop_body
      %s20 = ssub.s32 %s15, 1
      %s21 = ssub.s32 %s15, 2
      %s22 = sadd.s32 %s15, 1
      %s23 = ssub.s32 %s15, %s22
      %p24 = scmp.eq.s32.totalorder %s23, 0
      %s26 = sadd.s32 %s25, 1
      %s27 = scalar_select %p24, %s25, %s26
      %p30 = pneg %p24
      %p31 = scmp.eq.s32.totalorder %s15, 1
      %p32 = por %p30, %p31
      %p33 = scmp.ne.s32.totalorder %s25, %s28
      %p34 = scmp.eq.s32.totalorder %s15, 0
      %p35 = por %p33, %p34
      %p36 = scmp.ne.s32.totalorder %s25, %s28
      %p37 = scmp.eq.s32.totalorder %s20, 1
      %p38 = por %p36, %p37
      %p39 = scmp.ne.s32.totalorder %s28, %s29
      %p40 = scmp.eq.s32.totalorder %s20, 0
      %p41 = por %p39, %p40
      %p42 = scmp.ne.s32.totalorder %s28, %s29
      %p43 = scmp.eq.s32.totalorder %s21, 1
      %p44 = por %p42, %p43
      %p46 = scmp.ne.s32.totalorder %s29, %s45
      %p47 = scmp.eq.s32.totalorder %s21, 0
      %p48 = por %p46, %p47
      %s49 = ssub.s32 %s15, %s22
      %p50 = scmp.eq.s32.totalorder %s49, 0
      %s52 = sadd.s32 %s51, 1
      %s53 = scalar_select %p50, %s51, %s52
      %p56 = pneg %p50
      %p57 = scmp.eq.s32.totalorder %s15, 1
      %p58 = por %p56, %p57
      %p59 = scmp.ne.s32.totalorder %s51, %s54
      %p60 = scmp.eq.s32.totalorder %s15, 0
      %p61 = por %p59, %p60
      %p62 = scmp.ne.s32.totalorder %s51, %s54
      %p63 = scmp.eq.s32.totalorder %s20, 1
      %p64 = por %p62, %p63
      %p65 = scmp.ne.s32.totalorder %s54, %s55
      %p66 = scmp.eq.s32.totalorder %s20, 0
      %p67 = por %p65, %p66
      %p68 = scmp.ne.s32.totalorder %s54, %s55
      %p69 = scmp.eq.s32.totalorder %s21, 1
      %p70 = por %p68, %p69
      %p72 = scmp.ne.s32.totalorder %s55, %s71
      %p73 = scmp.eq.s32.totalorder %s21, 0
      %p74 = por %p72, %p73
      %s76 = sadd.s32 %s75, 1
      %p79 = scmp.eq.s32.totalorder %s15, 1
      %p80 = scmp.ne.s32.totalorder %s75, %s77
      %p81 = scmp.eq.s32.totalorder %s15, 0
      %p82 = por %p80, %p81
      %p83 = scmp.ne.s32.totalorder %s75, %s77
      %p84 = scmp.eq.s32.totalorder %s20, 1
      %p85 = por %p83, %p84
      %p86 = scmp.ne.s32.totalorder %s77, %s78
      %p87 = scmp.eq.s32.totalorder %s20, 0
      %p88 = por %p86, %p87
      %p89 = scmp.ne.s32.totalorder %s77, %s78
      %p90 = scmp.eq.s32.totalorder %s21, 1
      %p91 = por %p89, %p90
      %p93 = scmp.ne.s32.totalorder %s78, %s92
      %p94 = scmp.eq.s32.totalorder %s21, 0
      %p95 = por %p93, %p94
      %s97 = sadd.s32 %s96, 1
      %p100 = scmp.eq.s32.totalorder %s15, 1
      %p101 = scmp.ne.s32.totalorder %s96, %s98
      %p102 = scmp.eq.s32.totalorder %s15, 0
      %p103 = por %p101, %p102
      %p104 = scmp.ne.s32.totalorder %s96, %s98
      %p105 = scmp.eq.s32.totalorder %s20, 1
      %p106 = por %p104, %p105
      %p107 = scmp.ne.s32.totalorder %s98, %s99
      %p108 = scmp.eq.s32.totalorder %s20, 0
      %p109 = por %p107, %p108
      %p110 = scmp.ne.s32.totalorder %s98, %s99
      %p111 = scmp.eq.s32.totalorder %s21, 1
      %p112 = por %p110, %p111
      %p114 = scmp.ne.s32.totalorder %s99, %s113
      %p115 = scmp.eq.s32.totalorder %s21, 0
      %p116 = por %p114, %p115
      %s118 = sadd.s32 %s117, 1
      %p121 = scmp.eq.s32.totalorder %s15, 1
      %p122 = scmp.ne.s32.totalorder %s117, %s119
      %p123 = scmp.eq.s32.totalorder %s15, 0
      %p124 = por %p122, %p123
      %p125 = scmp.ne.s32.totalorder %s117, %s119
      %p126 = scmp.eq.s32.totalorder %s20, 1
      %p127 = por %p125, %p126
      %p128 = scmp.ne.s32.totalorder %s119, %s120
      %p129 = scmp.eq.s32.totalorder %s20, 0
      %p130 = por %p128, %p129
      %p131 = scmp.ne.s32.totalorder %s119, %s120
      %p132 = scmp.eq.s32.totalorder %s21, 1
      %p133 = por %p131, %p132
      %p135 = scmp.ne.s32.totalorder %s120, %s134
      %p136 = scmp.eq.s32.totalorder %s21, 0
      %p137 = por %p135, %p136
      %s139 = sadd.s32 %s138, 1
      %p142 = scmp.eq.s32.totalorder %s15, 1
      %p143 = scmp.ne.s32.totalorder %s138, %s140
      %p144 = scmp.eq.s32.totalorder %s15, 0
      %p145 = por %p143, %p144
      %p146 = scmp.ne.s32.totalorder %s138, %s140
      %p147 = scmp.eq.s32.totalorder %s20, 1
      %p148 = por %p146, %p147
      %p149 = scmp.ne.s32.totalorder %s140, %s141
      %p150 = scmp.eq.s32.totalorder %s20, 0
      %p151 = por %p149, %p150
      %p152 = scmp.ne.s32.totalorder %s140, %s141
      %p153 = scmp.eq.s32.totalorder %s21, 1
      %p154 = por %p152, %p153
      %p156 = scmp.ne.s32.totalorder %s141, %s155
      %p157 = scmp.eq.s32.totalorder %s21, 0
      %p158 = por %p156, %p157
      %s160 = sadd.s32 %s159, 1
      %p163 = scmp.eq.s32.totalorder %s15, 1
      %p164 = scmp.ne.s32.totalorder %s159, %s161
      %p165 = scmp.eq.s32.totalorder %s15, 0
      %p166 = por %p164, %p165
      %p167 = scmp.ne.s32.totalorder %s159, %s161
      %p168 = scmp.eq.s32.totalorder %s20, 1
      %p169 = por %p167, %p168
      %p170 = scmp.ne.s32.totalorder %s161, %s162
      %p171 = scmp.eq.s32.totalorder %s20, 0
      %p172 = por %p170, %p171
      %p173 = scmp.ne.s32.totalorder %s161, %s162
      %p174 = scmp.eq.s32.totalorder %s21, 1
      %p175 = por %p173, %p174
      %p177 = scmp.ne.s32.totalorder %s162, %s176
      %p178 = scmp.eq.s32.totalorder %s21, 0
      %p179 = por %p177, %p178
      %s181 = sadd.s32 %s180, 1
      %p184 = scmp.eq.s32.totalorder %s15, 1
      %p185 = scmp.ne.s32.totalorder %s180, %s182
      %p186 = scmp.eq.s32.totalorder %s15, 0
      %p187 = por %p185, %p186
      %p188 = scmp.ne.s32.totalorder %s180, %s182
      %p189 = scmp.eq.s32.totalorder %s20, 1
      %p190 = por %p188, %p189
      %p191 = scmp.ne.s32.totalorder %s182, %s183
      %p192 = scmp.eq.s32.totalorder %s20, 0
      %p193 = por %p191, %p192
      %p194 = scmp.ne.s32.totalorder %s182, %s183
      %p195 = scmp.eq.s32.totalorder %s21, 1
      %p196 = por %p194, %p195
      %p198 = scmp.ne.s32.totalorder %s183, %s197
      %p199 = scmp.eq.s32.totalorder %s21, 0
      %p200 = por %p198, %p199
      %s201 = ssub.s32 %s15, %s22
      %p202 = scmp.eq.s32.totalorder %s201, 0
      %s204 = sadd.s32 %s203, 1
      %s205 = scalar_select %p202, %s203, %s204
      %p208 = pneg %p202
      %p209 = scmp.eq.s32.totalorder %s15, 1
      %p210 = por %p208, %p209
      %p211 = scmp.ne.s32.totalorder %s203, %s206
      %p212 = scmp.eq.s32.totalorder %s15, 0
      %p213 = por %p211, %p212
      %p214 = scmp.ne.s32.totalorder %s203, %s206
      %p215 = scmp.eq.s32.totalorder %s20, 1
      %p216 = por %p214, %p215
      %p217 = scmp.ne.s32.totalorder %s206, %s207
      %p218 = scmp.eq.s32.totalorder %s20, 0
      %p219 = por %p217, %p218
      %p220 = scmp.ne.s32.totalorder %s206, %s207
      %p221 = scmp.eq.s32.totalorder %s21, 1
      %p222 = por %p220, %p221
      %p224 = scmp.ne.s32.totalorder %s207, %s223
      %p225 = scmp.eq.s32.totalorder %s21, 0
      %p226 = por %p224, %p225
      %p227 = scmp.le.s32.totalorder 1, %s15
      %p228 = scmp.lt.s32.totalorder %s15, 3
      %p229 = pnand %p227, %p228
      %p230 = pneg %p229
      // Predicated region
      $region9: #{cbam_cross_our.1} parent=5 // pred_check
        _
      $region10: #{cbam_cross_our.1} parent=5 // pred_check_branch
        %232 = sbr.rel (%p229) target = $region12
      $region11: #{cbam_cross_our.1} parent=5 // pred_region
        %s233 = ssub.s32 %s15, 1
        // Predicated region
        $region13: #{cbam_cross_our.1} parent=11 // pred_check
          %p234 = pneg %p88
        $region14: #{cbam_cross_our.1} parent=11 // pred_check_branch
          %236 = sbr.rel (%p234) target = $region16
        $region15: #{cbam_cross_our.1} parent=11 // pred_region
          _
        $region16: #{cbam_cross_our.1} parent=11 // pred_fallthru
          _
        // Predicated region
        $region17: #{cbam_cross_our.1} parent=11 // pred_check
          %p237 = pneg %p109
        $region18: #{cbam_cross_our.1} parent=11 // pred_check_branch
          %239 = sbr.rel (%p237) target = $region20
        $region19: #{cbam_cross_our.1} parent=11 // pred_region
          _
        $region20: #{cbam_cross_our.1} parent=11 // pred_fallthru
          _
        // Predicated region
        $region21: #{cbam_cross_our.1} parent=11 // pred_check
          %p240 = pneg %p130
        $region22: #{cbam_cross_our.1} parent=11 // pred_check_branch
          %242 = sbr.rel (%p240) target = $region24
        $region23: #{cbam_cross_our.1} parent=11 // pred_region
          _
        $region24: #{cbam_cross_our.1} parent=11 // pred_fallthru
          _
        // Predicated region
        $region25: #{cbam_cross_our.1} parent=11 // pred_check
          %p243 = pneg %p151
        $region26: #{cbam_cross_our.1} parent=11 // pred_check_branch
          %245 = sbr.rel (%p243) target = $region28
        $region27: #{cbam_cross_our.1} parent=11 // pred_region
          _
        $region28: #{cbam_cross_our.1} parent=11 // pred_fallthru
          _
        // Predicated region
        $region29: #{cbam_cross_our.1} parent=11 // pred_check
          %p246 = pneg %p172
        $region30: #{cbam_cross_our.1} parent=11 // pred_check_branch
          %248 = sbr.rel (%p246) target = $region32
        $region31: #{cbam_cross_our.1} parent=11 // pred_region
          _
        $region32: #{cbam_cross_our.1} parent=11 // pred_fallthru
          _
        // Predicated region
        $region33: #{cbam_cross_our.1} parent=11 // pred_check
          %p249 = pneg %p193
        $region34: #{cbam_cross_our.1} parent=11 // pred_check_branch
          %251 = sbr.rel (%p249) target = $region36
        $region35: #{cbam_cross_our.1} parent=11 // pred_region
          %s253 = ssub.s32 32, 32
          %254 = vsyncadd [#allocation5], %s253
          %s256 = sshll.u32 %s7, 4
          %s257 = int_to_ptr.vmem [resolvable:$true] %s256
          %259 = dma.vmem_to_smem %s257, 32, [#allocation4], [#allocation5]
        $region36: #{cbam_cross_our.1} parent=11 // pred_fallthru
          _
      $region12: #{cbam_cross_our.1} parent=5 // pred_fallthru
        _
      %p260 = scmp.lt.s32.totalorder %s15, 2
      // Predicated region
      $region37: #{cbam_cross_our.1} parent=5 // pred_check
        %p261 = pneg %p260
      $region38: #{cbam_cross_our.1} parent=5 // pred_check_branch
        %263 = sbr.rel (%p261) target = $region40
      $region39: #{cbam_cross_our.1} parent=5 // pred_region
        // Predicated region
        $region41: #{cbam_cross_our.1} parent=39 // pred_check
          %p264 = pneg %p35
        $region42: #{cbam_cross_our.1} parent=39 // pred_check_branch
          %266 = sbr.rel (%p264) target = $region44
        $region43: #{cbam_cross_our.1} parent=39 // pred_region
          %p267 = scmp.lt.s32.totalorder %s15, 1
          %s268 = scalar_select %p267, %s15, 1
          %s269 = smul.addr %s268, 8
          %s270 = smul.addr %s269, 8
          %s271 = scalar_lea.vmem %s0, %s270
        $region44: #{cbam_cross_our.1} parent=39 // pred_fallthru
          _
        // Predicated region
        $region45: #{cbam_cross_our.1} parent=39 // pred_check
          %p272 = pneg %p61
        $region46: #{cbam_cross_our.1} parent=39 // pred_check_branch
          %274 = sbr.rel (%p272) target = $region48
        $region47: #{cbam_cross_our.1} parent=39 // pred_region
          %p275 = scmp.lt.s32.totalorder %s15, 1
          %s276 = scalar_select %p275, %s15, 1
          %s277 = smul.addr %s276, 8
          %s278 = smul.addr %s277, 8
          %s279 = scalar_lea.vmem %s1, %s278
        $region48: #{cbam_cross_our.1} parent=39 // pred_fallthru
          _
      $region40: #{cbam_cross_our.1} parent=5 // pred_fallthru
        _
      %p280 = scmp.le.s32.totalorder 1, %s15
      %p281 = scmp.lt.s32.totalorder %s15, 3
      %p282 = pnand %p280, %p281
      %p283 = pneg %p282
      // Predicated region
      $region49: #{cbam_cross_our.1} parent=5 // pred_check
        _
      $region50: #{cbam_cross_our.1} parent=5 // pred_check_branch
        %285 = sbr.rel (%p282) target = $region52
      $region51: #{cbam_cross_our.1} parent=5 // pred_region
        %s286 = ssub.s32 %s15, 1
        // Predicated region
        $region53: #{cbam_cross_our.1} parent=51 // pred_check
          %p287 = pneg %p193
        $region54: #{cbam_cross_our.1} parent=51 // pred_check_branch
          %289 = sbr.rel (%p287) target = $region56
        $region55: #{cbam_cross_our.1} parent=51 // pred_region
          %290 = dma.done [#allocation5], 32
        $region56: #{cbam_cross_our.1} parent=51 // pred_fallthru
          _
        %291 = sfence
        %p292 = scmp.lt.s32.totalorder %s20, 1
        %s293 = scalar_select %p292, %s20, 1
        %s294 = smul.addr %s293, 8
        %s295 = smul.addr %s294, 8
        %s296 = scalar_lea.vmem %s0, %s295
        %p297 = pneg %p41
        %p298 = pneg %p38
        %p299 = scmp.lt.s32.totalorder %s20, 1
        %s300 = scalar_select %p299, %s20, 1
        %s301 = smul.addr %s300, 8
        %s302 = smul.addr %s301, 8
        %s303 = scalar_lea.vmem %s1, %s302
        %p304 = pneg %p67
        %p305 = pneg %p64
        %p306 = pneg %p88
        %p307 = pneg %p85
        %p308 = pneg %p109
        %p309 = pneg %p106
        %p310 = pneg %p130
        %p311 = pneg %p127
        %p312 = pneg %p151
        %p313 = pneg %p148
        %p314 = pneg %p172
        %p315 = pneg %p169
        %p316 = pneg %p193
        %p317 = pneg %p190
        %p318 = pneg %p219
        %p319 = pneg %p216
        %p320 = scmp.lt.s32.totalorder %s20, 1
        %s321 = scalar_select %p320, %s20, 1
        %s322 = smul.addr %s321, 8
        %s323 = smul.addr %s322, 8
        %s324 = scalar_lea.vmem %s8, %s323
        %p325 = scmp.lt.s32.totalorder %s20, 1
        %s326 = scalar_select %p325, %s20, 1
        %s327 = smul.addr %s326, 8
        %s328 = smul.addr %s327, 8
        %s329 = scalar_lea.vmem %s0, %s328
        %p330 = scmp.lt.s32.totalorder %s20, 1
        %s331 = scalar_select %p330, %s20, 1
        %s332 = smul.addr %s331, 8
        %s333 = smul.addr %s332, 8
        %s334 = scalar_lea.vmem %s1, %s333
        %p335 = scmp.lt.s32.totalorder %s20, 1
        %s336 = scalar_select %p335, %s20, 1
        %s337 = smul.addr %s336, 8
        %s338 = smul.addr %s337, 8
        %s339 = scalar_lea.vmem %s8, %s338
        %v340 = vld [vmem:[%s329] sm:$0xff]
        %v341 = vld [vmem:[%s329 + $0x8] sm:$0xff]
        %v342 = vld [vmem:[%s329 + $0x10] sm:$0xff]
        %v343 = vld [vmem:[%s329 + $0x18] sm:$0xff]
        %v344 = vld [vmem:[%s329 + $0x20] sm:$0xff]
        %v345 = vld [vmem:[%s329 + $0x28] sm:$0xff]
        %v346 = vld [vmem:[%s329 + $0x30] sm:$0xff]
        %v347 = vld [vmem:[%s329 + $0x38] sm:$0xff]
        %v348 = vld [vmem:[%s334] sm:$0xff]
        %v349 = vld [vmem:[%s334 + $0x8] sm:$0xff]
        %v350 = vld [vmem:[%s334 + $0x10] sm:$0xff]
        %v351 = vld [vmem:[%s334 + $0x18] sm:$0xff]
        %v352 = vld [vmem:[%s334 + $0x20] sm:$0xff]
        %v353 = vld [vmem:[%s334 + $0x28] sm:$0xff]
        %v354 = vld [vmem:[%s334 + $0x30] sm:$0xff]
        %v355 = vld [vmem:[%s334 + $0x38] sm:$0xff]
        %v356 = vld [vmem:[%s2] sm:$0xff]
        %v357 = vld [vmem:[%s2 + $0x8] sm:$0xff]
        %v358 = vld [vmem:[%s2 + $0x10] sm:$0xff]
        %v359 = vld [vmem:[%s2 + $0x18] sm:$0xff]
        %361 = vset.pattern.permute.xlu0 0
        %362 = vperm.xlu0 %361, %v356
        %v363 = vpop.permute.xlu0 %362
        %366 = vset.pattern.permute.xlu0 0
        %367 = vperm.xlu0 %366, %v357
        %v368 = vpop.permute.xlu0 %367
        %371 = vset.pattern.permute.xlu0 0
        %372 = vperm.xlu0 %371, %v358
        %v373 = vpop.permute.xlu0 %372
        %376 = vset.pattern.permute.xlu0 0
        %377 = vperm.xlu0 %376, %v359
        %v378 = vpop.permute.xlu0 %377
        %v380 = vmul.f32 %v363, %v340
        %v381 = vmul.f32 %v363, %v341
        %v382 = vmul.f32 %v368, %v342
        %v383 = vmul.f32 %v368, %v343
        %v384 = vmul.f32 %v373, %v344
        %v385 = vmul.f32 %v373, %v345
        %v386 = vmul.f32 %v378, %v346
        %v387 = vmul.f32 %v378, %v347
        %388 = vset.pattern.permute.xlu0 1
        %389 = vperm.xlu0 %388, %v356
        %v390 = vpop.permute.xlu0 %389
        %392 = vset.pattern.permute.xlu0 1
        %393 = vperm.xlu0 %392, %v357
        %v394 = vpop.permute.xlu0 %393
        %396 = vset.pattern.permute.xlu0 1
        %397 = vperm.xlu0 %396, %v358
        %v398 = vpop.permute.xlu0 %397
        %400 = vset.pattern.permute.xlu0 1
        %401 = vperm.xlu0 %400, %v359
        %v402 = vpop.permute.xlu0 %401
        %v404 = vmul.f32 %v390, %v348
        %v405 = vmul.f32 %v390, %v349
        %v406 = vmul.f32 %v394, %v350
        %v407 = vmul.f32 %v394, %v351
        %v408 = vmul.f32 %v398, %v352
        %v409 = vmul.f32 %v398, %v353
        %v410 = vmul.f32 %v402, %v354
        %v411 = vmul.f32 %v402, %v355
        %v412 = vadd.f32 %v380, %v404
        %v413 = vadd.f32 %v381, %v405
        %v414 = vadd.f32 %v382, %v406
        %v415 = vadd.f32 %v383, %v407
        %v416 = vadd.f32 %v384, %v408
        %v417 = vadd.f32 %v385, %v409
        %v418 = vadd.f32 %v386, %v410
        %v419 = vadd.f32 %v387, %v411
        %420 = vset.pattern.permute.xlu0 2
        %421 = vperm.xlu0 %420, %v356
        %v422 = vpop.permute.xlu0 %421
        %424 = vset.pattern.permute.xlu0 2
        %425 = vperm.xlu0 %424, %v357
        %v426 = vpop.permute.xlu0 %425
        %428 = vset.pattern.permute.xlu0 2
        %429 = vperm.xlu0 %428, %v358
        %v430 = vpop.permute.xlu0 %429
        %432 = vset.pattern.permute.xlu0 2
        %433 = vperm.xlu0 %432, %v359
        %v434 = vpop.permute.xlu0 %433
        %v436 = vmul.f32 %v422, %v412
        %v437 = vmul.f32 %v422, %v413
        %v438 = vmul.f32 %v426, %v414
        %v439 = vmul.f32 %v426, %v415
        %v440 = vmul.f32 %v430, %v416
        %v441 = vmul.f32 %v430, %v417
        %v442 = vmul.f32 %v434, %v418
        %v443 = vmul.f32 %v434, %v419
        %444 = vset.pattern.permute.xlu0 3
        %445 = vperm.xlu0 %444, %v356
        %v446 = vpop.permute.xlu0 %445
        %448 = vset.pattern.permute.xlu0 3
        %449 = vperm.xlu0 %448, %v357
        %v450 = vpop.permute.xlu0 %449
        %452 = vset.pattern.permute.xlu0 3
        %453 = vperm.xlu0 %452, %v358
        %v454 = vpop.permute.xlu0 %453
        %456 = vset.pattern.permute.xlu0 3
        %457 = vperm.xlu0 %456, %v359
        %v458 = vpop.permute.xlu0 %457
        %v460 = vadd.f32 %v436, %v446
        %v461 = vadd.f32 %v437, %v446
        %v462 = vadd.f32 %v438, %v450
        %v463 = vadd.f32 %v439, %v450
        %v464 = vadd.f32 %v440, %v454
        %v465 = vadd.f32 %v441, %v454
        %v466 = vadd.f32 %v442, %v458
        %v467 = vadd.f32 %v443, %v458
        %v468 = vmax.f32 %v460, 0.0
        %v469 = vmax.f32 %v461, 0.0
        %v470 = vmax.f32 %v462, 0.0
        %v471 = vmax.f32 %v463, 0.0
        %v472 = vmax.f32 %v464, 0.0
        %v473 = vmax.f32 %v465, 0.0
        %v474 = vmax.f32 %v466, 0.0
        %v475 = vmax.f32 %v467, 0.0
        %v476 = vlaneseq
        %v477 = vand.u32 %v476, 127
        %v478 = vadd.s32 %v477, 128
        %vm479 = vcmp.lt.s32.totalorder %v477, 0
        %v480 = vsub.s32 0, %v477
        %v481 = vsel %vm479, %v480, %v477
        %v482 = vshrl.u32 %v481, 4
        %v483 = vand.u32 %v481, 15
        %v484 = vsub.s32 0, %v483
        %v485 = vsel %vm479, %v484, %v483
        %vm486 = vcmp.lt.s32.totalorder %v478, 0
        %v487 = vsub.s32 0, %v478
        %v488 = vsel %vm486, %v487, %v478
        %v489 = vshrl.u32 %v488, 4
        %v490 = vand.u32 %v488, 15
        %v491 = vsub.s32 0, %v490
        %v492 = vsel %vm486, %v491, %v490
        %vm493 = vcmp.ne.s32.totalorder %v485, 0
        %vm494 = vcmp.ne.s32.totalorder %v492, 0
        %vm495 = vcmp.lt.s32.totalorder %v485, 0
        %vm496 = vcmp.lt.s32.totalorder %v492, 0
        %vm497 = vmand %vm495, %vm493
        %vm498 = vmand %vm496, %vm494
        %v499 = vadd.s32 %v485, 16
        %v500 = vadd.s32 %v492, 16
        %v501 = vsel %vm497, %v499, %v485
        %v502 = vsel %vm498, %v500, %v492
        %v503 = vadd.s32 %v501, 4294967293
        %v504 = vadd.s32 %v502, 4294967293
        %vm505 = vcmp.ge.s32.totalorder %v503, 0
        %vm506 = vcmp.ge.s32.totalorder %v504, 0
        %vm507 = vcmp.lt.s32.totalorder %v503, 16
        %vm508 = vcmp.lt.s32.totalorder %v504, 16
        %vm509 = vmand %vm505, %vm507
        %vm510 = vmand %vm506, %vm508
        %v511 = vsel %vm509, 1, 0
        %v512 = vsel %vm510, 1, 0
        %v513 = vcvt.s32.f32 %v511
        %v514 = vcvt.s32.f32 %v512
        %v515 = vadd.s32 %v501, 4294967294
        %v516 = vadd.s32 %v502, 4294967294
        %vm517 = vcmp.ge.s32.totalorder %v515, 0
        %vm518 = vcmp.ge.s32.totalorder %v516, 0
        %vm519 = vcmp.lt.s32.totalorder %v515, 16
        %vm520 = vcmp.lt.s32.totalorder %v516, 16
        %vm521 = vmand %vm517, %vm519
        %vm522 = vmand %vm518, %vm520
        %v523 = vsel %vm521, 1, 0
        %v524 = vsel %vm522, 1, 0
        %v525 = vcvt.s32.f32 %v523
        %v526 = vcvt.s32.f32 %v524
        %v527 = vadd.s32 %v501, 4294967295
        %v528 = vadd.s32 %v502, 4294967295
        %vm529 = vcmp.ge.s32.totalorder %v527, 0
        %vm530 = vcmp.ge.s32.totalorder %v528, 0
        %vm531 = vcmp.lt.s32.totalorder %v527, 16
        %vm532 = vcmp.lt.s32.totalorder %v528, 16
        %vm533 = vmand %vm529, %vm531
        %vm534 = vmand %vm530, %vm532
        %v535 = vsel %vm533, 1, 0
        %v536 = vsel %vm534, 1, 0
        %v537 = vcvt.s32.f32 %v535
        %v538 = vcvt.s32.f32 %v536
        %vm539 = vcmp.ge.s32.totalorder %v501, 0
        %vm540 = vcmp.ge.s32.totalorder %v502, 0
        %vm541 = vcmp.lt.s32.totalorder %v501, 16
        %vm542 = vcmp.lt.s32.totalorder %v502, 16
        %vm543 = vmand %vm539, %vm541
        %vm544 = vmand %vm540, %vm542
        %v545 = vsel %vm543, 1, 0
        %v546 = vsel %vm544, 1, 0
        %v547 = vcvt.s32.f32 %v545
        %v548 = vcvt.s32.f32 %v546
        %v549 = vadd.s32 %v501, 1
        %v550 = vadd.s32 %v502, 1
        %vm551 = vcmp.ge.s32.totalorder %v549, 0
        %vm552 = vcmp.ge.s32.totalorder %v550, 0
        %vm553 = vcmp.lt.s32.totalorder %v549, 16
        %vm554 = vcmp.lt.s32.totalorder %v550, 16
        %vm555 = vmand %vm551, %vm553
        %vm556 = vmand %vm552, %vm554
        %v557 = vsel %vm555, 1, 0
        %v558 = vsel %vm556, 1, 0
        %v559 = vcvt.s32.f32 %v557
        %v560 = vcvt.s32.f32 %v558
        %v561 = vadd.s32 %v501, 2
        %v562 = vadd.s32 %v502, 2
        %vm563 = vcmp.ge.s32.totalorder %v561, 0
        %vm564 = vcmp.ge.s32.totalorder %v562, 0
        %vm565 = vcmp.lt.s32.totalorder %v561, 16
        %vm566 = vcmp.lt.s32.totalorder %v562, 16
        %vm567 = vmand %vm563, %vm565
        %vm568 = vmand %vm564, %vm566
        %v569 = vsel %vm567, 1, 0
        %v570 = vsel %vm568, 1, 0
        %v571 = vcvt.s32.f32 %v569
        %v572 = vcvt.s32.f32 %v570
        %v573 = vadd.s32 %v501, 3
        %v574 = vadd.s32 %v502, 3
        %vm575 = vcmp.ge.s32.totalorder %v573, 0
        %vm576 = vcmp.ge.s32.totalorder %v574, 0
        %vm577 = vcmp.lt.s32.totalorder %v573, 16
        %vm578 = vcmp.lt.s32.totalorder %v574, 16
        %vm579 = vmand %vm575, %vm577
        %vm580 = vmand %vm576, %vm578
        %v581 = vsel %vm579, 1, 0
        %v582 = vsel %vm580, 1, 0
        %v583 = vcvt.s32.f32 %v581
        %v584 = vcvt.s32.f32 %v582
        %585 = vst [vmem:[#allocation2] sm:$0xff] 0.0
        %586 = vst [vmem:[#allocation2 + $0x8] sm:$0xff] 0.0
        %587 = vst [vmem:[#allocation2 + $0x10] sm:$0xff] 0.0
        %588 = vst [vmem:[#allocation2 + $0x18] sm:$0xff] 0.0
        %589 = vst [vmem:[#allocation2 + $0x20] sm:$0xff] 0.0
        %590 = vst [vmem:[#allocation2 + $0x28] sm:$0xff] 0.0
        %591 = vst [vmem:[#allocation2 + $0x30] sm:$0xff] 0.0
        %592 = vst [vmem:[#allocation2 + $0x38] sm:$0xff] 0.0
        %593 = vst [vmem:[#allocation2 + $0x40] sm:$0xff] 0.0
        %594 = vst [vmem:[#allocation2 + $0x48] sm:$0xff] 0.0
        %595 = vst [vmem:[#allocation2 + $0x50] sm:$0xff] 0.0
        %596 = vst [vmem:[#allocation2 + $0x58] sm:$0xff] 0.0
        %597 = vst [vmem:[#allocation2 + $0x60] sm:$0xff] 0.0
        %598 = vst [vmem:[#allocation2 + $0x68] sm:$0xff] 0.0
        %599 = vst [vmem:[#allocation2 + $0x70] sm:$0xff] 0.0
        %600 = vst [vmem:[#allocation2 + $0x78] sm:$0xff] 0.0
        %601 = vst [vmem:[#allocation2 + $0x8] sm:$0xff] %v468
        %602 = vst [vmem:[#allocation2 + $0x10] sm:$0xff] %v469
        %603 = vst [vmem:[#allocation2 + $0x28] sm:$0xff] %v470
        %604 = vst [vmem:[#allocation2 + $0x30] sm:$0xff] %v471
        %605 = vst [vmem:[#allocation2 + $0x48] sm:$0xff] %v472
        %606 = vst [vmem:[#allocation2 + $0x50] sm:$0xff] %v473
        %607 = vst [vmem:[#allocation2 + $0x68] sm:$0xff] %v474
        %608 = vst [vmem:[#allocation2 + $0x70] sm:$0xff] %v475
        %v609 = vld [vmem:[#allocation2] sm:$0xff]
        %v610 = vld [vmem:[#allocation2 + $0x8] sm:$0xff]
        %v611 = vld [vmem:[#allocation2 + $0x10] sm:$0xff]
        %v612 = vld [vmem:[#allocation2 + $0x20] sm:$0xff]
        %v613 = vld [vmem:[#allocation2 + $0x28] sm:$0xff]
        %v614 = vld [vmem:[#allocation2 + $0x30] sm:$0xff]
        %v615 = vld [vmem:[#allocation2 + $0x40] sm:$0xff]
        %v616 = vld [vmem:[#allocation2 + $0x48] sm:$0xff]
        %v617 = vld [vmem:[#allocation2 + $0x50] sm:$0xff]
        %v618 = vld [vmem:[#allocation2 + $0x60] sm:$0xff]
        %v619 = vld [vmem:[#allocation2 + $0x68] sm:$0xff]
        %v620 = vld [vmem:[#allocation2 + $0x70] sm:$0xff]
        %v621 = vld [vmem:[%s4] sm:$0x3]
        %634 = vrot.lane.b32.xlu0 %v609, 17
        %v635 = vpop.permute.xlu0 %634
        %636 = vrot.lane.b32.xlu0 %v610, 17
        %v637 = vpop.permute.xlu0 %636
        %638 = vrot.lane.b32.xlu0 %v611, 17
        %v639 = vpop.permute.xlu0 %638
        %640 = vrot.lane.b32.xlu0 %v612, 17
        %v641 = vpop.permute.xlu0 %640
        %642 = vrot.lane.b32.xlu0 %v613, 17
        %v643 = vpop.permute.xlu0 %642
        %644 = vrot.lane.b32.xlu0 %v614, 17
        %v645 = vpop.permute.xlu0 %644
        %646 = vrot.lane.b32.xlu0 %v615, 17
        %v647 = vpop.permute.xlu0 %646
        %648 = vrot.lane.b32.xlu0 %v616, 17
        %v649 = vpop.permute.xlu0 %648
        %650 = vrot.lane.b32.xlu0 %v617, 17
        %v651 = vpop.permute.xlu0 %650
        %652 = vrot.lane.b32.xlu0 %v618, 17
        %v653 = vpop.permute.xlu0 %652
        %654 = vrot.lane.b32.xlu0 %v619, 17
        %v655 = vpop.permute.xlu0 %654
        %656 = vrot.lane.b32.xlu0 %v620, 17
        %v657 = vpop.permute.xlu0 %656
        %vm658 = vcmask 138240
        %v659 = vsel %vm658, %v635, %v637
        %v660 = vsel %vm658, %v637, %v639
        %v661 = vsel %vm658, %v641, %v643
        %v662 = vsel %vm658, %v643, %v645
        %v663 = vsel %vm658, %v647, %v649
        %v664 = vsel %vm658, %v649, %v651
        %v665 = vsel %vm658, %v653, %v655
        %v666 = vsel %vm658, %v655, %v657
        %vm675 = vcmask 261120
        %v677 = vsel %vm675, %v621, 0
        %v679 = vand.u32 %v660, 4294901760
        %680 = vmatprep.subr.mxu0 %v679
        %v681 = vand.u32 %v659, 4294901760
        %682 = vmatpush1.msra.mxu0 %v681
        %v683 = vand.u32 %v662, 4294901760
        %684 = vmatprep.subr.mxu0 %v683
        %v685 = vand.u32 %v661, 4294901760
        %686 = vmatpush1.msra.mxu0 %v685
        %v687 = vand.u32 %v664, 4294901760
        %688 = vmatprep.subr.mxu0 %v687
        %v689 = vand.u32 %v663, 4294901760
        %690 = vmatpush1.msra.mxu0 %v689
        %v691 = vand.u32 %v666, 4294901760
        %692 = vmatprep.subr.mxu0 %v691
        %v693 = vand.u32 %v665, 4294901760
        %694 = vmatpush1.msra.mxu0 %v693
        %695 = vmatprep.subr.mxu0 0.0
        %696 = vmatpush1.msra.mxu0 0.0
        %697 = vmatprep.subr.mxu0 0.0
        %698 = vmatpush1.msra.mxu0 0.0
        %699 = vmatprep.subr.mxu0 0.0
        %700 = vmatpush1.msra.mxu0 0.0
        %701 = vmatprep.subr.mxu0 0.0
        %702 = vmatpush1.msra.mxu0 0.0
        %703 = vmatprep.subr.mxu0 0.0
        %704 = vmatpush1.msra.mxu0 0.0
        %705 = vmatprep.subr.mxu0 0.0
        %706 = vmatpush1.msra.mxu0 0.0
        %707 = vmatprep.subr.mxu0 0.0
        %708 = vmatpush1.msra.mxu0 0.0
        %709 = vmatprep.subr.mxu0 0.0
        %710 = vmatpush1.msra.mxu0 0.0
        %711 = vmatprep.subr.mxu0 0.0
        %712 = vmatpush1.msra.mxu0 0.0
        %713 = vmatprep.subr.mxu0 0.0
        %714 = vmatpush1.msra.mxu0 0.0
        %715 = vmatprep.subr.mxu0 0.0
        %716 = vmatpush1.msra.mxu0 0.0
        %717 = vmatprep.subr.mxu0 0.0
        %718 = vmatpush1.msra.mxu0 0.0
        %719 = vmatprep.subr.mxu0 0.0
        %720 = vmatpush1.msra.mxu0 0.0
        %721 = vmatprep.subr.mxu0 0.0
        %722 = vmatpush1.msra.mxu0 0.0
        %723 = vmatprep.subr.mxu0 0.0
        %724 = vmatpush1.msra.mxu0 0.0
        %725 = vmatprep.subr.mxu0 0.0
        %726 = vmatpush1.msra.mxu0 0.0
        %727 = vmatprep.subr.mxu0 0.0
        %728 = vmatpush1.msra.mxu0 0.0
        %729 = vmatprep.subr.mxu0 0.0
        %730 = vmatpush1.msra.mxu0 0.0
        %731 = vmatprep.subr.mxu0 0.0
        %732 = vmatpush1.msra.mxu0 0.0
        %733 = vmatprep.subr.mxu0 0.0
        %734 = vmatpush1.msra.mxu0 0.0
        %735 = vmatprep.subr.mxu0 0.0
        %736 = vmatpush1.msra.mxu0 0.0
        %737 = vmatprep.subr.mxu0 0.0
        %738 = vmatpush1.msra.mxu0 0.0
        %739 = vmatprep.subr.mxu0 0.0
        %740 = vmatpush1.msra.mxu0 0.0
        %741 = vmatprep.subr.mxu0 0.0
        %742 = vmatpush1.msra.mxu0 0.0
        %743 = vmatprep.subr.mxu0 0.0
        %744 = vmatpush1.msra.mxu0 0.0
        %745 = vmatprep.subr.mxu0 0.0
        %746 = vmatpush1.msra.mxu0 0.0
        %747 = vmatprep.subr.mxu0 0.0
        %748 = vmatpush1.msra.mxu0 0.0
        %749 = vmatprep.subr.mxu0 0.0
        %750 = vmatpush1.msra.mxu0 0.0
        %751 = vmatprep.mubr.f32.mxu0 0.0
        %v752 = vand.u32 %v677, 4294901760
        %v753 = vsub.f32 %v677, %v752
        %v754 = vand.u32 %v753, 4294901760
        %v755 = vsub.f32 %v753, %v754
        %v756 = vand.u32 %v755, 4294901760
        %757 = vmatmul.mubr.f32.gmra.mrb[0].mxu0 %v756
        %v758 = vpop.f32.mrb[0].mxu0
        %v759 = vadd.f32 0.0, %v758
        %v760 = vpop.f32.mrb[0].mxu0
        %v761 = vadd.f32 0.0, %v760
        %762 = vdwg.mxu0
        %v763 = vand.u32 %v660, 4294901760
        %v764 = vsub.f32 %v660, %v763
        %v765 = vand.u32 %v764, 4294901760
        %v766 = vsub.f32 %v764, %v765
        %v767 = vand.u32 %v766, 4294901760
        %768 = vmatprep.subr.mxu0 %v767
        %v769 = vand.u32 %v659, 4294901760
        %v770 = vsub.f32 %v659, %v769
        %v771 = vand.u32 %v770, 4294901760
        %v772 = vsub.f32 %v770, %v771
        %v773 = vand.u32 %v772, 4294901760
        %774 = vmatpush1.msra.mxu0 %v773
        %v775 = vand.u32 %v662, 4294901760
        %v776 = vsub.f32 %v662, %v775
        %v777 = vand.u32 %v776, 4294901760
        %v778 = vsub.f32 %v776, %v777
        %v779 = vand.u32 %v778, 4294901760
        %780 = vmatprep.subr.mxu0 %v779
        %v781 = vand.u32 %v661, 4294901760
        %v782 = vsub.f32 %v661, %v781
        %v783 = vand.u32 %v782, 4294901760
        %v784 = vsub.f32 %v782, %v783
        %v785 = vand.u32 %v784, 4294901760
        %786 = vmatpush1.msra.mxu0 %v785
        %v787 = vand.u32 %v664, 4294901760
        %v788 = vsub.f32 %v664, %v787
        %v789 = vand.u32 %v788, 4294901760
        %v790 = vsub.f32 %v788, %v789
        %v791 = vand.u32 %v790, 4294901760
        %792 = vmatprep.subr.mxu0 %v791
        %v793 = vand.u32 %v663, 4294901760
        %v794 = vsub.f32 %v663, %v793
        %v795 = vand.u32 %v794, 4294901760
        %v796 = vsub.f32 %v794, %v795
        %v797 = vand.u32 %v796, 4294901760
        %798 = vmatpush1.msra.mxu0 %v797
        %v799 = vand.u32 %v666, 4294901760
        %v800 = vsub.f32 %v666, %v799
        %v801 = vand.u32 %v800, 4294901760
        %v802 = vsub.f32 %v800, %v801
        %v803 = vand.u32 %v802, 4294901760
        %804 = vmatprep.subr.mxu0 %v803
        %v805 = vand.u32 %v665, 4294901760
        %v806 = vsub.f32 %v665, %v805
        %v807 = vand.u32 %v806, 4294901760
        %v808 = vsub.f32 %v806, %v807
        %v809 = vand.u32 %v808, 4294901760
        %810 = vmatpush1.msra.mxu0 %v809
        %811 = vmatprep.subr.mxu0 0.0
        %812 = vmatpush1.msra.mxu0 0.0
        %813 = vmatprep.subr.mxu0 0.0
        %814 = vmatpush1.msra.mxu0 0.0
        %815 = vmatprep.subr.mxu0 0.0
        %816 = vmatpush1.msra.mxu0 0.0
        %817 = vmatprep.subr.mxu0 0.0
        %818 = vmatpush1.msra.mxu0 0.0
        %819 = vmatprep.subr.mxu0 0.0
        %820 = vmatpush1.msra.mxu0 0.0
        %821 = vmatprep.subr.mxu0 0.0
        %822 = vmatpush1.msra.mxu0 0.0
        %823 = vmatprep.subr.mxu0 0.0
        %824 = vmatpush1.msra.mxu0 0.0
        %825 = vmatprep.subr.mxu0 0.0
        %826 = vmatpush1.msra.mxu0 0.0
        %827 = vmatprep.subr.mxu0 0.0
        %828 = vmatpush1.msra.mxu0 0.0
        %829 = vmatprep.subr.mxu0 0.0
        %830 = vmatpush1.msra.mxu0 0.0
        %831 = vmatprep.subr.mxu0 0.0
        %832 = vmatpush1.msra.mxu0 0.0
        %833 = vmatprep.subr.mxu0 0.0
        %834 = vmatpush1.msra.mxu0 0.0
        %835 = vmatprep.subr.mxu0 0.0
        %836 = vmatpush1.msra.mxu0 0.0
        %837 = vmatprep.subr.mxu0 0.0
        %838 = vmatpush1.msra.mxu0 0.0
        %839 = vmatprep.subr.mxu0 0.0
        %840 = vmatpush1.msra.mxu0 0.0
        %841 = vmatprep.subr.mxu0 0.0
        %842 = vmatpush1.msra.mxu0 0.0
        %843 = vmatprep.subr.mxu0 0.0
        %844 = vmatpush1.msra.mxu0 0.0
        %845 = vmatprep.subr.mxu0 0.0
        %846 = vmatpush1.msra.mxu0 0.0
        %847 = vmatprep.subr.mxu0 0.0
        %848 = vmatpush1.msra.mxu0 0.0
        %849 = vmatprep.subr.mxu0 0.0
        %850 = vmatpush1.msra.mxu0 0.0
        %851 = vmatprep.subr.mxu0 0.0
        %852 = vmatpush1.msra.mxu0 0.0
        %853 = vmatprep.subr.mxu0 0.0
        %854 = vmatpush1.msra.mxu0 0.0
        %855 = vmatprep.subr.mxu0 0.0
        %856 = vmatpush1.msra.mxu0 0.0
        %857 = vmatprep.subr.mxu0 0.0
        %858 = vmatpush1.msra.mxu0 0.0
        %859 = vmatprep.subr.mxu0 0.0
        %860 = vmatpush1.msra.mxu0 0.0
        %861 = vmatprep.subr.mxu0 0.0
        %862 = vmatpush1.msra.mxu0 0.0
        %863 = vmatprep.subr.mxu0 0.0
        %864 = vmatpush1.msra.mxu0 0.0
        %865 = vmatprep.subr.mxu0 0.0
        %866 = vmatpush1.msra.mxu0 0.0
        %867 = vmatprep.mubr.f32.mxu0 0.0
        %v868 = vand.u32 %v677, 4294901760
        %869 = vmatmul.mubr.f32.gmra.mrb[0].mxu0 %v868
        %v870 = vpop.f32.mrb[0].mxu0
        %v871 = vadd.f32 %v759, %v870
        %v872 = vpop.f32.mrb[0].mxu0
        %v873 = vadd.f32 %v761, %v872
        %874 = vdwg.mxu0
        %v875 = vand.u32 %v660, 4294901760
        %v876 = vsub.f32 %v660, %v875
        %877 = vmatprep.subr.mxu0 %v876
        %v878 = vand.u32 %v659, 4294901760
        %v879 = vsub.f32 %v659, %v878
        %880 = vmatpush1.msra.mxu0 %v879
        %v881 = vand.u32 %v662, 4294901760
        %v882 = vsub.f32 %v662, %v881
        %883 = vmatprep.subr.mxu0 %v882
        %v884 = vand.u32 %v661, 4294901760
        %v885 = vsub.f32 %v661, %v884
        %886 = vmatpush1.msra.mxu0 %v885
        %v887 = vand.u32 %v664, 4294901760
        %v888 = vsub.f32 %v664, %v887
        %889 = vmatprep.subr.mxu0 %v888
        %v890 = vand.u32 %v663, 4294901760
        %v891 = vsub.f32 %v663, %v890
        %892 = vmatpush1.msra.mxu0 %v891
        %v893 = vand.u32 %v666, 4294901760
        %v894 = vsub.f32 %v666, %v893
        %895 = vmatprep.subr.mxu0 %v894
        %v896 = vand.u32 %v665, 4294901760
        %v897 = vsub.f32 %v665, %v896
        %898 = vmatpush1.msra.mxu0 %v897
        %899 = vmatprep.subr.mxu0 0.0
        %900 = vmatpush1.msra.mxu0 0.0
        %901 = vmatprep.subr.mxu0 0.0
        %902 = vmatpush1.msra.mxu0 0.0
        %903 = vmatprep.subr.mxu0 0.0
        %904 = vmatpush1.msra.mxu0 0.0
        %905 = vmatprep.subr.mxu0 0.0
        %906 = vmatpush1.msra.mxu0 0.0
        %907 = vmatprep.subr.mxu0 0.0
        %908 = vmatpush1.msra.mxu0 0.0
        %909 = vmatprep.subr.mxu0 0.0
        %910 = vmatpush1.msra.mxu0 0.0
        %911 = vmatprep.subr.mxu0 0.0
        %912 = vmatpush1.msra.mxu0 0.0
        %913 = vmatprep.subr.mxu0 0.0
        %914 = vmatpush1.msra.mxu0 0.0
        %915 = vmatprep.subr.mxu0 0.0
        %916 = vmatpush1.msra.mxu0 0.0
        %917 = vmatprep.subr.mxu0 0.0
        %918 = vmatpush1.msra.mxu0 0.0
        %919 = vmatprep.subr.mxu0 0.0
        %920 = vmatpush1.msra.mxu0 0.0
        %921 = vmatprep.subr.mxu0 0.0
        %922 = vmatpush1.msra.mxu0 0.0
        %923 = vmatprep.subr.mxu0 0.0
        %924 = vmatpush1.msra.mxu0 0.0
        %925 = vmatprep.subr.mxu0 0.0
        %926 = vmatpush1.msra.mxu0 0.0
        %927 = vmatprep.subr.mxu0 0.0
        %928 = vmatpush1.msra.mxu0 0.0
        %929 = vmatprep.subr.mxu0 0.0
        %930 = vmatpush1.msra.mxu0 0.0
        %931 = vmatprep.subr.mxu0 0.0
        %932 = vmatpush1.msra.mxu0 0.0
        %933 = vmatprep.subr.mxu0 0.0
        %934 = vmatpush1.msra.mxu0 0.0
        %935 = vmatprep.subr.mxu0 0.0
        %936 = vmatpush1.msra.mxu0 0.0
        %937 = vmatprep.subr.mxu0 0.0
        %938 = vmatpush1.msra.mxu0 0.0
        %939 = vmatprep.subr.mxu0 0.0
        %940 = vmatpush1.msra.mxu0 0.0
        %941 = vmatprep.subr.mxu0 0.0
        %942 = vmatpush1.msra.mxu0 0.0
        %943 = vmatprep.subr.mxu0 0.0
        %944 = vmatpush1.msra.mxu0 0.0
        %945 = vmatprep.subr.mxu0 0.0
        %946 = vmatpush1.msra.mxu0 0.0
        %947 = vmatprep.subr.mxu0 0.0
        %948 = vmatpush1.msra.mxu0 0.0
        %949 = vmatprep.subr.mxu0 0.0
        %950 = vmatpush1.msra.mxu0 0.0
        %951 = vmatprep.subr.mxu0 0.0
        %952 = vmatpush1.msra.mxu0 0.0
        %953 = vmatprep.subr.mxu0 0.0
        %954 = vmatpush1.msra.mxu0 0.0
        %955 = vmatprep.mubr.f32.mxu0 0.0
        %v956 = vand.u32 %v677, 4294901760
        %v957 = vsub.f32 %v677, %v956
        %958 = vmatmul.mubr.f32.gmra.mrb[0].mxu0 %v957
        %v959 = vpop.f32.mrb[0].mxu0
        %v960 = vadd.f32 %v871, %v959
        %v961 = vpop.f32.mrb[0].mxu0
        %v962 = vadd.f32 %v873, %v961
        %963 = vdwg.mxu0
        %v964 = vand.u32 %v660, 4294901760
        %965 = vmatprep.subr.mxu0 %v964
        %v966 = vand.u32 %v659, 4294901760
        %967 = vmatpush1.msra.mxu0 %v966
        %v968 = vand.u32 %v662, 4294901760
        %969 = vmatprep.subr.mxu0 %v968
        %v970 = vand.u32 %v661, 4294901760
        %971 = vmatpush1.msra.mxu0 %v970
        %v972 = vand.u32 %v664, 4294901760
        %973 = vmatprep.subr.mxu0 %v972
        %v974 = vand.u32 %v663, 4294901760
        %975 = vmatpush1.msra.mxu0 %v974
        %v976 = vand.u32 %v666, 4294901760
        %977 = vmatprep.subr.mxu0 %v976
        %v978 = vand.u32 %v665, 4294901760
        %979 = vmatpush1.msra.mxu0 %v978
        %980 = vmatprep.subr.mxu0 0.0
        %981 = vmatpush1.msra.mxu0 0.0
        %982 = vmatprep.subr.mxu0 0.0
        %983 = vmatpush1.msra.mxu0 0.0
        %984 = vmatprep.subr.mxu0 0.0
        %985 = vmatpush1.msra.mxu0 0.0
        %986 = vmatprep.subr.mxu0 0.0
        %987 = vmatpush1.msra.mxu0 0.0
        %988 = vmatprep.subr.mxu0 0.0
        %989 = vmatpush1.msra.mxu0 0.0
        %990 = vmatprep.subr.mxu0 0.0
        %991 = vmatpush1.msra.mxu0 0.0
        %992 = vmatprep.subr.mxu0 0.0
        %993 = vmatpush1.msra.mxu0 0.0
        %994 = vmatprep.subr.mxu0 0.0
        %995 = vmatpush1.msra.mxu0 0.0
        %996 = vmatprep.subr.mxu0 0.0
        %997 = vmatpush1.msra.mxu0 0.0
        %998 = vmatprep.subr.mxu0 0.0
        %999 = vmatpush1.msra.mxu0 0.0
        %1000 = vmatprep.subr.mxu0 0.0
        %1001 = vmatpush1.msra.mxu0 0.0
        %1002 = vmatprep.subr.mxu0 0.0
        %1003 = vmatpush1.msra.mxu0 0.0
        %1004 = vmatprep.subr.mxu0 0.0
        %1005 = vmatpush1.msra.mxu0 0.0
        %1006 = vmatprep.subr.mxu0 0.0
        %1007 = vmatpush1.msra.mxu0 0.0
        %1008 = vmatprep.subr.mxu0 0.0
        %1009 = vmatpush1.msra.mxu0 0.0
        %1010 = vmatprep.subr.mxu0 0.0
        %1011 = vmatpush1.msra.mxu0 0.0
        %1012 = vmatprep.subr.mxu0 0.0
        %1013 = vmatpush1.msra.mxu0 0.0
        %1014 = vmatprep.subr.mxu0 0.0
        %1015 = vmatpush1.msra.mxu0 0.0
        %1016 = vmatprep.subr.mxu0 0.0
        %1017 = vmatpush1.msra.mxu0 0.0
        %1018 = vmatprep.subr.mxu0 0.0
        %1019 = vmatpush1.msra.mxu0 0.0
        %1020 = vmatprep.subr.mxu0 0.0
        %1021 = vmatpush1.msra.mxu0 0.0
        %1022 = vmatprep.subr.mxu0 0.0
        %1023 = vmatpush1.msra.mxu0 0.0
        %1024 = vmatprep.subr.mxu0 0.0
        %1025 = vmatpush1.msra.mxu0 0.0
        %1026 = vmatprep.subr.mxu0 0.0
        %1027 = vmatpush1.msra.mxu0 0.0
        %1028 = vmatprep.subr.mxu0 0.0
        %1029 = vmatpush1.msra.mxu0 0.0
        %1030 = vmatprep.subr.mxu0 0.0
        %1031 = vmatpush1.msra.mxu0 0.0
        %1032 = vmatprep.subr.mxu0 0.0
        %1033 = vmatpush1.msra.mxu0 0.0
        %1034 = vmatprep.subr.mxu0 0.0
        %1035 = vmatpush1.msra.mxu0 0.0
        %1036 = vmatprep.mubr.f32.mxu0 0.0
        %v1037 = vand.u32 %v677, 4294901760
        %v1038 = vsub.f32 %v677, %v1037
        %v1039 = vand.u32 %v1038, 4294901760
        %1040 = vmatmul.mubr.f32.gmra.mrb[0].mxu0 %v1039
        %v1041 = vpop.f32.mrb[0].mxu0
        %v1042 = vadd.f32 %v960, %v1041
        %v1043 = vpop.f32.mrb[0].mxu0
        %v1044 = vadd.f32 %v962, %v1043
        %1045 = vdwg.mxu0
        %v1046 = vand.u32 %v660, 4294901760
        %v1047 = vsub.f32 %v660, %v1046
        %v1048 = vand.u32 %v1047, 4294901760
        %1049 = vmatprep.subr.mxu0 %v1048
        %v1050 = vand.u32 %v659, 4294901760
        %v1051 = vsub.f32 %v659, %v1050
        %v1052 = vand.u32 %v1051, 4294901760
        %1053 = vmatpush1.msra.mxu0 %v1052
        %v1054 = vand.u32 %v662, 4294901760
        %v1055 = vsub.f32 %v662, %v1054
        %v1056 = vand.u32 %v1055, 4294901760
        %1057 = vmatprep.subr.mxu0 %v1056
        %v1058 = vand.u32 %v661, 4294901760
        %v1059 = vsub.f32 %v661, %v1058
        %v1060 = vand.u32 %v1059, 4294901760
        %1061 = vmatpush1.msra.mxu0 %v1060
        %v1062 = vand.u32 %v664, 4294901760
        %v1063 = vsub.f32 %v664, %v1062
        %v1064 = vand.u32 %v1063, 4294901760
        %1065 = vmatprep.subr.mxu0 %v1064
        %v1066 = vand.u32 %v663, 4294901760
        %v1067 = vsub.f32 %v663, %v1066
        %v1068 = vand.u32 %v1067, 4294901760
        %1069 = vmatpush1.msra.mxu0 %v1068
        %v1070 = vand.u32 %v666, 4294901760
        %v1071 = vsub.f32 %v666, %v1070
        %v1072 = vand.u32 %v1071, 4294901760
        %1073 = vmatprep.subr.mxu0 %v1072
        %v1074 = vand.u32 %v665, 4294901760
        %v1075 = vsub.f32 %v665, %v1074
        %v1076 = vand.u32 %v1075, 4294901760
        %1077 = vmatpush1.msra.mxu0 %v1076
        %1078 = vmatprep.subr.mxu0 0.0
        %1079 = vmatpush1.msra.mxu0 0.0
        %1080 = vmatprep.subr.mxu0 0.0
        %1081 = vmatpush1.msra.mxu0 0.0
        %1082 = vmatprep.subr.mxu0 0.0
        %1083 = vmatpush1.msra.mxu0 0.0
        %1084 = vmatprep.subr.mxu0 0.0
        %1085 = vmatpush1.msra.mxu0 0.0
        %1086 = vmatprep.subr.mxu0 0.0
        %1087 = vmatpush1.msra.mxu0 0.0
        %1088 = vmatprep.subr.mxu0 0.0
        %1089 = vmatpush1.msra.mxu0 0.0
        %1090 = vmatprep.subr.mxu0 0.0
        %1091 = vmatpush1.msra.mxu0 0.0
        %1092 = vmatprep.subr.mxu0 0.0
        %1093 = vmatpush1.msra.mxu0 0.0
        %1094 = vmatprep.subr.mxu0 0.0
        %1095 = vmatpush1.msra.mxu0 0.0
        %1096 = vmatprep.subr.mxu0 0.0
        %1097 = vmatpush1.msra.mxu0 0.0
        %1098 = vmatprep.subr.mxu0 0.0
        %1099 = vmatpush1.msra.mxu0 0.0
        %1100 = vmatprep.subr.mxu0 0.0
        %1101 = vmatpush1.msra.mxu0 0.0
        %1102 = vmatprep.subr.mxu0 0.0
        %1103 = vmatpush1.msra.mxu0 0.0
        %1104 = vmatprep.subr.mxu0 0.0
        %1105 = vmatpush1.msra.mxu0 0.0
        %1106 = vmatprep.subr.mxu0 0.0
        %1107 = vmatpush1.msra.mxu0 0.0
        %1108 = vmatprep.subr.mxu0 0.0
        %1109 = vmatpush1.msra.mxu0 0.0
        %1110 = vmatprep.subr.mxu0 0.0
        %1111 = vmatpush1.msra.mxu0 0.0
        %1112 = vmatprep.subr.mxu0 0.0
        %1113 = vmatpush1.msra.mxu0 0.0
        %1114 = vmatprep.subr.mxu0 0.0
        %1115 = vmatpush1.msra.mxu0 0.0
        %1116 = vmatprep.subr.mxu0 0.0
        %1117 = vmatpush1.msra.mxu0 0.0
        %1118 = vmatprep.subr.mxu0 0.0
        %1119 = vmatpush1.msra.mxu0 0.0
        %1120 = vmatprep.subr.mxu0 0.0
        %1121 = vmatpush1.msra.mxu0 0.0
        %1122 = vmatprep.subr.mxu0 0.0
        %1123 = vmatpush1.msra.mxu0 0.0
        %1124 = vmatprep.subr.mxu0 0.0
        %1125 = vmatpush1.msra.mxu0 0.0
        %1126 = vmatprep.subr.mxu0 0.0
        %1127 = vmatpush1.msra.mxu0 0.0
        %1128 = vmatprep.subr.mxu0 0.0
        %1129 = vmatpush1.msra.mxu0 0.0
        %1130 = vmatprep.subr.mxu0 0.0
        %1131 = vmatpush1.msra.mxu0 0.0
        %1132 = vmatprep.subr.mxu0 0.0
        %1133 = vmatpush1.msra.mxu0 0.0
        %1134 = vmatprep.mubr.f32.mxu0 0.0
        %v1135 = vand.u32 %v677, 4294901760
        %1136 = vmatmul.mubr.f32.gmra.mrb[0].mxu0 %v1135
        %v1137 = vpop.f32.mrb[0].mxu0
        %v1138 = vadd.f32 %v1042, %v1137
        %v1139 = vpop.f32.mrb[0].mxu0
        %v1140 = vadd.f32 %v1044, %v1139
        %1141 = vdwg.mxu0
        %v1142 = vand.u32 %v660, 4294901760
        %1143 = vmatprep.subr.mxu0 %v1142
        %v1144 = vand.u32 %v659, 4294901760
        %1145 = vmatpush1.msra.mxu0 %v1144
        %v1146 = vand.u32 %v662, 4294901760
        %1147 = vmatprep.subr.mxu0 %v1146
        %v1148 = vand.u32 %v661, 4294901760
        %1149 = vmatpush1.msra.mxu0 %v1148
        %v1150 = vand.u32 %v664, 4294901760
        %1151 = vmatprep.subr.mxu0 %v1150
        %v1152 = vand.u32 %v663, 4294901760
        %1153 = vmatpush1.msra.mxu0 %v1152
        %v1154 = vand.u32 %v666, 4294901760
        %1155 = vmatprep.subr.mxu0 %v1154
        %v1156 = vand.u32 %v665, 4294901760
        %1157 = vmatpush1.msra.mxu0 %v1156
        %1158 = vmatprep.subr.mxu0 0.0
        %1159 = vmatpush1.msra.mxu0 0.0
        %1160 = vmatprep.subr.mxu0 0.0
        %1161 = vmatpush1.msra.mxu0 0.0
        %1162 = vmatprep.subr.mxu0 0.0
        %1163 = vmatpush1.msra.mxu0 0.0
        %1164 = vmatprep.subr.mxu0 0.0
        %1165 = vmatpush1.msra.mxu0 0.0
        %1166 = vmatprep.subr.mxu0 0.0
        %1167 = vmatpush1.msra.mxu0 0.0
        %1168 = vmatprep.subr.mxu0 0.0
        %1169 = vmatpush1.msra.mxu0 0.0
        %1170 = vmatprep.subr.mxu0 0.0
        %1171 = vmatpush1.msra.mxu0 0.0
        %1172 = vmatprep.subr.mxu0 0.0
        %1173 = vmatpush1.msra.mxu0 0.0
        %1174 = vmatprep.subr.mxu0 0.0
        %1175 = vmatpush1.msra.mxu0 0.0
        %1176 = vmatprep.subr.mxu0 0.0
        %1177 = vmatpush1.msra.mxu0 0.0
        %1178 = vmatprep.subr.mxu0 0.0
        %1179 = vmatpush1.msra.mxu0 0.0
        %1180 = vmatprep.subr.mxu0 0.0
        %1181 = vmatpush1.msra.mxu0 0.0
        %1182 = vmatprep.subr.mxu0 0.0
        %1183 = vmatpush1.msra.mxu0 0.0
        %1184 = vmatprep.subr.mxu0 0.0
        %1185 = vmatpush1.msra.mxu0 0.0
        %1186 = vmatprep.subr.mxu0 0.0
        %1187 = vmatpush1.msra.mxu0 0.0
        %1188 = vmatprep.subr.mxu0 0.0
        %1189 = vmatpush1.msra.mxu0 0.0
        %1190 = vmatprep.subr.mxu0 0.0
        %1191 = vmatpush1.msra.mxu0 0.0
        %1192 = vmatprep.subr.mxu0 0.0
        %1193 = vmatpush1.msra.mxu0 0.0
        %1194 = vmatprep.subr.mxu0 0.0
        %1195 = vmatpush1.msra.mxu0 0.0
        %1196 = vmatprep.subr.mxu0 0.0
        %1197 = vmatpush1.msra.mxu0 0.0
        %1198 = vmatprep.subr.mxu0 0.0
        %1199 = vmatpush1.msra.mxu0 0.0
        %1200 = vmatprep.subr.mxu0 0.0
        %1201 = vmatpush1.msra.mxu0 0.0
        %1202 = vmatprep.subr.mxu0 0.0
        %1203 = vmatpush1.msra.mxu0 0.0
        %1204 = vmatprep.subr.mxu0 0.0
        %1205 = vmatpush1.msra.mxu0 0.0
        %1206 = vmatprep.subr.mxu0 0.0
        %1207 = vmatpush1.msra.mxu0 0.0
        %1208 = vmatprep.subr.mxu0 0.0
        %1209 = vmatpush1.msra.mxu0 0.0
        %1210 = vmatprep.subr.mxu0 0.0
        %1211 = vmatpush1.msra.mxu0 0.0
        %1212 = vmatprep.subr.mxu0 0.0
        %1213 = vmatpush1.msra.mxu0 0.0
        %1214 = vmatprep.mubr.f32.mxu0 0.0
        %v1215 = vand.u32 %v677, 4294901760
        %1216 = vmatmul.mubr.f32.gmra.mrb[0].mxu0 %v1215
        %v1217 = vpop.f32.mrb[0].mxu0
        %v1218 = vadd.f32 %v1138, %v1217
        %v1219 = vpop.f32.mrb[0].mxu0
        %v1220 = vadd.f32 %v1140, %v1219
        %1221 = vdwg.mxu0
        %v1222 = vmul.f32 %v1218, %v537
        %v1223 = vmul.f32 %v1220, %v538
        %v1224 = vadd.f32 %v1222, 0.0
        %v1225 = vadd.f32 %v1223, 0.0
        %v1226 = vld [vmem:[%s4 + $0x2] sm:$0x3]
        %1227 = vrot.lane.b32.xlu0 %v609, 16
        %v1228 = vpop.permute.xlu0 %1227
        %1229 = vrot.lane.b32.xlu0 %v610, 16
        %v1230 = vpop.permute.xlu0 %1229
        %1231 = vrot.lane.b32.xlu0 %v611, 16
        %v1232 = vpop.permute.xlu0 %1231
        %1233 = vrot.lane.b32.xlu0 %v612, 16
        %v1234 = vpop.permute.xlu0 %1233
        %1235 = vrot.lane.b32.xlu0 %v613, 16
        %v1236 = vpop.permute.xlu0 %1235
        %1237 = vrot.lane.b32.xlu0 %v614, 16
        %v1238 = vpop.permute.xlu0 %1237
        %1239 = vrot.lane.b32.xlu0 %v615, 16
        %v1240 = vpop.permute.xlu0 %1239
        %1241 = vrot.lane.b32.xlu0 %v616, 16
        %v1242 = vpop.permute.xlu0 %1241
        %1243 = vrot.lane.b32.xlu0 %v617, 16
        %v1244 = vpop.permute.xlu0 %1243
        %1245 = vrot.lane.b32.xlu0 %v618, 16
        %v1246 = vpop.permute.xlu0 %1245
        %1247 = vrot.lane.b32.xlu0 %v619, 16
        %v1248 = vpop.permute.xlu0 %1247
        %1249 = vrot.lane.b32.xlu0 %v620, 16
        %v1250 = vpop.permute.xlu0 %1249
        %vm1251 = vcmask 130048
        %v1252 = vsel %vm1251, %v1228, %v1230
        %v1253 = vsel %vm1251, %v1230, %v1232
        %v1254 = vsel %vm1251, %v1234, %v1236
        %v1255 = vsel %vm1251, %v1236, %v1238
        %v1256 = vsel %vm1251, %v1240, %v1242
        %v1257 = vsel %vm1251, %v1242, %v1244
        %v1258 = vsel %vm1251, %v1246, %v1248
        %v1259 = vsel %vm1251, %v1248, %v1250
        %v1269 = vsel %vm675, %v1226, 0
        %v1271 = vand.u32 %v1253, 4294901760
        %1272 = vmatprep.subr.mxu0 %v1271
        %v1273 = vand.u32 %v1252, 4294901760
        %1274 = vmatpush1.msra.mxu0 %v1273
        %v1275 = vand.u32 %v1255, 4294901760
        %1276 = vmatprep.subr.mxu0 %v1275
        %v1277 = vand.u32 %v1254, 4294901760
        %1278 = vmatpush1.msra.mxu0 %v1277
        %v1279 = vand.u32 %v1257, 4294901760
        %1280 = vmatprep.subr.mxu0 %v1279
        %v1281 = vand.u32 %v1256, 4294901760
        %1282 = vmatpush1.msra.mxu0 %v1281
        %v1283 = vand.u32 %v1259, 4294901760
        %1284 = vmatprep.subr.mxu0 %v1283
        %v1285 = vand.u32 %v1258, 4294901760
        %1286 = vmatpush1.msra.mxu0 %v1285
        %1287 = vmatprep.subr.mxu0 0.0
        %1288 = vmatpush1.msra.mxu0 0.0
        %1289 = vmatprep.subr.mxu0 0.0
        %1290 = vmatpush1.msra.mxu0 0.0
        %1291 = vmatprep.subr.mxu0 0.0
        %1292 = vmatpush1.msra.mxu0 0.0
        %1293 = vmatprep.subr.mxu0 0.0
        %1294 = vmatpush1.msra.mxu0 0.0
        %1295 = vmatprep.subr.mxu0 0.0
        %1296 = vmatpush1.msra.mxu0 0.0
        %1297 = vmatprep.subr.mxu0 0.0
        %1298 = vmatpush1.msra.mxu0 0.0
        %1299 = vmatprep.subr.mxu0 0.0
        %1300 = vmatpush1.msra.mxu0 0.0
        %1301 = vmatprep.subr.mxu0 0.0
        %1302 = vmatpush1.msra.mxu0 0.0
        %1303 = vmatprep.subr.mxu0 0.0
        %1304 = vmatpush1.msra.mxu0 0.0
        %1305 = vmatprep.subr.mxu0 0.0
        %1306 = vmatpush1.msra.mxu0 0.0
        %1307 = vmatprep.subr.mxu0 0.0
        %1308 = vmatpush1.msra.mxu0 0.0
        %1309 = vmatprep.subr.mxu0 0.0
        %1310 = vmatpush1.msra.mxu0 0.0
        %1311 = vmatprep.subr.mxu0 0.0
        %1312 = vmatpush1.msra.mxu0 0.0
        %1313 = vmatprep.subr.mxu0 0.0
        %1314 = vmatpush1.msra.mxu0 0.0
        %1315 = vmatprep.subr.mxu0 0.0
        %1316 = vmatpush1.msra.mxu0 0.0
        %1317 = vmatprep.subr.mxu0 0.0
        %1318 = vmatpush1.msra.mxu0 0.0
        %1319 = vmatprep.subr.mxu0 0.0
        %1320 = vmatpush1.msra.mxu0 0.0
        %1321 = vmatprep.subr.mxu0 0.0
        %1322 = vmatpush1.msra.mxu0 0.0
        %1323 = vmatprep.subr.mxu0 0.0
        %1324 = vmatpush1.msra.mxu0 0.0
        %1325 = vmatprep.subr.mxu0 0.0
        %1326 = vmatpush1.msra.mxu0 0.0
        %1327 = vmatprep.subr.mxu0 0.0
        %1328 = vmatpush1.msra.mxu0 0.0
        %1329 = vmatprep.subr.mxu0 0.0
        %1330 = vmatpush1.msra.mxu0 0.0
        %1331 = vmatprep.subr.mxu0 0.0
        %1332 = vmatpush1.msra.mxu0 0.0
        %1333 = vmatprep.subr.mxu0 0.0
        %1334 = vmatpush1.msra.mxu0 0.0
        %1335 = vmatprep.subr.mxu0 0.0
        %1336 = vmatpush1.msra.mxu0 0.0
        %1337 = vmatprep.subr.mxu0 0.0
        %1338 = vmatpush1.msra.mxu0 0.0
        %1339 = vmatprep.subr.mxu0 0.0
        %1340 = vmatpush1.msra.mxu0 0.0
        %1341 = vmatprep.subr.mxu0 0.0
        %1342 = vmatpush1.msra.mxu0 0.0
        %1343 = vmatprep.mubr.f32.mxu0 0.0
        %v1344 = vand.u32 %v1269, 4294901760
        %v1345 = vsub.f32 %v1269, %v1344
        %v1346 = vand.u32 %v1345, 4294901760
        %v1347 = vsub.f32 %v1345, %v1346
        %v1348 = vand.u32 %v1347, 4294901760
        %1349 = vmatmul.mubr.f32.gmra.mrb[0].mxu0 %v1348
        %v1350 = vpop.f32.mrb[0].mxu0
        %v1351 = vadd.f32 0.0, %v1350
        %v1352 = vpop.f32.mrb[0].mxu0
        %v1353 = vadd.f32 0.0, %v1352
        %1354 = vdwg.mxu0
        %v1355 = vand.u32 %v1253, 4294901760
        %v1356 = vsub.f32 %v1253, %v1355
        %v1357 = vand.u32 %v1356, 4294901760
        %v1358 = vsub.f32 %v1356, %v1357
        %v1359 = vand.u32 %v1358, 4294901760
        %1360 = vmatprep.subr.mxu0 %v1359
        %v1361 = vand.u32 %v1252, 4294901760
        %v1362 = vsub.f32 %v1252, %v1361
        %v1363 = vand.u32 %v1362, 4294901760
        %v1364 = vsub.f32 %v1362, %v1363
        %v1365 = vand.u32 %v1364, 4294901760
        %1366 = vmatpush1.msra.mxu0 %v1365
        %v1367 = vand.u32 %v1255, 4294901760
        %v1368 = vsub.f32 %v1255, %v1367
        %v1369 = vand.u32 %v1368, 4294901760
        %v1370 = vsub.f32 %v1368, %v1369
        %v1371 = vand.u32 %v1370, 4294901760
        %1372 = vmatprep.subr.mxu0 %v1371
        %v1373 = vand.u32 %v1254, 4294901760
        %v1374 = vsub.f32 %v1254, %v1373
        %v1375 = vand.u32 %v1374, 4294901760
        %v1376 = vsub.f32 %v1374, %v1375
        %v1377 = vand.u32 %v1376, 4294901760
        %1378 = vmatpush1.msra.mxu0 %v1377
        %v1379 = vand.u32 %v1257, 4294901760
        %v1380 = vsub.f32 %v1257, %v1379
        %v1381 = vand.u32 %v1380, 4294901760
        %v1382 = vsub.f32 %v1380, %v1381
        %v1383 = vand.u32 %v1382, 4294901760
        %1384 = vmatprep.subr.mxu0 %v1383
        %v1385 = vand.u32 %v1256, 4294901760
        %v1386 = vsub.f32 %v1256, %v1385
        %v1387 = vand.u32 %v1386, 4294901760
        %v1388 = vsub.f32 %v1386, %v1387
        %v1389 = vand.u32 %v1388, 4294901760
        %1390 = vmatpush1.msra.mxu0 %v1389
        %v1391 = vand.u32 %v1259, 4294901760
        %v1392 = vsub.f32 %v1259, %v1391
        %v1393 = vand.u32 %v1392, 4294901760
        %v1394 = vsub.f32 %v1392, %v1393
        %v1395 = vand.u32 %v1394, 4294901760
        %1396 = vmatprep.subr.mxu0 %v1395
        %v1397 = vand.u32 %v1258, 4294901760
        %v1398 = vsub.f32 %v1258, %v1397
        %v1399 = vand.u32 %v1398, 4294901760
        %v1400 = vsub.f32 %v1398, %v1399
        %v1401 = vand.u32 %v1400, 4294901760
        %1402 = vmatpush1.msra.mxu0 %v1401
        %1403 = vmatprep.subr.mxu0 0.0
        %1404 = vmatpush1.msra.mxu0 0.0
        %1405 = vmatprep.subr.mxu0 0.0
        %1406 = vmatpush1.msra.mxu0 0.0
        %1407 = vmatprep.subr.mxu0 0.0
        %1408 = vmatpush1.msra.mxu0 0.0
        %1409 = vmatprep.subr.mxu0 0.0
        %1410 = vmatpush1.msra.mxu0 0.0
        %1411 = vmatprep.subr.mxu0 0.0
        %1412 = vmatpush1.msra.mxu0 0.0
        %1413 = vmatprep.subr.mxu0 0.0
        %1414 = vmatpush1.msra.mxu0 0.0
        %1415 = vmatprep.subr.mxu0 0.0
        %1416 = vmatpush1.msra.mxu0 0.0
        %1417 = vmatprep.subr.mxu0 0.0
        %1418 = vmatpush1.msra.mxu0 0.0
        %1419 = vmatprep.subr.mxu0 0.0
        %1420 = vmatpush1.msra.mxu0 0.0
        %1421 = vmatprep.subr.mxu0 0.0
        %1422 = vmatpush1.msra.mxu0 0.0
        %1423 = vmatprep.subr.mxu0 0.0
        %1424 = vmatpush1.msra.mxu0 0.0
        %1425 = vmatprep.subr.mxu0 0.0
        %1426 = vmatpush1.msra.mxu0 0.0
        %1427 = vmatprep.subr.mxu0 0.0
        %1428 = vmatpush1.msra.mxu0 0.0
        %1429 = vmatprep.subr.mxu0 0.0
        %1430 = vmatpush1.msra.mxu0 0.0
        %1431 = vmatprep.subr.mxu0 0.0
        %1432 = vmatpush1.msra.mxu0 0.0
        %1433 = vmatprep.subr.mxu0 0.0
        %1434 = vmatpush1.msra.mxu0 0.0
        %1435 = vmatprep.subr.mxu0 0.0
        %1436 = vmatpush1.msra.mxu0 0.0
        %1437 = vmatprep.subr.mxu0 0.0
        %1438 = vmatpush1.msra.mxu0 0.0
        %1439 = vmatprep.subr.mxu0 0.0
        %1440 = vmatpush1.msra.mxu0 0.0
        %1441 = vmatprep.subr.mxu0 0.0
        %1442 = vmatpush1.msra.mxu0 0.0
        %1443 = vmatprep.subr.mxu0 0.0
        %1444 = vmatpush1.msra.mxu0 0.0
        %1445 = vmatprep.subr.mxu0 0.0
        %1446 = vmatpush1.msra.mxu0 0.0
        %1447 = vmatprep.subr.mxu0 0.0
        %1448 = vmatpush1.msra.mxu0 0.0
        %1449 = vmatprep.subr.mxu0 0.0
        %1450 = vmatpush1.msra.mxu0 0.0
        %1451 = vmatprep.subr.mxu0 0.0
        %1452 = vmatpush1.msra.mxu0 0.0
        %1453 = vmatprep.subr.mxu0 0.0
        %1454 = vmatpush1.msra.mxu0 0.0
        %1455 = vmatprep.subr.mxu0 0.0
        %1456 = vmatpush1.msra.mxu0 0.0
        %1457 = vmatprep.subr.mxu0 0.0
        %1458 = vmatpush1.msra.mxu0 0.0
        %1459 = vmatprep.mubr.f32.mxu0 0.0
        %v1460 = vand.u32 %v1269, 4294901760
        %1461 = vmatmul.mubr.f32.gmra.mrb[0].mxu0 %v1460
        %v1462 = vpop.f32.mrb[0].mxu0
        %v1463 = vadd.f32 %v1351, %v1462
        %v1464 = vpop.f32.mrb[0].mxu0
        %v1465 = vadd.f32 %v1353, %v1464
        %1466 = vdwg.mxu0
        %v1467 = vand.u32 %v1253, 4294901760
        %v1468 = vsub.f32 %v1253, %v1467
        %1469 = vmatprep.subr.mxu0 %v1468
        %v1470 = vand.u32 %v1252, 4294901760
        %v1471 = vsub.f32 %v1252, %v1470
        %1472 = vmatpush1.msra.mxu0 %v1471
        %v1473 = vand.u32 %v1255, 4294901760
        %v1474 = vsub.f32 %v1255, %v1473
        %1475 = vmatprep.subr.mxu0 %v1474
        %v1476 = vand.u32 %v1254, 4294901760
        %v1477 = vsub.f32 %v1254, %v1476
        %1478 = vmatpush1.msra.mxu0 %v1477
        %v1479 = vand.u32 %v1257, 4294901760
        %v1480 = vsub.f32 %v1257, %v1479
        %1481 = vmatprep.subr.mxu0 %v1480
        %v1482 = vand.u32 %v1256, 4294901760
        %v1483 = vsub.f32 %v1256, %v1482
        %1484 = vmatpush1.msra.mxu0 %v1483
        %v1485 = vand.u32 %v1259, 4294901760
        %v1486 = vsub.f32 %v1259, %v1485
        %1487 = vmatprep.subr.mxu0 %v1486
        %v1488 = vand.u32 %v1258, 4294901760
        %v1489 = vsub.f32 %v1258, %v1488
        %1490 = vmatpush1.msra.mxu0 %v1489
        %1491 = vmatprep.subr.mxu0 0.0
        %1492 = vmatpush1.msra.mxu0 0.0
        %1493 = vmatprep.subr.mxu0 0.0
        %1494 = vmatpush1.msra.mxu0 0.0
        %1495 = vmatprep.subr.mxu0 0.0
        %1496 = vmatpush1.msra.mxu0 0.0
        %1497 = vmatprep.subr.mxu0 0.0
        %1498 = vmatpush1.msra.mxu0 0.0
        %1499 = vmatprep.subr.mxu0 0.0
        %1500 = vmatpush1.msra.mxu0 0.0
        %1501 = vmatprep.subr.mxu0 0.0
        %1502 = vmatpush1.msra.mxu0 0.0
        %1503 = vmatprep.subr.mxu0 0.0
        %1504 = vmatpush1.msra.mxu0 0.0
        %1505 = vmatprep.subr.mxu0 0.0
        %1506 = vmatpush1.msra.mxu0 0.0
        %1507 = vmatprep.subr.mxu0 0.0
        %1508 = vmatpush1.msra.mxu0 0.0
        %1509 = vmatprep.subr.mxu0 0.0
        %1510 = vmatpush1.msra.mxu0 0.0
        %1511 = vmatprep.subr.mxu0 0.0
        %1512 = vmatpush1.msra.mxu0 0.0
        %1513 = vmatprep.subr.mxu0 0.0
        %1514 = vmatpush1.msra.mxu0 0.0
        %1515 = vmatprep.subr.mxu0 0.0
        %1516 = vmatpush1.msra.mxu0 0.0
        %1517 = vmatprep.subr.mxu0 0.0
        %1518 = vmatpush1.msra.mxu0 0.0
        %1519 = vmatprep.subr.mxu0 0.0
        %1520 = vmatpush1.msra.mxu0 0.0
        %1521 = vmatprep.subr.mxu0 0.0
        %1522 = vmatpush1.msra.mxu0 0.0
        %1523 = vmatprep.subr.mxu0 0.0
        %1524 = vmatpush1.msra.mxu0 0.0
        %1525 = vmatprep.subr.mxu0 0.0
        %1526 = vmatpush1.msra.mxu0 0.0
        %1527 = vmatprep.subr.mxu0 0.0
        %1528 = vmatpush1.msra.mxu0 0.0
        %1529 = vmatprep.subr.mxu0 0.0
        %1530 = vmatpush1.msra.mxu0 0.0
        %1531 = vmatprep.subr.mxu0 0.0
        %1532 = vmatpush1.msra.mxu0 0.0
        %1533 = vmatprep.subr.mxu0 0.0
        %1534 = vmatpush1.msra.mxu0 0.0
        %1535 = vmatprep.subr.mxu0 0.0
        %1536 = vmatpush1.msra.mxu0 0.0
        %1537 = vmatprep.subr.mxu0 0.0
        %1538 = vmatpush1.msra.mxu0 0.0
        %1539 = vmatprep.subr.mxu0 0.0
        %1540 = vmatpush1.msra.mxu0 0.0
        %1541 = vmatprep.subr.mxu0 0.0
        %1542 = vmatpush1.msra.mxu0 0.0
        %1543 = vmatprep.subr.mxu0 0.0
        %1544 = vmatpush1.msra.mxu0 0.0
        %1545 = vmatprep.subr.mxu0 0.0
        %1546 = vmatpush1.msra.mxu0 0.0
        %1547 = vmatprep.mubr.f32.mxu0 0.0
        %v1548 = vand.u32 %v1269, 4294901760
        %v1549 = vsub.f32 %v1269, %v1548
        %1550 = vmatmul.mubr.f32.gmra.mrb[0].mxu0 %v1549
        %v1551 = vpop.f32.mrb[0].mxu0
        %v1552 = vadd.f32 %v1463, %v1551
        %v1553 = vpop.f32.mrb[0].mxu0
        %v1554 = vadd.f32 %v1465, %v1553
        %1555 = vdwg.mxu0
        %v1556 = vand.u32 %v1253, 4294901760
        %1557 = vmatprep.subr.mxu0 %v1556
        %v1558 = vand.u32 %v1252, 4294901760
        %1559 = vmatpush1.msra.mxu0 %v1558
        %v1560 = vand.u32 %v1255, 4294901760
        %1561 = vmatprep.subr.mxu0 %v1560
        %v1562 = vand.u32 %v1254, 4294901760
        %1563 = vmatpush1.msra.mxu0 %v1562
        %v1564 = vand.u32 %v1257, 4294901760
        %1565 = vmatprep.subr.mxu0 %v1564
        %v1566 = vand.u32 %v1256, 4294901760
        %1567 = vmatpush1.msra.mxu0 %v1566
        %v1568 = vand.u32 %v1259, 4294901760
        %1569 = vmatprep.subr.mxu0 %v1568
        %v1570 = vand.u32 %v1258, 4294901760
        %1571 = vmatpush1.msra.mxu0 %v1570
        %1572 = vmatprep.subr.mxu0 0.0
        %1573 = vmatpush1.msra.mxu0 0.0
        %1574 = vmatprep.subr.mxu0 0.0
        %1575 = vmatpush1.msra.mxu0 0.0
        %1576 = vmatprep.subr.mxu0 0.0
        %1577 = vmatpush1.msra.mxu0 0.0
        %1578 = vmatprep.subr.mxu0 0.0
        %1579 = vmatpush1.msra.mxu0 0.0
        %1580 = vmatprep.subr.mxu0 0.0
        %1581 = vmatpush1.msra.mxu0 0.0
        %1582 = vmatprep.subr.mxu0 0.0
        %1583 = vmatpush1.msra.mxu0 0.0
        %1584 = vmatprep.subr.mxu0 0.0
        %1585 = vmatpush1.msra.mxu0 0.0
        %1586 = vmatprep.subr.mxu0 0.0
        %1587 = vmatpush1.msra.mxu0 0.0
        %1588 = vmatprep.subr.mxu0 0.0
        %1589 = vmatpush1.msra.mxu0 0.0
        %1590 = vmatprep.subr.mxu0 0.0
        %1591 = vmatpush1.msra.mxu0 0.0
        %1592 = vmatprep.subr.mxu0 0.0
        %1593 = vmatpush1.msra.mxu0 0.0
        %1594 = vmatprep.subr.mxu0 0.0
        %1595 = vmatpush1.msra.mxu0 0.0
        %1596 = vmatprep.subr.mxu0 0.0
        %1597 = vmatpush1.msra.mxu0 0.0
        %1598 = vmatprep.subr.mxu0 0.0
        %1599 = vmatpush1.msra.mxu0 0.0
        %1600 = vmatprep.subr.mxu0 0.0
        %1601 = vmatpush1.msra.mxu0 0.0
        %1602 = vmatprep.subr.mxu0 0.0
        %1603 = vmatpush1.msra.mxu0 0.0
        %1604 = vmatprep.subr.mxu0 0.0
        %1605 = vmatpush1.msra.mxu0 0.0
        %1606 = vmatprep.subr.mxu0 0.0
        %1607 = vmatpush1.msra.mxu0 0.0
        %1608 = vmatprep.subr.mxu0 0.0
        %1609 = vmatpush1.msra.mxu0 0.0
        %1610 = vmatprep.subr.mxu0 0.0
        %1611 = vmatpush1.msra.mxu0 0.0
        %1612 = vmatprep.subr.mxu0 0.0
        %1613 = vmatpush1.msra.mxu0 0.0
        %1614 = vmatprep.subr.mxu0 0.0
        %1615 = vmatpush1.msra.mxu0 0.0
        %1616 = vmatprep.subr.mxu0 0.0
        %1617 = vmatpush1.msra.mxu0 0.0
        %1618 = vmatprep.subr.mxu0 0.0
        %1619 = vmatpush1.msra.mxu0 0.0
        %1620 = vmatprep.subr.mxu0 0.0
        %1621 = vmatpush1.msra.mxu0 0.0
        %1622 = vmatprep.subr.mxu0 0.0
        %1623 = vmatpush1.msra.mxu0 0.0
        %1624 = vmatprep.subr.mxu0 0.0
        %1625 = vmatpush1.msra.mxu0 0.0
        %1626 = vmatprep.subr.mxu0 0.0
        %1627 = vmatpush1.msra.mxu0 0.0
        %1628 = vmatprep.mubr.f32.mxu0 0.0
        %v1629 = vand.u32 %v1269, 4294901760
        %v1630 = vsub.f32 %v1269, %v1629
        %v1631 = vand.u32 %v1630, 4294901760
        %1632 = vmatmul.mubr.f32.gmra.mrb[0].mxu0 %v1631
        %v1633 = vpop.f32.mrb[0].mxu0
        %v1634 = vadd.f32 %v1552, %v1633
        %v1635 = vpop.f32.mrb[0].mxu0
        %v1636 = vadd.f32 %v1554, %v1635
        %1637 = vdwg.mxu0
        %v1638 = vand.u32 %v1253, 4294901760
        %v1639 = vsub.f32 %v1253, %v1638
        %v1640 = vand.u32 %v1639, 4294901760
        %1641 = vmatprep.subr.mxu0 %v1640
        %v1642 = vand.u32 %v1252, 4294901760
        %v1643 = vsub.f32 %v1252, %v1642
        %v1644 = vand.u32 %v1643, 4294901760
        %1645 = vmatpush1.msra.mxu0 %v1644
        %v1646 = vand.u32 %v1255, 4294901760
        %v1647 = vsub.f32 %v1255, %v1646
        %v1648 = vand.u32 %v1647, 4294901760
        %1649 = vmatprep.subr.mxu0 %v1648
        %v1650 = vand.u32 %v1254, 4294901760
        %v1651 = vsub.f32 %v1254, %v1650
        %v1652 = vand.u32 %v1651, 4294901760
        %1653 = vmatpush1.msra.mxu0 %v1652
        %v1654 = vand.u32 %v1257, 4294901760
        %v1655 = vsub.f32 %v1257, %v1654
        %v1656 = vand.u32 %v1655, 4294901760
        %1657 = vmatprep.subr.mxu0 %v1656
        %v1658 = vand.u32 %v1256, 4294901760
        %v1659 = vsub.f32 %v1256, %v1658
        %v1660 = vand.u32 %v1659, 4294901760
        %1661 = vmatpush1.msra.mxu0 %v1660
        %v1662 = vand.u32 %v1259, 4294901760
        %v1663 = vsub.f32 %v1259, %v1662
        %v1664 = vand.u32 %v1663, 4294901760
        %1665 = vmatprep.subr.mxu0 %v1664
        %v1666 = vand.u32 %v1258, 4294901760
        %v1667 = vsub.f32 %v1258, %v1666
        %v1668 = vand.u32 %v1667, 4294901760
        %1669 = vmatpush1.msra.mxu0 %v1668
        %1670 = vmatprep.subr.mxu0 0.0
        %1671 = vmatpush1.msra.mxu0 0.0
        %1672 = vmatprep.subr.mxu0 0.0
        %1673 = vmatpush1.msra.mxu0 0.0
        %1674 = vmatprep.subr.mxu0 0.0
        %1675 = vmatpush1.msra.mxu0 0.0
        %1676 = vmatprep.subr.mxu0 0.0
        %1677 = vmatpush1.msra.mxu0 0.0
        %1678 = vmatprep.subr.mxu0 0.0
        %1679 = vmatpush1.msra.mxu0 0.0
        %1680 = vmatprep.subr.mxu0 0.0
        %1681 = vmatpush1.msra.mxu0 0.0
        %1682 = vmatprep.subr.mxu0 0.0
        %1683 = vmatpush1.msra.mxu0 0.0
        %1684 = vmatprep.subr.mxu0 0.0
        %1685 = vmatpush1.msra.mxu0 0.0
        %1686 = vmatprep.subr.mxu0 0.0
        %1687 = vmatpush1.msra.mxu0 0.0
        %1688 = vmatprep.subr.mxu0 0.0
        %1689 = vmatpush1.msra.mxu0 0.0
        %1690 = vmatprep.subr.mxu0 0.0
        %1691 = vmatpush1.msra.mxu0 0.0
        %1692 = vmatprep.subr.mxu0 0.0
        %1693 = vmatpush1.msra.mxu0 0.0
        %1694 = vmatprep.subr.mxu0 0.0
        %1695 = vmatpush1.msra.mxu0 0.0
        %1696 = vmatprep.subr.mxu0 0.0
        %1697 = vmatpush1.msra.mxu0 0.0
        %1698 = vmatprep.subr.mxu0 0.0
        %1699 = vmatpush1.msra.mxu0 0.0
        %1700 = vmatprep.subr.mxu0 0.0
        %1701 = vmatpush1.msra.mxu0 0.0
        %1702 = vmatprep.subr.mxu0 0.0
        %1703 = vmatpush1.msra.mxu0 0.0
        %1704 = vmatprep.subr.mxu0 0.0
        %1705 = vmatpush1.msra.mxu0 0.0
        %1706 = vmatprep.subr.mxu0 0.0
        %1707 = vmatpush1.msra.mxu0 0.0
        %1708 = vmatprep.subr.mxu0 0.0
        %1709 = vmatpush1.msra.mxu0 0.0
        %1710 = vmatprep.subr.mxu0 0.0
        %1711 = vmatpush1.msra.mxu0 0.0
        %1712 = vmatprep.subr.mxu0 0.0
        %1713 = vmatpush1.msra.mxu0 0.0
        %1714 = vmatprep.subr.mxu0 0.0
        %1715 = vmatpush1.msra.mxu0 0.0
        %1716 = vmatprep.subr.mxu0 0.0
        %1717 = vmatpush1.msra.mxu0 0.0
        %1718 = vmatprep.subr.mxu0 0.0
        %1719 = vmatpush1.msra.mxu0 0.0
        %1720 = vmatprep.subr.mxu0 0.0
        %1721 = vmatpush1.msra.mxu0 0.0
        %1722 = vmatprep.subr.mxu0 0.0
        %1723 = vmatpush1.msra.mxu0 0.0
        %1724 = vmatprep.subr.mxu0 0.0
        %1725 = vmatpush1.msra.mxu0 0.0
        %1726 = vmatprep.mubr.f32.mxu0 0.0
        %v1727 = vand.u32 %v1269, 4294901760
        %1728 = vmatmul.mubr.f32.gmra.mrb[0].mxu0 %v1727
        %v1729 = vpop.f32.mrb[0].mxu0
        %v1730 = vadd.f32 %v1634, %v1729
        %v1731 = vpop.f32.mrb[0].mxu0
        %v1732 = vadd.f32 %v1636, %v1731
        %1733 = vdwg.mxu0
        %v1734 = vand.u32 %v1253, 4294901760
        %1735 = vmatprep.subr.mxu0 %v1734
        %v1736 = vand.u32 %v1252, 4294901760
        %1737 = vmatpush1.msra.mxu0 %v1736
        %v1738 = vand.u32 %v1255, 4294901760
        %1739 = vmatprep.subr.mxu0 %v1738
        %v1740 = vand.u32 %v1254, 4294901760
        %1741 = vmatpush1.msra.mxu0 %v1740
        %v1742 = vand.u32 %v1257, 4294901760
        %1743 = vmatprep.subr.mxu0 %v1742
        %v1744 = vand.u32 %v1256, 4294901760
        %1745 = vmatpush1.msra.mxu0 %v1744
        %v1746 = vand.u32 %v1259, 4294901760
        %1747 = vmatprep.subr.mxu0 %v1746
        %v1748 = vand.u32 %v1258, 4294901760
        %1749 = vmatpush1.msra.mxu0 %v1748
        %1750 = vmatprep.subr.mxu0 0.0
        %1751 = vmatpush1.msra.mxu0 0.0
        %1752 = vmatprep.subr.mxu0 0.0
        %1753 = vmatpush1.msra.mxu0 0.0
        %1754 = vmatprep.subr.mxu0 0.0
        %1755 = vmatpush1.msra.mxu0 0.0
        %1756 = vmatprep.subr.mxu0 0.0
        %1757 = vmatpush1.msra.mxu0 0.0
        %1758 = vmatprep.subr.mxu0 0.0
        %1759 = vmatpush1.msra.mxu0 0.0
        %1760 = vmatprep.subr.mxu0 0.0
        %1761 = vmatpush1.msra.mxu0 0.0
        %1762 = vmatprep.subr.mxu0 0.0
        %1763 = vmatpush1.msra.mxu0 0.0
        %1764 = vmatprep.subr.mxu0 0.0
        %1765 = vmatpush1.msra.mxu0 0.0
        %1766 = vmatprep.subr.mxu0 0.0
        %1767 = vmatpush1.msra.mxu0 0.0
        %1768 = vmatprep.subr.mxu0 0.0
        %1769 = vmatpush1.msra.mxu0 0.0
        %1770 = vmatprep.subr.mxu0 0.0
        %1771 = vmatpush1.msra.mxu0 0.0
        %1772 = vmatprep.subr.mxu0 0.0
        %1773 = vmatpush1.msra.mxu0 0.0
        %1774 = vmatprep.subr.mxu0 0.0
        %1775 = vmatpush1.msra.mxu0 0.0
        %1776 = vmatprep.subr.mxu0 0.0
        %1777 = vmatpush1.msra.mxu0 0.0
        %1778 = vmatprep.subr.mxu0 0.0
        %1779 = vmatpush1.msra.mxu0 0.0
        %1780 = vmatprep.subr.mxu0 0.0
        %1781 = vmatpush1.msra.mxu0 0.0
        %1782 = vmatprep.subr.mxu0 0.0
        %1783 = vmatpush1.msra.mxu0 0.0
        %1784 = vmatprep.subr.mxu0 0.0
        %1785 = vmatpush1.msra.mxu0 0.0
        %1786 = vmatprep.subr.mxu0 0.0
        %1787 = vmatpush1.msra.mxu0 0.0
        %1788 = vmatprep.subr.mxu0 0.0
        %1789 = vmatpush1.msra.mxu0 0.0
        %1790 = vmatprep.subr.mxu0 0.0
        %1791 = vmatpush1.msra.mxu0 0.0
        %1792 = vmatprep.subr.mxu0 0.0
        %1793 = vmatpush1.msra.mxu0 0.0
        %1794 = vmatprep.subr.mxu0 0.0
        %1795 = vmatpush1.msra.mxu0 0.0
        %1796 = vmatprep.subr.mxu0 0.0
        %1797 = vmatpush1.msra.mxu0 0.0
        %1798 = vmatprep.subr.mxu0 0.0
        %1799 = vmatpush1.msra.mxu0 0.0
        %1800 = vmatprep.subr.mxu0 0.0
        %1801 = vmatpush1.msra.mxu0 0.0
        %1802 = vmatprep.subr.mxu0 0.0
        %1803 = vmatpush1.msra.mxu0 0.0
        %1804 = vmatprep.subr.mxu0 0.0
        %1805 = vmatpush1.msra.mxu0 0.0
        %1806 = vmatprep.mubr.f32.mxu0 0.0
        %v1807 = vand.u32 %v1269, 4294901760
        %1808 = vmatmul.mubr.f32.gmra.mrb[0].mxu0 %v1807
        %v1809 = vpop.f32.mrb[0].mxu0
        %v1810 = vadd.f32 %v1730, %v1809
        %v1811 = vpop.f32.mrb[0].mxu0
        %v1812 = vadd.f32 %v1732, %v1811
        %1813 = vdwg.mxu0
        %v1814 = vmul.f32 %v1810, %v547
        %v1815 = vmul.f32 %v1812, %v548
        %v1816 = vadd.f32 %v1224, %v1814
        %v1817 = vadd.f32 %v1225, %v1815
        %v1818 = vld [vmem:[%s4 + $0x4] sm:$0x3]
        %1819 = vrot.lane.b32.xlu0 %v609, 15
        %v1820 = vpop.permute.xlu0 %1819
        %1821 = vrot.lane.b32.xlu0 %v610, 15
        %v1822 = vpop.permute.xlu0 %1821
        %1823 = vrot.lane.b32.xlu0 %v611, 15
        %v1824 = vpop.permute.xlu0 %1823
        %1825 = vrot.lane.b32.xlu0 %v612, 15
        %v1826 = vpop.permute.xlu0 %1825
        %1827 = vrot.lane.b32.xlu0 %v613, 15
        %v1828 = vpop.permute.xlu0 %1827
        %1829 = vrot.lane.b32.xlu0 %v614, 15
        %v1830 = vpop.permute.xlu0 %1829
        %1831 = vrot.lane.b32.xlu0 %v615, 15
        %v1832 = vpop.permute.xlu0 %1831
        %1833 = vrot.lane.b32.xlu0 %v616, 15
        %v1834 = vpop.permute.xlu0 %1833
        %1835 = vrot.lane.b32.xlu0 %v617, 15
        %v1836 = vpop.permute.xlu0 %1835
        %1837 = vrot.lane.b32.xlu0 %v618, 15
        %v1838 = vpop.permute.xlu0 %1837
        %1839 = vrot.lane.b32.xlu0 %v619, 15
        %v1840 = vpop.permute.xlu0 %1839
        %1841 = vrot.lane.b32.xlu0 %v620, 15
        %v1842 = vpop.permute.xlu0 %1841
        %vm1843 = vcmask 121856
        %v1844 = vsel %vm1843, %v1820, %v1822
        %v1845 = vsel %vm1843, %v1822, %v1824
        %v1846 = vsel %vm1843, %v1826, %v1828
        %v1847 = vsel %vm1843, %v1828, %v1830
        %v1848 = vsel %vm1843, %v1832, %v1834
        %v1849 = vsel %vm1843, %v1834, %v1836
        %v1850 = vsel %vm1843, %v1838, %v1840
        %v1851 = vsel %vm1843, %v1840, %v1842
        %v1861 = vsel %vm675, %v1818, 0
        %v1863 = vand.u32 %v1845, 4294901760
        %1864 = vmatprep.subr.mxu0 %v1863
        %v1865 = vand.u32 %v1844, 4294901760
        %1866 = vmatpush1.msra.mxu0 %v1865
        %v1867 = vand.u32 %v1847, 4294901760
        %1868 = vmatprep.subr.mxu0 %v1867
        %v1869 = vand.u32 %v1846, 4294901760
        %1870 = vmatpush1.msra.mxu0 %v1869
        %v1871 = vand.u32 %v1849, 4294901760
        %1872 = vmatprep.subr.mxu0 %v1871
        %v1873 = vand.u32 %v1848, 4294901760
        %1874 = vmatpush1.msra.mxu0 %v1873
        %v1875 = vand.u32 %v1851, 4294901760
        %1876 = vmatprep.subr.mxu0 %v1875
        %v1877 = vand.u32 %v1850, 4294901760
        %1878 = vmatpush1.msra.mxu0 %v1877
        %1879 = vmatprep.subr.mxu0 0.0
        %1880 = vmatpush1.msra.mxu0 0.0
        %1881 = vmatprep.subr.mxu0 0.0
        %1882 = vmatpush1.msra.mxu0 0.0
        %1883 = vmatprep.subr.mxu0 0.0
        %1884 = vmatpush1.msra.mxu0 0.0
        %1885 = vmatprep.subr.mxu0 0.0
        %1886 = vmatpush1.msra.mxu0 0.0
        %1887 = vmatprep.subr.mxu0 0.0
        %1888 = vmatpush1.msra.mxu0 0.0
        %1889 = vmatprep.subr.mxu0 0.0
        %1890 = vmatpush1.msra.mxu0 0.0
        %1891 = vmatprep.subr.mxu0 0.0
        %1892 = vmatpush1.msra.mxu0 0.0
        %1893 = vmatprep.subr.mxu0 0.0
        %1894 = vmatpush1.msra.mxu0 0.0
        %1895 = vmatprep.subr.mxu0 0.0
        %1896 = vmatpush1.msra.mxu0 0.0
        %1897 = vmatprep.subr.mxu0 0.0
        %1898 = vmatpush1.msra.mxu0 0.0
        %1899 = vmatprep.subr.mxu0 0.0
        %1900 = vmatpush1.msra.mxu0 0.0
        %1901 = vmatprep.subr.mxu0 0.0
        %1902 = vmatpush1.msra.mxu0 0.0
        %1903 = vmatprep.subr.mxu0 0.0
        %1904 = vmatpush1.msra.mxu0 0.0
        %1905 = vmatprep.subr.mxu0 0.0
        %1906 = vmatpush1.msra.mxu0 0.0
        %1907 = vmatprep.subr.mxu0 0.0
        %1908 = vmatpush1.msra.mxu0 0.0
        %1909 = vmatprep.subr.mxu0 0.0
        %1910 = vmatpush1.msra.mxu0 0.0
        %1911 = vmatprep.subr.mxu0 0.0
        %1912 = vmatpush1.msra.mxu0 0.0
        %1913 = vmatprep.subr.mxu0 0.0
        %1914 = vmatpush1.msra.mxu0 0.0
        %1915 = vmatprep.subr.mxu0 0.0
        %1916 = vmatpush1.msra.mxu0 0.0
        %1917 = vmatprep.subr.mxu0 0.0
        %1918 = vmatpush1.msra.mxu0 0.0
        %1919 = vmatprep.subr.mxu0 0.0
        %1920 = vmatpush1.msra.mxu0 0.0
        %1921 = vmatprep.subr.mxu0 0.0
        %1922 = vmatpush1.msra.mxu0 0.0
        %1923 = vmatprep.subr.mxu0 0.0
        %1924 = vmatpush1.msra.mxu0 0.0
        %1925 = vmatprep.subr.mxu0 0.0
        %1926 = vmatpush1.msra.mxu0 0.0
        %1927 = vmatprep.subr.mxu0 0.0
        %1928 = vmatpush1.msra.mxu0 0.0
        %1929 = vmatprep.subr.mxu0 0.0
        %1930 = vmatpush1.msra.mxu0 0.0
        %1931 = vmatprep.subr.mxu0 0.0
        %1932 = vmatpush1.msra.mxu0 0.0
        %1933 = vmatprep.subr.mxu0 0.0
        %1934 = vmatpush1.msra.mxu0 0.0
        %1935 = vmatprep.mubr.f32.mxu0 0.0
        %v1936 = vand.u32 %v1861, 4294901760
        %v1937 = vsub.f32 %v1861, %v1936
        %v1938 = vand.u32 %v1937, 4294901760
        %v1939 = vsub.f32 %v1937, %v1938
        %v1940 = vand.u32 %v1939, 4294901760
        %1941 = vmatmul.mubr.f32.gmra.mrb[0].mxu0 %v1940
        %v1942 = vpop.f32.mrb[0].mxu0
        %v1943 = vadd.f32 0.0, %v1942
        %v1944 = vpop.f32.mrb[0].mxu0
        %v1945 = vadd.f32 0.0, %v1944
        %1946 = vdwg.mxu0
        %v1947 = vand.u32 %v1845, 4294901760
        %v1948 = vsub.f32 %v1845, %v1947
        %v1949 = vand.u32 %v1948, 4294901760
        %v1950 = vsub.f32 %v1948, %v1949
        %v1951 = vand.u32 %v1950, 4294901760
        %1952 = vmatprep.subr.mxu0 %v1951
        %v1953 = vand.u32 %v1844, 4294901760
        %v1954 = vsub.f32 %v1844, %v1953
        %v1955 = vand.u32 %v1954, 4294901760
        %v1956 = vsub.f32 %v1954, %v1955
        %v1957 = vand.u32 %v1956, 4294901760
        %1958 = vmatpush1.msra.mxu0 %v1957
        %v1959 = vand.u32 %v1847, 4294901760
        %v1960 = vsub.f32 %v1847, %v1959
        %v1961 = vand.u32 %v1960, 4294901760
        %v1962 = vsub.f32 %v1960, %v1961
        %v1963 = vand.u32 %v1962, 4294901760
        %1964 = vmatprep.subr.mxu0 %v1963
        %v1965 = vand.u32 %v1846, 4294901760
        %v1966 = vsub.f32 %v1846, %v1965
        %v1967 = vand.u32 %v1966, 4294901760
        %v1968 = vsub.f32 %v1966, %v1967
        %v1969 = vand.u32 %v1968, 4294901760
        %1970 = vmatpush1.msra.mxu0 %v1969
        %v1971 = vand.u32 %v1849, 4294901760
        %v1972 = vsub.f32 %v1849, %v1971
        %v1973 = vand.u32 %v1972, 4294901760
        %v1974 = vsub.f32 %v1972, %v1973
        %v1975 = vand.u32 %v1974, 4294901760
        %1976 = vmatprep.subr.mxu0 %v1975
        %v1977 = vand.u32 %v1848, 4294901760
        %v1978 = vsub.f32 %v1848, %v1977
        %v1979 = vand.u32 %v1978, 4294901760
        %v1980 = vsub.f32 %v1978, %v1979
        %v1981 = vand.u32 %v1980, 4294901760
        %1982 = vmatpush1.msra.mxu0 %v1981
        %v1983 = vand.u32 %v1851, 4294901760
        %v1984 = vsub.f32 %v1851, %v1983
        %v1985 = vand.u32 %v1984, 4294901760
        %v1986 = vsub.f32 %v1984, %v1985
        %v1987 = vand.u32 %v1986, 4294901760
        %1988 = vmatprep.subr.mxu0 %v1987
        %v1989 = vand.u32 %v1850, 4294901760
        %v1990 = vsub.f32 %v1850, %v1989
        %v1991 = vand.u32 %v1990, 4294901760
        %v1992 = vsub.f32 %v1990, %v1991
        %v1993 = vand.u32 %v1992, 4294901760
        %1994 = vmatpush1.msra.mxu0 %v1993
        %1995 = vmatprep.subr.mxu0 0.0
        %1996 = vmatpush1.msra.mxu0 0.0
        %1997 = vmatprep.subr.mxu0 0.0
        %1998 = vmatpush1.msra.mxu0 0.0
        %1999 = vmatprep.subr.mxu0 0.0
        %2000 = vmatpush1.msra.mxu0 0.0
        %2001 = vmatprep.subr.mxu0 0.0
        %2002 = vmatpush1.msra.mxu0 0.0
        %2003 = vmatprep.subr.mxu0 0.0
        %2004 = vmatpush1.msra.mxu0 0.0
        %2005 = vmatprep.subr.mxu0 0.0
        %2006 = vmatpush1.msra.mxu0 0.0
        %2007 = vmatprep.subr.mxu0 0.0
        %2008 = vmatpush1.msra.mxu0 0.0
        %2009 = vmatprep.subr.mxu0 0.0
        %2010 = vmatpush1.msra.mxu0 0.0
        %2011 = vmatprep.subr.mxu0 0.0
        %2012 = vmatpush1.msra.mxu0 0.0
        %2013 = vmatprep.subr.mxu0 0.0
        %2014 = vmatpush1.msra.mxu0 0.0
        %2015 = vmatprep.subr.mxu0 0.0
        %2016 = vmatpush1.msra.mxu0 0.0
        %2017 = vmatprep.subr.mxu0 0.0
        %2018 = vmatpush1.msra.mxu0 0.0
        %2019 = vmatprep.subr.mxu0 0.0
        %2020 = vmatpush1.msra.mxu0 0.0
        %2021 = vmatprep.subr.mxu0 0.0
        %2022 = vmatpush1.msra.mxu0 0.0
        %2023 = vmatprep.subr.mxu0 0.0
        %2024 = vmatpush1.msra.mxu0 0.0
        %2025 = vmatprep.subr.mxu0 0.0
        %2026 = vmatpush1.msra.mxu0 0.0
        %2027 = vmatprep.subr.mxu0 0.0
        %2028 = vmatpush1.msra.mxu0 0.0
        %2029 = vmatprep.subr.mxu0 0.0
        %2030 = vmatpush1.msra.mxu0 0.0
        %2031 = vmatprep.subr.mxu0 0.0
        %2032 = vmatpush1.msra.mxu0 0.0
        %2033 = vmatprep.subr.mxu0 0.0
        %2034 = vmatpush1.msra.mxu0 0.0
        %2035 = vmatprep.subr.mxu0 0.0
        %2036 = vmatpush1.msra.mxu0 0.0
        %2037 = vmatprep.subr.mxu0 0.0
        %2038 = vmatpush1.msra.mxu0 0.0
        %2039 = vmatprep.subr.mxu0 0.0
        %2040 = vmatpush1.msra.mxu0 0.0
        %2041 = vmatprep.subr.mxu0 0.0
        %2042 = vmatpush1.msra.mxu0 0.0
        %2043 = vmatprep.subr.mxu0 0.0
        %2044 = vmatpush1.msra.mxu0 0.0
        %2045 = vmatprep.subr.mxu0 0.0
        %2046 = vmatpush1.msra.mxu0 0.0
        %2047 = vmatprep.subr.mxu0 0.0
        %2048 = vmatpush1.msra.mxu0 0.0
        %2049 = vmatprep.subr.mxu0 0.0
        %2050 = vmatpush1.msra.mxu0 0.0
        %2051 = vmatprep.mubr.f32.mxu0 0.0
        %v2052 = vand.u32 %v1861, 4294901760
        %2053 = vmatmul.mubr.f32.gmra.mrb[0].mxu0 %v2052
        %v2054 = vpop.f32.mrb[0].mxu0
        %v2055 = vadd.f32 %v1943, %v2054
        %v2056 = vpop.f32.mrb[0].mxu0
        %v2057 = vadd.f32 %v1945, %v2056
        %2058 = vdwg.mxu0
        %v2059 = vand.u32 %v1845, 4294901760
        %v2060 = vsub.f32 %v1845, %v2059
        %2061 = vmatprep.subr.mxu0 %v2060
        %v2062 = vand.u32 %v1844, 4294901760
        %v2063 = vsub.f32 %v1844, %v2062
        %2064 = vmatpush1.msra.mxu0 %v2063
        %v2065 = vand.u32 %v1847, 4294901760
        %v2066 = vsub.f32 %v1847, %v2065
        %2067 = vmatprep.subr.mxu0 %v2066
        %v2068 = vand.u32 %v1846, 4294901760
        %v2069 = vsub.f32 %v1846, %v2068
        %2070 = vmatpush1.msra.mxu0 %v2069
        %v2071 = vand.u32 %v1849, 4294901760
        %v2072 = vsub.f32 %v1849, %v2071
        %2073 = vmatprep.subr.mxu0 %v2072
        %v2074 = vand.u32 %v1848, 4294901760
        %v2075 = vsub.f32 %v1848, %v2074
        %2076 = vmatpush1.msra.mxu0 %v2075
        %v2077 = vand.u32 %v1851, 4294901760
        %v2078 = vsub.f32 %v1851, %v2077
        %2079 = vmatprep.subr.mxu0 %v2078
        %v2080 = vand.u32 %v1850, 4294901760
        %v2081 = vsub.f32 %v1850, %v2080
        %2082 = vmatpush1.msra.mxu0 %v2081
        %2083 = vmatprep.subr.mxu0 0.0
        %2084 = vmatpush1.msra.mxu0 0.0
        %2085 = vmatprep.subr.mxu0 0.0
        %2086 = vmatpush1.msra.mxu0 0.0
        %2087 = vmatprep.subr.mxu0 0.0
        %2088 = vmatpush1.msra.mxu0 0.0
        %2089 = vmatprep.subr.mxu0 0.0
        %2090 = vmatpush1.msra.mxu0 0.0
        %2091 = vmatprep.subr.mxu0 0.0
        %2092 = vmatpush1.msra.mxu0 0.0
        %2093 = vmatprep.subr.mxu0 0.0
        %2094 = vmatpush1.msra.mxu0 0.0
        %2095 = vmatprep.subr.mxu0 0.0
        %2096 = vmatpush1.msra.mxu0 0.0
        %2097 = vmatprep.subr.mxu0 0.0
        %2098 = vmatpush1.msra.mxu0 0.0
        %2099 = vmatprep.subr.mxu0 0.0
        %2100 = vmatpush1.msra.mxu0 0.0
        %2101 = vmatprep.subr.mxu0 0.0
        %2102 = vmatpush1.msra.mxu0 0.0
        %2103 = vmatprep.subr.mxu0 0.0
        %2104 = vmatpush1.msra.mxu0 0.0
        %2105 = vmatprep.subr.mxu0 0.0
        %2106 = vmatpush1.msra.mxu0 0.0
        %2107 = vmatprep.subr.mxu0 0.0
        %2108 = vmatpush1.msra.mxu0 0.0
        %2109 = vmatprep.subr.mxu0 0.0
        %2110 = vmatpush1.msra.mxu0 0.0
        %2111 = vmatprep.subr.mxu0 0.0
        %2112 = vmatpush1.msra.mxu0 0.0
        %2113 = vmatprep.subr.mxu0 0.0
        %2114 = vmatpush1.msra.mxu0 0.0
        %2115 = vmatprep.subr.mxu0 0.0
        %2116 = vmatpush1.msra.mxu0 0.0
        %2117 = vmatprep.subr.mxu0 0.0
        %2118 = vmatpush1.msra.mxu0 0.0
        %2119 = vmatprep.subr.mxu0 0.0
        %2120 = vmatpush1.msra.mxu0 0.0
        %2121 = vmatprep.subr.mxu0 0.0
        %2122 = vmatpush1.msra.mxu0 0.0
        %2123 = vmatprep.subr.mxu0 0.0
        %2124 = vmatpush1.msra.mxu0 0.0
        %2125 = vmatprep.subr.mxu0 0.0
        %2126 = vmatpush1.msra.mxu0 0.0
        %2127 = vmatprep.subr.mxu0 0.0
        %2128 = vmatpush1.msra.mxu0 0.0
        %2129 = vmatprep.subr.mxu0 0.0
        %2130 = vmatpush1.msra.mxu0 0.0
        %2131 = vmatprep.subr.mxu0 0.0
        %2132 = vmatpush1.msra.mxu0 0.0
        %2133 = vmatprep.subr.mxu0 0.0
        %2134 = vmatpush1.msra.mxu0 0.0
        %2135 = vmatprep.subr.mxu0 0.0
        %2136 = vmatpush1.msra.mxu0 0.0
        %2137 = vmatprep.subr.mxu0 0.0
        %2138 = vmatpush1.msra.mxu0 0.0
        %2139 = vmatprep.mubr.f32.mxu0 0.0
        %v2140 = vand.u32 %v1861, 4294901760
        %v2141 = vsub.f32 %v1861, %v2140
        %2142 = vmatmul.mubr.f32.gmra.mrb[0].mxu0 %v2141
        %v2143 = vpop.f32.mrb[0].mxu0
        %v2144 = vadd.f32 %v2055, %v2143
        %v2145 = vpop.f32.mrb[0].mxu0
        %v2146 = vadd.f32 %v2057, %v2145
        %2147 = vdwg.mxu0
        %v2148 = vand.u32 %v1845, 4294901760
        %2149 = vmatprep.subr.mxu0 %v2148
        %v2150 = vand.u32 %v1844, 4294901760
        %2151 = vmatpush1.msra.mxu0 %v2150
        %v2152 = vand.u32 %v1847, 4294901760
        %2153 = vmatprep.subr.mxu0 %v2152
        %v2154 = vand.u32 %v1846, 4294901760
        %2155 = vmatpush1.msra.mxu0 %v2154
        %v2156 = vand.u32 %v1849, 4294901760
        %2157 = vmatprep.subr.mxu0 %v2156
        %v2158 = vand.u32 %v1848, 4294901760
        %2159 = vmatpush1.msra.mxu0 %v2158
        %v2160 = vand.u32 %v1851, 4294901760
        %2161 = vmatprep.subr.mxu0 %v2160
        %v2162 = vand.u32 %v1850, 4294901760
        %2163 = vmatpush1.msra.mxu0 %v2162
        %2164 = vmatprep.subr.mxu0 0.0
        %2165 = vmatpush1.msra.mxu0 0.0
        %2166 = vmatprep.subr.mxu0 0.0
        %2167 = vmatpush1.msra.mxu0 0.0
        %2168 = vmatprep.subr.mxu0 0.0
        %2169 = vmatpush1.msra.mxu0 0.0
        %2170 = vmatprep.subr.mxu0 0.0
        %2171 = vmatpush1.msra.mxu0 0.0
        %2172 = vmatprep.subr.mxu0 0.0
        %2173 = vmatpush1.msra.mxu0 0.0
        %2174 = vmatprep.subr.mxu0 0.0
        %2175 = vmatpush1.msra.mxu0 0.0
        %2176 = vmatprep.subr.mxu0 0.0
        %2177 = vmatpush1.msra.mxu0 0.0
        %2178 = vmatprep.subr.mxu0 0.0
        %2179 = vmatpush1.msra.mxu0 0.0
        %2180 = vmatprep.subr.mxu0 0.0
        %2181 = vmatpush1.msra.mxu0 0.0
        %2182 = vmatprep.subr.mxu0 0.0
        %2183 = vmatpush1.msra.mxu0 0.0
        %2184 = vmatprep.subr.mxu0 0.0
        %2185 = vmatpush1.msra.mxu0 0.0
        %2186 = vmatprep.subr.mxu0 0.0
        %2187 = vmatpush1.msra.mxu0 0.0
        %2188 = vmatprep.subr.mxu0 0.0
        %2189 = vmatpush1.msra.mxu0 0.0
        %2190 = vmatprep.subr.mxu0 0.0
        %2191 = vmatpush1.msra.mxu0 0.0
        %2192 = vmatprep.subr.mxu0 0.0
        %2193 = vmatpush1.msra.mxu0 0.0
        %2194 = vmatprep.subr.mxu0 0.0
        %2195 = vmatpush1.msra.mxu0 0.0
        %2196 = vmatprep.subr.mxu0 0.0
        %2197 = vmatpush1.msra.mxu0 0.0
        %2198 = vmatprep.subr.mxu0 0.0
        %2199 = vmatpush1.msra.mxu0 0.0
        %2200 = vmatprep.subr.mxu0 0.0
        %2201 = vmatpush1.msra.mxu0 0.0
        %2202 = vmatprep.subr.mxu0 0.0
        %2203 = vmatpush1.msra.mxu0 0.0
        %2204 = vmatprep.subr.mxu0 0.0
        %2205 = vmatpush1.msra.mxu0 0.0
        %2206 = vmatprep.subr.mxu0 0.0
        %2207 = vmatpush1.msra.mxu0 0.0
        %2208 = vmatprep.subr.mxu0 0.0
        %2209 = vmatpush1.msra.mxu0 0.0
        %2210 = vmatprep.subr.mxu0 0.0
        %2211 = vmatpush1.msra.mxu0 0.0
        %2212 = vmatprep.subr.mxu0 0.0
        %2213 = vmatpush1.msra.mxu0 0.0
        %2214 = vmatprep.subr.mxu0 0.0
        %2215 = vmatpush1.msra.mxu0 0.0
        %2216 = vmatprep.subr.mxu0 0.0
        %2217 = vmatpush1.msra.mxu0 0.0
        %2218 = vmatprep.subr.mxu0 0.0
        %2219 = vmatpush1.msra.mxu0 0.0
        %2220 = vmatprep.mubr.f32.mxu0 0.0
        %v2221 = vand.u32 %v1861, 4294901760
        %v2222 = vsub.f32 %v1861, %v2221
        %v2223 = vand.u32 %v2222, 4294901760
        %2224 = vmatmul.mubr.f32.gmra.mrb[0].mxu0 %v2223
        %v2225 = vpop.f32.mrb[0].mxu0
        %v2226 = vadd.f32 %v2144, %v2225
        %v2227 = vpop.f32.mrb[0].mxu0
        %v2228 = vadd.f32 %v2146, %v2227
        %2229 = vdwg.mxu0
        %v2230 = vand.u32 %v1845, 4294901760
        %v2231 = vsub.f32 %v1845, %v2230
        %v2232 = vand.u32 %v2231, 4294901760
        %2233 = vmatprep.subr.mxu0 %v2232
        %v2234 = vand.u32 %v1844, 4294901760
        %v2235 = vsub.f32 %v1844, %v2234
        %v2236 = vand.u32 %v2235, 4294901760
        %2237 = vmatpush1.msra.mxu0 %v2236
        %v2238 = vand.u32 %v1847, 4294901760
        %v2239 = vsub.f32 %v1847, %v2238
        %v2240 = vand.u32 %v2239, 4294901760
        %2241 = vmatprep.subr.mxu0 %v2240
        %v2242 = vand.u32 %v1846, 4294901760
        %v2243 = vsub.f32 %v1846, %v2242
        %v2244 = vand.u32 %v2243, 4294901760
        %2245 = vmatpush1.msra.mxu0 %v2244
        %v2246 = vand.u32 %v1849, 4294901760
        %v2247 = vsub.f32 %v1849, %v2246
        %v2248 = vand.u32 %v2247, 4294901760
        %2249 = vmatprep.subr.mxu0 %v2248
        %v2250 = vand.u32 %v1848, 4294901760
        %v2251 = vsub.f32 %v1848, %v2250
        %v2252 = vand.u32 %v2251, 4294901760
        %2253 = vmatpush1.msra.mxu0 %v2252
        %v2254 = vand.u32 %v1851, 4294901760
        %v2255 = vsub.f32 %v1851, %v2254
        %v2256 = vand.u32 %v2255, 4294901760
        %2257 = vmatprep.subr.mxu0 %v2256
        %v2258 = vand.u32 %v1850, 4294901760
        %v2259 = vsub.f32 %v1850, %v2258
        %v2260 = vand.u32 %v2259, 4294901760
        %2261 = vmatpush1.msra.mxu0 %v2260
        %2262 = vmatprep.subr.mxu0 0.0
        %2263 = vmatpush1.msra.mxu0 0.0
        %2264 = vmatprep.subr.mxu0 0.0
        %2265 = vmatpush1.msra.mxu0 0.0
        %2266 = vmatprep.subr.mxu0 0.0
        %2267 = vmatpush1.msra.mxu0 0.0
        %2268 = vmatprep.subr.mxu0 0.0
        %2269 = vmatpush1.msra.mxu0 0.0
        %2270 = vmatprep.subr.mxu0 0.0
        %2271 = vmatpush1.msra.mxu0 0.0
        %2272 = vmatprep.subr.mxu0 0.0
        %2273 = vmatpush1.msra.mxu0 0.0
        %2274 = vmatprep.subr.mxu0 0.0
        %2275 = vmatpush1.msra.mxu0 0.0
        %2276 = vmatprep.subr.mxu0 0.0
        %2277 = vmatpush1.msra.mxu0 0.0
        %2278 = vmatprep.subr.mxu0 0.0
        %2279 = vmatpush1.msra.mxu0 0.0
        %2280 = vmatprep.subr.mxu0 0.0
        %2281 = vmatpush1.msra.mxu0 0.0
        %2282 = vmatprep.subr.mxu0 0.0
        %2283 = vmatpush1.msra.mxu0 0.0
        %2284 = vmatprep.subr.mxu0 0.0
        %2285 = vmatpush1.msra.mxu0 0.0
        %2286 = vmatprep.subr.mxu0 0.0
        %2287 = vmatpush1.msra.mxu0 0.0
        %2288 = vmatprep.subr.mxu0 0.0
        %2289 = vmatpush1.msra.mxu0 0.0
        %2290 = vmatprep.subr.mxu0 0.0
        %2291 = vmatpush1.msra.mxu0 0.0
        %2292 = vmatprep.subr.mxu0 0.0
        %2293 = vmatpush1.msra.mxu0 0.0
        %2294 = vmatprep.subr.mxu0 0.0
        %2295 = vmatpush1.msra.mxu0 0.0
        %2296 = vmatprep.subr.mxu0 0.0
        %2297 = vmatpush1.msra.mxu0 0.0
        %2298 = vmatprep.subr.mxu0 0.0
        %2299 = vmatpush1.msra.mxu0 0.0
        %2300 = vmatprep.subr.mxu0 0.0
        %2301 = vmatpush1.msra.mxu0 0.0
        %2302 = vmatprep.subr.mxu0 0.0
        %2303 = vmatpush1.msra.mxu0 0.0
        %2304 = vmatprep.subr.mxu0 0.0
        %2305 = vmatpush1.msra.mxu0 0.0
        %2306 = vmatprep.subr.mxu0 0.0
        %2307 = vmatpush1.msra.mxu0 0.0
        %2308 = vmatprep.subr.mxu0 0.0
        %2309 = vmatpush1.msra.mxu0 0.0
        %2310 = vmatprep.subr.mxu0 0.0
        %2311 = vmatpush1.msra.mxu0 0.0
        %2312 = vmatprep.subr.mxu0 0.0
        %2313 = vmatpush1.msra.mxu0 0.0
        %2314 = vmatprep.subr.mxu0 0.0
        %2315 = vmatpush1.msra.mxu0 0.0
        %2316 = vmatprep.subr.mxu0 0.0
        %2317 = vmatpush1.msra.mxu0 0.0
        %2318 = vmatprep.mubr.f32.mxu0 0.0
        %v2319 = vand.u32 %v1861, 4294901760
        %2320 = vmatmul.mubr.f32.gmra.mrb[0].mxu0 %v2319
        %v2321 = vpop.f32.mrb[0].mxu0
        %v2322 = vadd.f32 %v2226, %v2321
        %v2323 = vpop.f32.mrb[0].mxu0
        %v2324 = vadd.f32 %v2228, %v2323
        %2325 = vdwg.mxu0
        %v2326 = vand.u32 %v1845, 4294901760
        %2327 = vmatprep.subr.mxu0 %v2326
        %v2328 = vand.u32 %v1844, 4294901760
        %2329 = vmatpush1.msra.mxu0 %v2328
        %v2330 = vand.u32 %v1847, 4294901760
        %2331 = vmatprep.subr.mxu0 %v2330
        %v2332 = vand.u32 %v1846, 4294901760
        %2333 = vmatpush1.msra.mxu0 %v2332
        %v2334 = vand.u32 %v1849, 4294901760
        %2335 = vmatprep.subr.mxu0 %v2334
        %v2336 = vand.u32 %v1848, 4294901760
        %2337 = vmatpush1.msra.mxu0 %v2336
        %v2338 = vand.u32 %v1851, 4294901760
        %2339 = vmatprep.subr.mxu0 %v2338
        %v2340 = vand.u32 %v1850, 4294901760
        %2341 = vmatpush1.msra.mxu0 %v2340
        %2342 = vmatprep.subr.mxu0 0.0
        %2343 = vmatpush1.msra.mxu0 0.0
        %2344 = vmatprep.subr.mxu0 0.0
        %2345 = vmatpush1.msra.mxu0 0.0
        %2346 = vmatprep.subr.mxu0 0.0
        %2347 = vmatpush1.msra.mxu0 0.0
        %2348 = vmatprep.subr.mxu0 0.0
        %2349 = vmatpush1.msra.mxu0 0.0
        %2350 = vmatprep.subr.mxu0 0.0
        %2351 = vmatpush1.msra.mxu0 0.0
        %2352 = vmatprep.subr.mxu0 0.0
        %2353 = vmatpush1.msra.mxu0 0.0
        %2354 = vmatprep.subr.mxu0 0.0
        %2355 = vmatpush1.msra.mxu0 0.0
        %2356 = vmatprep.subr.mxu0 0.0
        %2357 = vmatpush1.msra.mxu0 0.0
        %2358 = vmatprep.subr.mxu0 0.0
        %2359 = vmatpush1.msra.mxu0 0.0
        %2360 = vmatprep.subr.mxu0 0.0
        %2361 = vmatpush1.msra.mxu0 0.0
        %2362 = vmatprep.subr.mxu0 0.0
        %2363 = vmatpush1.msra.mxu0 0.0
        %2364 = vmatprep.subr.mxu0 0.0
        %2365 = vmatpush1.msra.mxu0 0.0
        %2366 = vmatprep.subr.mxu0 0.0
        %2367 = vmatpush1.msra.mxu0 0.0
        %2368 = vmatprep.subr.mxu0 0.0
        %2369 = vmatpush1.msra.mxu0 0.0
        %2370 = vmatprep.subr.mxu0 0.0
        %2371 = vmatpush1.msra.mxu0 0.0
        %2372 = vmatprep.subr.mxu0 0.0
        %2373 = vmatpush1.msra.mxu0 0.0
        %2374 = vmatprep.subr.mxu0 0.0
        %2375 = vmatpush1.msra.mxu0 0.0
        %2376 = vmatprep.subr.mxu0 0.0
        %2377 = vmatpush1.msra.mxu0 0.0
        %2378 = vmatprep.subr.mxu0 0.0
        %2379 = vmatpush1.msra.mxu0 0.0
        %2380 = vmatprep.subr.mxu0 0.0
        %2381 = vmatpush1.msra.mxu0 0.0
        %2382 = vmatprep.subr.mxu0 0.0
        %2383 = vmatpush1.msra.mxu0 0.0
        %2384 = vmatprep.subr.mxu0 0.0
        %2385 = vmatpush1.msra.mxu0 0.0
        %2386 = vmatprep.subr.mxu0 0.0
        %2387 = vmatpush1.msra.mxu0 0.0
        %2388 = vmatprep.subr.mxu0 0.0
        %2389 = vmatpush1.msra.mxu0 0.0
        %2390 = vmatprep.subr.mxu0 0.0
        %2391 = vmatpush1.msra.mxu0 0.0
        %2392 = vmatprep.subr.mxu0 0.0
        %2393 = vmatpush1.msra.mxu0 0.0
        %2394 = vmatprep.subr.mxu0 0.0
        %2395 = vmatpush1.msra.mxu0 0.0
        %2396 = vmatprep.subr.mxu0 0.0
        %2397 = vmatpush1.msra.mxu0 0.0
        %2398 = vmatprep.mubr.f32.mxu0 0.0
        %v2399 = vand.u32 %v1861, 4294901760
        %2400 = vmatmul.mubr.f32.gmra.mrb[0].mxu0 %v2399
        %v2401 = vpop.f32.mrb[0].mxu0
        %v2402 = vadd.f32 %v2322, %v2401
        %v2403 = vpop.f32.mrb[0].mxu0
        %v2404 = vadd.f32 %v2324, %v2403
        %2405 = vdwg.mxu0
        %v2406 = vmul.f32 %v2402, %v559
        %v2407 = vmul.f32 %v2404, %v560
        %v2408 = vadd.f32 %v1816, %v2406
        %v2409 = vadd.f32 %v1817, %v2407
        %v2410 = vld [vmem:[%s4 + $0x6] sm:$0x3]
        %2411 = vrot.lane.b32.xlu0 %v609, 1
        %v2412 = vpop.permute.xlu0 %2411
        %2413 = vrot.lane.b32.xlu0 %v610, 1
        %v2414 = vpop.permute.xlu0 %2413
        %2415 = vrot.lane.b32.xlu0 %v611, 1
        %v2416 = vpop.permute.xlu0 %2415
        %2417 = vrot.lane.b32.xlu0 %v612, 1
        %v2418 = vpop.permute.xlu0 %2417
        %2419 = vrot.lane.b32.xlu0 %v613, 1
        %v2420 = vpop.permute.xlu0 %2419
        %2421 = vrot.lane.b32.xlu0 %v614, 1
        %v2422 = vpop.permute.xlu0 %2421
        %2423 = vrot.lane.b32.xlu0 %v615, 1
        %v2424 = vpop.permute.xlu0 %2423
        %2425 = vrot.lane.b32.xlu0 %v616, 1
        %v2426 = vpop.permute.xlu0 %2425
        %2427 = vrot.lane.b32.xlu0 %v617, 1
        %v2428 = vpop.permute.xlu0 %2427
        %2429 = vrot.lane.b32.xlu0 %v618, 1
        %v2430 = vpop.permute.xlu0 %2429
        %2431 = vrot.lane.b32.xlu0 %v619, 1
        %v2432 = vpop.permute.xlu0 %2431
        %2433 = vrot.lane.b32.xlu0 %v620, 1
        %v2434 = vpop.permute.xlu0 %2433
        %vm2435 = vcmask 7168
        %v2436 = vsel %vm2435, %v2412, %v2414
        %v2437 = vsel %vm2435, %v2414, %v2416
        %v2438 = vsel %vm2435, %v2418, %v2420
        %v2439 = vsel %vm2435, %v2420, %v2422
        %v2440 = vsel %vm2435, %v2424, %v2426
        %v2441 = vsel %vm2435, %v2426, %v2428
        %v2442 = vsel %vm2435, %v2430, %v2432
        %v2443 = vsel %vm2435, %v2432, %v2434
        %v2453 = vsel %vm675, %v2410, 0
        %v2455 = vand.u32 %v2437, 4294901760
        %2456 = vmatprep.subr.mxu0 %v2455
        %v2457 = vand.u32 %v2436, 4294901760
        %2458 = vmatpush1.msra.mxu0 %v2457
        %v2459 = vand.u32 %v2439, 4294901760
        %2460 = vmatprep.subr.mxu0 %v2459
        %v2461 = vand.u32 %v2438, 4294901760
        %2462 = vmatpush1.msra.mxu0 %v2461
        %v2463 = vand.u32 %v2441, 4294901760
        %2464 = vmatprep.subr.mxu0 %v2463
        %v2465 = vand.u32 %v2440, 4294901760
        %2466 = vmatpush1.msra.mxu0 %v2465
        %v2467 = vand.u32 %v2443, 4294901760
        %2468 = vmatprep.subr.mxu0 %v2467
        %v2469 = vand.u32 %v2442, 4294901760
        %2470 = vmatpush1.msra.mxu0 %v2469
        %2471 = vmatprep.subr.mxu0 0.0
        %2472 = vmatpush1.msra.mxu0 0.0
        %2473 = vmatprep.subr.mxu0 0.0
        %2474 = vmatpush1.msra.mxu0 0.0
        %2475 = vmatprep.subr.mxu0 0.0
        %2476 = vmatpush1.msra.mxu0 0.0
        %2477 = vmatprep.subr.mxu0 0.0
        %2478 = vmatpush1.msra.mxu0 0.0
        %2479 = vmatprep.subr.mxu0 0.0
        %2480 = vmatpush1.msra.mxu0 0.0
        %2481 = vmatprep.subr.mxu0 0.0
        %2482 = vmatpush1.msra.mxu0 0.0
        %2483 = vmatprep.subr.mxu0 0.0
        %2484 = vmatpush1.msra.mxu0 0.0
        %2485 = vmatprep.subr.mxu0 0.0
        %2486 = vmatpush1.msra.mxu0 0.0
        %2487 = vmatprep.subr.mxu0 0.0
        %2488 = vmatpush1.msra.mxu0 0.0
        %2489 = vmatprep.subr.mxu0 0.0
        %2490 = vmatpush1.msra.mxu0 0.0
        %2491 = vmatprep.subr.mxu0 0.0
        %2492 = vmatpush1.msra.mxu0 0.0
        %2493 = vmatprep.subr.mxu0 0.0
        %2494 = vmatpush1.msra.mxu0 0.0
        %2495 = vmatprep.subr.mxu0 0.0
        %2496 = vmatpush1.msra.mxu0 0.0
        %2497 = vmatprep.subr.mxu0 0.0
        %2498 = vmatpush1.msra.mxu0 0.0
        %2499 = vmatprep.subr.mxu0 0.0
        %2500 = vmatpush1.msra.mxu0 0.0
        %2501 = vmatprep.subr.mxu0 0.0
        %2502 = vmatpush1.msra.mxu0 0.0
        %2503 = vmatprep.subr.mxu0 0.0
        %2504 = vmatpush1.msra.mxu0 0.0
        %2505 = vmatprep.subr.mxu0 0.0
        %2506 = vmatpush1.msra.mxu0 0.0
        %2507 = vmatprep.subr.mxu0 0.0
        %2508 = vmatpush1.msra.mxu0 0.0
        %2509 = vmatprep.subr.mxu0 0.0
        %2510 = vmatpush1.msra.mxu0 0.0
        %2511 = vmatprep.subr.mxu0 0.0
        %2512 = vmatpush1.msra.mxu0 0.0
        %2513 = vmatprep.subr.mxu0 0.0
        %2514 = vmatpush1.msra.mxu0 0.0
        %2515 = vmatprep.subr.mxu0 0.0
        %2516 = vmatpush1.msra.mxu0 0.0
        %2517 = vmatprep.subr.mxu0 0.0
        %2518 = vmatpush1.msra.mxu0 0.0
        %2519 = vmatprep.subr.mxu0 0.0
        %2520 = vmatpush1.msra.mxu0 0.0
        %2521 = vmatprep.subr.mxu0 0.0
        %2522 = vmatpush1.msra.mxu0 0.0
        %2523 = vmatprep.subr.mxu0 0.0
        %2524 = vmatpush1.msra.mxu0 0.0
        %2525 = vmatprep.subr.mxu0 0.0
        %2526 = vmatpush1.msra.mxu0 0.0
        %2527 = vmatprep.mubr.f32.mxu0 0.0
        %v2528 = vand.u32 %v2453, 4294901760
        %v2529 = vsub.f32 %v2453, %v2528
        %v2530 = vand.u32 %v2529, 4294901760
        %v2531 = vsub.f32 %v2529, %v2530
        %v2532 = vand.u32 %v2531, 4294901760
        %2533 = vmatmul.mubr.f32.gmra.mrb[0].mxu0 %v2532
        %v2534 = vpop.f32.mrb[0].mxu0
        %v2535 = vadd.f32 0.0, %v2534
        %v2536 = vpop.f32.mrb[0].mxu0
        %v2537 = vadd.f32 0.0, %v2536
        %2538 = vdwg.mxu0
        %v2539 = vand.u32 %v2437, 4294901760
        %v2540 = vsub.f32 %v2437, %v2539
        %v2541 = vand.u32 %v2540, 4294901760
        %v2542 = vsub.f32 %v2540, %v2541
        %v2543 = vand.u32 %v2542, 4294901760
        %2544 = vmatprep.subr.mxu0 %v2543
        %v2545 = vand.u32 %v2436, 4294901760
        %v2546 = vsub.f32 %v2436, %v2545
        %v2547 = vand.u32 %v2546, 4294901760
        %v2548 = vsub.f32 %v2546, %v2547
        %v2549 = vand.u32 %v2548, 4294901760
        %2550 = vmatpush1.msra.mxu0 %v2549
        %v2551 = vand.u32 %v2439, 4294901760
        %v2552 = vsub.f32 %v2439, %v2551
        %v2553 = vand.u32 %v2552, 4294901760
        %v2554 = vsub.f32 %v2552, %v2553
        %v2555 = vand.u32 %v2554, 4294901760
        %2556 = vmatprep.subr.mxu0 %v2555
        %v2557 = vand.u32 %v2438, 4294901760
        %v2558 = vsub.f32 %v2438, %v2557
        %v2559 = vand.u32 %v2558, 4294901760
        %v2560 = vsub.f32 %v2558, %v2559
        %v2561 = vand.u32 %v2560, 4294901760
        %2562 = vmatpush1.msra.mxu0 %v2561
        %v2563 = vand.u32 %v2441, 4294901760
        %v2564 = vsub.f32 %v2441, %v2563
        %v2565 = vand.u32 %v2564, 4294901760
        %v2566 = vsub.f32 %v2564, %v2565
        %v2567 = vand.u32 %v2566, 4294901760
        %2568 = vmatprep.subr.mxu0 %v2567
        %v2569 = vand.u32 %v2440, 4294901760
        %v2570 = vsub.f32 %v2440, %v2569
        %v2571 = vand.u32 %v2570, 4294901760
        %v2572 = vsub.f32 %v2570, %v2571
        %v2573 = vand.u32 %v2572, 4294901760
        %2574 = vmatpush1.msra.mxu0 %v2573
        %v2575 = vand.u32 %v2443, 4294901760
        %v2576 = vsub.f32 %v2443, %v2575
        %v2577 = vand.u32 %v2576, 4294901760
        %v2578 = vsub.f32 %v2576, %v2577
        %v2579 = vand.u32 %v2578, 4294901760
        %2580 = vmatprep.subr.mxu0 %v2579
        %v2581 = vand.u32 %v2442, 4294901760
        %v2582 = vsub.f32 %v2442, %v2581
        %v2583 = vand.u32 %v2582, 4294901760
        %v2584 = vsub.f32 %v2582, %v2583
        %v2585 = vand.u32 %v2584, 4294901760
        %2586 = vmatpush1.msra.mxu0 %v2585
        %2587 = vmatprep.subr.mxu0 0.0
        %2588 = vmatpush1.msra.mxu0 0.0
        %2589 = vmatprep.subr.mxu0 0.0
        %2590 = vmatpush1.msra.mxu0 0.0
        %2591 = vmatprep.subr.mxu0 0.0
        %2592 = vmatpush1.msra.mxu0 0.0
        %2593 = vmatprep.subr.mxu0 0.0
        %2594 = vmatpush1.msra.mxu0 0.0
        %2595 = vmatprep.subr.mxu0 0.0
        %2596 = vmatpush1.msra.mxu0 0.0
        %2597 = vmatprep.subr.mxu0 0.0
        %2598 = vmatpush1.msra.mxu0 0.0
        %2599 = vmatprep.subr.mxu0 0.0
        %2600 = vmatpush1.msra.mxu0 0.0
        %2601 = vmatprep.subr.mxu0 0.0
        %2602 = vmatpush1.msra.mxu0 0.0
        %2603 = vmatprep.subr.mxu0 0.0
        %2604 = vmatpush1.msra.mxu0 0.0
        %2605 = vmatprep.subr.mxu0 0.0
        %2606 = vmatpush1.msra.mxu0 0.0
        %2607 = vmatprep.subr.mxu0 0.0
        %2608 = vmatpush1.msra.mxu0 0.0
        %2609 = vmatprep.subr.mxu0 0.0
        %2610 = vmatpush1.msra.mxu0 0.0
        %2611 = vmatprep.subr.mxu0 0.0
        %2612 = vmatpush1.msra.mxu0 0.0
        %2613 = vmatprep.subr.mxu0 0.0
        %2614 = vmatpush1.msra.mxu0 0.0
        %2615 = vmatprep.subr.mxu0 0.0
        %2616 = vmatpush1.msra.mxu0 0.0
        %2617 = vmatprep.subr.mxu0 0.0
        %2618 = vmatpush1.msra.mxu0 0.0
        %2619 = vmatprep.subr.mxu0 0.0
        %2620 = vmatpush1.msra.mxu0 0.0
        %2621 = vmatprep.subr.mxu0 0.0
        %2622 = vmatpush1.msra.mxu0 0.0
        %2623 = vmatprep.subr.mxu0 0.0
        %2624 = vmatpush1.msra.mxu0 0.0
        %2625 = vmatprep.subr.mxu0 0.0
        %2626 = vmatpush1.msra.mxu0 0.0
        %2627 = vmatprep.subr.mxu0 0.0
        %2628 = vmatpush1.msra.mxu0 0.0
        %2629 = vmatprep.subr.mxu0 0.0
        %2630 = vmatpush1.msra.mxu0 0.0
        %2631 = vmatprep.subr.mxu0 0.0
        %2632 = vmatpush1.msra.mxu0 0.0
        %2633 = vmatprep.subr.mxu0 0.0
        %2634 = vmatpush1.msra.mxu0 0.0
        %2635 = vmatprep.subr.mxu0 0.0
        %2636 = vmatpush1.msra.mxu0 0.0
        %2637 = vmatprep.subr.mxu0 0.0
        %2638 = vmatpush1.msra.mxu0 0.0
        %2639 = vmatprep.subr.mxu0 0.0
        %2640 = vmatpush1.msra.mxu0 0.0
        %2641 = vmatprep.subr.mxu0 0.0
        %2642 = vmatpush1.msra.mxu0 0.0
        %2643 = vmatprep.mubr.f32.mxu0 0.0
        %v2644 = vand.u32 %v2453, 4294901760
        %2645 = vmatmul.mubr.f32.gmra.mrb[0].mxu0 %v2644
        %v2646 = vpop.f32.mrb[0].mxu0
        %v2647 = vadd.f32 %v2535, %v2646
        %v2648 = vpop.f32.mrb[0].mxu0
        %v2649 = vadd.f32 %v2537, %v2648
        %2650 = vdwg.mxu0
        %v2651 = vand.u32 %v2437, 4294901760
        %v2652 = vsub.f32 %v2437, %v2651
        %2653 = vmatprep.subr.mxu0 %v2652
        %v2654 = vand.u32 %v2436, 4294901760
        %v2655 = vsub.f32 %v2436, %v2654
        %2656 = vmatpush1.msra.mxu0 %v2655
        %v2657 = vand.u32 %v2439, 4294901760
        %v2658 = vsub.f32 %v2439, %v2657
        %2659 = vmatprep.subr.mxu0 %v2658
        %v2660 = vand.u32 %v2438, 4294901760
        %v2661 = vsub.f32 %v2438, %v2660
        %2662 = vmatpush1.msra.mxu0 %v2661
        %v2663 = vand.u32 %v2441, 4294901760
        %v2664 = vsub.f32 %v2441, %v2663
        %2665 = vmatprep.subr.mxu0 %v2664
        %v2666 = vand.u32 %v2440, 4294901760
        %v2667 = vsub.f32 %v2440, %v2666
        %2668 = vmatpush1.msra.mxu0 %v2667
        %v2669 = vand.u32 %v2443, 4294901760
        %v2670 = vsub.f32 %v2443, %v2669
        %2671 = vmatprep.subr.mxu0 %v2670
        %v2672 = vand.u32 %v2442, 4294901760
        %v2673 = vsub.f32 %v2442, %v2672
        %2674 = vmatpush1.msra.mxu0 %v2673
        %2675 = vmatprep.subr.mxu0 0.0
        %2676 = vmatpush1.msra.mxu0 0.0
        %2677 = vmatprep.subr.mxu0 0.0
        %2678 = vmatpush1.msra.mxu0 0.0
        %2679 = vmatprep.subr.mxu0 0.0
        %2680 = vmatpush1.msra.mxu0 0.0
        %2681 = vmatprep.subr.mxu0 0.0
        %2682 = vmatpush1.msra.mxu0 0.0
        %2683 = vmatprep.subr.mxu0 0.0
        %2684 = vmatpush1.msra.mxu0 0.0
        %2685 = vmatprep.subr.mxu0 0.0
        %2686 = vmatpush1.msra.mxu0 0.0
        %2687 = vmatprep.subr.mxu0 0.0
        %2688 = vmatpush1.msra.mxu0 0.0
        %2689 = vmatprep.subr.mxu0 0.0
        %2690 = vmatpush1.msra.mxu0 0.0
        %2691 = vmatprep.subr.mxu0 0.0
        %2692 = vmatpush1.msra.mxu0 0.0
        %2693 = vmatprep.subr.mxu0 0.0
        %2694 = vmatpush1.msra.mxu0 0.0
        %2695 = vmatprep.subr.mxu0 0.0
        %2696 = vmatpush1.msra.mxu0 0.0
        %2697 = vmatprep.subr.mxu0 0.0
        %2698 = vmatpush1.msra.mxu0 0.0
        %2699 = vmatprep.subr.mxu0 0.0
        %2700 = vmatpush1.msra.mxu0 0.0
        %2701 = vmatprep.subr.mxu0 0.0
        %2702 = vmatpush1.msra.mxu0 0.0
        %2703 = vmatprep.subr.mxu0 0.0
        %2704 = vmatpush1.msra.mxu0 0.0
        %2705 = vmatprep.subr.mxu0 0.0
        %2706 = vmatpush1.msra.mxu0 0.0
        %2707 = vmatprep.subr.mxu0 0.0
        %2708 = vmatpush1.msra.mxu0 0.0
        %2709 = vmatprep.subr.mxu0 0.0
        %2710 = vmatpush1.msra.mxu0 0.0
        %2711 = vmatprep.subr.mxu0 0.0
        %2712 = vmatpush1.msra.mxu0 0.0
        %2713 = vmatprep.subr.mxu0 0.0
        %2714 = vmatpush1.msra.mxu0 0.0
        %2715 = vmatprep.subr.mxu0 0.0
        %2716 = vmatpush1.msra.mxu0 0.0
        %2717 = vmatprep.subr.mxu0 0.0
        %2718 = vmatpush1.msra.mxu0 0.0
        %2719 = vmatprep.subr.mxu0 0.0
        %2720 = vmatpush1.msra.mxu0 0.0
        %2721 = vmatprep.subr.mxu0 0.0
        %2722 = vmatpush1.msra.mxu0 0.0
        %2723 = vmatprep.subr.mxu0 0.0
        %2724 = vmatpush1.msra.mxu0 0.0
        %2725 = vmatprep.subr.mxu0 0.0
        %2726 = vmatpush1.msra.mxu0 0.0
        %2727 = vmatprep.subr.mxu0 0.0
        %2728 = vmatpush1.msra.mxu0 0.0
        %2729 = vmatprep.subr.mxu0 0.0
        %2730 = vmatpush1.msra.mxu0 0.0
        %2731 = vmatprep.mubr.f32.mxu0 0.0
        %v2732 = vand.u32 %v2453, 4294901760
        %v2733 = vsub.f32 %v2453, %v2732
        %2734 = vmatmul.mubr.f32.gmra.mrb[0].mxu0 %v2733
        %v2735 = vpop.f32.mrb[0].mxu0
        %v2736 = vadd.f32 %v2647, %v2735
        %v2737 = vpop.f32.mrb[0].mxu0
        %v2738 = vadd.f32 %v2649, %v2737
        %2739 = vdwg.mxu0
        %v2740 = vand.u32 %v2437, 4294901760
        %2741 = vmatprep.subr.mxu0 %v2740
        %v2742 = vand.u32 %v2436, 4294901760
        %2743 = vmatpush1.msra.mxu0 %v2742
        %v2744 = vand.u32 %v2439, 4294901760
        %2745 = vmatprep.subr.mxu0 %v2744
        %v2746 = vand.u32 %v2438, 4294901760
        %2747 = vmatpush1.msra.mxu0 %v2746
        %v2748 = vand.u32 %v2441, 4294901760
        %2749 = vmatprep.subr.mxu0 %v2748
        %v2750 = vand.u32 %v2440, 4294901760
        %2751 = vmatpush1.msra.mxu0 %v2750
        %v2752 = vand.u32 %v2443, 4294901760
        %2753 = vmatprep.subr.mxu0 %v2752
        %v2754 = vand.u32 %v2442, 4294901760
        %2755 = vmatpush1.msra.mxu0 %v2754
        %2756 = vmatprep.subr.mxu0 0.0
        %2757 = vmatpush1.msra.mxu0 0.0
        %2758 = vmatprep.subr.mxu0 0.0
        %2759 = vmatpush1.msra.mxu0 0.0
        %2760 = vmatprep.subr.mxu0 0.0
        %2761 = vmatpush1.msra.mxu0 0.0
        %2762 = vmatprep.subr.mxu0 0.0
        %2763 = vmatpush1.msra.mxu0 0.0
        %2764 = vmatprep.subr.mxu0 0.0
        %2765 = vmatpush1.msra.mxu0 0.0
        %2766 = vmatprep.subr.mxu0 0.0
        %2767 = vmatpush1.msra.mxu0 0.0
        %2768 = vmatprep.subr.mxu0 0.0
        %2769 = vmatpush1.msra.mxu0 0.0
        %2770 = vmatprep.subr.mxu0 0.0
        %2771 = vmatpush1.msra.mxu0 0.0
        %2772 = vmatprep.subr.mxu0 0.0
        %2773 = vmatpush1.msra.mxu0 0.0
        %2774 = vmatprep.subr.mxu0 0.0
        %2775 = vmatpush1.msra.mxu0 0.0
        %2776 = vmatprep.subr.mxu0 0.0
        %2777 = vmatpush1.msra.mxu0 0.0
        %2778 = vmatprep.subr.mxu0 0.0
        %2779 = vmatpush1.msra.mxu0 0.0
        %2780 = vmatprep.subr.mxu0 0.0
        %2781 = vmatpush1.msra.mxu0 0.0
        %2782 = vmatprep.subr.mxu0 0.0
        %2783 = vmatpush1.msra.mxu0 0.0
        %2784 = vmatprep.subr.mxu0 0.0
        %2785 = vmatpush1.msra.mxu0 0.0
        %2786 = vmatprep.subr.mxu0 0.0
        %2787 = vmatpush1.msra.mxu0 0.0
        %2788 = vmatprep.subr.mxu0 0.0
        %2789 = vmatpush1.msra.mxu0 0.0
        %2790 = vmatprep.subr.mxu0 0.0
        %2791 = vmatpush1.msra.mxu0 0.0
        %2792 = vmatprep.subr.mxu0 0.0
        %2793 = vmatpush1.msra.mxu0 0.0
        %2794 = vmatprep.subr.mxu0 0.0
        %2795 = vmatpush1.msra.mxu0 0.0
        %2796 = vmatprep.subr.mxu0 0.0
        %2797 = vmatpush1.msra.mxu0 0.0
        %2798 = vmatprep.subr.mxu0 0.0
        %2799 = vmatpush1.msra.mxu0 0.0
        %2800 = vmatprep.subr.mxu0 0.0
        %2801 = vmatpush1.msra.mxu0 0.0
        %2802 = vmatprep.subr.mxu0 0.0
        %2803 = vmatpush1.msra.mxu0 0.0
        %2804 = vmatprep.subr.mxu0 0.0
        %2805 = vmatpush1.msra.mxu0 0.0
        %2806 = vmatprep.subr.mxu0 0.0
        %2807 = vmatpush1.msra.mxu0 0.0
        %2808 = vmatprep.subr.mxu0 0.0
        %2809 = vmatpush1.msra.mxu0 0.0
        %2810 = vmatprep.subr.mxu0 0.0
        %2811 = vmatpush1.msra.mxu0 0.0
        %2812 = vmatprep.mubr.f32.mxu0 0.0
        %v2813 = vand.u32 %v2453, 4294901760
        %v2814 = vsub.f32 %v2453, %v2813
        %v2815 = vand.u32 %v2814, 4294901760
        %2816 = vmatmul.mubr.f32.gmra.mrb[0].mxu0 %v2815
        %v2817 = vpop.f32.mrb[0].mxu0
        %v2818 = vadd.f32 %v2736, %v2817
        %v2819 = vpop.f32.mrb[0].mxu0
        %v2820 = vadd.f32 %v2738, %v2819
        %2821 = vdwg.mxu0
        %v2822 = vand.u32 %v2437, 4294901760
        %v2823 = vsub.f32 %v2437, %v2822
        %v2824 = vand.u32 %v2823, 4294901760
        %2825 = vmatprep.subr.mxu0 %v2824
        %v2826 = vand.u32 %v2436, 4294901760
        %v2827 = vsub.f32 %v2436, %v2826
        %v2828 = vand.u32 %v2827, 4294901760
        %2829 = vmatpush1.msra.mxu0 %v2828
        %v2830 = vand.u32 %v2439, 4294901760
        %v2831 = vsub.f32 %v2439, %v2830
        %v2832 = vand.u32 %v2831, 4294901760
        %2833 = vmatprep.subr.mxu0 %v2832
        %v2834 = vand.u32 %v2438, 4294901760
        %v2835 = vsub.f32 %v2438, %v2834
        %v2836 = vand.u32 %v2835, 4294901760
        %2837 = vmatpush1.msra.mxu0 %v2836
        %v2838 = vand.u32 %v2441, 4294901760
        %v2839 = vsub.f32 %v2441, %v2838
        %v2840 = vand.u32 %v2839, 4294901760
        %2841 = vmatprep.subr.mxu0 %v2840
        %v2842 = vand.u32 %v2440, 4294901760
        %v2843 = vsub.f32 %v2440, %v2842
        %v2844 = vand.u32 %v2843, 4294901760
        %2845 = vmatpush1.msra.mxu0 %v2844
        %v2846 = vand.u32 %v2443, 4294901760
        %v2847 = vsub.f32 %v2443, %v2846
        %v2848 = vand.u32 %v2847, 4294901760
        %2849 = vmatprep.subr.mxu0 %v2848
        %v2850 = vand.u32 %v2442, 4294901760
        %v2851 = vsub.f32 %v2442, %v2850
        %v2852 = vand.u32 %v2851, 4294901760
        %2853 = vmatpush1.msra.mxu0 %v2852
        %2854 = vmatprep.subr.mxu0 0.0
        %2855 = vmatpush1.msra.mxu0 0.0
        %2856 = vmatprep.subr.mxu0 0.0
        %2857 = vmatpush1.msra.mxu0 0.0
        %2858 = vmatprep.subr.mxu0 0.0
        %2859 = vmatpush1.msra.mxu0 0.0
        %2860 = vmatprep.subr.mxu0 0.0
        %2861 = vmatpush1.msra.mxu0 0.0
        %2862 = vmatprep.subr.mxu0 0.0
        %2863 = vmatpush1.msra.mxu0 0.0
        %2864 = vmatprep.subr.mxu0 0.0
        %2865 = vmatpush1.msra.mxu0 0.0
        %2866 = vmatprep.subr.mxu0 0.0
        %2867 = vmatpush1.msra.mxu0 0.0
        %2868 = vmatprep.subr.mxu0 0.0
        %2869 = vmatpush1.msra.mxu0 0.0
        %2870 = vmatprep.subr.mxu0 0.0
        %2871 = vmatpush1.msra.mxu0 0.0
        %2872 = vmatprep.subr.mxu0 0.0
        %2873 = vmatpush1.msra.mxu0 0.0
        %2874 = vmatprep.subr.mxu0 0.0
        %2875 = vmatpush1.msra.mxu0 0.0
        %2876 = vmatprep.subr.mxu0 0.0
        %2877 = vmatpush1.msra.mxu0 0.0
        %2878 = vmatprep.subr.mxu0 0.0
        %2879 = vmatpush1.msra.mxu0 0.0
        %2880 = vmatprep.subr.mxu0 0.0
        %2881 = vmatpush1.msra.mxu0 0.0
        %2882 = vmatprep.subr.mxu0 0.0
        %2883 = vmatpush1.msra.mxu0 0.0
        %2884 = vmatprep.subr.mxu0 0.0
        %2885 = vmatpush1.msra.mxu0 0.0
        %2886 = vmatprep.subr.mxu0 0.0
        %2887 = vmatpush1.msra.mxu0 0.0
        %2888 = vmatprep.subr.mxu0 0.0
        %2889 = vmatpush1.msra.mxu0 0.0
        %2890 = vmatprep.subr.mxu0 0.0
        %2891 = vmatpush1.msra.mxu0 0.0
        %2892 = vmatprep.subr.mxu0 0.0
        %2893 = vmatpush1.msra.mxu0 0.0
        %2894 = vmatprep.subr.mxu0 0.0
        %2895 = vmatpush1.msra.mxu0 0.0
        %2896 = vmatprep.subr.mxu0 0.0
        %2897 = vmatpush1.msra.mxu0 0.0
        %2898 = vmatprep.subr.mxu0 0.0
        %2899 = vmatpush1.msra.mxu0 0.0
        %2900 = vmatprep.subr.mxu0 0.0
        %2901 = vmatpush1.msra.mxu0 0.0
        %2902 = vmatprep.subr.mxu0 0.0
        %2903 = vmatpush1.msra.mxu0 0.0
        %2904 = vmatprep.subr.mxu0 0.0
        %2905 = vmatpush1.msra.mxu0 0.0
        %2906 = vmatprep.subr.mxu0 0.0
        %2907 = vmatpush1.msra.mxu0 0.0
        %2908 = vmatprep.subr.mxu0 0.0
        %2909 = vmatpush1.msra.mxu0 0.0
        %2910 = vmatprep.mubr.f32.mxu0 0.0
        %v2911 = vand.u32 %v2453, 4294901760
        %2912 = vmatmul.mubr.f32.gmra.mrb[0].mxu0 %v2911
        %v2913 = vpop.f32.mrb[0].mxu0
        %v2914 = vadd.f32 %v2818, %v2913
        %v2915 = vpop.f32.mrb[0].mxu0
        %v2916 = vadd.f32 %v2820, %v2915
        %2917 = vdwg.mxu0
        %v2918 = vand.u32 %v2437, 4294901760
        %2919 = vmatprep.subr.mxu0 %v2918
        %v2920 = vand.u32 %v2436, 4294901760
        %2921 = vmatpush1.msra.mxu0 %v2920
        %v2922 = vand.u32 %v2439, 4294901760
        %2923 = vmatprep.subr.mxu0 %v2922
        %v2924 = vand.u32 %v2438, 4294901760
        %2925 = vmatpush1.msra.mxu0 %v2924
        %v2926 = vand.u32 %v2441, 4294901760
        %2927 = vmatprep.subr.mxu0 %v2926
        %v2928 = vand.u32 %v2440, 4294901760
        %2929 = vmatpush1.msra.mxu0 %v2928
        %v2930 = vand.u32 %v2443, 4294901760
        %2931 = vmatprep.subr.mxu0 %v2930
        %v2932 = vand.u32 %v2442, 4294901760
        %2933 = vmatpush1.msra.mxu0 %v2932
        %2934 = vmatprep.subr.mxu0 0.0
        %2935 = vmatpush1.msra.mxu0 0.0
        %2936 = vmatprep.subr.mxu0 0.0
        %2937 = vmatpush1.msra.mxu0 0.0
        %2938 = vmatprep.subr.mxu0 0.0
        %2939 = vmatpush1.msra.mxu0 0.0
        %2940 = vmatprep.subr.mxu0 0.0
        %2941 = vmatpush1.msra.mxu0 0.0
        %2942 = vmatprep.subr.mxu0 0.0
        %2943 = vmatpush1.msra.mxu0 0.0
        %2944 = vmatprep.subr.mxu0 0.0
        %2945 = vmatpush1.msra.mxu0 0.0
        %2946 = vmatprep.subr.mxu0 0.0
        %2947 = vmatpush1.msra.mxu0 0.0
        %2948 = vmatprep.subr.mxu0 0.0
        %2949 = vmatpush1.msra.mxu0 0.0
        %2950 = vmatprep.subr.mxu0 0.0
        %2951 = vmatpush1.msra.mxu0 0.0
        %2952 = vmatprep.subr.mxu0 0.0
        %2953 = vmatpush1.msra.mxu0 0.0
        %2954 = vmatprep.subr.mxu0 0.0
        %2955 = vmatpush1.msra.mxu0 0.0
        %2956 = vmatprep.subr.mxu0 0.0
        %2957 = vmatpush1.msra.mxu0 0.0
        %2958 = vmatprep.subr.mxu0 0.0
        %2959 = vmatpush1.msra.mxu0 0.0
        %2960 = vmatprep.subr.mxu0 0.0
        %2961 = vmatpush1.msra.mxu0 0.0
        %2962 = vmatprep.subr.mxu0 0.0
        %2963 = vmatpush1.msra.mxu0 0.0
        %2964 = vmatprep.subr.mxu0 0.0
        %2965 = vmatpush1.msra.mxu0 0.0
        %2966 = vmatprep.subr.mxu0 0.0
        %2967 = vmatpush1.msra.mxu0 0.0
        %2968 = vmatprep.subr.mxu0 0.0
        %2969 = vmatpush1.msra.mxu0 0.0
        %2970 = vmatprep.subr.mxu0 0.0
        %2971 = vmatpush1.msra.mxu0 0.0
        %2972 = vmatprep.subr.mxu0 0.0
        %2973 = vmatpush1.msra.mxu0 0.0
        %2974 = vmatprep.subr.mxu0 0.0
        %2975 = vmatpush1.msra.mxu0 0.0
        %2976 = vmatprep.subr.mxu0 0.0
        %2977 = vmatpush1.msra.mxu0 0.0
        %2978 = vmatprep.subr.mxu0 0.0
        %2979 = vmatpush1.msra.mxu0 0.0
        %2980 = vmatprep.subr.mxu0 0.0
        %2981 = vmatpush1.msra.mxu0 0.0
        %2982 = vmatprep.subr.mxu0 0.0
        %2983 = vmatpush1.msra.mxu0 0.0
        %2984 = vmatprep.subr.mxu0 0.0
        %2985 = vmatpush1.msra.mxu0 0.0
        %2986 = vmatprep.subr.mxu0 0.0
        %2987 = vmatpush1.msra.mxu0 0.0
        %2988 = vmatprep.subr.mxu0 0.0
        %2989 = vmatpush1.msra.mxu0 0.0
        %2990 = vmatprep.mubr.f32.mxu0 0.0
        %v2991 = vand.u32 %v2453, 4294901760
        %2992 = vmatmul.mubr.f32.gmra.mrb[0].mxu0 %v2991
        %v2993 = vpop.f32.mrb[0].mxu0
        %v2994 = vadd.f32 %v2914, %v2993
        %v2995 = vpop.f32.mrb[0].mxu0
        %v2996 = vadd.f32 %v2916, %v2995
        %2997 = vdwg.mxu0
        %v2998 = vmul.f32 %v2994, %v537
        %v2999 = vmul.f32 %v2996, %v538
        %v3000 = vadd.f32 %v2408, %v2998
        %v3001 = vadd.f32 %v2409, %v2999
        %v3002 = vld [vmem:[%s4 + $0x8] sm:$0x3]
        %v3004 = vsel %vm675, %v3002, 0
        %v3006 = vand.u32 %v611, 4294901760
        %3007 = vmatprep.subr.mxu0 %v3006
        %v3008 = vand.u32 %v610, 4294901760
        %3009 = vmatpush1.msra.mxu0 %v3008
        %v3010 = vand.u32 %v614, 4294901760
        %3011 = vmatprep.subr.mxu0 %v3010
        %v3012 = vand.u32 %v613, 4294901760
        %3013 = vmatpush1.msra.mxu0 %v3012
        %v3014 = vand.u32 %v617, 4294901760
        %3015 = vmatprep.subr.mxu0 %v3014
        %v3016 = vand.u32 %v616, 4294901760
        %3017 = vmatpush1.msra.mxu0 %v3016
        %v3018 = vand.u32 %v620, 4294901760
        %3019 = vmatprep.subr.mxu0 %v3018
        %v3020 = vand.u32 %v619, 4294901760
        %3021 = vmatpush1.msra.mxu0 %v3020
        %3022 = vmatprep.subr.mxu0 0.0
        %3023 = vmatpush1.msra.mxu0 0.0
        %3024 = vmatprep.subr.mxu0 0.0
        %3025 = vmatpush1.msra.mxu0 0.0
        %3026 = vmatprep.subr.mxu0 0.0
        %3027 = vmatpush1.msra.mxu0 0.0
        %3028 = vmatprep.subr.mxu0 0.0
        %3029 = vmatpush1.msra.mxu0 0.0
        %3030 = vmatprep.subr.mxu0 0.0
        %3031 = vmatpush1.msra.mxu0 0.0
        %3032 = vmatprep.subr.mxu0 0.0
        %3033 = vmatpush1.msra.mxu0 0.0
        %3034 = vmatprep.subr.mxu0 0.0
        %3035 = vmatpush1.msra.mxu0 0.0
        %3036 = vmatprep.subr.mxu0 0.0
        %3037 = vmatpush1.msra.mxu0 0.0
        %3038 = vmatprep.subr.mxu0 0.0
        %3039 = vmatpush1.msra.mxu0 0.0
        %3040 = vmatprep.subr.mxu0 0.0
        %3041 = vmatpush1.msra.mxu0 0.0
        %3042 = vmatprep.subr.mxu0 0.0
        %3043 = vmatpush1.msra.mxu0 0.0
        %3044 = vmatprep.subr.mxu0 0.0
        %3045 = vmatpush1.msra.mxu0 0.0
        %3046 = vmatprep.subr.mxu0 0.0
        %3047 = vmatpush1.msra.mxu0 0.0
        %3048 = vmatprep.subr.mxu0 0.0
        %3049 = vmatpush1.msra.mxu0 0.0
        %3050 = vmatprep.subr.mxu0 0.0
        %3051 = vmatpush1.msra.mxu0 0.0
        %3052 = vmatprep.subr.mxu0 0.0
        %3053 = vmatpush1.msra.mxu0 0.0
        %3054 = vmatprep.subr.mxu0 0.0
        %3055 = vmatpush1.msra.mxu0 0.0
        %3056 = vmatprep.subr.mxu0 0.0
        %3057 = vmatpush1.msra.mxu0 0.0
        %3058 = vmatprep.subr.mxu0 0.0
        %3059 = vmatpush1.msra.mxu0 0.0
        %3060 = vmatprep.subr.mxu0 0.0
        %3061 = vmatpush1.msra.mxu0 0.0
        %3062 = vmatprep.subr.mxu0 0.0
        %3063 = vmatpush1.msra.mxu0 0.0
        %3064 = vmatprep.subr.mxu0 0.0
        %3065 = vmatpush1.msra.mxu0 0.0
        %3066 = vmatprep.subr.mxu0 0.0
        %3067 = vmatpush1.msra.mxu0 0.0
        %3068 = vmatprep.subr.mxu0 0.0
        %3069 = vmatpush1.msra.mxu0 0.0
        %3070 = vmatprep.subr.mxu0 0.0
        %3071 = vmatpush1.msra.mxu0 0.0
        %3072 = vmatprep.subr.mxu0 0.0
        %3073 = vmatpush1.msra.mxu0 0.0
        %3074 = vmatprep.subr.mxu0 0.0
        %3075 = vmatpush1.msra.mxu0 0.0
        %3076 = vmatprep.subr.mxu0 0.0
        %3077 = vmatpush1.msra.mxu0 0.0
        %3078 = vmatprep.mubr.f32.mxu0 0.0
        %v3079 = vand.u32 %v3004, 4294901760
        %v3080 = vsub.f32 %v3004, %v3079
        %v3081 = vand.u32 %v3080, 4294901760
        %v3082 = vsub.f32 %v3080, %v3081
        %v3083 = vand.u32 %v3082, 4294901760
        %3084 = vmatmul.mubr.f32.gmra.mrb[0].mxu0 %v3083
        %v3085 = vpop.f32.mrb[0].mxu0
        %v3086 = vadd.f32 0.0, %v3085
        %v3087 = vpop.f32.mrb[0].mxu0
        %v3088 = vadd.f32 0.0, %v3087
        %3089 = vdwg.mxu0
        %v3090 = vand.u32 %v611, 4294901760
        %v3091 = vsub.f32 %v611, %v3090
        %v3092 = vand.u32 %v3091, 4294901760
        %v3093 = vsub.f32 %v3091, %v3092
        %v3094 = vand.u32 %v3093, 4294901760
        %3095 = vmatprep.subr.mxu0 %v3094
        %v3096 = vand.u32 %v610, 4294901760
        %v3097 = vsub.f32 %v610, %v3096
        %v3098 = vand.u32 %v3097, 4294901760
        %v3099 = vsub.f32 %v3097, %v3098
        %v3100 = vand.u32 %v3099, 4294901760
        %3101 = vmatpush1.msra.mxu0 %v3100
        %v3102 = vand.u32 %v614, 4294901760
        %v3103 = vsub.f32 %v614, %v3102
        %v3104 = vand.u32 %v3103, 4294901760
        %v3105 = vsub.f32 %v3103, %v3104
        %v3106 = vand.u32 %v3105, 4294901760
        %3107 = vmatprep.subr.mxu0 %v3106
        %v3108 = vand.u32 %v613, 4294901760
        %v3109 = vsub.f32 %v613, %v3108
        %v3110 = vand.u32 %v3109, 4294901760
        %v3111 = vsub.f32 %v3109, %v3110
        %v3112 = vand.u32 %v3111, 4294901760
        %3113 = vmatpush1.msra.mxu0 %v3112
        %v3114 = vand.u32 %v617, 4294901760
        %v3115 = vsub.f32 %v617, %v3114
        %v3116 = vand.u32 %v3115, 4294901760
        %v3117 = vsub.f32 %v3115, %v3116
        %v3118 = vand.u32 %v3117, 4294901760
        %3119 = vmatprep.subr.mxu0 %v3118
        %v3120 = vand.u32 %v616, 4294901760
        %v3121 = vsub.f32 %v616, %v3120
        %v3122 = vand.u32 %v3121, 4294901760
        %v3123 = vsub.f32 %v3121, %v3122
        %v3124 = vand.u32 %v3123, 4294901760
        %3125 = vmatpush1.msra.mxu0 %v3124
        %v3126 = vand.u32 %v620, 4294901760
        %v3127 = vsub.f32 %v620, %v3126
        %v3128 = vand.u32 %v3127, 4294901760
        %v3129 = vsub.f32 %v3127, %v3128
        %v3130 = vand.u32 %v3129, 4294901760
        %3131 = vmatprep.subr.mxu0 %v3130
        %v3132 = vand.u32 %v619, 4294901760
        %v3133 = vsub.f32 %v619, %v3132
        %v3134 = vand.u32 %v3133, 4294901760
        %v3135 = vsub.f32 %v3133, %v3134
        %v3136 = vand.u32 %v3135, 4294901760
        %3137 = vmatpush1.msra.mxu0 %v3136
        %3138 = vmatprep.subr.mxu0 0.0
        %3139 = vmatpush1.msra.mxu0 0.0
        %3140 = vmatprep.subr.mxu0 0.0
        %3141 = vmatpush1.msra.mxu0 0.0
        %3142 = vmatprep.subr.mxu0 0.0
        %3143 = vmatpush1.msra.mxu0 0.0
        %3144 = vmatprep.subr.mxu0 0.0
        %3145 = vmatpush1.msra.mxu0 0.0
        %3146 = vmatprep.subr.mxu0 0.0
        %3147 = vmatpush1.msra.mxu0 0.0
        %3148 = vmatprep.subr.mxu0 0.0
        %3149 = vmatpush1.msra.mxu0 0.0
        %3150 = vmatprep.subr.mxu0 0.0
        %3151 = vmatpush1.msra.mxu0 0.0
        %3152 = vmatprep.subr.mxu0 0.0
        %3153 = vmatpush1.msra.mxu0 0.0
        %3154 = vmatprep.subr.mxu0 0.0
        %3155 = vmatpush1.msra.mxu0 0.0
        %3156 = vmatprep.subr.mxu0 0.0
        %3157 = vmatpush1.msra.mxu0 0.0
        %3158 = vmatprep.subr.mxu0 0.0
        %3159 = vmatpush1.msra.mxu0 0.0
        %3160 = vmatprep.subr.mxu0 0.0
        %3161 = vmatpush1.msra.mxu0 0.0
        %3162 = vmatprep.subr.mxu0 0.0
        %3163 = vmatpush1.msra.mxu0 0.0
        %3164 = vmatprep.subr.mxu0 0.0
        %3165 = vmatpush1.msra.mxu0 0.0
        %3166 = vmatprep.subr.mxu0 0.0
        %3167 = vmatpush1.msra.mxu0 0.0
        %3168 = vmatprep.subr.mxu0 0.0
        %3169 = vmatpush1.msra.mxu0 0.0
        %3170 = vmatprep.subr.mxu0 0.0
        %3171 = vmatpush1.msra.mxu0 0.0
        %3172 = vmatprep.subr.mxu0 0.0
        %3173 = vmatpush1.msra.mxu0 0.0
        %3174 = vmatprep.subr.mxu0 0.0
        %3175 = vmatpush1.msra.mxu0 0.0
        %3176 = vmatprep.subr.mxu0 0.0
        %3177 = vmatpush1.msra.mxu0 0.0
        %3178 = vmatprep.subr.mxu0 0.0
        %3179 = vmatpush1.msra.mxu0 0.0
        %3180 = vmatprep.subr.mxu0 0.0
        %3181 = vmatpush1.msra.mxu0 0.0
        %3182 = vmatprep.subr.mxu0 0.0
        %3183 = vmatpush1.msra.mxu0 0.0
        %3184 = vmatprep.subr.mxu0 0.0
        %3185 = vmatpush1.msra.mxu0 0.0
        %3186 = vmatprep.subr.mxu0 0.0
        %3187 = vmatpush1.msra.mxu0 0.0
        %3188 = vmatprep.subr.mxu0 0.0
        %3189 = vmatpush1.msra.mxu0 0.0
        %3190 = vmatprep.subr.mxu0 0.0
        %3191 = vmatpush1.msra.mxu0 0.0
        %3192 = vmatprep.subr.mxu0 0.0
        %3193 = vmatpush1.msra.mxu0 0.0
        %3194 = vmatprep.mubr.f32.mxu0 0.0
        %v3195 = vand.u32 %v3004, 4294901760
        %3196 = vmatmul.mubr.f32.gmra.mrb[0].mxu0 %v3195
        %v3197 = vpop.f32.mrb[0].mxu0
        %v3198 = vadd.f32 %v3086, %v3197
        %v3199 = vpop.f32.mrb[0].mxu0
        %v3200 = vadd.f32 %v3088, %v3199
        %3201 = vdwg.mxu0
        %v3202 = vand.u32 %v611, 4294901760
        %v3203 = vsub.f32 %v611, %v3202
        %3204 = vmatprep.subr.mxu0 %v3203
        %v3205 = vand.u32 %v610, 4294901760
        %v3206 = vsub.f32 %v610, %v3205
        %3207 = vmatpush1.msra.mxu0 %v3206
        %v3208 = vand.u32 %v614, 4294901760
        %v3209 = vsub.f32 %v614, %v3208
        %3210 = vmatprep.subr.mxu0 %v3209
        %v3211 = vand.u32 %v613, 4294901760
        %v3212 = vsub.f32 %v613, %v3211
        %3213 = vmatpush1.msra.mxu0 %v3212
        %v3214 = vand.u32 %v617, 4294901760
        %v3215 = vsub.f32 %v617, %v3214
        %3216 = vmatprep.subr.mxu0 %v3215
        %v3217 = vand.u32 %v616, 4294901760
        %v3218 = vsub.f32 %v616, %v3217
        %3219 = vmatpush1.msra.mxu0 %v3218
        %v3220 = vand.u32 %v620, 4294901760
        %v3221 = vsub.f32 %v620, %v3220
        %3222 = vmatprep.subr.mxu0 %v3221
        %v3223 = vand.u32 %v619, 4294901760
        %v3224 = vsub.f32 %v619, %v3223
        %3225 = vmatpush1.msra.mxu0 %v3224
        %3226 = vmatprep.subr.mxu0 0.0
        %3227 = vmatpush1.msra.mxu0 0.0
        %3228 = vmatprep.subr.mxu0 0.0
        %3229 = vmatpush1.msra.mxu0 0.0
        %3230 = vmatprep.subr.mxu0 0.0
        %3231 = vmatpush1.msra.mxu0 0.0
        %3232 = vmatprep.subr.mxu0 0.0
        %3233 = vmatpush1.msra.mxu0 0.0
        %3234 = vmatprep.subr.mxu0 0.0
        %3235 = vmatpush1.msra.mxu0 0.0
        %3236 = vmatprep.subr.mxu0 0.0
        %3237 = vmatpush1.msra.mxu0 0.0
        %3238 = vmatprep.subr.mxu0 0.0
        %3239 = vmatpush1.msra.mxu0 0.0
        %3240 = vmatprep.subr.mxu0 0.0
        %3241 = vmatpush1.msra.mxu0 0.0
        %3242 = vmatprep.subr.mxu0 0.0
        %3243 = vmatpush1.msra.mxu0 0.0
        %3244 = vmatprep.subr.mxu0 0.0
        %3245 = vmatpush1.msra.mxu0 0.0
        %3246 = vmatprep.subr.mxu0 0.0
        %3247 = vmatpush1.msra.mxu0 0.0
        %3248 = vmatprep.subr.mxu0 0.0
        %3249 = vmatpush1.msra.mxu0 0.0
        %3250 = vmatprep.subr.mxu0 0.0
        %3251 = vmatpush1.msra.mxu0 0.0
        %3252 = vmatprep.subr.mxu0 0.0
        %3253 = vmatpush1.msra.mxu0 0.0
        %3254 = vmatprep.subr.mxu0 0.0
        %3255 = vmatpush1.msra.mxu0 0.0
        %3256 = vmatprep.subr.mxu0 0.0
        %3257 = vmatpush1.msra.mxu0 0.0
        %3258 = vmatprep.subr.mxu0 0.0
        %3259 = vmatpush1.msra.mxu0 0.0
        %3260 = vmatprep.subr.mxu0 0.0
        %3261 = vmatpush1.msra.mxu0 0.0
        %3262 = vmatprep.subr.mxu0 0.0
        %3263 = vmatpush1.msra.mxu0 0.0
        %3264 = vmatprep.subr.mxu0 0.0
        %3265 = vmatpush1.msra.mxu0 0.0
        %3266 = vmatprep.subr.mxu0 0.0
        %3267 = vmatpush1.msra.mxu0 0.0
        %3268 = vmatprep.subr.mxu0 0.0
        %3269 = vmatpush1.msra.mxu0 0.0
        %3270 = vmatprep.subr.mxu0 0.0
        %3271 = vmatpush1.msra.mxu0 0.0
        %3272 = vmatprep.subr.mxu0 0.0
        %3273 = vmatpush1.msra.mxu0 0.0
        %3274 = vmatprep.subr.mxu0 0.0
        %3275 = vmatpush1.msra.mxu0 0.0
        %3276 = vmatprep.subr.mxu0 0.0
        %3277 = vmatpush1.msra.mxu0 0.0
        %3278 = vmatprep.subr.mxu0 0.0
        %3279 = vmatpush1.msra.mxu0 0.0
        %3280 = vmatprep.subr.mxu0 0.0
        %3281 = vmatpush1.msra.mxu0 0.0
        %3282 = vmatprep.mubr.f32.mxu0 0.0
        %v3283 = vand.u32 %v3004, 4294901760
        %v3284 = vsub.f32 %v3004, %v3283
        %3285 = vmatmul.mubr.f32.gmra.mrb[0].mxu0 %v3284
        %v3286 = vpop.f32.mrb[0].mxu0
        %v3287 = vadd.f32 %v3198, %v3286
        %v3288 = vpop.f32.mrb[0].mxu0
        %v3289 = vadd.f32 %v3200, %v3288
        %3290 = vdwg.mxu0
        %v3291 = vand.u32 %v611, 4294901760
        %3292 = vmatprep.subr.mxu0 %v3291
        %v3293 = vand.u32 %v610, 4294901760
        %3294 = vmatpush1.msra.mxu0 %v3293
        %v3295 = vand.u32 %v614, 4294901760
        %3296 = vmatprep.subr.mxu0 %v3295
        %v3297 = vand.u32 %v613, 4294901760
        %3298 = vmatpush1.msra.mxu0 %v3297
        %v3299 = vand.u32 %v617, 4294901760
        %3300 = vmatprep.subr.mxu0 %v3299
        %v3301 = vand.u32 %v616, 4294901760
        %3302 = vmatpush1.msra.mxu0 %v3301
        %v3303 = vand.u32 %v620, 4294901760
        %3304 = vmatprep.subr.mxu0 %v3303
        %v3305 = vand.u32 %v619, 4294901760
        %3306 = vmatpush1.msra.mxu0 %v3305
        %3307 = vmatprep.subr.mxu0 0.0
        %3308 = vmatpush1.msra.mxu0 0.0
        %3309 = vmatprep.subr.mxu0 0.0
        %3310 = vmatpush1.msra.mxu0 0.0
        %3311 = vmatprep.subr.mxu0 0.0
        %3312 = vmatpush1.msra.mxu0 0.0
        %3313 = vmatprep.subr.mxu0 0.0
        %3314 = vmatpush1.msra.mxu0 0.0
        %3315 = vmatprep.subr.mxu0 0.0
        %3316 = vmatpush1.msra.mxu0 0.0
        %3317 = vmatprep.subr.mxu0 0.0
        %3318 = vmatpush1.msra.mxu0 0.0
        %3319 = vmatprep.subr.mxu0 0.0
        %3320 = vmatpush1.msra.mxu0 0.0
        %3321 = vmatprep.subr.mxu0 0.0
        %3322 = vmatpush1.msra.mxu0 0.0
        %3323 = vmatprep.subr.mxu0 0.0
        %3324 = vmatpush1.msra.mxu0 0.0
        %3325 = vmatprep.subr.mxu0 0.0
        %3326 = vmatpush1.msra.mxu0 0.0
        %3327 = vmatprep.subr.mxu0 0.0
        %3328 = vmatpush1.msra.mxu0 0.0
        %3329 = vmatprep.subr.mxu0 0.0
        %3330 = vmatpush1.msra.mxu0 0.0
        %3331 = vmatprep.subr.mxu0 0.0
        %3332 = vmatpush1.msra.mxu0 0.0
        %3333 = vmatprep.subr.mxu0 0.0
        %3334 = vmatpush1.msra.mxu0 0.0
        %3335 = vmatprep.subr.mxu0 0.0
        %3336 = vmatpush1.msra.mxu0 0.0
        %3337 = vmatprep.subr.mxu0 0.0
        %3338 = vmatpush1.msra.mxu0 0.0
        %3339 = vmatprep.subr.mxu0 0.0
        %3340 = vmatpush1.msra.mxu0 0.0
        %3341 = vmatprep.subr.mxu0 0.0
        %3342 = vmatpush1.msra.mxu0 0.0
        %3343 = vmatprep.subr.mxu0 0.0
        %3344 = vmatpush1.msra.mxu0 0.0
        %3345 = vmatprep.subr.mxu0 0.0
        %3346 = vmatpush1.msra.mxu0 0.0
        %3347 = vmatprep.subr.mxu0 0.0
        %3348 = vmatpush1.msra.mxu0 0.0
        %3349 = vmatprep.subr.mxu0 0.0
        %3350 = vmatpush1.msra.mxu0 0.0
        %3351 = vmatprep.subr.mxu0 0.0
        %3352 = vmatpush1.msra.mxu0 0.0
        %3353 = vmatprep.subr.mxu0 0.0
        %3354 = vmatpush1.msra.mxu0 0.0
        %3355 = vmatprep.subr.mxu0 0.0
        %3356 = vmatpush1.msra.mxu0 0.0
        %3357 = vmatprep.subr.mxu0 0.0
        %3358 = vmatpush1.msra.mxu0 0.0
        %3359 = vmatprep.subr.mxu0 0.0
        %3360 = vmatpush1.msra.mxu0 0.0
        %3361 = vmatprep.subr.mxu0 0.0
        %3362 = vmatpush1.msra.mxu0 0.0
        %3363 = vmatprep.mubr.f32.mxu0 0.0
        %v3364 = vand.u32 %v3004, 4294901760
        %v3365 = vsub.f32 %v3004, %v3364
        %v3366 = vand.u32 %v3365, 4294901760
        %3367 = vmatmul.mubr.f32.gmra.mrb[0].mxu0 %v3366
        %v3368 = vpop.f32.mrb[0].mxu0
        %v3369 = vadd.f32 %v3287, %v3368
        %v3370 = vpop.f32.mrb[0].mxu0
        %v3371 = vadd.f32 %v3289, %v3370
        %3372 = vdwg.mxu0
        %v3373 = vand.u32 %v611, 4294901760
        %v3374 = vsub.f32 %v611, %v3373
        %v3375 = vand.u32 %v3374, 4294901760
        %3376 = vmatprep.subr.mxu0 %v3375
        %v3377 = vand.u32 %v610, 4294901760
        %v3378 = vsub.f32 %v610, %v3377
        %v3379 = vand.u32 %v3378, 4294901760
        %3380 = vmatpush1.msra.mxu0 %v3379
        %v3381 = vand.u32 %v614, 4294901760
        %v3382 = vsub.f32 %v614, %v3381
        %v3383 = vand.u32 %v3382, 4294901760
        %3384 = vmatprep.subr.mxu0 %v3383
        %v3385 = vand.u32 %v613, 4294901760
        %v3386 = vsub.f32 %v613, %v3385
        %v3387 = vand.u32 %v3386, 4294901760
        %3388 = vmatpush1.msra.mxu0 %v3387
        %v3389 = vand.u32 %v617, 4294901760
        %v3390 = vsub.f32 %v617, %v3389
        %v3391 = vand.u32 %v3390, 4294901760
        %3392 = vmatprep.subr.mxu0 %v3391
        %v3393 = vand.u32 %v616, 4294901760
        %v3394 = vsub.f32 %v616, %v3393
        %v3395 = vand.u32 %v3394, 4294901760
        %3396 = vmatpush1.msra.mxu0 %v3395
        %v3397 = vand.u32 %v620, 4294901760
        %v3398 = vsub.f32 %v620, %v3397
        %v3399 = vand.u32 %v3398, 4294901760
        %3400 = vmatprep.subr.mxu0 %v3399
        %v3401 = vand.u32 %v619, 4294901760
        %v3402 = vsub.f32 %v619, %v3401
        %v3403 = vand.u32 %v3402, 4294901760
        %3404 = vmatpush1.msra.mxu0 %v3403
        %3405 = vmatprep.subr.mxu0 0.0
        %3406 = vmatpush1.msra.mxu0 0.0
        %3407 = vmatprep.subr.mxu0 0.0
        %3408 = vmatpush1.msra.mxu0 0.0
        %3409 = vmatprep.subr.mxu0 0.0
        %3410 = vmatpush1.msra.mxu0 0.0
        %3411 = vmatprep.subr.mxu0 0.0
        %3412 = vmatpush1.msra.mxu0 0.0
        %3413 = vmatprep.subr.mxu0 0.0
        %3414 = vmatpush1.msra.mxu0 0.0
        %3415 = vmatprep.subr.mxu0 0.0
        %3416 = vmatpush1.msra.mxu0 0.0
        %3417 = vmatprep.subr.mxu0 0.0
        %3418 = vmatpush1.msra.mxu0 0.0
        %3419 = vmatprep.subr.mxu0 0.0
        %3420 = vmatpush1.msra.mxu0 0.0
        %3421 = vmatprep.subr.mxu0 0.0
        %3422 = vmatpush1.msra.mxu0 0.0
        %3423 = vmatprep.subr.mxu0 0.0
        %3424 = vmatpush1.msra.mxu0 0.0
        %3425 = vmatprep.subr.mxu0 0.0
        %3426 = vmatpush1.msra.mxu0 0.0
        %3427 = vmatprep.subr.mxu0 0.0
        %3428 = vmatpush1.msra.mxu0 0.0
        %3429 = vmatprep.subr.mxu0 0.0
        %3430 = vmatpush1.msra.mxu0 0.0
        %3431 = vmatprep.subr.mxu0 0.0
        %3432 = vmatpush1.msra.mxu0 0.0
        %3433 = vmatprep.subr.mxu0 0.0
        %3434 = vmatpush1.msra.mxu0 0.0
        %3435 = vmatprep.subr.mxu0 0.0
        %3436 = vmatpush1.msra.mxu0 0.0
        %3437 = vmatprep.subr.mxu0 0.0
        %3438 = vmatpush1.msra.mxu0 0.0
        %3439 = vmatprep.subr.mxu0 0.0
        %3440 = vmatpush1.msra.mxu0 0.0
        %3441 = vmatprep.subr.mxu0 0.0
        %3442 = vmatpush1.msra.mxu0 0.0
        %3443 = vmatprep.subr.mxu0 0.0
        %3444 = vmatpush1.msra.mxu0 0.0
        %3445 = vmatprep.subr.mxu0 0.0
        %3446 = vmatpush1.msra.mxu0 0.0
        %3447 = vmatprep.subr.mxu0 0.0
        %3448 = vmatpush1.msra.mxu0 0.0
        %3449 = vmatprep.subr.mxu0 0.0
        %3450 = vmatpush1.msra.mxu0 0.0
        %3451 = vmatprep.subr.mxu0 0.0
        %3452 = vmatpush1.msra.mxu0 0.0
        %3453 = vmatprep.subr.mxu0 0.0
        %3454 = vmatpush1.msra.mxu0 0.0
        %3455 = vmatprep.subr.mxu0 0.0
        %3456 = vmatpush1.msra.mxu0 0.0
        %3457 = vmatprep.subr.mxu0 0.0
        %3458 = vmatpush1.msra.mxu0 0.0
        %3459 = vmatprep.subr.mxu0 0.0
        %3460 = vmatpush1.msra.mxu0 0.0
        %3461 = vmatprep.mubr.f32.mxu0 0.0
        %v3462 = vand.u32 %v3004, 4294901760
        %3463 = vmatmul.mubr.f32.gmra.mrb[0].mxu0 %v3462
        %v3464 = vpop.f32.mrb[0].mxu0
        %v3465 = vadd.f32 %v3369, %v3464
        %v3466 = vpop.f32.mrb[0].mxu0
        %v3467 = vadd.f32 %v3371, %v3466
        %3468 = vdwg.mxu0
        %v3469 = vand.u32 %v611, 4294901760
        %3470 = vmatprep.subr.mxu0 %v3469
        %v3471 = vand.u32 %v610, 4294901760
        %3472 = vmatpush1.msra.mxu0 %v3471
        %v3473 = vand.u32 %v614, 4294901760
        %3474 = vmatprep.subr.mxu0 %v3473
        %v3475 = vand.u32 %v613, 4294901760
        %3476 = vmatpush1.msra.mxu0 %v3475
        %v3477 = vand.u32 %v617, 4294901760
        %3478 = vmatprep.subr.mxu0 %v3477
        %v3479 = vand.u32 %v616, 4294901760
        %3480 = vmatpush1.msra.mxu0 %v3479
        %v3481 = vand.u32 %v620, 4294901760
        %3482 = vmatprep.subr.mxu0 %v3481
        %v3483 = vand.u32 %v619, 4294901760
        %3484 = vmatpush1.msra.mxu0 %v3483
        %3485 = vmatprep.subr.mxu0 0.0
        %3486 = vmatpush1.msra.mxu0 0.0
        %3487 = vmatprep.subr.mxu0 0.0
        %3488 = vmatpush1.msra.mxu0 0.0
        %3489 = vmatprep.subr.mxu0 0.0
        %3490 = vmatpush1.msra.mxu0 0.0
        %3491 = vmatprep.subr.mxu0 0.0
        %3492 = vmatpush1.msra.mxu0 0.0
        %3493 = vmatprep.subr.mxu0 0.0
        %3494 = vmatpush1.msra.mxu0 0.0
        %3495 = vmatprep.subr.mxu0 0.0
        %3496 = vmatpush1.msra.mxu0 0.0
        %3497 = vmatprep.subr.mxu0 0.0
        %3498 = vmatpush1.msra.mxu0 0.0
        %3499 = vmatprep.subr.mxu0 0.0
        %3500 = vmatpush1.msra.mxu0 0.0
        %3501 = vmatprep.subr.mxu0 0.0
        %3502 = vmatpush1.msra.mxu0 0.0
        %3503 = vmatprep.subr.mxu0 0.0
        %3504 = vmatpush1.msra.mxu0 0.0
        %3505 = vmatprep.subr.mxu0 0.0
        %3506 = vmatpush1.msra.mxu0 0.0
        %3507 = vmatprep.subr.mxu0 0.0
        %3508 = vmatpush1.msra.mxu0 0.0
        %3509 = vmatprep.subr.mxu0 0.0
        %3510 = vmatpush1.msra.mxu0 0.0
        %3511 = vmatprep.subr.mxu0 0.0
        %3512 = vmatpush1.msra.mxu0 0.0
        %3513 = vmatprep.subr.mxu0 0.0
        %3514 = vmatpush1.msra.mxu0 0.0
        %3515 = vmatprep.subr.mxu0 0.0
        %3516 = vmatpush1.msra.mxu0 0.0
        %3517 = vmatprep.subr.mxu0 0.0
        %3518 = vmatpush1.msra.mxu0 0.0
        %3519 = vmatprep.subr.mxu0 0.0
        %3520 = vmatpush1.msra.mxu0 0.0
        %3521 = vmatprep.subr.mxu0 0.0
        %3522 = vmatpush1.msra.mxu0 0.0
        %3523 = vmatprep.subr.mxu0 0.0
        %3524 = vmatpush1.msra.mxu0 0.0
        %3525 = vmatprep.subr.mxu0 0.0
        %3526 = vmatpush1.msra.mxu0 0.0
        %3527 = vmatprep.subr.mxu0 0.0
        %3528 = vmatpush1.msra.mxu0 0.0
        %3529 = vmatprep.subr.mxu0 0.0
        %3530 = vmatpush1.msra.mxu0 0.0
        %3531 = vmatprep.subr.mxu0 0.0
        %3532 = vmatpush1.msra.mxu0 0.0
        %3533 = vmatprep.subr.mxu0 0.0
        %3534 = vmatpush1.msra.mxu0 0.0
        %3535 = vmatprep.subr.mxu0 0.0
        %3536 = vmatpush1.msra.mxu0 0.0
        %3537 = vmatprep.subr.mxu0 0.0
        %3538 = vmatpush1.msra.mxu0 0.0
        %3539 = vmatprep.subr.mxu0 0.0
        %3540 = vmatpush1.msra.mxu0 0.0
        %3541 = vmatprep.mubr.f32.mxu0 0.0
        %v3542 = vand.u32 %v3004, 4294901760
        %3543 = vmatmul.mubr.f32.gmra.mrb[0].mxu0 %v3542
        %v3544 = vpop.f32.mrb[0].mxu0
        %v3545 = vadd.f32 %v3465, %v3544
        %v3546 = vpop.f32.mrb[0].mxu0
        %v3547 = vadd.f32 %v3467, %v3546
        %3548 = vdwg.mxu0
        %v3549 = vmul.f32 %v3545, %v547
        %v3550 = vmul.f32 %v3547, %v548
        %v3551 = vadd.f32 %v3000, %v3549
        %v3552 = vadd.f32 %v3001, %v3550
        %v3553 = vld [vmem:[#allocation2 + $0x8] sm:$0xff]
        %v3554 = vld [vmem:[#allocation2 + $0x10] sm:$0xff]
        %v3555 = vld [vmem:[#allocation2 + $0x18] sm:$0xff]
        %v3556 = vld [vmem:[#allocation2 + $0x28] sm:$0xff]
        %v3557 = vld [vmem:[#allocation2 + $0x30] sm:$0xff]
        %v3558 = vld [vmem:[#allocation2 + $0x38] sm:$0xff]
        %v3559 = vld [vmem:[#allocation2 + $0x48] sm:$0xff]
        %v3560 = vld [vmem:[#allocation2 + $0x50] sm:$0xff]
        %v3561 = vld [vmem:[#allocation2 + $0x58] sm:$0xff]
        %v3562 = vld [vmem:[#allocation2 + $0x68] sm:$0xff]
        %v3563 = vld [vmem:[#allocation2 + $0x70] sm:$0xff]
        %v3564 = vld [vmem:[#allocation2 + $0x78] sm:$0xff]
        %v3565 = vld [vmem:[%s4 + $0xa] sm:$0x3]
        %3578 = vrot.lane.b32.xlu0 %v3553, 127
        %v3579 = vpop.permute.xlu0 %3578
        %3580 = vrot.lane.b32.xlu0 %v3554, 127
        %v3581 = vpop.permute.xlu0 %3580
        %3582 = vrot.lane.b32.xlu0 %v3555, 127
        %v3583 = vpop.permute.xlu0 %3582
        %3584 = vrot.lane.b32.xlu0 %v3556, 127
        %v3585 = vpop.permute.xlu0 %3584
        %3586 = vrot.lane.b32.xlu0 %v3557, 127
        %v3587 = vpop.permute.xlu0 %3586
        %3588 = vrot.lane.b32.xlu0 %v3558, 127
        %v3589 = vpop.permute.xlu0 %3588
        %3590 = vrot.lane.b32.xlu0 %v3559, 127
        %v3591 = vpop.permute.xlu0 %3590
        %3592 = vrot.lane.b32.xlu0 %v3560, 127
        %v3593 = vpop.permute.xlu0 %3592
        %3594 = vrot.lane.b32.xlu0 %v3561, 127
        %v3595 = vpop.permute.xlu0 %3594
        %3596 = vrot.lane.b32.xlu0 %v3562, 127
        %v3597 = vpop.permute.xlu0 %3596
        %3598 = vrot.lane.b32.xlu0 %v3563, 127
        %v3599 = vpop.permute.xlu0 %3598
        %3600 = vrot.lane.b32.xlu0 %v3564, 127
        %v3601 = vpop.permute.xlu0 %3600
        %vm3602 = vcmask 1039360
        %v3603 = vsel %vm3602, %v3579, %v3581
        %v3604 = vsel %vm3602, %v3581, %v3583
        %v3605 = vsel %vm3602, %v3585, %v3587
        %v3606 = vsel %vm3602, %v3587, %v3589
        %v3607 = vsel %vm3602, %v3591, %v3593
        %v3608 = vsel %vm3602, %v3593, %v3595
        %v3609 = vsel %vm3602, %v3597, %v3599
        %v3610 = vsel %vm3602, %v3599, %v3601
        %v3620 = vsel %vm675, %v3565, 0
        %v3622 = vand.u32 %v3604, 4294901760
        %3623 = vmatprep.subr.mxu0 %v3622
        %v3624 = vand.u32 %v3603, 4294901760
        %3625 = vmatpush1.msra.mxu0 %v3624
        %v3626 = vand.u32 %v3606, 4294901760
        %3627 = vmatprep.subr.mxu0 %v3626
        %v3628 = vand.u32 %v3605, 4294901760
        %3629 = vmatpush1.msra.mxu0 %v3628
        %v3630 = vand.u32 %v3608, 4294901760
        %3631 = vmatprep.subr.mxu0 %v3630
        %v3632 = vand.u32 %v3607, 4294901760
        %3633 = vmatpush1.msra.mxu0 %v3632
        %v3634 = vand.u32 %v3610, 4294901760
        %3635 = vmatprep.subr.mxu0 %v3634
        %v3636 = vand.u32 %v3609, 4294901760
        %3637 = vmatpush1.msra.mxu0 %v3636
        %3638 = vmatprep.subr.mxu0 0.0
        %3639 = vmatpush1.msra.mxu0 0.0
        %3640 = vmatprep.subr.mxu0 0.0
        %3641 = vmatpush1.msra.mxu0 0.0
        %3642 = vmatprep.subr.mxu0 0.0
        %3643 = vmatpush1.msra.mxu0 0.0
        %3644 = vmatprep.subr.mxu0 0.0
        %3645 = vmatpush1.msra.mxu0 0.0
        %3646 = vmatprep.subr.mxu0 0.0
        %3647 = vmatpush1.msra.mxu0 0.0
        %3648 = vmatprep.subr.mxu0 0.0
        %3649 = vmatpush1.msra.mxu0 0.0
        %3650 = vmatprep.subr.mxu0 0.0
        %3651 = vmatpush1.msra.mxu0 0.0
        %3652 = vmatprep.subr.mxu0 0.0
        %3653 = vmatpush1.msra.mxu0 0.0
        %3654 = vmatprep.subr.mxu0 0.0
        %3655 = vmatpush1.msra.mxu0 0.0
        %3656 = vmatprep.subr.mxu0 0.0
        %3657 = vmatpush1.msra.mxu0 0.0
        %3658 = vmatprep.subr.mxu0 0.0
        %3659 = vmatpush1.msra.mxu0 0.0
        %3660 = vmatprep.subr.mxu0 0.0
        %3661 = vmatpush1.msra.mxu0 0.0
        %3662 = vmatprep.subr.mxu0 0.0
        %3663 = vmatpush1.msra.mxu0 0.0
        %3664 = vmatprep.subr.mxu0 0.0
        %3665 = vmatpush1.msra.mxu0 0.0
        %3666 = vmatprep.subr.mxu0 0.0
        %3667 = vmatpush1.msra.mxu0 0.0
        %3668 = vmatprep.subr.mxu0 0.0
        %3669 = vmatpush1.msra.mxu0 0.0
        %3670 = vmatprep.subr.mxu0 0.0
        %3671 = vmatpush1.msra.mxu0 0.0
        %3672 = vmatprep.subr.mxu0 0.0
        %3673 = vmatpush1.msra.mxu0 0.0
        %3674 = vmatprep.subr.mxu0 0.0
        %3675 = vmatpush1.msra.mxu0 0.0
        %3676 = vmatprep.subr.mxu0 0.0
        %3677 = vmatpush1.msra.mxu0 0.0
        %3678 = vmatprep.subr.mxu0 0.0
        %3679 = vmatpush1.msra.mxu0 0.0
        %3680 = vmatprep.subr.mxu0 0.0
        %3681 = vmatpush1.msra.mxu0 0.0
        %3682 = vmatprep.subr.mxu0 0.0
        %3683 = vmatpush1.msra.mxu0 0.0
        %3684 = vmatprep.subr.mxu0 0.0
        %3685 = vmatpush1.msra.mxu0 0.0
        %3686 = vmatprep.subr.mxu0 0.0
        %3687 = vmatpush1.msra.mxu0 0.0
        %3688 = vmatprep.subr.mxu0 0.0
        %3689 = vmatpush1.msra.mxu0 0.0
        %3690 = vmatprep.subr.mxu0 0.0
        %3691 = vmatpush1.msra.mxu0 0.0
        %3692 = vmatprep.subr.mxu0 0.0
        %3693 = vmatpush1.msra.mxu0 0.0
        %3694 = vmatprep.mubr.f32.mxu0 0.0
        %v3695 = vand.u32 %v3620, 4294901760
        %v3696 = vsub.f32 %v3620, %v3695
        %v3697 = vand.u32 %v3696, 4294901760
        %v3698 = vsub.f32 %v3696, %v3697
        %v3699 = vand.u32 %v3698, 4294901760
        %3700 = vmatmul.mubr.f32.gmra.mrb[0].mxu0 %v3699
        %v3701 = vpop.f32.mrb[0].mxu0
        %v3702 = vadd.f32 0.0, %v3701
        %v3703 = vpop.f32.mrb[0].mxu0
        %v3704 = vadd.f32 0.0, %v3703
        %3705 = vdwg.mxu0
        %v3706 = vand.u32 %v3604, 4294901760
        %v3707 = vsub.f32 %v3604, %v3706
        %v3708 = vand.u32 %v3707, 4294901760
        %v3709 = vsub.f32 %v3707, %v3708
        %v3710 = vand.u32 %v3709, 4294901760
        %3711 = vmatprep.subr.mxu0 %v3710
        %v3712 = vand.u32 %v3603, 4294901760
        %v3713 = vsub.f32 %v3603, %v3712
        %v3714 = vand.u32 %v3713, 4294901760
        %v3715 = vsub.f32 %v3713, %v3714
        %v3716 = vand.u32 %v3715, 4294901760
        %3717 = vmatpush1.msra.mxu0 %v3716
        %v3718 = vand.u32 %v3606, 4294901760
        %v3719 = vsub.f32 %v3606, %v3718
        %v3720 = vand.u32 %v3719, 4294901760
        %v3721 = vsub.f32 %v3719, %v3720
        %v3722 = vand.u32 %v3721, 4294901760
        %3723 = vmatprep.subr.mxu0 %v3722
        %v3724 = vand.u32 %v3605, 4294901760
        %v3725 = vsub.f32 %v3605, %v3724
        %v3726 = vand.u32 %v3725, 4294901760
        %v3727 = vsub.f32 %v3725, %v3726
        %v3728 = vand.u32 %v3727, 4294901760
        %3729 = vmatpush1.msra.mxu0 %v3728
        %v3730 = vand.u32 %v3608, 4294901760
        %v3731 = vsub.f32 %v3608, %v3730
        %v3732 = vand.u32 %v3731, 4294901760
        %v3733 = vsub.f32 %v3731, %v3732
        %v3734 = vand.u32 %v3733, 4294901760
        %3735 = vmatprep.subr.mxu0 %v3734
        %v3736 = vand.u32 %v3607, 4294901760
        %v3737 = vsub.f32 %v3607, %v3736
        %v3738 = vand.u32 %v3737, 4294901760
        %v3739 = vsub.f32 %v3737, %v3738
        %v3740 = vand.u32 %v3739, 4294901760
        %3741 = vmatpush1.msra.mxu0 %v3740
        %v3742 = vand.u32 %v3610, 4294901760
        %v3743 = vsub.f32 %v3610, %v3742
        %v3744 = vand.u32 %v3743, 4294901760
        %v3745 = vsub.f32 %v3743, %v3744
        %v3746 = vand.u32 %v3745, 4294901760
        %3747 = vmatprep.subr.mxu0 %v3746
        %v3748 = vand.u32 %v3609, 4294901760
        %v3749 = vsub.f32 %v3609, %v3748
        %v3750 = vand.u32 %v3749, 4294901760
        %v3751 = vsub.f32 %v3749, %v3750
        %v3752 = vand.u32 %v3751, 4294901760
        %3753 = vmatpush1.msra.mxu0 %v3752
        %3754 = vmatprep.subr.mxu0 0.0
        %3755 = vmatpush1.msra.mxu0 0.0
        %3756 = vmatprep.subr.mxu0 0.0
        %3757 = vmatpush1.msra.mxu0 0.0
        %3758 = vmatprep.subr.mxu0 0.0
        %3759 = vmatpush1.msra.mxu0 0.0
        %3760 = vmatprep.subr.mxu0 0.0
        %3761 = vmatpush1.msra.mxu0 0.0
        %3762 = vmatprep.subr.mxu0 0.0
        %3763 = vmatpush1.msra.mxu0 0.0
        %3764 = vmatprep.subr.mxu0 0.0
        %3765 = vmatpush1.msra.mxu0 0.0
        %3766 = vmatprep.subr.mxu0 0.0
        %3767 = vmatpush1.msra.mxu0 0.0
        %3768 = vmatprep.subr.mxu0 0.0
        %3769 = vmatpush1.msra.mxu0 0.0
        %3770 = vmatprep.subr.mxu0 0.0
        %3771 = vmatpush1.msra.mxu0 0.0
        %3772 = vmatprep.subr.mxu0 0.0
        %3773 = vmatpush1.msra.mxu0 0.0
        %3774 = vmatprep.subr.mxu0 0.0
        %3775 = vmatpush1.msra.mxu0 0.0
        %3776 = vmatprep.subr.mxu0 0.0
        %3777 = vmatpush1.msra.mxu0 0.0
        %3778 = vmatprep.subr.mxu0 0.0
        %3779 = vmatpush1.msra.mxu0 0.0
        %3780 = vmatprep.subr.mxu0 0.0
        %3781 = vmatpush1.msra.mxu0 0.0
        %3782 = vmatprep.subr.mxu0 0.0
        %3783 = vmatpush1.msra.mxu0 0.0
        %3784 = vmatprep.subr.mxu0 0.0
        %3785 = vmatpush1.msra.mxu0 0.0
        %3786 = vmatprep.subr.mxu0 0.0
        %3787 = vmatpush1.msra.mxu0 0.0
        %3788 = vmatprep.subr.mxu0 0.0
        %3789 = vmatpush1.msra.mxu0 0.0
        %3790 = vmatprep.subr.mxu0 0.0
        %3791 = vmatpush1.msra.mxu0 0.0
        %3792 = vmatprep.subr.mxu0 0.0
        %3793 = vmatpush1.msra.mxu0 0.0
        %3794 = vmatprep.subr.mxu0 0.0
        %3795 = vmatpush1.msra.mxu0 0.0
        %3796 = vmatprep.subr.mxu0 0.0
        %3797 = vmatpush1.msra.mxu0 0.0
        %3798 = vmatprep.subr.mxu0 0.0
        %3799 = vmatpush1.msra.mxu0 0.0
        %3800 = vmatprep.subr.mxu0 0.0
        %3801 = vmatpush1.msra.mxu0 0.0
        %3802 = vmatprep.subr.mxu0 0.0
        %3803 = vmatpush1.msra.mxu0 0.0
        %3804 = vmatprep.subr.mxu0 0.0
        %3805 = vmatpush1.msra.mxu0 0.0
        %3806 = vmatprep.subr.mxu0 0.0
        %3807 = vmatpush1.msra.mxu0 0.0
        %3808 = vmatprep.subr.mxu0 0.0
        %3809 = vmatpush1.msra.mxu0 0.0
        %3810 = vmatprep.mubr.f32.mxu0 0.0
        %v3811 = vand.u32 %v3620, 4294901760
        %3812 = vmatmul.mubr.f32.gmra.mrb[0].mxu0 %v3811
        %v3813 = vpop.f32.mrb[0].mxu0
        %v3814 = vadd.f32 %v3702, %v3813
        %v3815 = vpop.f32.mrb[0].mxu0
        %v3816 = vadd.f32 %v3704, %v3815
        %3817 = vdwg.mxu0
        %v3818 = vand.u32 %v3604, 4294901760
        %v3819 = vsub.f32 %v3604, %v3818
        %3820 = vmatprep.subr.mxu0 %v3819
        %v3821 = vand.u32 %v3603, 4294901760
        %v3822 = vsub.f32 %v3603, %v3821
        %3823 = vmatpush1.msra.mxu0 %v3822
        %v3824 = vand.u32 %v3606, 4294901760
        %v3825 = vsub.f32 %v3606, %v3824
        %3826 = vmatprep.subr.mxu0 %v3825
        %v3827 = vand.u32 %v3605, 4294901760
        %v3828 = vsub.f32 %v3605, %v3827
        %3829 = vmatpush1.msra.mxu0 %v3828
        %v3830 = vand.u32 %v3608, 4294901760
        %v3831 = vsub.f32 %v3608, %v3830
        %3832 = vmatprep.subr.mxu0 %v3831
        %v3833 = vand.u32 %v3607, 4294901760
        %v3834 = vsub.f32 %v3607, %v3833
        %3835 = vmatpush1.msra.mxu0 %v3834
        %v3836 = vand.u32 %v3610, 4294901760
        %v3837 = vsub.f32 %v3610, %v3836
        %3838 = vmatprep.subr.mxu0 %v3837
        %v3839 = vand.u32 %v3609, 4294901760
        %v3840 = vsub.f32 %v3609, %v3839
        %3841 = vmatpush1.msra.mxu0 %v3840
        %3842 = vmatprep.subr.mxu0 0.0
        %3843 = vmatpush1.msra.mxu0 0.0
        %3844 = vmatprep.subr.mxu0 0.0
        %3845 = vmatpush1.msra.mxu0 0.0
        %3846 = vmatprep.subr.mxu0 0.0
        %3847 = vmatpush1.msra.mxu0 0.0
        %3848 = vmatprep.subr.mxu0 0.0
        %3849 = vmatpush1.msra.mxu0 0.0
        %3850 = vmatprep.subr.mxu0 0.0
        %3851 = vmatpush1.msra.mxu0 0.0
        %3852 = vmatprep.subr.mxu0 0.0
        %3853 = vmatpush1.msra.mxu0 0.0
        %3854 = vmatprep.subr.mxu0 0.0
        %3855 = vmatpush1.msra.mxu0 0.0
        %3856 = vmatprep.subr.mxu0 0.0
        %3857 = vmatpush1.msra.mxu0 0.0
        %3858 = vmatprep.subr.mxu0 0.0
        %3859 = vmatpush1.msra.mxu0 0.0
        %3860 = vmatprep.subr.mxu0 0.0
        %3861 = vmatpush1.msra.mxu0 0.0
        %3862 = vmatprep.subr.mxu0 0.0
        %3863 = vmatpush1.msra.mxu0 0.0
        %3864 = vmatprep.subr.mxu0 0.0
        %3865 = vmatpush1.msra.mxu0 0.0
        %3866 = vmatprep.subr.mxu0 0.0
        %3867 = vmatpush1.msra.mxu0 0.0
        %3868 = vmatprep.subr.mxu0 0.0
        %3869 = vmatpush1.msra.mxu0 0.0
        %3870 = vmatprep.subr.mxu0 0.0
        %3871 = vmatpush1.msra.mxu0 0.0
        %3872 = vmatprep.subr.mxu0 0.0
        %3873 = vmatpush1.msra.mxu0 0.0
        %3874 = vmatprep.subr.mxu0 0.0
        %3875 = vmatpush1.msra.mxu0 0.0
        %3876 = vmatprep.subr.mxu0 0.0
        %3877 = vmatpush1.msra.mxu0 0.0
        %3878 = vmatprep.subr.mxu0 0.0
        %3879 = vmatpush1.msra.mxu0 0.0
        %3880 = vmatprep.subr.mxu0 0.0
        %3881 = vmatpush1.msra.mxu0 0.0
        %3882 = vmatprep.subr.mxu0 0.0
        %3883 = vmatpush1.msra.mxu0 0.0
        %3884 = vmatprep.subr.mxu0 0.0
        %3885 = vmatpush1.msra.mxu0 0.0
        %3886 = vmatprep.subr.mxu0 0.0
        %3887 = vmatpush1.msra.mxu0 0.0
        %3888 = vmatprep.subr.mxu0 0.0
        %3889 = vmatpush1.msra.mxu0 0.0
        %3890 = vmatprep.subr.mxu0 0.0
        %3891 = vmatpush1.msra.mxu0 0.0
        %3892 = vmatprep.subr.mxu0 0.0
        %3893 = vmatpush1.msra.mxu0 0.0
        %3894 = vmatprep.subr.mxu0 0.0
        %3895 = vmatpush1.msra.mxu0 0.0
        %3896 = vmatprep.subr.mxu0 0.0
        %3897 = vmatpush1.msra.mxu0 0.0
        %3898 = vmatprep.mubr.f32.mxu0 0.0
        %v3899 = vand.u32 %v3620, 4294901760
        %v3900 = vsub.f32 %v3620, %v3899
        %3901 = vmatmul.mubr.f32.gmra.mrb[0].mxu0 %v3900
        %v3902 = vpop.f32.mrb[0].mxu0
        %v3903 = vadd.f32 %v3814, %v3902
        %v3904 = vpop.f32.mrb[0].mxu0
        %v3905 = vadd.f32 %v3816, %v3904
        %3906 = vdwg.mxu0
        %v3907 = vand.u32 %v3604, 4294901760
        %3908 = vmatprep.subr.mxu0 %v3907
        %v3909 = vand.u32 %v3603, 4294901760
        %3910 = vmatpush1.msra.mxu0 %v3909
        %v3911 = vand.u32 %v3606, 4294901760
        %3912 = vmatprep.subr.mxu0 %v3911
        %v3913 = vand.u32 %v3605, 4294901760
        %3914 = vmatpush1.msra.mxu0 %v3913
        %v3915 = vand.u32 %v3608, 4294901760
        %3916 = vmatprep.subr.mxu0 %v3915
        %v3917 = vand.u32 %v3607, 4294901760
        %3918 = vmatpush1.msra.mxu0 %v3917
        %v3919 = vand.u32 %v3610, 4294901760
        %3920 = vmatprep.subr.mxu0 %v3919
        %v3921 = vand.u32 %v3609, 4294901760
        %3922 = vmatpush1.msra.mxu0 %v3921
        %3923 = vmatprep.subr.mxu0 0.0
        %3924 = vmatpush1.msra.mxu0 0.0
        %3925 = vmatprep.subr.mxu0 0.0
        %3926 = vmatpush1.msra.mxu0 0.0
        %3927 = vmatprep.subr.mxu0 0.0
        %3928 = vmatpush1.msra.mxu0 0.0
        %3929 = vmatprep.subr.mxu0 0.0
        %3930 = vmatpush1.msra.mxu0 0.0
        %3931 = vmatprep.subr.mxu0 0.0
        %3932 = vmatpush1.msra.mxu0 0.0
        %3933 = vmatprep.subr.mxu0 0.0
        %3934 = vmatpush1.msra.mxu0 0.0
        %3935 = vmatprep.subr.mxu0 0.0
        %3936 = vmatpush1.msra.mxu0 0.0
        %3937 = vmatprep.subr.mxu0 0.0
        %3938 = vmatpush1.msra.mxu0 0.0
        %3939 = vmatprep.subr.mxu0 0.0
        %3940 = vmatpush1.msra.mxu0 0.0
        %3941 = vmatprep.subr.mxu0 0.0
        %3942 = vmatpush1.msra.mxu0 0.0
        %3943 = vmatprep.subr.mxu0 0.0
        %3944 = vmatpush1.msra.mxu0 0.0
        %3945 = vmatprep.subr.mxu0 0.0
        %3946 = vmatpush1.msra.mxu0 0.0
        %3947 = vmatprep.subr.mxu0 0.0
        %3948 = vmatpush1.msra.mxu0 0.0
        %3949 = vmatprep.subr.mxu0 0.0
        %3950 = vmatpush1.msra.mxu0 0.0
        %3951 = vmatprep.subr.mxu0 0.0
        %3952 = vmatpush1.msra.mxu0 0.0
        %3953 = vmatprep.subr.mxu0 0.0
        %3954 = vmatpush1.msra.mxu0 0.0
        %3955 = vmatprep.subr.mxu0 0.0
        %3956 = vmatpush1.msra.mxu0 0.0
        %3957 = vmatprep.subr.mxu0 0.0
        %3958 = vmatpush1.msra.mxu0 0.0
        %3959 = vmatprep.subr.mxu0 0.0
        %3960 = vmatpush1.msra.mxu0 0.0
        %3961 = vmatprep.subr.mxu0 0.0
        %3962 = vmatpush1.msra.mxu0 0.0
        %3963 = vmatprep.subr.mxu0 0.0
        %3964 = vmatpush1.msra.mxu0 0.0
        %3965 = vmatprep.subr.mxu0 0.0
        %3966 = vmatpush1.msra.mxu0 0.0
        %3967 = vmatprep.subr.mxu0 0.0
        %3968 = vmatpush1.msra.mxu0 0.0
        %3969 = vmatprep.subr.mxu0 0.0
        %3970 = vmatpush1.msra.mxu0 0.0
        %3971 = vmatprep.subr.mxu0 0.0
        %3972 = vmatpush1.msra.mxu0 0.0
        %3973 = vmatprep.subr.mxu0 0.0
        %3974 = vmatpush1.msra.mxu0 0.0
        %3975 = vmatprep.subr.mxu0 0.0
        %3976 = vmatpush1.msra.mxu0 0.0
        %3977 = vmatprep.subr.mxu0 0.0
        %3978 = vmatpush1.msra.mxu0 0.0
        %3979 = vmatprep.mubr.f32.mxu0 0.0
        %v3980 = vand.u32 %v3620, 4294901760
        %v3981 = vsub.f32 %v3620, %v3980
        %v3982 = vand.u32 %v3981, 4294901760
        %3983 = vmatmul.mubr.f32.gmra.mrb[0].mxu0 %v3982
        %v3984 = vpop.f32.mrb[0].mxu0
        %v3985 = vadd.f32 %v3903, %v3984
        %v3986 = vpop.f32.mrb[0].mxu0
        %v3987 = vadd.f32 %v3905, %v3986
        %3988 = vdwg.mxu0
        %v3989 = vand.u32 %v3604, 4294901760
        %v3990 = vsub.f32 %v3604, %v3989
        %v3991 = vand.u32 %v3990, 4294901760
        %3992 = vmatprep.subr.mxu0 %v3991
        %v3993 = vand.u32 %v3603, 4294901760
        %v3994 = vsub.f32 %v3603, %v3993
        %v3995 = vand.u32 %v3994, 4294901760
        %3996 = vmatpush1.msra.mxu0 %v3995
        %v3997 = vand.u32 %v3606, 4294901760
        %v3998 = vsub.f32 %v3606, %v3997
        %v3999 = vand.u32 %v3998, 4294901760
        %4000 = vmatprep.subr.mxu0 %v3999
        %v4001 = vand.u32 %v3605, 4294901760
        %v4002 = vsub.f32 %v3605, %v4001
        %v4003 = vand.u32 %v4002, 4294901760
        %4004 = vmatpush1.msra.mxu0 %v4003
        %v4005 = vand.u32 %v3608, 4294901760
        %v4006 = vsub.f32 %v3608, %v4005
        %v4007 = vand.u32 %v4006, 4294901760
        %4008 = vmatprep.subr.mxu0 %v4007
        %v4009 = vand.u32 %v3607, 4294901760
        %v4010 = vsub.f32 %v3607, %v4009
        %v4011 = vand.u32 %v4010, 4294901760
        %4012 = vmatpush1.msra.mxu0 %v4011
        %v4013 = vand.u32 %v3610, 4294901760
        %v4014 = vsub.f32 %v3610, %v4013
        %v4015 = vand.u32 %v4014, 4294901760
        %4016 = vmatprep.subr.mxu0 %v4015
        %v4017 = vand.u32 %v3609, 4294901760
        %v4018 = vsub.f32 %v3609, %v4017
        %v4019 = vand.u32 %v4018, 4294901760
        %4020 = vmatpush1.msra.mxu0 %v4019
        %4021 = vmatprep.subr.mxu0 0.0
        %4022 = vmatpush1.msra.mxu0 0.0
        %4023 = vmatprep.subr.mxu0 0.0
        %4024 = vmatpush1.msra.mxu0 0.0
        %4025 = vmatprep.subr.mxu0 0.0
        %4026 = vmatpush1.msra.mxu0 0.0
        %4027 = vmatprep.subr.mxu0 0.0
        %4028 = vmatpush1.msra.mxu0 0.0
        %4029 = vmatprep.subr.mxu0 0.0
        %4030 = vmatpush1.msra.mxu0 0.0
        %4031 = vmatprep.subr.mxu0 0.0
        %4032 = vmatpush1.msra.mxu0 0.0
        %4033 = vmatprep.subr.mxu0 0.0
        %4034 = vmatpush1.msra.mxu0 0.0
        %4035 = vmatprep.subr.mxu0 0.0
        %4036 = vmatpush1.msra.mxu0 0.0
        %4037 = vmatprep.subr.mxu0 0.0
        %4038 = vmatpush1.msra.mxu0 0.0
        %4039 = vmatprep.subr.mxu0 0.0
        %4040 = vmatpush1.msra.mxu0 0.0
        %4041 = vmatprep.subr.mxu0 0.0
        %4042 = vmatpush1.msra.mxu0 0.0
        %4043 = vmatprep.subr.mxu0 0.0
        %4044 = vmatpush1.msra.mxu0 0.0
        %4045 = vmatprep.subr.mxu0 0.0
        %4046 = vmatpush1.msra.mxu0 0.0
        %4047 = vmatprep.subr.mxu0 0.0
        %4048 = vmatpush1.msra.mxu0 0.0
        %4049 = vmatprep.subr.mxu0 0.0
        %4050 = vmatpush1.msra.mxu0 0.0
        %4051 = vmatprep.subr.mxu0 0.0
        %4052 = vmatpush1.msra.mxu0 0.0
        %4053 = vmatprep.subr.mxu0 0.0
        %4054 = vmatpush1.msra.mxu0 0.0
        %4055 = vmatprep.subr.mxu0 0.0
        %4056 = vmatpush1.msra.mxu0 0.0
        %4057 = vmatprep.subr.mxu0 0.0
        %4058 = vmatpush1.msra.mxu0 0.0
        %4059 = vmatprep.subr.mxu0 0.0
        %4060 = vmatpush1.msra.mxu0 0.0
        %4061 = vmatprep.subr.mxu0 0.0
        %4062 = vmatpush1.msra.mxu0 0.0
        %4063 = vmatprep.subr.mxu0 0.0
        %4064 = vmatpush1.msra.mxu0 0.0
        %4065 = vmatprep.subr.mxu0 0.0
        %4066 = vmatpush1.msra.mxu0 0.0
        %4067 = vmatprep.subr.mxu0 0.0
        %4068 = vmatpush1.msra.mxu0 0.0
        %4069 = vmatprep.subr.mxu0 0.0
        %4070 = vmatpush1.msra.mxu0 0.0
        %4071 = vmatprep.subr.mxu0 0.0
        %4072 = vmatpush1.msra.mxu0 0.0
        %4073 = vmatprep.subr.mxu0 0.0
        %4074 = vmatpush1.msra.mxu0 0.0
        %4075 = vmatprep.subr.mxu0 0.0
        %4076 = vmatpush1.msra.mxu0 0.0
        %4077 = vmatprep.mubr.f32.mxu0 0.0
        %v4078 = vand.u32 %v3620, 4294901760
        %4079 = vmatmul.mubr.f32.gmra.mrb[0].mxu0 %v4078
        %v4080 = vpop.f32.mrb[0].mxu0
        %v4081 = vadd.f32 %v3985, %v4080
        %v4082 = vpop.f32.mrb[0].mxu0
        %v4083 = vadd.f32 %v3987, %v4082
        %4084 = vdwg.mxu0
        %v4085 = vand.u32 %v3604, 4294901760
        %4086 = vmatprep.subr.mxu0 %v4085
        %v4087 = vand.u32 %v3603, 4294901760
        %4088 = vmatpush1.msra.mxu0 %v4087
        %v4089 = vand.u32 %v3606, 4294901760
        %4090 = vmatprep.subr.mxu0 %v4089
        %v4091 = vand.u32 %v3605, 4294901760
        %4092 = vmatpush1.msra.mxu0 %v4091
        %v4093 = vand.u32 %v3608, 4294901760
        %4094 = vmatprep.subr.mxu0 %v4093
        %v4095 = vand.u32 %v3607, 4294901760
        %4096 = vmatpush1.msra.mxu0 %v4095
        %v4097 = vand.u32 %v3610, 4294901760
        %4098 = vmatprep.subr.mxu0 %v4097
        %v4099 = vand.u32 %v3609, 4294901760
        %4100 = vmatpush1.msra.mxu0 %v4099
        %4101 = vmatprep.subr.mxu0 0.0
        %4102 = vmatpush1.msra.mxu0 0.0
        %4103 = vmatprep.subr.mxu0 0.0
        %4104 = vmatpush1.msra.mxu0 0.0
        %4105 = vmatprep.subr.mxu0 0.0
        %4106 = vmatpush1.msra.mxu0 0.0
        %4107 = vmatprep.subr.mxu0 0.0
        %4108 = vmatpush1.msra.mxu0 0.0
        %4109 = vmatprep.subr.mxu0 0.0
        %4110 = vmatpush1.msra.mxu0 0.0
        %4111 = vmatprep.subr.mxu0 0.0
        %4112 = vmatpush1.msra.mxu0 0.0
        %4113 = vmatprep.subr.mxu0 0.0
        %4114 = vmatpush1.msra.mxu0 0.0
        %4115 = vmatprep.subr.mxu0 0.0
        %4116 = vmatpush1.msra.mxu0 0.0
        %4117 = vmatprep.subr.mxu0 0.0
        %4118 = vmatpush1.msra.mxu0 0.0
        %4119 = vmatprep.subr.mxu0 0.0
        %4120 = vmatpush1.msra.mxu0 0.0
        %4121 = vmatprep.subr.mxu0 0.0
        %4122 = vmatpush1.msra.mxu0 0.0
        %4123 = vmatprep.subr.mxu0 0.0
        %4124 = vmatpush1.msra.mxu0 0.0
        %4125 = vmatprep.subr.mxu0 0.0
        %4126 = vmatpush1.msra.mxu0 0.0
        %4127 = vmatprep.subr.mxu0 0.0
        %4128 = vmatpush1.msra.mxu0 0.0
        %4129 = vmatprep.subr.mxu0 0.0
        %4130 = vmatpush1.msra.mxu0 0.0
        %4131 = vmatprep.subr.mxu0 0.0
        %4132 = vmatpush1.msra.mxu0 0.0
        %4133 = vmatprep.subr.mxu0 0.0
        %4134 = vmatpush1.msra.mxu0 0.0
        %4135 = vmatprep.subr.mxu0 0.0
        %4136 = vmatpush1.msra.mxu0 0.0
        %4137 = vmatprep.subr.mxu0 0.0
        %4138 = vmatpush1.msra.mxu0 0.0
        %4139 = vmatprep.subr.mxu0 0.0
        %4140 = vmatpush1.msra.mxu0 0.0
        %4141 = vmatprep.subr.mxu0 0.0
        %4142 = vmatpush1.msra.mxu0 0.0
        %4143 = vmatprep.subr.mxu0 0.0
        %4144 = vmatpush1.msra.mxu0 0.0
        %4145 = vmatprep.subr.mxu0 0.0
        %4146 = vmatpush1.msra.mxu0 0.0
        %4147 = vmatprep.subr.mxu0 0.0
        %4148 = vmatpush1.msra.mxu0 0.0
        %4149 = vmatprep.subr.mxu0 0.0
        %4150 = vmatpush1.msra.mxu0 0.0
        %4151 = vmatprep.subr.mxu0 0.0
        %4152 = vmatpush1.msra.mxu0 0.0
        %4153 = vmatprep.subr.mxu0 0.0
        %4154 = vmatpush1.msra.mxu0 0.0
        %4155 = vmatprep.subr.mxu0 0.0
        %4156 = vmatpush1.msra.mxu0 0.0
        %4157 = vmatprep.mubr.f32.mxu0 0.0
        %v4158 = vand.u32 %v3620, 4294901760
        %4159 = vmatmul.mubr.f32.gmra.mrb[0].mxu0 %v4158
        %v4160 = vpop.f32.mrb[0].mxu0
        %v4161 = vadd.f32 %v4081, %v4160
        %v4162 = vpop.f32.mrb[0].mxu0
        %v4163 = vadd.f32 %v4083, %v4162
        %4164 = vdwg.mxu0
        %v4165 = vmul.f32 %v4161, %v559
        %v4166 = vmul.f32 %v4163, %v560
        %v4167 = vadd.f32 %v3551, %v4165
        %v4168 = vadd.f32 %v3552, %v4166
        %v4169 = vld [vmem:[%s4 + $0xc] sm:$0x3]
        %4170 = vrot.lane.b32.xlu0 %v3553, 113
        %v4171 = vpop.permute.xlu0 %4170
        %4172 = vrot.lane.b32.xlu0 %v3554, 113
        %v4173 = vpop.permute.xlu0 %4172
        %4174 = vrot.lane.b32.xlu0 %v3555, 113
        %v4175 = vpop.permute.xlu0 %4174
        %4176 = vrot.lane.b32.xlu0 %v3556, 113
        %v4177 = vpop.permute.xlu0 %4176
        %4178 = vrot.lane.b32.xlu0 %v3557, 113
        %v4179 = vpop.permute.xlu0 %4178
        %4180 = vrot.lane.b32.xlu0 %v3558, 113
        %v4181 = vpop.permute.xlu0 %4180
        %4182 = vrot.lane.b32.xlu0 %v3559, 113
        %v4183 = vpop.permute.xlu0 %4182
        %4184 = vrot.lane.b32.xlu0 %v3560, 113
        %v4185 = vpop.permute.xlu0 %4184
        %4186 = vrot.lane.b32.xlu0 %v3561, 113
        %v4187 = vpop.permute.xlu0 %4186
        %4188 = vrot.lane.b32.xlu0 %v3562, 113
        %v4189 = vpop.permute.xlu0 %4188
        %4190 = vrot.lane.b32.xlu0 %v3563, 113
        %v4191 = vpop.permute.xlu0 %4190
        %4192 = vrot.lane.b32.xlu0 %v3564, 113
        %v4193 = vpop.permute.xlu0 %4192
        %vm4194 = vcmask 924672
        %v4195 = vsel %vm4194, %v4171, %v4173
        %v4196 = vsel %vm4194, %v4173, %v4175
        %v4197 = vsel %vm4194, %v4177, %v4179
        %v4198 = vsel %vm4194, %v4179, %v4181
        %v4199 = vsel %vm4194, %v4183, %v4185
        %v4200 = vsel %vm4194, %v4185, %v4187
        %v4201 = vsel %vm4194, %v4189, %v4191
        %v4202 = vsel %vm4194, %v4191, %v4193
        %v4212 = vsel %vm675, %v4169, 0
        %v4214 = vand.u32 %v4196, 4294901760
        %4215 = vmatprep.subr.mxu0 %v4214
        %v4216 = vand.u32 %v4195, 4294901760
        %4217 = vmatpush1.msra.mxu0 %v4216
        %v4218 = vand.u32 %v4198, 4294901760
        %4219 = vmatprep.subr.mxu0 %v4218
        %v4220 = vand.u32 %v4197, 4294901760
        %4221 = vmatpush1.msra.mxu0 %v4220
        %v4222 = vand.u32 %v4200, 4294901760
        %4223 = vmatprep.subr.mxu0 %v4222
        %v4224 = vand.u32 %v4199, 4294901760
        %4225 = vmatpush1.msra.mxu0 %v4224
        %v4226 = vand.u32 %v4202, 4294901760
        %4227 = vmatprep.subr.mxu0 %v4226
        %v4228 = vand.u32 %v4201, 4294901760
        %4229 = vmatpush1.msra.mxu0 %v4228
        %4230 = vmatprep.subr.mxu0 0.0
        %4231 = vmatpush1.msra.mxu0 0.0
        %4232 = vmatprep.subr.mxu0 0.0
        %4233 = vmatpush1.msra.mxu0 0.0
        %4234 = vmatprep.subr.mxu0 0.0
        %4235 = vmatpush1.msra.mxu0 0.0
        %4236 = vmatprep.subr.mxu0 0.0
        %4237 = vmatpush1.msra.mxu0 0.0
        %4238 = vmatprep.subr.mxu0 0.0
        %4239 = vmatpush1.msra.mxu0 0.0
        %4240 = vmatprep.subr.mxu0 0.0
        %4241 = vmatpush1.msra.mxu0 0.0
        %4242 = vmatprep.subr.mxu0 0.0
        %4243 = vmatpush1.msra.mxu0 0.0
        %4244 = vmatprep.subr.mxu0 0.0
        %4245 = vmatpush1.msra.mxu0 0.0
        %4246 = vmatprep.subr.mxu0 0.0
        %4247 = vmatpush1.msra.mxu0 0.0
        %4248 = vmatprep.subr.mxu0 0.0
        %4249 = vmatpush1.msra.mxu0 0.0
        %4250 = vmatprep.subr.mxu0 0.0
        %4251 = vmatpush1.msra.mxu0 0.0
        %4252 = vmatprep.subr.mxu0 0.0
        %4253 = vmatpush1.msra.mxu0 0.0
        %4254 = vmatprep.subr.mxu0 0.0
        %4255 = vmatpush1.msra.mxu0 0.0
        %4256 = vmatprep.subr.mxu0 0.0
        %4257 = vmatpush1.msra.mxu0 0.0
        %4258 = vmatprep.subr.mxu0 0.0
        %4259 = vmatpush1.msra.mxu0 0.0
        %4260 = vmatprep.subr.mxu0 0.0
        %4261 = vmatpush1.msra.mxu0 0.0
        %4262 = vmatprep.subr.mxu0 0.0
        %4263 = vmatpush1.msra.mxu0 0.0
        %4264 = vmatprep.subr.mxu0 0.0
        %4265 = vmatpush1.msra.mxu0 0.0
        %4266 = vmatprep.subr.mxu0 0.0
        %4267 = vmatpush1.msra.mxu0 0.0
        %4268 = vmatprep.subr.mxu0 0.0
        %4269 = vmatpush1.msra.mxu0 0.0
        %4270 = vmatprep.subr.mxu0 0.0
        %4271 = vmatpush1.msra.mxu0 0.0
        %4272 = vmatprep.subr.mxu0 0.0
        %4273 = vmatpush1.msra.mxu0 0.0
        %4274 = vmatprep.subr.mxu0 0.0
        %4275 = vmatpush1.msra.mxu0 0.0
        %4276 = vmatprep.subr.mxu0 0.0
        %4277 = vmatpush1.msra.mxu0 0.0
        %4278 = vmatprep.subr.mxu0 0.0
        %4279 = vmatpush1.msra.mxu0 0.0
        %4280 = vmatprep.subr.mxu0 0.0
        %4281 = vmatpush1.msra.mxu0 0.0
        %4282 = vmatprep.subr.mxu0 0.0
        %4283 = vmatpush1.msra.mxu0 0.0
        %4284 = vmatprep.subr.mxu0 0.0
        %4285 = vmatpush1.msra.mxu0 0.0
        %4286 = vmatprep.mubr.f32.mxu0 0.0
        %v4287 = vand.u32 %v4212, 4294901760
        %v4288 = vsub.f32 %v4212, %v4287
        %v4289 = vand.u32 %v4288, 4294901760
        %v4290 = vsub.f32 %v4288, %v4289
        %v4291 = vand.u32 %v4290, 4294901760
        %4292 = vmatmul.mubr.f32.gmra.mrb[0].mxu0 %v4291
        %v4293 = vpop.f32.mrb[0].mxu0
        %v4294 = vadd.f32 0.0, %v4293
        %v4295 = vpop.f32.mrb[0].mxu0
        %v4296 = vadd.f32 0.0, %v4295
        %4297 = vdwg.mxu0
        %v4298 = vand.u32 %v4196, 4294901760
        %v4299 = vsub.f32 %v4196, %v4298
        %v4300 = vand.u32 %v4299, 4294901760
        %v4301 = vsub.f32 %v4299, %v4300
        %v4302 = vand.u32 %v4301, 4294901760
        %4303 = vmatprep.subr.mxu0 %v4302
        %v4304 = vand.u32 %v4195, 4294901760
        %v4305 = vsub.f32 %v4195, %v4304
        %v4306 = vand.u32 %v4305, 4294901760
        %v4307 = vsub.f32 %v4305, %v4306
        %v4308 = vand.u32 %v4307, 4294901760
        %4309 = vmatpush1.msra.mxu0 %v4308
        %v4310 = vand.u32 %v4198, 4294901760
        %v4311 = vsub.f32 %v4198, %v4310
        %v4312 = vand.u32 %v4311, 4294901760
        %v4313 = vsub.f32 %v4311, %v4312
        %v4314 = vand.u32 %v4313, 4294901760
        %4315 = vmatprep.subr.mxu0 %v4314
        %v4316 = vand.u32 %v4197, 4294901760
        %v4317 = vsub.f32 %v4197, %v4316
        %v4318 = vand.u32 %v4317, 4294901760
        %v4319 = vsub.f32 %v4317, %v4318
        %v4320 = vand.u32 %v4319, 4294901760
        %4321 = vmatpush1.msra.mxu0 %v4320
        %v4322 = vand.u32 %v4200, 4294901760
        %v4323 = vsub.f32 %v4200, %v4322
        %v4324 = vand.u32 %v4323, 4294901760
        %v4325 = vsub.f32 %v4323, %v4324
        %v4326 = vand.u32 %v4325, 4294901760
        %4327 = vmatprep.subr.mxu0 %v4326
        %v4328 = vand.u32 %v4199, 4294901760
        %v4329 = vsub.f32 %v4199, %v4328
        %v4330 = vand.u32 %v4329, 4294901760
        %v4331 = vsub.f32 %v4329, %v4330
        %v4332 = vand.u32 %v4331, 4294901760
        %4333 = vmatpush1.msra.mxu0 %v4332
        %v4334 = vand.u32 %v4202, 4294901760
        %v4335 = vsub.f32 %v4202, %v4334
        %v4336 = vand.u32 %v4335, 4294901760
        %v4337 = vsub.f32 %v4335, %v4336
        %v4338 = vand.u32 %v4337, 4294901760
        %4339 = vmatprep.subr.mxu0 %v4338
        %v4340 = vand.u32 %v4201, 4294901760
        %v4341 = vsub.f32 %v4201, %v4340
        %v4342 = vand.u32 %v4341, 4294901760
        %v4343 = vsub.f32 %v4341, %v4342
        %v4344 = vand.u32 %v4343, 4294901760
        %4345 = vmatpush1.msra.mxu0 %v4344
        %4346 = vmatprep.subr.mxu0 0.0
        %4347 = vmatpush1.msra.mxu0 0.0
        %4348 = vmatprep.subr.mxu0 0.0
        %4349 = vmatpush1.msra.mxu0 0.0
        %4350 = vmatprep.subr.mxu0 0.0
        %4351 = vmatpush1.msra.mxu0 0.0
        %4352 = vmatprep.subr.mxu0 0.0
        %4353 = vmatpush1.msra.mxu0 0.0
        %4354 = vmatprep.subr.mxu0 0.0
        %4355 = vmatpush1.msra.mxu0 0.0
        %4356 = vmatprep.subr.mxu0 0.0
        %4357 = vmatpush1.msra.mxu0 0.0
        %4358 = vmatprep.subr.mxu0 0.0
        %4359 = vmatpush1.msra.mxu0 0.0
        %4360 = vmatprep.subr.mxu0 0.0
        %4361 = vmatpush1.msra.mxu0 0.0
        %4362 = vmatprep.subr.mxu0 0.0
        %4363 = vmatpush1.msra.mxu0 0.0
        %4364 = vmatprep.subr.mxu0 0.0
        %4365 = vmatpush1.msra.mxu0 0.0
        %4366 = vmatprep.subr.mxu0 0.0
        %4367 = vmatpush1.msra.mxu0 0.0
        %4368 = vmatprep.subr.mxu0 0.0
        %4369 = vmatpush1.msra.mxu0 0.0
        %4370 = vmatprep.subr.mxu0 0.0
        %4371 = vmatpush1.msra.mxu0 0.0
        %4372 = vmatprep.subr.mxu0 0.0
        %4373 = vmatpush1.msra.mxu0 0.0
        %4374 = vmatprep.subr.mxu0 0.0
        %4375 = vmatpush1.msra.mxu0 0.0
        %4376 = vmatprep.subr.mxu0 0.0
        %4377 = vmatpush1.msra.mxu0 0.0
        %4378 = vmatprep.subr.mxu0 0.0
        %4379 = vmatpush1.msra.mxu0 0.0
        %4380 = vmatprep.subr.mxu0 0.0
        %4381 = vmatpush1.msra.mxu0 0.0
        %4382 = vmatprep.subr.mxu0 0.0
        %4383 = vmatpush1.msra.mxu0 0.0
        %4384 = vmatprep.subr.mxu0 0.0
        %4385 = vmatpush1.msra.mxu0 0.0
        %4386 = vmatprep.subr.mxu0 0.0
        %4387 = vmatpush1.msra.mxu0 0.0
        %4388 = vmatprep.subr.mxu0 0.0
        %4389 = vmatpush1.msra.mxu0 0.0
        %4390 = vmatprep.subr.mxu0 0.0
        %4391 = vmatpush1.msra.mxu0 0.0
        %4392 = vmatprep.subr.mxu0 0.0
        %4393 = vmatpush1.msra.mxu0 0.0
        %4394 = vmatprep.subr.mxu0 0.0
        %4395 = vmatpush1.msra.mxu0 0.0
        %4396 = vmatprep.subr.mxu0 0.0
        %4397 = vmatpush1.msra.mxu0 0.0
        %4398 = vmatprep.subr.mxu0 0.0
        %4399 = vmatpush1.msra.mxu0 0.0
        %4400 = vmatprep.subr.mxu0 0.0
        %4401 = vmatpush1.msra.mxu0 0.0
        %4402 = vmatprep.mubr.f32.mxu0 0.0
        %v4403 = vand.u32 %v4212, 4294901760
        %4404 = vmatmul.mubr.f32.gmra.mrb[0].mxu0 %v4403
        %v4405 = vpop.f32.mrb[0].mxu0
        %v4406 = vadd.f32 %v4294, %v4405
        %v4407 = vpop.f32.mrb[0].mxu0
        %v4408 = vadd.f32 %v4296, %v4407
        %4409 = vdwg.mxu0
        %v4410 = vand.u32 %v4196, 4294901760
        %v4411 = vsub.f32 %v4196, %v4410
        %4412 = vmatprep.subr.mxu0 %v4411
        %v4413 = vand.u32 %v4195, 4294901760
        %v4414 = vsub.f32 %v4195, %v4413
        %4415 = vmatpush1.msra.mxu0 %v4414
        %v4416 = vand.u32 %v4198, 4294901760
        %v4417 = vsub.f32 %v4198, %v4416
        %4418 = vmatprep.subr.mxu0 %v4417
        %v4419 = vand.u32 %v4197, 4294901760
        %v4420 = vsub.f32 %v4197, %v4419
        %4421 = vmatpush1.msra.mxu0 %v4420
        %v4422 = vand.u32 %v4200, 4294901760
        %v4423 = vsub.f32 %v4200, %v4422
        %4424 = vmatprep.subr.mxu0 %v4423
        %v4425 = vand.u32 %v4199, 4294901760
        %v4426 = vsub.f32 %v4199, %v4425
        %4427 = vmatpush1.msra.mxu0 %v4426
        %v4428 = vand.u32 %v4202, 4294901760
        %v4429 = vsub.f32 %v4202, %v4428
        %4430 = vmatprep.subr.mxu0 %v4429
        %v4431 = vand.u32 %v4201, 4294901760
        %v4432 = vsub.f32 %v4201, %v4431
        %4433 = vmatpush1.msra.mxu0 %v4432
        %4434 = vmatprep.subr.mxu0 0.0
        %4435 = vmatpush1.msra.mxu0 0.0
        %4436 = vmatprep.subr.mxu0 0.0
        %4437 = vmatpush1.msra.mxu0 0.0
        %4438 = vmatprep.subr.mxu0 0.0
        %4439 = vmatpush1.msra.mxu0 0.0
        %4440 = vmatprep.subr.mxu0 0.0
        %4441 = vmatpush1.msra.mxu0 0.0
        %4442 = vmatprep.subr.mxu0 0.0
        %4443 = vmatpush1.msra.mxu0 0.0
        %4444 = vmatprep.subr.mxu0 0.0
        %4445 = vmatpush1.msra.mxu0 0.0
        %4446 = vmatprep.subr.mxu0 0.0
        %4447 = vmatpush1.msra.mxu0 0.0
        %4448 = vmatprep.subr.mxu0 0.0
        %4449 = vmatpush1.msra.mxu0 0.0
        %4450 = vmatprep.subr.mxu0 0.0
        %4451 = vmatpush1.msra.mxu0 0.0
        %4452 = vmatprep.subr.mxu0 0.0
        %4453 = vmatpush1.msra.mxu0 0.0
        %4454 = vmatprep.subr.mxu0 0.0
        %4455 = vmatpush1.msra.mxu0 0.0
        %4456 = vmatprep.subr.mxu0 0.0
        %4457 = vmatpush1.msra.mxu0 0.0
        %4458 = vmatprep.subr.mxu0 0.0
        %4459 = vmatpush1.msra.mxu0 0.0
        %4460 = vmatprep.subr.mxu0 0.0
        %4461 = vmatpush1.msra.mxu0 0.0
        %4462 = vmatprep.subr.mxu0 0.0
        %4463 = vmatpush1.msra.mxu0 0.0
        %4464 = vmatprep.subr.mxu0 0.0
        %4465 = vmatpush1.msra.mxu0 0.0
        %4466 = vmatprep.subr.mxu0 0.0
        %4467 = vmatpush1.msra.mxu0 0.0
        %4468 = vmatprep.subr.mxu0 0.0
        %4469 = vmatpush1.msra.mxu0 0.0
        %4470 = vmatprep.subr.mxu0 0.0
        %4471 = vmatpush1.msra.mxu0 0.0
        %4472 = vmatprep.subr.mxu0 0.0
        %4473 = vmatpush1.msra.mxu0 0.0
        %4474 = vmatprep.subr.mxu0 0.0
        %4475 = vmatpush1.msra.mxu0 0.0
        %4476 = vmatprep.subr.mxu0 0.0
        %4477 = vmatpush1.msra.mxu0 0.0
        %4478 = vmatprep.subr.mxu0 0.0
        %4479 = vmatpush1.msra.mxu0 0.0
        %4480 = vmatprep.subr.mxu0 0.0
        %4481 = vmatpush1.msra.mxu0 0.0
        %4482 = vmatprep.subr.mxu0 0.0
        %4483 = vmatpush1.msra.mxu0 0.0
        %4484 = vmatprep.subr.mxu0 0.0
        %4485 = vmatpush1.msra.mxu0 0.0
        %4486 = vmatprep.subr.mxu0 0.0
        %4487 = vmatpush1.msra.mxu0 0.0
        %4488 = vmatprep.subr.mxu0 0.0
        %4489 = vmatpush1.msra.mxu0 0.0
        %4490 = vmatprep.mubr.f32.mxu0 0.0
        %v4491 = vand.u32 %v4212, 4294901760
        %v4492 = vsub.f32 %v4212, %v4491
        %4493 = vmatmul.mubr.f32.gmra.mrb[0].mxu0 %v4492
        %v4494 = vpop.f32.mrb[0].mxu0
        %v4495 = vadd.f32 %v4406, %v4494
        %v4496 = vpop.f32.mrb[0].mxu0
        %v4497 = vadd.f32 %v4408, %v4496
        %4498 = vdwg.mxu0
        %v4499 = vand.u32 %v4196, 4294901760
        %4500 = vmatprep.subr.mxu0 %v4499
        %v4501 = vand.u32 %v4195, 4294901760
        %4502 = vmatpush1.msra.mxu0 %v4501
        %v4503 = vand.u32 %v4198, 4294901760
        %4504 = vmatprep.subr.mxu0 %v4503
        %v4505 = vand.u32 %v4197, 4294901760
        %4506 = vmatpush1.msra.mxu0 %v4505
        %v4507 = vand.u32 %v4200, 4294901760
        %4508 = vmatprep.subr.mxu0 %v4507
        %v4509 = vand.u32 %v4199, 4294901760
        %4510 = vmatpush1.msra.mxu0 %v4509
        %v4511 = vand.u32 %v4202, 4294901760
        %4512 = vmatprep.subr.mxu0 %v4511
        %v4513 = vand.u32 %v4201, 4294901760
        %4514 = vmatpush1.msra.mxu0 %v4513
        %4515 = vmatprep.subr.mxu0 0.0
        %4516 = vmatpush1.msra.mxu0 0.0
        %4517 = vmatprep.subr.mxu0 0.0
        %4518 = vmatpush1.msra.mxu0 0.0
        %4519 = vmatprep.subr.mxu0 0.0
        %4520 = vmatpush1.msra.mxu0 0.0
        %4521 = vmatprep.subr.mxu0 0.0
        %4522 = vmatpush1.msra.mxu0 0.0
        %4523 = vmatprep.subr.mxu0 0.0
        %4524 = vmatpush1.msra.mxu0 0.0
        %4525 = vmatprep.subr.mxu0 0.0
        %4526 = vmatpush1.msra.mxu0 0.0
        %4527 = vmatprep.subr.mxu0 0.0
        %4528 = vmatpush1.msra.mxu0 0.0
        %4529 = vmatprep.subr.mxu0 0.0
        %4530 = vmatpush1.msra.mxu0 0.0
        %4531 = vmatprep.subr.mxu0 0.0
        %4532 = vmatpush1.msra.mxu0 0.0
        %4533 = vmatprep.subr.mxu0 0.0
        %4534 = vmatpush1.msra.mxu0 0.0
        %4535 = vmatprep.subr.mxu0 0.0
        %4536 = vmatpush1.msra.mxu0 0.0
        %4537 = vmatprep.subr.mxu0 0.0
        %4538 = vmatpush1.msra.mxu0 0.0
        %4539 = vmatprep.subr.mxu0 0.0
        %4540 = vmatpush1.msra.mxu0 0.0
        %4541 = vmatprep.subr.mxu0 0.0
        %4542 = vmatpush1.msra.mxu0 0.0
        %4543 = vmatprep.subr.mxu0 0.0
        %4544 = vmatpush1.msra.mxu0 0.0
        %4545 = vmatprep.subr.mxu0 0.0
        %4546 = vmatpush1.msra.mxu0 0.0
        %4547 = vmatprep.subr.mxu0 0.0
        %4548 = vmatpush1.msra.mxu0 0.0
        %4549 = vmatprep.subr.mxu0 0.0
        %4550 = vmatpush1.msra.mxu0 0.0
        %4551 = vmatprep.subr.mxu0 0.0
        %4552 = vmatpush1.msra.mxu0 0.0
        %4553 = vmatprep.subr.mxu0 0.0
        %4554 = vmatpush1.msra.mxu0 0.0
        %4555 = vmatprep.subr.mxu0 0.0
        %4556 = vmatpush1.msra.mxu0 0.0
        %4557 = vmatprep.subr.mxu0 0.0
        %4558 = vmatpush1.msra.mxu0 0.0
        %4559 = vmatprep.subr.mxu0 0.0
        %4560 = vmatpush1.msra.mxu0 0.0
        %4561 = vmatprep.subr.mxu0 0.0
        %4562 = vmatpush1.msra.mxu0 0.0
        %4563 = vmatprep.subr.mxu0 0.0
        %4564 = vmatpush1.msra.mxu0 0.0
        %4565 = vmatprep.subr.mxu0 0.0
        %4566 = vmatpush1.msra.mxu0 0.0
        %4567 = vmatprep.subr.mxu0 0.0
        %4568 = vmatpush1.msra.mxu0 0.0
        %4569 = vmatprep.subr.mxu0 0.0
        %4570 = vmatpush1.msra.mxu0 0.0
        %4571 = vmatprep.mubr.f32.mxu0 0.0
        %v4572 = vand.u32 %v4212, 4294901760
        %v4573 = vsub.f32 %v4212, %v4572
        %v4574 = vand.u32 %v4573, 4294901760
        %4575 = vmatmul.mubr.f32.gmra.mrb[0].mxu0 %v4574
        %v4576 = vpop.f32.mrb[0].mxu0
        %v4577 = vadd.f32 %v4495, %v4576
        %v4578 = vpop.f32.mrb[0].mxu0
        %v4579 = vadd.f32 %v4497, %v4578
        %4580 = vdwg.mxu0
        %v4581 = vand.u32 %v4196, 4294901760
        %v4582 = vsub.f32 %v4196, %v4581
        %v4583 = vand.u32 %v4582, 4294901760
        %4584 = vmatprep.subr.mxu0 %v4583
        %v4585 = vand.u32 %v4195, 4294901760
        %v4586 = vsub.f32 %v4195, %v4585
        %v4587 = vand.u32 %v4586, 4294901760
        %4588 = vmatpush1.msra.mxu0 %v4587
        %v4589 = vand.u32 %v4198, 4294901760
        %v4590 = vsub.f32 %v4198, %v4589
        %v4591 = vand.u32 %v4590, 4294901760
        %4592 = vmatprep.subr.mxu0 %v4591
        %v4593 = vand.u32 %v4197, 4294901760
        %v4594 = vsub.f32 %v4197, %v4593
        %v4595 = vand.u32 %v4594, 4294901760
        %4596 = vmatpush1.msra.mxu0 %v4595
        %v4597 = vand.u32 %v4200, 4294901760
        %v4598 = vsub.f32 %v4200, %v4597
        %v4599 = vand.u32 %v4598, 4294901760
        %4600 = vmatprep.subr.mxu0 %v4599
        %v4601 = vand.u32 %v4199, 4294901760
        %v4602 = vsub.f32 %v4199, %v4601
        %v4603 = vand.u32 %v4602, 4294901760
        %4604 = vmatpush1.msra.mxu0 %v4603
        %v4605 = vand.u32 %v4202, 4294901760
        %v4606 = vsub.f32 %v4202, %v4605
        %v4607 = vand.u32 %v4606, 4294901760
        %4608 = vmatprep.subr.mxu0 %v4607
        %v4609 = vand.u32 %v4201, 4294901760
        %v4610 = vsub.f32 %v4201, %v4609
        %v4611 = vand.u32 %v4610, 4294901760
        %4612 = vmatpush1.msra.mxu0 %v4611
        %4613 = vmatprep.subr.mxu0 0.0
        %4614 = vmatpush1.msra.mxu0 0.0
        %4615 = vmatprep.subr.mxu0 0.0
        %4616 = vmatpush1.msra.mxu0 0.0
        %4617 = vmatprep.subr.mxu0 0.0
        %4618 = vmatpush1.msra.mxu0 0.0
        %4619 = vmatprep.subr.mxu0 0.0
        %4620 = vmatpush1.msra.mxu0 0.0
        %4621 = vmatprep.subr.mxu0 0.0
        %4622 = vmatpush1.msra.mxu0 0.0
        %4623 = vmatprep.subr.mxu0 0.0
        %4624 = vmatpush1.msra.mxu0 0.0
        %4625 = vmatprep.subr.mxu0 0.0
        %4626 = vmatpush1.msra.mxu0 0.0
        %4627 = vmatprep.subr.mxu0 0.0
        %4628 = vmatpush1.msra.mxu0 0.0
        %4629 = vmatprep.subr.mxu0 0.0
        %4630 = vmatpush1.msra.mxu0 0.0
        %4631 = vmatprep.subr.mxu0 0.0
        %4632 = vmatpush1.msra.mxu0 0.0
        %4633 = vmatprep.subr.mxu0 0.0
        %4634 = vmatpush1.msra.mxu0 0.0
        %4635 = vmatprep.subr.mxu0 0.0
        %4636 = vmatpush1.msra.mxu0 0.0
        %4637 = vmatprep.subr.mxu0 0.0
        %4638 = vmatpush1.msra.mxu0 0.0
        %4639 = vmatprep.subr.mxu0 0.0
        %4640 = vmatpush1.msra.mxu0 0.0
        %4641 = vmatprep.subr.mxu0 0.0
        %4642 = vmatpush1.msra.mxu0 0.0
        %4643 = vmatprep.subr.mxu0 0.0
        %4644 = vmatpush1.msra.mxu0 0.0
        %4645 = vmatprep.subr.mxu0 0.0
        %4646 = vmatpush1.msra.mxu0 0.0
        %4647 = vmatprep.subr.mxu0 0.0
        %4648 = vmatpush1.msra.mxu0 0.0
        %4649 = vmatprep.subr.mxu0 0.0
        %4650 = vmatpush1.msra.mxu0 0.0
        %4651 = vmatprep.subr.mxu0 0.0
        %4652 = vmatpush1.msra.mxu0 0.0
        %4653 = vmatprep.subr.mxu0 0.0
        %4654 = vmatpush1.msra.mxu0 0.0
        %4655 = vmatprep.subr.mxu0 0.0
        %4656 = vmatpush1.msra.mxu0 0.0
        %4657 = vmatprep.subr.mxu0 0.0
        %4658 = vmatpush1.msra.mxu0 0.0
        %4659 = vmatprep.subr.mxu0 0.0
        %4660 = vmatpush1.msra.mxu0 0.0
        %4661 = vmatprep.subr.mxu0 0.0
        %4662 = vmatpush1.msra.mxu0 0.0
        %4663 = vmatprep.subr.mxu0 0.0
        %4664 = vmatpush1.msra.mxu0 0.0
        %4665 = vmatprep.subr.mxu0 0.0
        %4666 = vmatpush1.msra.mxu0 0.0
        %4667 = vmatprep.subr.mxu0 0.0
        %4668 = vmatpush1.msra.mxu0 0.0
        %4669 = vmatprep.mubr.f32.mxu0 0.0
        %v4670 = vand.u32 %v4212, 4294901760
        %4671 = vmatmul.mubr.f32.gmra.mrb[0].mxu0 %v4670
        %v4672 = vpop.f32.mrb[0].mxu0
        %v4673 = vadd.f32 %v4577, %v4672
        %v4674 = vpop.f32.mrb[0].mxu0
        %v4675 = vadd.f32 %v4579, %v4674
        %4676 = vdwg.mxu0
        %v4677 = vand.u32 %v4196, 4294901760
        %4678 = vmatprep.subr.mxu0 %v4677
        %v4679 = vand.u32 %v4195, 4294901760
        %4680 = vmatpush1.msra.mxu0 %v4679
        %v4681 = vand.u32 %v4198, 4294901760
        %4682 = vmatprep.subr.mxu0 %v4681
        %v4683 = vand.u32 %v4197, 4294901760
        %4684 = vmatpush1.msra.mxu0 %v4683
        %v4685 = vand.u32 %v4200, 4294901760
        %4686 = vmatprep.subr.mxu0 %v4685
        %v4687 = vand.u32 %v4199, 4294901760
        %4688 = vmatpush1.msra.mxu0 %v4687
        %v4689 = vand.u32 %v4202, 4294901760
        %4690 = vmatprep.subr.mxu0 %v4689
        %v4691 = vand.u32 %v4201, 4294901760
        %4692 = vmatpush1.msra.mxu0 %v4691
        %4693 = vmatprep.subr.mxu0 0.0
        %4694 = vmatpush1.msra.mxu0 0.0
        %4695 = vmatprep.subr.mxu0 0.0
        %4696 = vmatpush1.msra.mxu0 0.0
        %4697 = vmatprep.subr.mxu0 0.0
        %4698 = vmatpush1.msra.mxu0 0.0
        %4699 = vmatprep.subr.mxu0 0.0
        %4700 = vmatpush1.msra.mxu0 0.0
        %4701 = vmatprep.subr.mxu0 0.0
        %4702 = vmatpush1.msra.mxu0 0.0
        %4703 = vmatprep.subr.mxu0 0.0
        %4704 = vmatpush1.msra.mxu0 0.0
        %4705 = vmatprep.subr.mxu0 0.0
        %4706 = vmatpush1.msra.mxu0 0.0
        %4707 = vmatprep.subr.mxu0 0.0
        %4708 = vmatpush1.msra.mxu0 0.0
        %4709 = vmatprep.subr.mxu0 0.0
        %4710 = vmatpush1.msra.mxu0 0.0
        %4711 = vmatprep.subr.mxu0 0.0
        %4712 = vmatpush1.msra.mxu0 0.0
        %4713 = vmatprep.subr.mxu0 0.0
        %4714 = vmatpush1.msra.mxu0 0.0
        %4715 = vmatprep.subr.mxu0 0.0
        %4716 = vmatpush1.msra.mxu0 0.0
        %4717 = vmatprep.subr.mxu0 0.0
        %4718 = vmatpush1.msra.mxu0 0.0
        %4719 = vmatprep.subr.mxu0 0.0
        %4720 = vmatpush1.msra.mxu0 0.0
        %4721 = vmatprep.subr.mxu0 0.0
        %4722 = vmatpush1.msra.mxu0 0.0
        %4723 = vmatprep.subr.mxu0 0.0
        %4724 = vmatpush1.msra.mxu0 0.0
        %4725 = vmatprep.subr.mxu0 0.0
        %4726 = vmatpush1.msra.mxu0 0.0
        %4727 = vmatprep.subr.mxu0 0.0
        %4728 = vmatpush1.msra.mxu0 0.0
        %4729 = vmatprep.subr.mxu0 0.0
        %4730 = vmatpush1.msra.mxu0 0.0
        %4731 = vmatprep.subr.mxu0 0.0
        %4732 = vmatpush1.msra.mxu0 0.0
        %4733 = vmatprep.subr.mxu0 0.0
        %4734 = vmatpush1.msra.mxu0 0.0
        %4735 = vmatprep.subr.mxu0 0.0
        %4736 = vmatpush1.msra.mxu0 0.0
        %4737 = vmatprep.subr.mxu0 0.0
        %4738 = vmatpush1.msra.mxu0 0.0
        %4739 = vmatprep.subr.mxu0 0.0
        %4740 = vmatpush1.msra.mxu0 0.0
        %4741 = vmatprep.subr.mxu0 0.0
        %4742 = vmatpush1.msra.mxu0 0.0
        %4743 = vmatprep.subr.mxu0 0.0
        %4744 = vmatpush1.msra.mxu0 0.0
        %4745 = vmatprep.subr.mxu0 0.0
        %4746 = vmatpush1.msra.mxu0 0.0
        %4747 = vmatprep.subr.mxu0 0.0
        %4748 = vmatpush1.msra.mxu0 0.0
        %4749 = vmatprep.mubr.f32.mxu0 0.0
        %v4750 = vand.u32 %v4212, 4294901760
        %4751 = vmatmul.mubr.f32.gmra.mrb[0].mxu0 %v4750
        %v4752 = vpop.f32.mrb[0].mxu0
        %v4753 = vadd.f32 %v4673, %v4752
        %v4754 = vpop.f32.mrb[0].mxu0
        %v4755 = vadd.f32 %v4675, %v4754
        %4756 = vdwg.mxu0
        %v4757 = vmul.f32 %v4753, %v537
        %v4758 = vmul.f32 %v4755, %v538
        %v4759 = vadd.f32 %v4167, %v4757
        %v4760 = vadd.f32 %v4168, %v4758
        %v4761 = vld [vmem:[%s4 + $0xe] sm:$0x3]
        %4762 = vrot.lane.b32.xlu0 %v3553, 112
        %v4763 = vpop.permute.xlu0 %4762
        %4764 = vrot.lane.b32.xlu0 %v3554, 112
        %v4765 = vpop.permute.xlu0 %4764
        %4766 = vrot.lane.b32.xlu0 %v3555, 112
        %v4767 = vpop.permute.xlu0 %4766
        %4768 = vrot.lane.b32.xlu0 %v3556, 112
        %v4769 = vpop.permute.xlu0 %4768
        %4770 = vrot.lane.b32.xlu0 %v3557, 112
        %v4771 = vpop.permute.xlu0 %4770
        %4772 = vrot.lane.b32.xlu0 %v3558, 112
        %v4773 = vpop.permute.xlu0 %4772
        %4774 = vrot.lane.b32.xlu0 %v3559, 112
        %v4775 = vpop.permute.xlu0 %4774
        %4776 = vrot.lane.b32.xlu0 %v3560, 112
        %v4777 = vpop.permute.xlu0 %4776
        %4778 = vrot.lane.b32.xlu0 %v3561, 112
        %v4779 = vpop.permute.xlu0 %4778
        %4780 = vrot.lane.b32.xlu0 %v3562, 112
        %v4781 = vpop.permute.xlu0 %4780
        %4782 = vrot.lane.b32.xlu0 %v3563, 112
        %v4783 = vpop.permute.xlu0 %4782
        %4784 = vrot.lane.b32.xlu0 %v3564, 112
        %v4785 = vpop.permute.xlu0 %4784
        %vm4786 = vcmask 916480
        %v4787 = vsel %vm4786, %v4763, %v4765
        %v4788 = vsel %vm4786, %v4765, %v4767
        %v4789 = vsel %vm4786, %v4769, %v4771
        %v4790 = vsel %vm4786, %v4771, %v4773
        %v4791 = vsel %vm4786, %v4775, %v4777
        %v4792 = vsel %vm4786, %v4777, %v4779
        %v4793 = vsel %vm4786, %v4781, %v4783
        %v4794 = vsel %vm4786, %v4783, %v4785
        %v4804 = vsel %vm675, %v4761, 0
        %v4806 = vand.u32 %v4788, 4294901760
        %4807 = vmatprep.subr.mxu0 %v4806
        %v4808 = vand.u32 %v4787, 4294901760
        %4809 = vmatpush1.msra.mxu0 %v4808
        %v4810 = vand.u32 %v4790, 4294901760
        %4811 = vmatprep.subr.mxu0 %v4810
        %v4812 = vand.u32 %v4789, 4294901760
        %4813 = vmatpush1.msra.mxu0 %v4812
        %v4814 = vand.u32 %v4792, 4294901760
        %4815 = vmatprep.subr.mxu0 %v4814
        %v4816 = vand.u32 %v4791, 4294901760
        %4817 = vmatpush1.msra.mxu0 %v4816
        %v4818 = vand.u32 %v4794, 4294901760
        %4819 = vmatprep.subr.mxu0 %v4818
        %v4820 = vand.u32 %v4793, 4294901760
        %4821 = vmatpush1.msra.mxu0 %v4820
        %4822 = vmatprep.subr.mxu0 0.0
        %4823 = vmatpush1.msra.mxu0 0.0
        %4824 = vmatprep.subr.mxu0 0.0
        %4825 = vmatpush1.msra.mxu0 0.0
        %4826 = vmatprep.subr.mxu0 0.0
        %4827 = vmatpush1.msra.mxu0 0.0
        %4828 = vmatprep.subr.mxu0 0.0
        %4829 = vmatpush1.msra.mxu0 0.0
        %4830 = vmatprep.subr.mxu0 0.0
        %4831 = vmatpush1.msra.mxu0 0.0
        %4832 = vmatprep.subr.mxu0 0.0
        %4833 = vmatpush1.msra.mxu0 0.0
        %4834 = vmatprep.subr.mxu0 0.0
        %4835 = vmatpush1.msra.mxu0 0.0
        %4836 = vmatprep.subr.mxu0 0.0
        %4837 = vmatpush1.msra.mxu0 0.0
        %4838 = vmatprep.subr.mxu0 0.0
        %4839 = vmatpush1.msra.mxu0 0.0
        %4840 = vmatprep.subr.mxu0 0.0
        %4841 = vmatpush1.msra.mxu0 0.0
        %4842 = vmatprep.subr.mxu0 0.0
        %4843 = vmatpush1.msra.mxu0 0.0
        %4844 = vmatprep.subr.mxu0 0.0
        %4845 = vmatpush1.msra.mxu0 0.0
        %4846 = vmatprep.subr.mxu0 0.0
        %4847 = vmatpush1.msra.mxu0 0.0
        %4848 = vmatprep.subr.mxu0 0.0
        %4849 = vmatpush1.msra.mxu0 0.0
        %4850 = vmatprep.subr.mxu0 0.0
        %4851 = vmatpush1.msra.mxu0 0.0
        %4852 = vmatprep.subr.mxu0 0.0
        %4853 = vmatpush1.msra.mxu0 0.0
        %4854 = vmatprep.subr.mxu0 0.0
        %4855 = vmatpush1.msra.mxu0 0.0
        %4856 = vmatprep.subr.mxu0 0.0
        %4857 = vmatpush1.msra.mxu0 0.0
        %4858 = vmatprep.subr.mxu0 0.0
        %4859 = vmatpush1.msra.mxu0 0.0
        %4860 = vmatprep.subr.mxu0 0.0
        %4861 = vmatpush1.msra.mxu0 0.0
        %4862 = vmatprep.subr.mxu0 0.0
        %4863 = vmatpush1.msra.mxu0 0.0
        %4864 = vmatprep.subr.mxu0 0.0
        %4865 = vmatpush1.msra.mxu0 0.0
        %4866 = vmatprep.subr.mxu0 0.0
        %4867 = vmatpush1.msra.mxu0 0.0
        %4868 = vmatprep.subr.mxu0 0.0
        %4869 = vmatpush1.msra.mxu0 0.0
        %4870 = vmatprep.subr.mxu0 0.0
        %4871 = vmatpush1.msra.mxu0 0.0
        %4872 = vmatprep.subr.mxu0 0.0
        %4873 = vmatpush1.msra.mxu0 0.0
        %4874 = vmatprep.subr.mxu0 0.0
        %4875 = vmatpush1.msra.mxu0 0.0
        %4876 = vmatprep.subr.mxu0 0.0
        %4877 = vmatpush1.msra.mxu0 0.0
        %4878 = vmatprep.mubr.f32.mxu0 0.0
        %v4879 = vand.u32 %v4804, 4294901760
        %v4880 = vsub.f32 %v4804, %v4879
        %v4881 = vand.u32 %v4880, 4294901760
        %v4882 = vsub.f32 %v4880, %v4881
        %v4883 = vand.u32 %v4882, 4294901760
        %4884 = vmatmul.mubr.f32.gmra.mrb[0].mxu0 %v4883
        %v4885 = vpop.f32.mrb[0].mxu0
        %v4886 = vadd.f32 0.0, %v4885
        %v4887 = vpop.f32.mrb[0].mxu0
        %v4888 = vadd.f32 0.0, %v4887
        %4889 = vdwg.mxu0
        %v4890 = vand.u32 %v4788, 4294901760
        %v4891 = vsub.f32 %v4788, %v4890
        %v4892 = vand.u32 %v4891, 4294901760
        %v4893 = vsub.f32 %v4891, %v4892
        %v4894 = vand.u32 %v4893, 4294901760
        %4895 = vmatprep.subr.mxu0 %v4894
        %v4896 = vand.u32 %v4787, 4294901760
        %v4897 = vsub.f32 %v4787, %v4896
        %v4898 = vand.u32 %v4897, 4294901760
        %v4899 = vsub.f32 %v4897, %v4898
        %v4900 = vand.u32 %v4899, 4294901760
        %4901 = vmatpush1.msra.mxu0 %v4900
        %v4902 = vand.u32 %v4790, 4294901760
        %v4903 = vsub.f32 %v4790, %v4902
        %v4904 = vand.u32 %v4903, 4294901760
        %v4905 = vsub.f32 %v4903, %v4904
        %v4906 = vand.u32 %v4905, 4294901760
        %4907 = vmatprep.subr.mxu0 %v4906
        %v4908 = vand.u32 %v4789, 4294901760
        %v4909 = vsub.f32 %v4789, %v4908
        %v4910 = vand.u32 %v4909, 4294901760
        %v4911 = vsub.f32 %v4909, %v4910
        %v4912 = vand.u32 %v4911, 4294901760
        %4913 = vmatpush1.msra.mxu0 %v4912
        %v4914 = vand.u32 %v4792, 4294901760
        %v4915 = vsub.f32 %v4792, %v4914
        %v4916 = vand.u32 %v4915, 4294901760
        %v4917 = vsub.f32 %v4915, %v4916
        %v4918 = vand.u32 %v4917, 4294901760
        %4919 = vmatprep.subr.mxu0 %v4918
        %v4920 = vand.u32 %v4791, 4294901760
        %v4921 = vsub.f32 %v4791, %v4920
        %v4922 = vand.u32 %v4921, 4294901760
        %v4923 = vsub.f32 %v4921, %v4922
        %v4924 = vand.u32 %v4923, 4294901760
        %4925 = vmatpush1.msra.mxu0 %v4924
        %v4926 = vand.u32 %v4794, 4294901760
        %v4927 = vsub.f32 %v4794, %v4926
        %v4928 = vand.u32 %v4927, 4294901760
        %v4929 = vsub.f32 %v4927, %v4928
        %v4930 = vand.u32 %v4929, 4294901760
        %4931 = vmatprep.subr.mxu0 %v4930
        %v4932 = vand.u32 %v4793, 4294901760
        %v4933 = vsub.f32 %v4793, %v4932
        %v4934 = vand.u32 %v4933, 4294901760
        %v4935 = vsub.f32 %v4933, %v4934
        %v4936 = vand.u32 %v4935, 4294901760
        %4937 = vmatpush1.msra.mxu0 %v4936
        %4938 = vmatprep.subr.mxu0 0.0
        %4939 = vmatpush1.msra.mxu0 0.0
        %4940 = vmatprep.subr.mxu0 0.0
        %4941 = vmatpush1.msra.mxu0 0.0
        %4942 = vmatprep.subr.mxu0 0.0
        %4943 = vmatpush1.msra.mxu0 0.0
        %4944 = vmatprep.subr.mxu0 0.0
        %4945 = vmatpush1.msra.mxu0 0.0
        %4946 = vmatprep.subr.mxu0 0.0
        %4947 = vmatpush1.msra.mxu0 0.0
        %4948 = vmatprep.subr.mxu0 0.0
        %4949 = vmatpush1.msra.mxu0 0.0
        %4950 = vmatprep.subr.mxu0 0.0
        %4951 = vmatpush1.msra.mxu0 0.0
        %4952 = vmatprep.subr.mxu0 0.0
        %4953 = vmatpush1.msra.mxu0 0.0
        %4954 = vmatprep.subr.mxu0 0.0
        %4955 = vmatpush1.msra.mxu0 0.0
        %4956 = vmatprep.subr.mxu0 0.0
        %4957 = vmatpush1.msra.mxu0 0.0
        %4958 = vmatprep.subr.mxu0 0.0
        %4959 = vmatpush1.msra.mxu0 0.0
        %4960 = vmatprep.subr.mxu0 0.0
        %4961 = vmatpush1.msra.mxu0 0.0
        %4962 = vmatprep.subr.mxu0 0.0
        %4963 = vmatpush1.msra.mxu0 0.0
        %4964 = vmatprep.subr.mxu0 0.0
        %4965 = vmatpush1.msra.mxu0 0.0
        %4966 = vmatprep.subr.mxu0 0.0
        %4967 = vmatpush1.msra.mxu0 0.0
        %4968 = vmatprep.subr.mxu0 0.0
        %4969 = vmatpush1.msra.mxu0 0.0
        %4970 = vmatprep.subr.mxu0 0.0
        %4971 = vmatpush1.msra.mxu0 0.0
        %4972 = vmatprep.subr.mxu0 0.0
        %4973 = vmatpush1.msra.mxu0 0.0
        %4974 = vmatprep.subr.mxu0 0.0
        %4975 = vmatpush1.msra.mxu0 0.0
        %4976 = vmatprep.subr.mxu0 0.0
        %4977 = vmatpush1.msra.mxu0 0.0
        %4978 = vmatprep.subr.mxu0 0.0
        %4979 = vmatpush1.msra.mxu0 0.0
        %4980 = vmatprep.subr.mxu0 0.0
        %4981 = vmatpush1.msra.mxu0 0.0
        %4982 = vmatprep.subr.mxu0 0.0
        %4983 = vmatpush1.msra.mxu0 0.0
        %4984 = vmatprep.subr.mxu0 0.0
        %4985 = vmatpush1.msra.mxu0 0.0
        %4986 = vmatprep.subr.mxu0 0.0
        %4987 = vmatpush1.msra.mxu0 0.0
        %4988 = vmatprep.subr.mxu0 0.0
        %4989 = vmatpush1.msra.mxu0 0.0
        %4990 = vmatprep.subr.mxu0 0.0
        %4991 = vmatpush1.msra.mxu0 0.0
        %4992 = vmatprep.subr.mxu0 0.0
        %4993 = vmatpush1.msra.mxu0 0.0
        %4994 = vmatprep.mubr.f32.mxu0 0.0
        %v4995 = vand.u32 %v4804, 4294901760
        %4996 = vmatmul.mubr.f32.gmra.mrb[0].mxu0 %v4995
        %v4997 = vpop.f32.mrb[0].mxu0
        %v4998 = vadd.f32 %v4886, %v4997
        %v4999 = vpop.f32.mrb[0].mxu0
        %v5000 = vadd.f32 %v4888, %v4999
        %5001 = vdwg.mxu0
        %v5002 = vand.u32 %v4788, 4294901760
        %v5003 = vsub.f32 %v4788, %v5002
        %5004 = vmatprep.subr.mxu0 %v5003
        %v5005 = vand.u32 %v4787, 4294901760
        %v5006 = vsub.f32 %v4787, %v5005
        %5007 = vmatpush1.msra.mxu0 %v5006
        %v5008 = vand.u32 %v4790, 4294901760
        %v5009 = vsub.f32 %v4790, %v5008
        %5010 = vmatprep.subr.mxu0 %v5009
        %v5011 = vand.u32 %v4789, 4294901760
        %v5012 = vsub.f32 %v4789, %v5011
        %5013 = vmatpush1.msra.mxu0 %v5012
        %v5014 = vand.u32 %v4792, 4294901760
        %v5015 = vsub.f32 %v4792, %v5014
        %5016 = vmatprep.subr.mxu0 %v5015
        %v5017 = vand.u32 %v4791, 4294901760
        %v5018 = vsub.f32 %v4791, %v5017
        %5019 = vmatpush1.msra.mxu0 %v5018
        %v5020 = vand.u32 %v4794, 4294901760
        %v5021 = vsub.f32 %v4794, %v5020
        %5022 = vmatprep.subr.mxu0 %v5021
        %v5023 = vand.u32 %v4793, 4294901760
        %v5024 = vsub.f32 %v4793, %v5023
        %5025 = vmatpush1.msra.mxu0 %v5024
        %5026 = vmatprep.subr.mxu0 0.0
        %5027 = vmatpush1.msra.mxu0 0.0
        %5028 = vmatprep.subr.mxu0 0.0
        %5029 = vmatpush1.msra.mxu0 0.0
        %5030 = vmatprep.subr.mxu0 0.0
        %5031 = vmatpush1.msra.mxu0 0.0
        %5032 = vmatprep.subr.mxu0 0.0
        %5033 = vmatpush1.msra.mxu0 0.0
        %5034 = vmatprep.subr.mxu0 0.0
        %5035 = vmatpush1.msra.mxu0 0.0
        %5036 = vmatprep.subr.mxu0 0.0
        %5037 = vmatpush1.msra.mxu0 0.0
        %5038 = vmatprep.subr.mxu0 0.0
        %5039 = vmatpush1.msra.mxu0 0.0
        %5040 = vmatprep.subr.mxu0 0.0
        %5041 = vmatpush1.msra.mxu0 0.0
        %5042 = vmatprep.subr.mxu0 0.0
        %5043 = vmatpush1.msra.mxu0 0.0
        %5044 = vmatprep.subr.mxu0 0.0
        %5045 = vmatpush1.msra.mxu0 0.0
        %5046 = vmatprep.subr.mxu0 0.0
        %5047 = vmatpush1.msra.mxu0 0.0
        %5048 = vmatprep.subr.mxu0 0.0
        %5049 = vmatpush1.msra.mxu0 0.0
        %5050 = vmatprep.subr.mxu0 0.0
        %5051 = vmatpush1.msra.mxu0 0.0
        %5052 = vmatprep.subr.mxu0 0.0
        %5053 = vmatpush1.msra.mxu0 0.0
        %5054 = vmatprep.subr.mxu0 0.0
        %5055 = vmatpush1.msra.mxu0 0.0
        %5056 = vmatprep.subr.mxu0 0.0
        %5057 = vmatpush1.msra.mxu0 0.0
        %5058 = vmatprep.subr.mxu0 0.0
        %5059 = vmatpush1.msra.mxu0 0.0
        %5060 = vmatprep.subr.mxu0 0.0
        %5061 = vmatpush1.msra.mxu0 0.0
        %5062 = vmatprep.subr.mxu0 0.0
        %5063 = vmatpush1.msra.mxu0 0.0
        %5064 = vmatprep.subr.mxu0 0.0
        %5065 = vmatpush1.msra.mxu0 0.0
        %5066 = vmatprep.subr.mxu0 0.0
        %5067 = vmatpush1.msra.mxu0 0.0
        %5068 = vmatprep.subr.mxu0 0.0
        %5069 = vmatpush1.msra.mxu0 0.0
        %5070 = vmatprep.subr.mxu0 0.0
        %5071 = vmatpush1.msra.mxu0 0.0
        %5072 = vmatprep.subr.mxu0 0.0
        %5073 = vmatpush1.msra.mxu0 0.0
        %5074 = vmatprep.subr.mxu0 0.0
        %5075 = vmatpush1.msra.mxu0 0.0
        %5076 = vmatprep.subr.mxu0 0.0
        %5077 = vmatpush1.msra.mxu0 0.0
        %5078 = vmatprep.subr.mxu0 0.0
        %5079 = vmatpush1.msra.mxu0 0.0
        %5080 = vmatprep.subr.mxu0 0.0
        %5081 = vmatpush1.msra.mxu0 0.0
        %5082 = vmatprep.mubr.f32.mxu0 0.0
        %v5083 = vand.u32 %v4804, 4294901760
        %v5084 = vsub.f32 %v4804, %v5083
        %5085 = vmatmul.mubr.f32.gmra.mrb[0].mxu0 %v5084
        %v5086 = vpop.f32.mrb[0].mxu0
        %v5087 = vadd.f32 %v4998, %v5086
        %v5088 = vpop.f32.mrb[0].mxu0
        %v5089 = vadd.f32 %v5000, %v5088
        %5090 = vdwg.mxu0
        %v5091 = vand.u32 %v4788, 4294901760
        %5092 = vmatprep.subr.mxu0 %v5091
        %v5093 = vand.u32 %v4787, 4294901760
        %5094 = vmatpush1.msra.mxu0 %v5093
        %v5095 = vand.u32 %v4790, 4294901760
        %5096 = vmatprep.subr.mxu0 %v5095
        %v5097 = vand.u32 %v4789, 4294901760
        %5098 = vmatpush1.msra.mxu0 %v5097
        %v5099 = vand.u32 %v4792, 4294901760
        %5100 = vmatprep.subr.mxu0 %v5099
        %v5101 = vand.u32 %v4791, 4294901760
        %5102 = vmatpush1.msra.mxu0 %v5101
        %v5103 = vand.u32 %v4794, 4294901760
        %5104 = vmatprep.subr.mxu0 %v5103
        %v5105 = vand.u32 %v4793, 4294901760
        %5106 = vmatpush1.msra.mxu0 %v5105
        %5107 = vmatprep.subr.mxu0 0.0
        %5108 = vmatpush1.msra.mxu0 0.0
        %5109 = vmatprep.subr.mxu0 0.0
        %5110 = vmatpush1.msra.mxu0 0.0
        %5111 = vmatprep.subr.mxu0 0.0
        %5112 = vmatpush1.msra.mxu0 0.0
        %5113 = vmatprep.subr.mxu0 0.0
        %5114 = vmatpush1.msra.mxu0 0.0
        %5115 = vmatprep.subr.mxu0 0.0
        %5116 = vmatpush1.msra.mxu0 0.0
        %5117 = vmatprep.subr.mxu0 0.0
        %5118 = vmatpush1.msra.mxu0 0.0
        %5119 = vmatprep.subr.mxu0 0.0
        %5120 = vmatpush1.msra.mxu0 0.0
        %5121 = vmatprep.subr.mxu0 0.0
        %5122 = vmatpush1.msra.mxu0 0.0
        %5123 = vmatprep.subr.mxu0 0.0
        %5124 = vmatpush1.msra.mxu0 0.0
        %5125 = vmatprep.subr.mxu0 0.0
        %5126 = vmatpush1.msra.mxu0 0.0
        %5127 = vmatprep.subr.mxu0 0.0
        %5128 = vmatpush1.msra.mxu0 0.0
        %5129 = vmatprep.subr.mxu0 0.0
        %5130 = vmatpush1.msra.mxu0 0.0
        %5131 = vmatprep.subr.mxu0 0.0
        %5132 = vmatpush1.msra.mxu0 0.0
        %5133 = vmatprep.subr.mxu0 0.0
        %5134 = vmatpush1.msra.mxu0 0.0
        %5135 = vmatprep.subr.mxu0 0.0
        %5136 = vmatpush1.msra.mxu0 0.0
        %5137 = vmatprep.subr.mxu0 0.0
        %5138 = vmatpush1.msra.mxu0 0.0
        %5139 = vmatprep.subr.mxu0 0.0
        %5140 = vmatpush1.msra.mxu0 0.0
        %5141 = vmatprep.subr.mxu0 0.0
        %5142 = vmatpush1.msra.mxu0 0.0
        %5143 = vmatprep.subr.mxu0 0.0
        %5144 = vmatpush1.msra.mxu0 0.0
        %5145 = vmatprep.subr.mxu0 0.0
        %5146 = vmatpush1.msra.mxu0 0.0
        %5147 = vmatprep.subr.mxu0 0.0
        %5148 = vmatpush1.msra.mxu0 0.0
        %5149 = vmatprep.subr.mxu0 0.0
        %5150 = vmatpush1.msra.mxu0 0.0
        %5151 = vmatprep.subr.mxu0 0.0
        %5152 = vmatpush1.msra.mxu0 0.0
        %5153 = vmatprep.subr.mxu0 0.0
        %5154 = vmatpush1.msra.mxu0 0.0
        %5155 = vmatprep.subr.mxu0 0.0
        %5156 = vmatpush1.msra.mxu0 0.0
        %5157 = vmatprep.subr.mxu0 0.0
        %5158 = vmatpush1.msra.mxu0 0.0
        %5159 = vmatprep.subr.mxu0 0.0
        %5160 = vmatpush1.msra.mxu0 0.0
        %5161 = vmatprep.subr.mxu0 0.0
        %5162 = vmatpush1.msra.mxu0 0.0
        %5163 = vmatprep.mubr.f32.mxu0 0.0
        %v5164 = vand.u32 %v4804, 4294901760
        %v5165 = vsub.f32 %v4804, %v5164
        %v5166 = vand.u32 %v5165, 4294901760
        %5167 = vmatmul.mubr.f32.gmra.mrb[0].mxu0 %v5166
        %v5168 = vpop.f32.mrb[0].mxu0
        %v5169 = vadd.f32 %v5087, %v5168
        %v5170 = vpop.f32.mrb[0].mxu0
        %v5171 = vadd.f32 %v5089, %v5170
        %5172 = vdwg.mxu0
        %v5173 = vand.u32 %v4788, 4294901760
        %v5174 = vsub.f32 %v4788, %v5173
        %v5175 = vand.u32 %v5174, 4294901760
        %5176 = vmatprep.subr.mxu0 %v5175
        %v5177 = vand.u32 %v4787, 4294901760
        %v5178 = vsub.f32 %v4787, %v5177
        %v5179 = vand.u32 %v5178, 4294901760
        %5180 = vmatpush1.msra.mxu0 %v5179
        %v5181 = vand.u32 %v4790, 4294901760
        %v5182 = vsub.f32 %v4790, %v5181
        %v5183 = vand.u32 %v5182, 4294901760
        %5184 = vmatprep.subr.mxu0 %v5183
        %v5185 = vand.u32 %v4789, 4294901760
        %v5186 = vsub.f32 %v4789, %v5185
        %v5187 = vand.u32 %v5186, 4294901760
        %5188 = vmatpush1.msra.mxu0 %v5187
        %v5189 = vand.u32 %v4792, 4294901760
        %v5190 = vsub.f32 %v4792, %v5189
        %v5191 = vand.u32 %v5190, 4294901760
        %5192 = vmatprep.subr.mxu0 %v5191
        %v5193 = vand.u32 %v4791, 4294901760
        %v5194 = vsub.f32 %v4791, %v5193
        %v5195 = vand.u32 %v5194, 4294901760
        %5196 = vmatpush1.msra.mxu0 %v5195
        %v5197 = vand.u32 %v4794, 4294901760
        %v5198 = vsub.f32 %v4794, %v5197
        %v5199 = vand.u32 %v5198, 4294901760
        %5200 = vmatprep.subr.mxu0 %v5199
        %v5201 = vand.u32 %v4793, 4294901760
        %v5202 = vsub.f32 %v4793, %v5201
        %v5203 = vand.u32 %v5202, 4294901760
        %5204 = vmatpush1.msra.mxu0 %v5203
        %5205 = vmatprep.subr.mxu0 0.0
        %5206 = vmatpush1.msra.mxu0 0.0
        %5207 = vmatprep.subr.mxu0 0.0
        %5208 = vmatpush1.msra.mxu0 0.0
        %5209 = vmatprep.subr.mxu0 0.0
        %5210 = vmatpush1.msra.mxu0 0.0
        %5211 = vmatprep.subr.mxu0 0.0
        %5212 = vmatpush1.msra.mxu0 0.0
        %5213 = vmatprep.subr.mxu0 0.0
        %5214 = vmatpush1.msra.mxu0 0.0
        %5215 = vmatprep.subr.mxu0 0.0
        %5216 = vmatpush1.msra.mxu0 0.0
        %5217 = vmatprep.subr.mxu0 0.0
        %5218 = vmatpush1.msra.mxu0 0.0
        %5219 = vmatprep.subr.mxu0 0.0
        %5220 = vmatpush1.msra.mxu0 0.0
        %5221 = vmatprep.subr.mxu0 0.0
        %5222 = vmatpush1.msra.mxu0 0.0
        %5223 = vmatprep.subr.mxu0 0.0
        %5224 = vmatpush1.msra.mxu0 0.0
        %5225 = vmatprep.subr.mxu0 0.0
        %5226 = vmatpush1.msra.mxu0 0.0
        %5227 = vmatprep.subr.mxu0 0.0
        %5228 = vmatpush1.msra.mxu0 0.0
        %5229 = vmatprep.subr.mxu0 0.0
        %5230 = vmatpush1.msra.mxu0 0.0
        %5231 = vmatprep.subr.mxu0 0.0
        %5232 = vmatpush1.msra.mxu0 0.0
        %5233 = vmatprep.subr.mxu0 0.0
        %5234 = vmatpush1.msra.mxu0 0.0
        %5235 = vmatprep.subr.mxu0 0.0
        %5236 = vmatpush1.msra.mxu0 0.0
        %5237 = vmatprep.subr.mxu0 0.0
        %5238 = vmatpush1.msra.mxu0 0.0
        %5239 = vmatprep.subr.mxu0 0.0
        %5240 = vmatpush1.msra.mxu0 0.0
        %5241 = vmatprep.subr.mxu0 0.0
        %5242 = vmatpush1.msra.mxu0 0.0
        %5243 = vmatprep.subr.mxu0 0.0
        %5244 = vmatpush1.msra.mxu0 0.0
        %5245 = vmatprep.subr.mxu0 0.0
        %5246 = vmatpush1.msra.mxu0 0.0
        %5247 = vmatprep.subr.mxu0 0.0
        %5248 = vmatpush1.msra.mxu0 0.0
        %5249 = vmatprep.subr.mxu0 0.0
        %5250 = vmatpush1.msra.mxu0 0.0
        %5251 = vmatprep.subr.mxu0 0.0
        %5252 = vmatpush1.msra.mxu0 0.0
        %5253 = vmatprep.subr.mxu0 0.0
        %5254 = vmatpush1.msra.mxu0 0.0
        %5255 = vmatprep.subr.mxu0 0.0
        %5256 = vmatpush1.msra.mxu0 0.0
        %5257 = vmatprep.subr.mxu0 0.0
        %5258 = vmatpush1.msra.mxu0 0.0
        %5259 = vmatprep.subr.mxu0 0.0
        %5260 = vmatpush1.msra.mxu0 0.0
        %5261 = vmatprep.mubr.f32.mxu0 0.0
        %v5262 = vand.u32 %v4804, 4294901760
        %5263 = vmatmul.mubr.f32.gmra.mrb[0].mxu0 %v5262
        %v5264 = vpop.f32.mrb[0].mxu0
        %v5265 = vadd.f32 %v5169, %v5264
        %v5266 = vpop.f32.mrb[0].mxu0
        %v5267 = vadd.f32 %v5171, %v5266
        %5268 = vdwg.mxu0
        %v5269 = vand.u32 %v4788, 4294901760
        %5270 = vmatprep.subr.mxu0 %v5269
        %v5271 = vand.u32 %v4787, 4294901760
        %5272 = vmatpush1.msra.mxu0 %v5271
        %v5273 = vand.u32 %v4790, 4294901760
        %5274 = vmatprep.subr.mxu0 %v5273
        %v5275 = vand.u32 %v4789, 4294901760
        %5276 = vmatpush1.msra.mxu0 %v5275
        %v5277 = vand.u32 %v4792, 4294901760
        %5278 = vmatprep.subr.mxu0 %v5277
        %v5279 = vand.u32 %v4791, 4294901760
        %5280 = vmatpush1.msra.mxu0 %v5279
        %v5281 = vand.u32 %v4794, 4294901760
        %5282 = vmatprep.subr.mxu0 %v5281
        %v5283 = vand.u32 %v4793, 4294901760
        %5284 = vmatpush1.msra.mxu0 %v5283
        %5285 = vmatprep.subr.mxu0 0.0
        %5286 = vmatpush1.msra.mxu0 0.0
        %5287 = vmatprep.subr.mxu0 0.0
        %5288 = vmatpush1.msra.mxu0 0.0
        %5289 = vmatprep.subr.mxu0 0.0
        %5290 = vmatpush1.msra.mxu0 0.0
        %5291 = vmatprep.subr.mxu0 0.0
        %5292 = vmatpush1.msra.mxu0 0.0
        %5293 = vmatprep.subr.mxu0 0.0
        %5294 = vmatpush1.msra.mxu0 0.0
        %5295 = vmatprep.subr.mxu0 0.0
        %5296 = vmatpush1.msra.mxu0 0.0
        %5297 = vmatprep.subr.mxu0 0.0
        %5298 = vmatpush1.msra.mxu0 0.0
        %5299 = vmatprep.subr.mxu0 0.0
        %5300 = vmatpush1.msra.mxu0 0.0
        %5301 = vmatprep.subr.mxu0 0.0
        %5302 = vmatpush1.msra.mxu0 0.0
        %5303 = vmatprep.subr.mxu0 0.0
        %5304 = vmatpush1.msra.mxu0 0.0
        %5305 = vmatprep.subr.mxu0 0.0
        %5306 = vmatpush1.msra.mxu0 0.0
        %5307 = vmatprep.subr.mxu0 0.0
        %5308 = vmatpush1.msra.mxu0 0.0
        %5309 = vmatprep.subr.mxu0 0.0
        %5310 = vmatpush1.msra.mxu0 0.0
        %5311 = vmatprep.subr.mxu0 0.0
        %5312 = vmatpush1.msra.mxu0 0.0
        %5313 = vmatprep.subr.mxu0 0.0
        %5314 = vmatpush1.msra.mxu0 0.0
        %5315 = vmatprep.subr.mxu0 0.0
        %5316 = vmatpush1.msra.mxu0 0.0
        %5317 = vmatprep.subr.mxu0 0.0
        %5318 = vmatpush1.msra.mxu0 0.0
        %5319 = vmatprep.subr.mxu0 0.0
        %5320 = vmatpush1.msra.mxu0 0.0
        %5321 = vmatprep.subr.mxu0 0.0
        %5322 = vmatpush1.msra.mxu0 0.0
        %5323 = vmatprep.subr.mxu0 0.0
        %5324 = vmatpush1.msra.mxu0 0.0
        %5325 = vmatprep.subr.mxu0 0.0
        %5326 = vmatpush1.msra.mxu0 0.0
        %5327 = vmatprep.subr.mxu0 0.0
        %5328 = vmatpush1.msra.mxu0 0.0
        %5329 = vmatprep.subr.mxu0 0.0
        %5330 = vmatpush1.msra.mxu0 0.0
        %5331 = vmatprep.subr.mxu0 0.0
        %5332 = vmatpush1.msra.mxu0 0.0
        %5333 = vmatprep.subr.mxu0 0.0
        %5334 = vmatpush1.msra.mxu0 0.0
        %5335 = vmatprep.subr.mxu0 0.0
        %5336 = vmatpush1.msra.mxu0 0.0
        %5337 = vmatprep.subr.mxu0 0.0
        %5338 = vmatpush1.msra.mxu0 0.0
        %5339 = vmatprep.subr.mxu0 0.0
        %5340 = vmatpush1.msra.mxu0 0.0
        %5341 = vmatprep.mubr.f32.mxu0 0.0
        %v5342 = vand.u32 %v4804, 4294901760
        %5343 = vmatmul.mubr.f32.gmra.mrb[0].mxu0 %v5342
        %v5344 = vpop.f32.mrb[0].mxu0
        %v5345 = vadd.f32 %v5265, %v5344
        %v5346 = vpop.f32.mrb[0].mxu0
        %v5347 = vadd.f32 %v5267, %v5346
        %5348 = vdwg.mxu0
        %v5349 = vmul.f32 %v5345, %v547
        %v5350 = vmul.f32 %v5347, %v548
        %v5351 = vadd.f32 %v4759, %v5349
        %v5352 = vadd.f32 %v4760, %v5350
        %v5353 = vld [vmem:[%s4 + $0x10] sm:$0x3]
        %5354 = vrot.lane.b32.xlu0 %v3553, 111
        %v5355 = vpop.permute.xlu0 %5354
        %5356 = vrot.lane.b32.xlu0 %v3554, 111
        %v5357 = vpop.permute.xlu0 %5356
        %5358 = vrot.lane.b32.xlu0 %v3555, 111
        %v5359 = vpop.permute.xlu0 %5358
        %5360 = vrot.lane.b32.xlu0 %v3556, 111
        %v5361 = vpop.permute.xlu0 %5360
        %5362 = vrot.lane.b32.xlu0 %v3557, 111
        %v5363 = vpop.permute.xlu0 %5362
        %5364 = vrot.lane.b32.xlu0 %v3558, 111
        %v5365 = vpop.permute.xlu0 %5364
        %5366 = vrot.lane.b32.xlu0 %v3559, 111
        %v5367 = vpop.permute.xlu0 %5366
        %5368 = vrot.lane.b32.xlu0 %v3560, 111
        %v5369 = vpop.permute.xlu0 %5368
        %5370 = vrot.lane.b32.xlu0 %v3561, 111
        %v5371 = vpop.permute.xlu0 %5370
        %5372 = vrot.lane.b32.xlu0 %v3562, 111
        %v5373 = vpop.permute.xlu0 %5372
        %5374 = vrot.lane.b32.xlu0 %v3563, 111
        %v5375 = vpop.permute.xlu0 %5374
        %5376 = vrot.lane.b32.xlu0 %v3564, 111
        %v5377 = vpop.permute.xlu0 %5376
        %vm5378 = vcmask 908288
        %v5379 = vsel %vm5378, %v5355, %v5357
        %v5380 = vsel %vm5378, %v5357, %v5359
        %v5381 = vsel %vm5378, %v5361, %v5363
        %v5382 = vsel %vm5378, %v5363, %v5365
        %v5383 = vsel %vm5378, %v5367, %v5369
        %v5384 = vsel %vm5378, %v5369, %v5371
        %v5385 = vsel %vm5378, %v5373, %v5375
        %v5386 = vsel %vm5378, %v5375, %v5377
        %v5396 = vsel %vm675, %v5353, 0
        %v5398 = vand.u32 %v5380, 4294901760
        %5399 = vmatprep.subr.mxu0 %v5398
        %v5400 = vand.u32 %v5379, 4294901760
        %5401 = vmatpush1.msra.mxu0 %v5400
        %v5402 = vand.u32 %v5382, 4294901760
        %5403 = vmatprep.subr.mxu0 %v5402
        %v5404 = vand.u32 %v5381, 4294901760
        %5405 = vmatpush1.msra.mxu0 %v5404
        %v5406 = vand.u32 %v5384, 4294901760
        %5407 = vmatprep.subr.mxu0 %v5406
        %v5408 = vand.u32 %v5383, 4294901760
        %5409 = vmatpush1.msra.mxu0 %v5408
        %v5410 = vand.u32 %v5386, 4294901760
        %5411 = vmatprep.subr.mxu0 %v5410
        %v5412 = vand.u32 %v5385, 4294901760
        %5413 = vmatpush1.msra.mxu0 %v5412
        %5414 = vmatprep.subr.mxu0 0.0
        %5415 = vmatpush1.msra.mxu0 0.0
        %5416 = vmatprep.subr.mxu0 0.0
        %5417 = vmatpush1.msra.mxu0 0.0
        %5418 = vmatprep.subr.mxu0 0.0
        %5419 = vmatpush1.msra.mxu0 0.0
        %5420 = vmatprep.subr.mxu0 0.0
        %5421 = vmatpush1.msra.mxu0 0.0
        %5422 = vmatprep.subr.mxu0 0.0
        %5423 = vmatpush1.msra.mxu0 0.0
        %5424 = vmatprep.subr.mxu0 0.0
        %5425 = vmatpush1.msra.mxu0 0.0
        %5426 = vmatprep.subr.mxu0 0.0
        %5427 = vmatpush1.msra.mxu0 0.0
        %5428 = vmatprep.subr.mxu0 0.0
        %5429 = vmatpush1.msra.mxu0 0.0
        %5430 = vmatprep.subr.mxu0 0.0
        %5431 = vmatpush1.msra.mxu0 0.0
        %5432 = vmatprep.subr.mxu0 0.0
        %5433 = vmatpush1.msra.mxu0 0.0
        %5434 = vmatprep.subr.mxu0 0.0
        %5435 = vmatpush1.msra.mxu0 0.0
        %5436 = vmatprep.subr.mxu0 0.0
        %5437 = vmatpush1.msra.mxu0 0.0
        %5438 = vmatprep.subr.mxu0 0.0
        %5439 = vmatpush1.msra.mxu0 0.0
        %5440 = vmatprep.subr.mxu0 0.0
        %5441 = vmatpush1.msra.mxu0 0.0
        %5442 = vmatprep.subr.mxu0 0.0
        %5443 = vmatpush1.msra.mxu0 0.0
        %5444 = vmatprep.subr.mxu0 0.0
        %5445 = vmatpush1.msra.mxu0 0.0
        %5446 = vmatprep.subr.mxu0 0.0
        %5447 = vmatpush1.msra.mxu0 0.0
        %5448 = vmatprep.subr.mxu0 0.0
        %5449 = vmatpush1.msra.mxu0 0.0
        %5450 = vmatprep.subr.mxu0 0.0
        %5451 = vmatpush1.msra.mxu0 0.0
        %5452 = vmatprep.subr.mxu0 0.0
        %5453 = vmatpush1.msra.mxu0 0.0
        %5454 = vmatprep.subr.mxu0 0.0
        %5455 = vmatpush1.msra.mxu0 0.0
        %5456 = vmatprep.subr.mxu0 0.0
        %5457 = vmatpush1.msra.mxu0 0.0
        %5458 = vmatprep.subr.mxu0 0.0
        %5459 = vmatpush1.msra.mxu0 0.0
        %5460 = vmatprep.subr.mxu0 0.0
        %5461 = vmatpush1.msra.mxu0 0.0
        %5462 = vmatprep.subr.mxu0 0.0
        %5463 = vmatpush1.msra.mxu0 0.0
        %5464 = vmatprep.subr.mxu0 0.0
        %5465 = vmatpush1.msra.mxu0 0.0
        %5466 = vmatprep.subr.mxu0 0.0
        %5467 = vmatpush1.msra.mxu0 0.0
        %5468 = vmatprep.subr.mxu0 0.0
        %5469 = vmatpush1.msra.mxu0 0.0
        %5470 = vmatprep.mubr.f32.mxu0 0.0
        %v5471 = vand.u32 %v5396, 4294901760
        %v5472 = vsub.f32 %v5396, %v5471
        %v5473 = vand.u32 %v5472, 4294901760
        %v5474 = vsub.f32 %v5472, %v5473
        %v5475 = vand.u32 %v5474, 4294901760
        %5476 = vmatmul.mubr.f32.gmra.mrb[0].mxu0 %v5475
        %v5477 = vpop.f32.mrb[0].mxu0
        %v5478 = vadd.f32 0.0, %v5477
        %v5479 = vpop.f32.mrb[0].mxu0
        %v5480 = vadd.f32 0.0, %v5479
        %5481 = vdwg.mxu0
        %v5482 = vand.u32 %v5380, 4294901760
        %v5483 = vsub.f32 %v5380, %v5482
        %v5484 = vand.u32 %v5483, 4294901760
        %v5485 = vsub.f32 %v5483, %v5484
        %v5486 = vand.u32 %v5485, 4294901760
        %5487 = vmatprep.subr.mxu0 %v5486
        %v5488 = vand.u32 %v5379, 4294901760
        %v5489 = vsub.f32 %v5379, %v5488
        %v5490 = vand.u32 %v5489, 4294901760
        %v5491 = vsub.f32 %v5489, %v5490
        %v5492 = vand.u32 %v5491, 4294901760
        %5493 = vmatpush1.msra.mxu0 %v5492
        %v5494 = vand.u32 %v5382, 4294901760
        %v5495 = vsub.f32 %v5382, %v5494
        %v5496 = vand.u32 %v5495, 4294901760
        %v5497 = vsub.f32 %v5495, %v5496
        %v5498 = vand.u32 %v5497, 4294901760
        %5499 = vmatprep.subr.mxu0 %v5498
        %v5500 = vand.u32 %v5381, 4294901760
        %v5501 = vsub.f32 %v5381, %v5500
        %v5502 = vand.u32 %v5501, 4294901760
        %v5503 = vsub.f32 %v5501, %v5502
        %v5504 = vand.u32 %v5503, 4294901760
        %5505 = vmatpush1.msra.mxu0 %v5504
        %v5506 = vand.u32 %v5384, 4294901760
        %v5507 = vsub.f32 %v5384, %v5506
        %v5508 = vand.u32 %v5507, 4294901760
        %v5509 = vsub.f32 %v5507, %v5508
        %v5510 = vand.u32 %v5509, 4294901760
        %5511 = vmatprep.subr.mxu0 %v5510
        %v5512 = vand.u32 %v5383, 4294901760
        %v5513 = vsub.f32 %v5383, %v5512
        %v5514 = vand.u32 %v5513, 4294901760
        %v5515 = vsub.f32 %v5513, %v5514
        %v5516 = vand.u32 %v5515, 4294901760
        %5517 = vmatpush1.msra.mxu0 %v5516
        %v5518 = vand.u32 %v5386, 4294901760
        %v5519 = vsub.f32 %v5386, %v5518
        %v5520 = vand.u32 %v5519, 4294901760
        %v5521 = vsub.f32 %v5519, %v5520
        %v5522 = vand.u32 %v5521, 4294901760
        %5523 = vmatprep.subr.mxu0 %v5522
        %v5524 = vand.u32 %v5385, 4294901760
        %v5525 = vsub.f32 %v5385, %v5524
        %v5526 = vand.u32 %v5525, 4294901760
        %v5527 = vsub.f32 %v5525, %v5526
        %v5528 = vand.u32 %v5527, 4294901760
        %5529 = vmatpush1.msra.mxu0 %v5528
        %5530 = vmatprep.subr.mxu0 0.0
        %5531 = vmatpush1.msra.mxu0 0.0
        %5532 = vmatprep.subr.mxu0 0.0
        %5533 = vmatpush1.msra.mxu0 0.0
        %5534 = vmatprep.subr.mxu0 0.0
        %5535 = vmatpush1.msra.mxu0 0.0
        %5536 = vmatprep.subr.mxu0 0.0
        %5537 = vmatpush1.msra.mxu0 0.0
        %5538 = vmatprep.subr.mxu0 0.0
        %5539 = vmatpush1.msra.mxu0 0.0
        %5540 = vmatprep.subr.mxu0 0.0
        %5541 = vmatpush1.msra.mxu0 0.0
        %5542 = vmatprep.subr.mxu0 0.0
        %5543 = vmatpush1.msra.mxu0 0.0
        %5544 = vmatprep.subr.mxu0 0.0
        %5545 = vmatpush1.msra.mxu0 0.0
        %5546 = vmatprep.subr.mxu0 0.0
        %5547 = vmatpush1.msra.mxu0 0.0
        %5548 = vmatprep.subr.mxu0 0.0
        %5549 = vmatpush1.msra.mxu0 0.0
        %5550 = vmatprep.subr.mxu0 0.0
        %5551 = vmatpush1.msra.mxu0 0.0
        %5552 = vmatprep.subr.mxu0 0.0
        %5553 = vmatpush1.msra.mxu0 0.0
        %5554 = vmatprep.subr.mxu0 0.0
        %5555 = vmatpush1.msra.mxu0 0.0
        %5556 = vmatprep.subr.mxu0 0.0
        %5557 = vmatpush1.msra.mxu0 0.0
        %5558 = vmatprep.subr.mxu0 0.0
        %5559 = vmatpush1.msra.mxu0 0.0
        %5560 = vmatprep.subr.mxu0 0.0
        %5561 = vmatpush1.msra.mxu0 0.0
        %5562 = vmatprep.subr.mxu0 0.0
        %5563 = vmatpush1.msra.mxu0 0.0
        %5564 = vmatprep.subr.mxu0 0.0
        %5565 = vmatpush1.msra.mxu0 0.0
        %5566 = vmatprep.subr.mxu0 0.0
        %5567 = vmatpush1.msra.mxu0 0.0
        %5568 = vmatprep.subr.mxu0 0.0
        %5569 = vmatpush1.msra.mxu0 0.0
        %5570 = vmatprep.subr.mxu0 0.0
        %5571 = vmatpush1.msra.mxu0 0.0
        %5572 = vmatprep.subr.mxu0 0.0
        %5573 = vmatpush1.msra.mxu0 0.0
        %5574 = vmatprep.subr.mxu0 0.0
        %5575 = vmatpush1.msra.mxu0 0.0
        %5576 = vmatprep.subr.mxu0 0.0
        %5577 = vmatpush1.msra.mxu0 0.0
        %5578 = vmatprep.subr.mxu0 0.0
        %5579 = vmatpush1.msra.mxu0 0.0
        %5580 = vmatprep.subr.mxu0 0.0
        %5581 = vmatpush1.msra.mxu0 0.0
        %5582 = vmatprep.subr.mxu0 0.0
        %5583 = vmatpush1.msra.mxu0 0.0
        %5584 = vmatprep.subr.mxu0 0.0
        %5585 = vmatpush1.msra.mxu0 0.0
        %5586 = vmatprep.mubr.f32.mxu0 0.0
        %v5587 = vand.u32 %v5396, 4294901760
        %5588 = vmatmul.mubr.f32.gmra.mrb[0].mxu0 %v5587
        %v5589 = vpop.f32.mrb[0].mxu0
        %v5590 = vadd.f32 %v5478, %v5589
        %v5591 = vpop.f32.mrb[0].mxu0
        %v5592 = vadd.f32 %v5480, %v5591
        %5593 = vdwg.mxu0
        %v5594 = vand.u32 %v5380, 4294901760
        %v5595 = vsub.f32 %v5380, %v5594
        %5596 = vmatprep.subr.mxu0 %v5595
        %v5597 = vand.u32 %v5379, 4294901760
        %v5598 = vsub.f32 %v5379, %v5597
        %5599 = vmatpush1.msra.mxu0 %v5598
        %v5600 = vand.u32 %v5382, 4294901760
        %v5601 = vsub.f32 %v5382, %v5600
        %5602 = vmatprep.subr.mxu0 %v5601
        %v5603 = vand.u32 %v5381, 4294901760
        %v5604 = vsub.f32 %v5381, %v5603
        %5605 = vmatpush1.msra.mxu0 %v5604
        %v5606 = vand.u32 %v5384, 4294901760
        %v5607 = vsub.f32 %v5384, %v5606
        %5608 = vmatprep.subr.mxu0 %v5607
        %v5609 = vand.u32 %v5383, 4294901760
        %v5610 = vsub.f32 %v5383, %v5609
        %5611 = vmatpush1.msra.mxu0 %v5610
        %v5612 = vand.u32 %v5386, 4294901760
        %v5613 = vsub.f32 %v5386, %v5612
        %5614 = vmatprep.subr.mxu0 %v5613
        %v5615 = vand.u32 %v5385, 4294901760
        %v5616 = vsub.f32 %v5385, %v5615
        %5617 = vmatpush1.msra.mxu0 %v5616
        %5618 = vmatprep.subr.mxu0 0.0
        %5619 = vmatpush1.msra.mxu0 0.0
        %5620 = vmatprep.subr.mxu0 0.0
        %5621 = vmatpush1.msra.mxu0 0.0
        %5622 = vmatprep.subr.mxu0 0.0
        %5623 = vmatpush1.msra.mxu0 0.0
        %5624 = vmatprep.subr.mxu0 0.0
        %5625 = vmatpush1.msra.mxu0 0.0
        %5626 = vmatprep.subr.mxu0 0.0
        %5627 = vmatpush1.msra.mxu0 0.0
        %5628 = vmatprep.subr.mxu0 0.0
        %5629 = vmatpush1.msra.mxu0 0.0
        %5630 = vmatprep.subr.mxu0 0.0
        %5631 = vmatpush1.msra.mxu0 0.0
        %5632 = vmatprep.subr.mxu0 0.0
        %5633 = vmatpush1.msra.mxu0 0.0
        %5634 = vmatprep.subr.mxu0 0.0
        %5635 = vmatpush1.msra.mxu0 0.0
        %5636 = vmatprep.subr.mxu0 0.0
        %5637 = vmatpush1.msra.mxu0 0.0
        %5638 = vmatprep.subr.mxu0 0.0
        %5639 = vmatpush1.msra.mxu0 0.0
        %5640 = vmatprep.subr.mxu0 0.0
        %5641 = vmatpush1.msra.mxu0 0.0
        %5642 = vmatprep.subr.mxu0 0.0
        %5643 = vmatpush1.msra.mxu0 0.0
        %5644 = vmatprep.subr.mxu0 0.0
        %5645 = vmatpush1.msra.mxu0 0.0
        %5646 = vmatprep.subr.mxu0 0.0
        %5647 = vmatpush1.msra.mxu0 0.0
        %5648 = vmatprep.subr.mxu0 0.0
        %5649 = vmatpush1.msra.mxu0 0.0
        %5650 = vmatprep.subr.mxu0 0.0
        %5651 = vmatpush1.msra.mxu0 0.0
        %5652 = vmatprep.subr.mxu0 0.0
        %5653 = vmatpush1.msra.mxu0 0.0
        %5654 = vmatprep.subr.mxu0 0.0
        %5655 = vmatpush1.msra.mxu0 0.0
        %5656 = vmatprep.subr.mxu0 0.0
        %5657 = vmatpush1.msra.mxu0 0.0
        %5658 = vmatprep.subr.mxu0 0.0
        %5659 = vmatpush1.msra.mxu0 0.0
        %5660 = vmatprep.subr.mxu0 0.0
        %5661 = vmatpush1.msra.mxu0 0.0
        %5662 = vmatprep.subr.mxu0 0.0
        %5663 = vmatpush1.msra.mxu0 0.0
        %5664 = vmatprep.subr.mxu0 0.0
        %5665 = vmatpush1.msra.mxu0 0.0
        %5666 = vmatprep.subr.mxu0 0.0
        %5667 = vmatpush1.msra.mxu0 0.0
        %5668 = vmatprep.subr.mxu0 0.0
        %5669 = vmatpush1.msra.mxu0 0.0
        %5670 = vmatprep.subr.mxu0 0.0
        %5671 = vmatpush1.msra.mxu0 0.0
        %5672 = vmatprep.subr.mxu0 0.0
        %5673 = vmatpush1.msra.mxu0 0.0
        %5674 = vmatprep.mubr.f32.mxu0 0.0
        %v5675 = vand.u32 %v5396, 4294901760
        %v5676 = vsub.f32 %v5396, %v5675
        %5677 = vmatmul.mubr.f32.gmra.mrb[0].mxu0 %v5676
        %v5678 = vpop.f32.mrb[0].mxu0
        %v5679 = vadd.f32 %v5590, %v5678
        %v5680 = vpop.f32.mrb[0].mxu0
        %v5681 = vadd.f32 %v5592, %v5680
        %5682 = vdwg.mxu0
        %v5683 = vand.u32 %v5380, 4294901760
        %5684 = vmatprep.subr.mxu0 %v5683
        %v5685 = vand.u32 %v5379, 4294901760
        %5686 = vmatpush1.msra.mxu0 %v5685
        %v5687 = vand.u32 %v5382, 4294901760
        %5688 = vmatprep.subr.mxu0 %v5687
        %v5689 = vand.u32 %v5381, 4294901760
        %5690 = vmatpush1.msra.mxu0 %v5689
        %v5691 = vand.u32 %v5384, 4294901760
        %5692 = vmatprep.subr.mxu0 %v5691
        %v5693 = vand.u32 %v5383, 4294901760
        %5694 = vmatpush1.msra.mxu0 %v5693
        %v5695 = vand.u32 %v5386, 4294901760
        %5696 = vmatprep.subr.mxu0 %v5695
        %v5697 = vand.u32 %v5385, 4294901760
        %5698 = vmatpush1.msra.mxu0 %v5697
        %5699 = vmatprep.subr.mxu0 0.0
        %5700 = vmatpush1.msra.mxu0 0.0
        %5701 = vmatprep.subr.mxu0 0.0
        %5702 = vmatpush1.msra.mxu0 0.0
        %5703 = vmatprep.subr.mxu0 0.0
        %5704 = vmatpush1.msra.mxu0 0.0
        %5705 = vmatprep.subr.mxu0 0.0
        %5706 = vmatpush1.msra.mxu0 0.0
        %5707 = vmatprep.subr.mxu0 0.0
        %5708 = vmatpush1.msra.mxu0 0.0
        %5709 = vmatprep.subr.mxu0 0.0
        %5710 = vmatpush1.msra.mxu0 0.0
        %5711 = vmatprep.subr.mxu0 0.0
        %5712 = vmatpush1.msra.mxu0 0.0
        %5713 = vmatprep.subr.mxu0 0.0
        %5714 = vmatpush1.msra.mxu0 0.0
        %5715 = vmatprep.subr.mxu0 0.0
        %5716 = vmatpush1.msra.mxu0 0.0
        %5717 = vmatprep.subr.mxu0 0.0
        %5718 = vmatpush1.msra.mxu0 0.0
        %5719 = vmatprep.subr.mxu0 0.0
        %5720 = vmatpush1.msra.mxu0 0.0
        %5721 = vmatprep.subr.mxu0 0.0
        %5722 = vmatpush1.msra.mxu0 0.0
        %5723 = vmatprep.subr.mxu0 0.0
        %5724 = vmatpush1.msra.mxu0 0.0
        %5725 = vmatprep.subr.mxu0 0.0
        %5726 = vmatpush1.msra.mxu0 0.0
        %5727 = vmatprep.subr.mxu0 0.0
        %5728 = vmatpush1.msra.mxu0 0.0
        %5729 = vmatprep.subr.mxu0 0.0
        %5730 = vmatpush1.msra.mxu0 0.0
        %5731 = vmatprep.subr.mxu0 0.0
        %5732 = vmatpush1.msra.mxu0 0.0
        %5733 = vmatprep.subr.mxu0 0.0
        %5734 = vmatpush1.msra.mxu0 0.0
        %5735 = vmatprep.subr.mxu0 0.0
        %5736 = vmatpush1.msra.mxu0 0.0
        %5737 = vmatprep.subr.mxu0 0.0
        %5738 = vmatpush1.msra.mxu0 0.0
        %5739 = vmatprep.subr.mxu0 0.0
        %5740 = vmatpush1.msra.mxu0 0.0
        %5741 = vmatprep.subr.mxu0 0.0
        %5742 = vmatpush1.msra.mxu0 0.0
        %5743 = vmatprep.subr.mxu0 0.0
        %5744 = vmatpush1.msra.mxu0 0.0
        %5745 = vmatprep.subr.mxu0 0.0
        %5746 = vmatpush1.msra.mxu0 0.0
        %5747 = vmatprep.subr.mxu0 0.0
        %5748 = vmatpush1.msra.mxu0 0.0
        %5749 = vmatprep.subr.mxu0 0.0
        %5750 = vmatpush1.msra.mxu0 0.0
        %5751 = vmatprep.subr.mxu0 0.0
        %5752 = vmatpush1.msra.mxu0 0.0
        %5753 = vmatprep.subr.mxu0 0.0
        %5754 = vmatpush1.msra.mxu0 0.0
        %5755 = vmatprep.mubr.f32.mxu0 0.0
        %v5756 = vand.u32 %v5396, 4294901760
        %v5757 = vsub.f32 %v5396, %v5756
        %v5758 = vand.u32 %v5757, 4294901760
        %5759 = vmatmul.mubr.f32.gmra.mrb[0].mxu0 %v5758
        %v5760 = vpop.f32.mrb[0].mxu0
        %v5761 = vadd.f32 %v5679, %v5760
        %v5762 = vpop.f32.mrb[0].mxu0
        %v5763 = vadd.f32 %v5681, %v5762
        %5764 = vdwg.mxu0
        %v5765 = vand.u32 %v5380, 4294901760
        %v5766 = vsub.f32 %v5380, %v5765
        %v5767 = vand.u32 %v5766, 4294901760
        %5768 = vmatprep.subr.mxu0 %v5767
        %v5769 = vand.u32 %v5379, 4294901760
        %v5770 = vsub.f32 %v5379, %v5769
        %v5771 = vand.u32 %v5770, 4294901760
        %5772 = vmatpush1.msra.mxu0 %v5771
        %v5773 = vand.u32 %v5382, 4294901760
        %v5774 = vsub.f32 %v5382, %v5773
        %v5775 = vand.u32 %v5774, 4294901760
        %5776 = vmatprep.subr.mxu0 %v5775
        %v5777 = vand.u32 %v5381, 4294901760
        %v5778 = vsub.f32 %v5381, %v5777
        %v5779 = vand.u32 %v5778, 4294901760
        %5780 = vmatpush1.msra.mxu0 %v5779
        %v5781 = vand.u32 %v5384, 4294901760
        %v5782 = vsub.f32 %v5384, %v5781
        %v5783 = vand.u32 %v5782, 4294901760
        %5784 = vmatprep.subr.mxu0 %v5783
        %v5785 = vand.u32 %v5383, 4294901760
        %v5786 = vsub.f32 %v5383, %v5785
        %v5787 = vand.u32 %v5786, 4294901760
        %5788 = vmatpush1.msra.mxu0 %v5787
        %v5789 = vand.u32 %v5386, 4294901760
        %v5790 = vsub.f32 %v5386, %v5789
        %v5791 = vand.u32 %v5790, 4294901760
        %5792 = vmatprep.subr.mxu0 %v5791
        %v5793 = vand.u32 %v5385, 4294901760
        %v5794 = vsub.f32 %v5385, %v5793
        %v5795 = vand.u32 %v5794, 4294901760
        %5796 = vmatpush1.msra.mxu0 %v5795
        %5797 = vmatprep.subr.mxu0 0.0
        %5798 = vmatpush1.msra.mxu0 0.0
        %5799 = vmatprep.subr.mxu0 0.0
        %5800 = vmatpush1.msra.mxu0 0.0
        %5801 = vmatprep.subr.mxu0 0.0
        %5802 = vmatpush1.msra.mxu0 0.0
        %5803 = vmatprep.subr.mxu0 0.0
        %5804 = vmatpush1.msra.mxu0 0.0
        %5805 = vmatprep.subr.mxu0 0.0
        %5806 = vmatpush1.msra.mxu0 0.0
        %5807 = vmatprep.subr.mxu0 0.0
        %5808 = vmatpush1.msra.mxu0 0.0
        %5809 = vmatprep.subr.mxu0 0.0
        %5810 = vmatpush1.msra.mxu0 0.0
        %5811 = vmatprep.subr.mxu0 0.0
        %5812 = vmatpush1.msra.mxu0 0.0
        %5813 = vmatprep.subr.mxu0 0.0
        %5814 = vmatpush1.msra.mxu0 0.0
        %5815 = vmatprep.subr.mxu0 0.0
        %5816 = vmatpush1.msra.mxu0 0.0
        %5817 = vmatprep.subr.mxu0 0.0
        %5818 = vmatpush1.msra.mxu0 0.0
        %5819 = vmatprep.subr.mxu0 0.0
        %5820 = vmatpush1.msra.mxu0 0.0
        %5821 = vmatprep.subr.mxu0 0.0
        %5822 = vmatpush1.msra.mxu0 0.0
        %5823 = vmatprep.subr.mxu0 0.0
        %5824 = vmatpush1.msra.mxu0 0.0
        %5825 = vmatprep.subr.mxu0 0.0
        %5826 = vmatpush1.msra.mxu0 0.0
        %5827 = vmatprep.subr.mxu0 0.0
        %5828 = vmatpush1.msra.mxu0 0.0
        %5829 = vmatprep.subr.mxu0 0.0
        %5830 = vmatpush1.msra.mxu0 0.0
        %5831 = vmatprep.subr.mxu0 0.0
        %5832 = vmatpush1.msra.mxu0 0.0
        %5833 = vmatprep.subr.mxu0 0.0
        %5834 = vmatpush1.msra.mxu0 0.0
        %5835 = vmatprep.subr.mxu0 0.0
        %5836 = vmatpush1.msra.mxu0 0.0
        %5837 = vmatprep.subr.mxu0 0.0
        %5838 = vmatpush1.msra.mxu0 0.0
        %5839 = vmatprep.subr.mxu0 0.0
        %5840 = vmatpush1.msra.mxu0 0.0
        %5841 = vmatprep.subr.mxu0 0.0
        %5842 = vmatpush1.msra.mxu0 0.0
        %5843 = vmatprep.subr.mxu0 0.0
        %5844 = vmatpush1.msra.mxu0 0.0
        %5845 = vmatprep.subr.mxu0 0.0
        %5846 = vmatpush1.msra.mxu0 0.0
        %5847 = vmatprep.subr.mxu0 0.0
        %5848 = vmatpush1.msra.mxu0 0.0
        %5849 = vmatprep.subr.mxu0 0.0
        %5850 = vmatpush1.msra.mxu0 0.0
        %5851 = vmatprep.subr.mxu0 0.0
        %5852 = vmatpush1.msra.mxu0 0.0
        %5853 = vmatprep.mubr.f32.mxu0 0.0
        %v5854 = vand.u32 %v5396, 4294901760
        %5855 = vmatmul.mubr.f32.gmra.mrb[0].mxu0 %v5854
        %v5856 = vpop.f32.mrb[0].mxu0
        %v5857 = vadd.f32 %v5761, %v5856
        %v5858 = vpop.f32.mrb[0].mxu0
        %v5859 = vadd.f32 %v5763, %v5858
        %5860 = vdwg.mxu0
        %v5861 = vand.u32 %v5380, 4294901760
        %5862 = vmatprep.subr.mxu0 %v5861
        %v5863 = vand.u32 %v5379, 4294901760
        %5864 = vmatpush1.msra.mxu0 %v5863
        %v5865 = vand.u32 %v5382, 4294901760
        %5866 = vmatprep.subr.mxu0 %v5865
        %v5867 = vand.u32 %v5381, 4294901760
        %5868 = vmatpush1.msra.mxu0 %v5867
        %v5869 = vand.u32 %v5384, 4294901760
        %5870 = vmatprep.subr.mxu0 %v5869
        %v5871 = vand.u32 %v5383, 4294901760
        %5872 = vmatpush1.msra.mxu0 %v5871
        %v5873 = vand.u32 %v5386, 4294901760
        %5874 = vmatprep.subr.mxu0 %v5873
        %v5875 = vand.u32 %v5385, 4294901760
        %5876 = vmatpush1.msra.mxu0 %v5875
        %5877 = vmatprep.subr.mxu0 0.0
        %5878 = vmatpush1.msra.mxu0 0.0
        %5879 = vmatprep.subr.mxu0 0.0
        %5880 = vmatpush1.msra.mxu0 0.0
        %5881 = vmatprep.subr.mxu0 0.0
        %5882 = vmatpush1.msra.mxu0 0.0
        %5883 = vmatprep.subr.mxu0 0.0
        %5884 = vmatpush1.msra.mxu0 0.0
        %5885 = vmatprep.subr.mxu0 0.0
        %5886 = vmatpush1.msra.mxu0 0.0
        %5887 = vmatprep.subr.mxu0 0.0
        %5888 = vmatpush1.msra.mxu0 0.0
        %5889 = vmatprep.subr.mxu0 0.0
        %5890 = vmatpush1.msra.mxu0 0.0
        %5891 = vmatprep.subr.mxu0 0.0
        %5892 = vmatpush1.msra.mxu0 0.0
        %5893 = vmatprep.subr.mxu0 0.0
        %5894 = vmatpush1.msra.mxu0 0.0
        %5895 = vmatprep.subr.mxu0 0.0
        %5896 = vmatpush1.msra.mxu0 0.0
        %5897 = vmatprep.subr.mxu0 0.0
        %5898 = vmatpush1.msra.mxu0 0.0
        %5899 = vmatprep.subr.mxu0 0.0
        %5900 = vmatpush1.msra.mxu0 0.0
        %5901 = vmatprep.subr.mxu0 0.0
        %5902 = vmatpush1.msra.mxu0 0.0
        %5903 = vmatprep.subr.mxu0 0.0
        %5904 = vmatpush1.msra.mxu0 0.0
        %5905 = vmatprep.subr.mxu0 0.0
        %5906 = vmatpush1.msra.mxu0 0.0
        %5907 = vmatprep.subr.mxu0 0.0
        %5908 = vmatpush1.msra.mxu0 0.0
        %5909 = vmatprep.subr.mxu0 0.0
        %5910 = vmatpush1.msra.mxu0 0.0
        %5911 = vmatprep.subr.mxu0 0.0
        %5912 = vmatpush1.msra.mxu0 0.0
        %5913 = vmatprep.subr.mxu0 0.0
        %5914 = vmatpush1.msra.mxu0 0.0
        %5915 = vmatprep.subr.mxu0 0.0
        %5916 = vmatpush1.msra.mxu0 0.0
        %5917 = vmatprep.subr.mxu0 0.0
        %5918 = vmatpush1.msra.mxu0 0.0
        %5919 = vmatprep.subr.mxu0 0.0
        %5920 = vmatpush1.msra.mxu0 0.0
        %5921 = vmatprep.subr.mxu0 0.0
        %5922 = vmatpush1.msra.mxu0 0.0
        %5923 = vmatprep.subr.mxu0 0.0
        %5924 = vmatpush1.msra.mxu0 0.0
        %5925 = vmatprep.subr.mxu0 0.0
        %5926 = vmatpush1.msra.mxu0 0.0
        %5927 = vmatprep.subr.mxu0 0.0
        %5928 = vmatpush1.msra.mxu0 0.0
        %5929 = vmatprep.subr.mxu0 0.0
        %5930 = vmatpush1.msra.mxu0 0.0
        %5931 = vmatprep.subr.mxu0 0.0
        %5932 = vmatpush1.msra.mxu0 0.0
        %5933 = vmatprep.mubr.f32.mxu0 0.0
        %v5934 = vand.u32 %v5396, 4294901760
        %5935 = vmatmul.mubr.f32.gmra.mrb[0].mxu0 %v5934
        %v5936 = vpop.f32.mrb[0].mxu0
        %v5937 = vadd.f32 %v5857, %v5936
        %v5938 = vpop.f32.mrb[0].mxu0
        %v5939 = vadd.f32 %v5859, %v5938
        %5940 = vdwg.mxu0
        %v5941 = vmul.f32 %v5937, %v559
        %v5942 = vmul.f32 %v5939, %v560
        %v5943 = vadd.f32 %v5351, %v5941
        %v5944 = vadd.f32 %v5352, %v5942
        %v5945 = vld [vmem:[%s3] sm:$0x3]
        %5947 = vset.pattern.permute.xlu0 0
        %5948 = vperm.xlu0 %5947, %v5945
        %v5949 = vpop.permute.xlu0 %5948
        %v5951 = vmul.f32 %v5949, %v5943
        %v5952 = vmul.f32 %v5949, %v5944
        %5953 = vset.pattern.permute.xlu0 1
        %5954 = vperm.xlu0 %5953, %v5945
        %v5955 = vpop.permute.xlu0 %5954
        %v5957 = vadd.f32 %v5951, %v5955
        %v5958 = vadd.f32 %v5952, %v5955
        %v5959 = vmax.f32 %v5957, 0.0
        %v5960 = vmax.f32 %v5958, 0.0
        %vm5961 = vcmask 1041408
        %v5962 = vsel %vm5961, %v5959, 0.0
        %v5963 = vsel %vm5961, %v5960, 0.0
        %v5964 = vadd.f32 %v5962, %v5963
        %5965 = vadd.xlane.f32.xlu0 %v5964
        %v5966 = vpop.xlane.xlu0 %5965
        %v5967 = vrcp.pop 256.0
        %v5968 = vmul.f32 %v5966, %v5967
        %v5969 = vld [vmem:[%s5] sm:$0x3]
        %vm5971 = vcmask 15360
        %v5973 = vsel %vm5971, %v5969, 0
        %v5975 = vsel %vm5961, %v5968, 0
        %v5977 = vand.u32 %v5975, 4294901760
        %5978 = vmatprep.subr.mxu0 %v5977
        %v5979 = vand.u32 %v5975, 4294901760
        %5980 = vmatpush1.msra.mxu0 %v5979
        %5981 = vmatprep.subr.mxu0 0.0
        %5982 = vmatpush1.msra.mxu0 0.0
        %5983 = vmatprep.subr.mxu0 0.0
        %5984 = vmatpush1.msra.mxu0 0.0
        %5985 = vmatprep.subr.mxu0 0.0
        %5986 = vmatpush1.msra.mxu0 0.0
        %5987 = vmatprep.subr.mxu0 0.0
        %5988 = vmatpush1.msra.mxu0 0.0
        %5989 = vmatprep.subr.mxu0 0.0
        %5990 = vmatpush1.msra.mxu0 0.0
        %5991 = vmatprep.subr.mxu0 0.0
        %5992 = vmatpush1.msra.mxu0 0.0
        %5993 = vmatprep.subr.mxu0 0.0
        %5994 = vmatpush1.msra.mxu0 0.0
        %5995 = vmatprep.subr.mxu0 0.0
        %5996 = vmatpush1.msra.mxu0 0.0
        %5997 = vmatprep.subr.mxu0 0.0
        %5998 = vmatpush1.msra.mxu0 0.0
        %5999 = vmatprep.subr.mxu0 0.0
        %6000 = vmatpush1.msra.mxu0 0.0
        %6001 = vmatprep.subr.mxu0 0.0
        %6002 = vmatpush1.msra.mxu0 0.0
        %6003 = vmatprep.subr.mxu0 0.0
        %6004 = vmatpush1.msra.mxu0 0.0
        %6005 = vmatprep.subr.mxu0 0.0
        %6006 = vmatpush1.msra.mxu0 0.0
        %6007 = vmatprep.subr.mxu0 0.0
        %6008 = vmatpush1.msra.mxu0 0.0
        %6009 = vmatprep.subr.mxu0 0.0
        %6010 = vmatpush1.msra.mxu0 0.0
        %6011 = vmatprep.subr.mxu0 0.0
        %6012 = vmatpush1.msra.mxu0 0.0
        %6013 = vmatprep.subr.mxu0 0.0
        %6014 = vmatpush1.msra.mxu0 0.0
        %6015 = vmatprep.subr.mxu0 0.0
        %6016 = vmatpush1.msra.mxu0 0.0
        %6017 = vmatprep.subr.mxu0 0.0
        %6018 = vmatpush1.msra.mxu0 0.0
        %6019 = vmatprep.subr.mxu0 0.0
        %6020 = vmatpush1.msra.mxu0 0.0
        %6021 = vmatprep.subr.mxu0 0.0
        %6022 = vmatpush1.msra.mxu0 0.0
        %6023 = vmatprep.subr.mxu0 0.0
        %6024 = vmatpush1.msra.mxu0 0.0
        %6025 = vmatprep.subr.mxu0 0.0
        %6026 = vmatpush1.msra.mxu0 0.0
        %6027 = vmatprep.subr.mxu0 0.0
        %6028 = vmatpush1.msra.mxu0 0.0
        %6029 = vmatprep.subr.mxu0 0.0
        %6030 = vmatpush1.msra.mxu0 0.0
        %6031 = vmatprep.subr.mxu0 0.0
        %6032 = vmatpush1.msra.mxu0 0.0
        %6033 = vmatprep.subr.mxu0 0.0
        %6034 = vmatpush1.msra.mxu0 0.0
        %6035 = vmatprep.subr.mxu0 0.0
        %6036 = vmatpush1.msra.mxu0 0.0
        %6037 = vmatprep.subr.mxu0 0.0
        %6038 = vmatpush1.msra.mxu0 0.0
        %6039 = vmatprep.subr.mxu0 0.0
        %6040 = vmatpush1.msra.mxu0 0.0
        %6041 = vmatprep.subr.mxu0 0.0
        %6042 = vmatpush1.msra.mxu0 0.0
        %6043 = vmatprep.mubr.f32.mxu0 0.0
        %v6044 = vand.u32 %v5973, 4294901760
        %v6045 = vsub.f32 %v5973, %v6044
        %v6046 = vand.u32 %v6045, 4294901760
        %v6047 = vsub.f32 %v6045, %v6046
        %v6048 = vand.u32 %v6047, 4294901760
        %6049 = vmatmul.mubr.f32.gmra.mrb[0].mxu0 %v6048
        %v6050 = vpop.f32.mrb[0].mxu0
        %v6051 = vadd.f32 0.0, %v6050
        %v6052 = vpop.f32.mrb[0].mxu0
        %v6053 = vadd.f32 0.0, %v6052
        %6054 = vdwg.mxu0
        %v6055 = vand.u32 %v5975, 4294901760
        %v6056 = vsub.f32 %v5975, %v6055
        %v6057 = vand.u32 %v6056, 4294901760
        %v6058 = vsub.f32 %v6056, %v6057
        %v6059 = vand.u32 %v6058, 4294901760
        %6060 = vmatprep.subr.mxu0 %v6059
        %v6061 = vand.u32 %v5975, 4294901760
        %v6062 = vsub.f32 %v5975, %v6061
        %v6063 = vand.u32 %v6062, 4294901760
        %v6064 = vsub.f32 %v6062, %v6063
        %v6065 = vand.u32 %v6064, 4294901760
        %6066 = vmatpush1.msra.mxu0 %v6065
        %6067 = vmatprep.subr.mxu0 0.0
        %6068 = vmatpush1.msra.mxu0 0.0
        %6069 = vmatprep.subr.mxu0 0.0
        %6070 = vmatpush1.msra.mxu0 0.0
        %6071 = vmatprep.subr.mxu0 0.0
        %6072 = vmatpush1.msra.mxu0 0.0
        %6073 = vmatprep.subr.mxu0 0.0
        %6074 = vmatpush1.msra.mxu0 0.0
        %6075 = vmatprep.subr.mxu0 0.0
        %6076 = vmatpush1.msra.mxu0 0.0
        %6077 = vmatprep.subr.mxu0 0.0
        %6078 = vmatpush1.msra.mxu0 0.0
        %6079 = vmatprep.subr.mxu0 0.0
        %6080 = vmatpush1.msra.mxu0 0.0
        %6081 = vmatprep.subr.mxu0 0.0
        %6082 = vmatpush1.msra.mxu0 0.0
        %6083 = vmatprep.subr.mxu0 0.0
        %6084 = vmatpush1.msra.mxu0 0.0
        %6085 = vmatprep.subr.mxu0 0.0
        %6086 = vmatpush1.msra.mxu0 0.0
        %6087 = vmatprep.subr.mxu0 0.0
        %6088 = vmatpush1.msra.mxu0 0.0
        %6089 = vmatprep.subr.mxu0 0.0
        %6090 = vmatpush1.msra.mxu0 0.0
        %6091 = vmatprep.subr.mxu0 0.0
        %6092 = vmatpush1.msra.mxu0 0.0
        %6093 = vmatprep.subr.mxu0 0.0
        %6094 = vmatpush1.msra.mxu0 0.0
        %6095 = vmatprep.subr.mxu0 0.0
        %6096 = vmatpush1.msra.mxu0 0.0
        %6097 = vmatprep.subr.mxu0 0.0
        %6098 = vmatpush1.msra.mxu0 0.0
        %6099 = vmatprep.subr.mxu0 0.0
        %6100 = vmatpush1.msra.mxu0 0.0
        %6101 = vmatprep.subr.mxu0 0.0
        %6102 = vmatpush1.msra.mxu0 0.0
        %6103 = vmatprep.subr.mxu0 0.0
        %6104 = vmatpush1.msra.mxu0 0.0
        %6105 = vmatprep.subr.mxu0 0.0
        %6106 = vmatpush1.msra.mxu0 0.0
        %6107 = vmatprep.subr.mxu0 0.0
        %6108 = vmatpush1.msra.mxu0 0.0
        %6109 = vmatprep.subr.mxu0 0.0
        %6110 = vmatpush1.msra.mxu0 0.0
        %6111 = vmatprep.subr.mxu0 0.0
        %6112 = vmatpush1.msra.mxu0 0.0
        %6113 = vmatprep.subr.mxu0 0.0
        %6114 = vmatpush1.msra.mxu0 0.0
        %6115 = vmatprep.subr.mxu0 0.0
        %6116 = vmatpush1.msra.mxu0 0.0
        %6117 = vmatprep.subr.mxu0 0.0
        %6118 = vmatpush1.msra.mxu0 0.0
        %6119 = vmatprep.subr.mxu0 0.0
        %6120 = vmatpush1.msra.mxu0 0.0
        %6121 = vmatprep.subr.mxu0 0.0
        %6122 = vmatpush1.msra.mxu0 0.0
        %6123 = vmatprep.subr.mxu0 0.0
        %6124 = vmatpush1.msra.mxu0 0.0
        %6125 = vmatprep.subr.mxu0 0.0
        %6126 = vmatpush1.msra.mxu0 0.0
        %6127 = vmatprep.subr.mxu0 0.0
        %6128 = vmatpush1.msra.mxu0 0.0
        %6129 = vmatprep.mubr.f32.mxu0 0.0
        %v6130 = vand.u32 %v5973, 4294901760
        %6131 = vmatmul.mubr.f32.gmra.mrb[0].mxu0 %v6130
        %v6132 = vpop.f32.mrb[0].mxu0
        %v6133 = vadd.f32 %v6051, %v6132
        %v6134 = vpop.f32.mrb[0].mxu0
        %v6135 = vadd.f32 %v6053, %v6134
        %6136 = vdwg.mxu0
        %v6137 = vand.u32 %v5975, 4294901760
        %v6138 = vsub.f32 %v5975, %v6137
        %6139 = vmatprep.subr.mxu0 %v6138
        %v6140 = vand.u32 %v5975, 4294901760
        %v6141 = vsub.f32 %v5975, %v6140
        %6142 = vmatpush1.msra.mxu0 %v6141
        %6143 = vmatprep.subr.mxu0 0.0
        %6144 = vmatpush1.msra.mxu0 0.0
        %6145 = vmatprep.subr.mxu0 0.0
        %6146 = vmatpush1.msra.mxu0 0.0
        %6147 = vmatprep.subr.mxu0 0.0
        %6148 = vmatpush1.msra.mxu0 0.0
        %6149 = vmatprep.subr.mxu0 0.0
        %6150 = vmatpush1.msra.mxu0 0.0
        %6151 = vmatprep.subr.mxu0 0.0
        %6152 = vmatpush1.msra.mxu0 0.0
        %6153 = vmatprep.subr.mxu0 0.0
        %6154 = vmatpush1.msra.mxu0 0.0
        %6155 = vmatprep.subr.mxu0 0.0
        %6156 = vmatpush1.msra.mxu0 0.0
        %6157 = vmatprep.subr.mxu0 0.0
        %6158 = vmatpush1.msra.mxu0 0.0
        %6159 = vmatprep.subr.mxu0 0.0
        %6160 = vmatpush1.msra.mxu0 0.0
        %6161 = vmatprep.subr.mxu0 0.0
        %6162 = vmatpush1.msra.mxu0 0.0
        %6163 = vmatprep.subr.mxu0 0.0
        %6164 = vmatpush1.msra.mxu0 0.0
        %6165 = vmatprep.subr.mxu0 0.0
        %6166 = vmatpush1.msra.mxu0 0.0
        %6167 = vmatprep.subr.mxu0 0.0
        %6168 = vmatpush1.msra.mxu0 0.0
        %6169 = vmatprep.subr.mxu0 0.0
        %6170 = vmatpush1.msra.mxu0 0.0
        %6171 = vmatprep.subr.mxu0 0.0
        %6172 = vmatpush1.msra.mxu0 0.0
        %6173 = vmatprep.subr.mxu0 0.0
        %6174 = vmatpush1.msra.mxu0 0.0
        %6175 = vmatprep.subr.mxu0 0.0
        %6176 = vmatpush1.msra.mxu0 0.0
        %6177 = vmatprep.subr.mxu0 0.0
        %6178 = vmatpush1.msra.mxu0 0.0
        %6179 = vmatprep.subr.mxu0 0.0
        %6180 = vmatpush1.msra.mxu0 0.0
        %6181 = vmatprep.subr.mxu0 0.0
        %6182 = vmatpush1.msra.mxu0 0.0
        %6183 = vmatprep.subr.mxu0 0.0
        %6184 = vmatpush1.msra.mxu0 0.0
        %6185 = vmatprep.subr.mxu0 0.0
        %6186 = vmatpush1.msra.mxu0 0.0
        %6187 = vmatprep.subr.mxu0 0.0
        %6188 = vmatpush1.msra.mxu0 0.0
        %6189 = vmatprep.subr.mxu0 0.0
        %6190 = vmatpush1.msra.mxu0 0.0
        %6191 = vmatprep.subr.mxu0 0.0
        %6192 = vmatpush1.msra.mxu0 0.0
        %6193 = vmatprep.subr.mxu0 0.0
        %6194 = vmatpush1.msra.mxu0 0.0
        %6195 = vmatprep.subr.mxu0 0.0
        %6196 = vmatpush1.msra.mxu0 0.0
        %6197 = vmatprep.subr.mxu0 0.0
        %6198 = vmatpush1.msra.mxu0 0.0
        %6199 = vmatprep.subr.mxu0 0.0
        %6200 = vmatpush1.msra.mxu0 0.0
        %6201 = vmatprep.subr.mxu0 0.0
        %6202 = vmatpush1.msra.mxu0 0.0
        %6203 = vmatprep.subr.mxu0 0.0
        %6204 = vmatpush1.msra.mxu0 0.0
        %6205 = vmatprep.mubr.f32.mxu0 0.0
        %v6206 = vand.u32 %v5973, 4294901760
        %v6207 = vsub.f32 %v5973, %v6206
        %6208 = vmatmul.mubr.f32.gmra.mrb[0].mxu0 %v6207
        %v6209 = vpop.f32.mrb[0].mxu0
        %v6210 = vadd.f32 %v6133, %v6209
        %v6211 = vpop.f32.mrb[0].mxu0
        %v6212 = vadd.f32 %v6135, %v6211
        %6213 = vdwg.mxu0
        %v6214 = vand.u32 %v5975, 4294901760
        %6215 = vmatprep.subr.mxu0 %v6214
        %v6216 = vand.u32 %v5975, 4294901760
        %6217 = vmatpush1.msra.mxu0 %v6216
        %6218 = vmatprep.subr.mxu0 0.0
        %6219 = vmatpush1.msra.mxu0 0.0
        %6220 = vmatprep.subr.mxu0 0.0
        %6221 = vmatpush1.msra.mxu0 0.0
        %6222 = vmatprep.subr.mxu0 0.0
        %6223 = vmatpush1.msra.mxu0 0.0
        %6224 = vmatprep.subr.mxu0 0.0
        %6225 = vmatpush1.msra.mxu0 0.0
        %6226 = vmatprep.subr.mxu0 0.0
        %6227 = vmatpush1.msra.mxu0 0.0
        %6228 = vmatprep.subr.mxu0 0.0
        %6229 = vmatpush1.msra.mxu0 0.0
        %6230 = vmatprep.subr.mxu0 0.0
        %6231 = vmatpush1.msra.mxu0 0.0
        %6232 = vmatprep.subr.mxu0 0.0
        %6233 = vmatpush1.msra.mxu0 0.0
        %6234 = vmatprep.subr.mxu0 0.0
        %6235 = vmatpush1.msra.mxu0 0.0
        %6236 = vmatprep.subr.mxu0 0.0
        %6237 = vmatpush1.msra.mxu0 0.0
        %6238 = vmatprep.subr.mxu0 0.0
        %6239 = vmatpush1.msra.mxu0 0.0
        %6240 = vmatprep.subr.mxu0 0.0
        %6241 = vmatpush1.msra.mxu0 0.0
        %6242 = vmatprep.subr.mxu0 0.0
        %6243 = vmatpush1.msra.mxu0 0.0
        %6244 = vmatprep.subr.mxu0 0.0
        %6245 = vmatpush1.msra.mxu0 0.0
        %6246 = vmatprep.subr.mxu0 0.0
        %6247 = vmatpush1.msra.mxu0 0.0
        %6248 = vmatprep.subr.mxu0 0.0
        %6249 = vmatpush1.msra.mxu0 0.0
        %6250 = vmatprep.subr.mxu0 0.0
        %6251 = vmatpush1.msra.mxu0 0.0
        %6252 = vmatprep.subr.mxu0 0.0
        %6253 = vmatpush1.msra.mxu0 0.0
        %6254 = vmatprep.subr.mxu0 0.0
        %6255 = vmatpush1.msra.mxu0 0.0
        %6256 = vmatprep.subr.mxu0 0.0
        %6257 = vmatpush1.msra.mxu0 0.0
        %6258 = vmatprep.subr.mxu0 0.0
        %6259 = vmatpush1.msra.mxu0 0.0
        %6260 = vmatprep.subr.mxu0 0.0
        %6261 = vmatpush1.msra.mxu0 0.0
        %6262 = vmatprep.subr.mxu0 0.0
        %6263 = vmatpush1.msra.mxu0 0.0
        %6264 = vmatprep.subr.mxu0 0.0
        %6265 = vmatpush1.msra.mxu0 0.0
        %6266 = vmatprep.subr.mxu0 0.0
        %6267 = vmatpush1.msra.mxu0 0.0
        %6268 = vmatprep.subr.mxu0 0.0
        %6269 = vmatpush1.msra.mxu0 0.0
        %6270 = vmatprep.subr.mxu0 0.0
        %6271 = vmatpush1.msra.mxu0 0.0
        %6272 = vmatprep.subr.mxu0 0.0
        %6273 = vmatpush1.msra.mxu0 0.0
        %6274 = vmatprep.subr.mxu0 0.0
        %6275 = vmatpush1.msra.mxu0 0.0
        %6276 = vmatprep.subr.mxu0 0.0
        %6277 = vmatpush1.msra.mxu0 0.0
        %6278 = vmatprep.subr.mxu0 0.0
        %6279 = vmatpush1.msra.mxu0 0.0
        %6280 = vmatprep.mubr.f32.mxu0 0.0
        %v6281 = vand.u32 %v5973, 4294901760
        %v6282 = vsub.f32 %v5973, %v6281
        %v6283 = vand.u32 %v6282, 4294901760
        %6284 = vmatmul.mubr.f32.gmra.mrb[0].mxu0 %v6283
        %v6285 = vpop.f32.mrb[0].mxu0
        %v6286 = vadd.f32 %v6210, %v6285
        %v6287 = vpop.f32.mrb[0].mxu0
        %v6288 = vadd.f32 %v6212, %v6287
        %6289 = vdwg.mxu0
        %v6290 = vand.u32 %v5975, 4294901760
        %v6291 = vsub.f32 %v5975, %v6290
        %v6292 = vand.u32 %v6291, 4294901760
        %6293 = vmatprep.subr.mxu0 %v6292
        %v6294 = vand.u32 %v5975, 4294901760
        %v6295 = vsub.f32 %v5975, %v6294
        %v6296 = vand.u32 %v6295, 4294901760
        %6297 = vmatpush1.msra.mxu0 %v6296
        %6298 = vmatprep.subr.mxu0 0.0
        %6299 = vmatpush1.msra.mxu0 0.0
        %6300 = vmatprep.subr.mxu0 0.0
        %6301 = vmatpush1.msra.mxu0 0.0
        %6302 = vmatprep.subr.mxu0 0.0
        %6303 = vmatpush1.msra.mxu0 0.0
        %6304 = vmatprep.subr.mxu0 0.0
        %6305 = vmatpush1.msra.mxu0 0.0
        %6306 = vmatprep.subr.mxu0 0.0
        %6307 = vmatpush1.msra.mxu0 0.0
        %6308 = vmatprep.subr.mxu0 0.0
        %6309 = vmatpush1.msra.mxu0 0.0
        %6310 = vmatprep.subr.mxu0 0.0
        %6311 = vmatpush1.msra.mxu0 0.0
        %6312 = vmatprep.subr.mxu0 0.0
        %6313 = vmatpush1.msra.mxu0 0.0
        %6314 = vmatprep.subr.mxu0 0.0
        %6315 = vmatpush1.msra.mxu0 0.0
        %6316 = vmatprep.subr.mxu0 0.0
        %6317 = vmatpush1.msra.mxu0 0.0
        %6318 = vmatprep.subr.mxu0 0.0
        %6319 = vmatpush1.msra.mxu0 0.0
        %6320 = vmatprep.subr.mxu0 0.0
        %6321 = vmatpush1.msra.mxu0 0.0
        %6322 = vmatprep.subr.mxu0 0.0
        %6323 = vmatpush1.msra.mxu0 0.0
        %6324 = vmatprep.subr.mxu0 0.0
        %6325 = vmatpush1.msra.mxu0 0.0
        %6326 = vmatprep.subr.mxu0 0.0
        %6327 = vmatpush1.msra.mxu0 0.0
        %6328 = vmatprep.subr.mxu0 0.0
        %6329 = vmatpush1.msra.mxu0 0.0
        %6330 = vmatprep.subr.mxu0 0.0
        %6331 = vmatpush1.msra.mxu0 0.0
        %6332 = vmatprep.subr.mxu0 0.0
        %6333 = vmatpush1.msra.mxu0 0.0
        %6334 = vmatprep.subr.mxu0 0.0
        %6335 = vmatpush1.msra.mxu0 0.0
        %6336 = vmatprep.subr.mxu0 0.0
        %6337 = vmatpush1.msra.mxu0 0.0
        %6338 = vmatprep.subr.mxu0 0.0
        %6339 = vmatpush1.msra.mxu0 0.0
        %6340 = vmatprep.subr.mxu0 0.0
        %6341 = vmatpush1.msra.mxu0 0.0
        %6342 = vmatprep.subr.mxu0 0.0
        %6343 = vmatpush1.msra.mxu0 0.0
        %6344 = vmatprep.subr.mxu0 0.0
        %6345 = vmatpush1.msra.mxu0 0.0
        %6346 = vmatprep.subr.mxu0 0.0
        %6347 = vmatpush1.msra.mxu0 0.0
        %6348 = vmatprep.subr.mxu0 0.0
        %6349 = vmatpush1.msra.mxu0 0.0
        %6350 = vmatprep.subr.mxu0 0.0
        %6351 = vmatpush1.msra.mxu0 0.0
        %6352 = vmatprep.subr.mxu0 0.0
        %6353 = vmatpush1.msra.mxu0 0.0
        %6354 = vmatprep.subr.mxu0 0.0
        %6355 = vmatpush1.msra.mxu0 0.0
        %6356 = vmatprep.subr.mxu0 0.0
        %6357 = vmatpush1.msra.mxu0 0.0
        %6358 = vmatprep.subr.mxu0 0.0
        %6359 = vmatpush1.msra.mxu0 0.0
        %6360 = vmatprep.mubr.f32.mxu0 0.0
        %v6361 = vand.u32 %v5973, 4294901760
        %6362 = vmatmul.mubr.f32.gmra.mrb[0].mxu0 %v6361
        %v6363 = vpop.f32.mrb[0].mxu0
        %v6364 = vadd.f32 %v6286, %v6363
        %v6365 = vpop.f32.mrb[0].mxu0
        %v6366 = vadd.f32 %v6288, %v6365
        %6367 = vdwg.mxu0
        %v6368 = vand.u32 %v5975, 4294901760
        %6369 = vmatprep.subr.mxu0 %v6368
        %v6370 = vand.u32 %v5975, 4294901760
        %6371 = vmatpush1.msra.mxu0 %v6370
        %6372 = vmatprep.subr.mxu0 0.0
        %6373 = vmatpush1.msra.mxu0 0.0
        %6374 = vmatprep.subr.mxu0 0.0
        %6375 = vmatpush1.msra.mxu0 0.0
        %6376 = vmatprep.subr.mxu0 0.0
        %6377 = vmatpush1.msra.mxu0 0.0
        %6378 = vmatprep.subr.mxu0 0.0
        %6379 = vmatpush1.msra.mxu0 0.0
        %6380 = vmatprep.subr.mxu0 0.0
        %6381 = vmatpush1.msra.mxu0 0.0
        %6382 = vmatprep.subr.mxu0 0.0
        %6383 = vmatpush1.msra.mxu0 0.0
        %6384 = vmatprep.subr.mxu0 0.0
        %6385 = vmatpush1.msra.mxu0 0.0
        %6386 = vmatprep.subr.mxu0 0.0
        %6387 = vmatpush1.msra.mxu0 0.0
        %6388 = vmatprep.subr.mxu0 0.0
        %6389 = vmatpush1.msra.mxu0 0.0
        %6390 = vmatprep.subr.mxu0 0.0
        %6391 = vmatpush1.msra.mxu0 0.0
        %6392 = vmatprep.subr.mxu0 0.0
        %6393 = vmatpush1.msra.mxu0 0.0
        %6394 = vmatprep.subr.mxu0 0.0
        %6395 = vmatpush1.msra.mxu0 0.0
        %6396 = vmatprep.subr.mxu0 0.0
        %6397 = vmatpush1.msra.mxu0 0.0
        %6398 = vmatprep.subr.mxu0 0.0
        %6399 = vmatpush1.msra.mxu0 0.0
        %6400 = vmatprep.subr.mxu0 0.0
        %6401 = vmatpush1.msra.mxu0 0.0
        %6402 = vmatprep.subr.mxu0 0.0
        %6403 = vmatpush1.msra.mxu0 0.0
        %6404 = vmatprep.subr.mxu0 0.0
        %6405 = vmatpush1.msra.mxu0 0.0
        %6406 = vmatprep.subr.mxu0 0.0
        %6407 = vmatpush1.msra.mxu0 0.0
        %6408 = vmatprep.subr.mxu0 0.0
        %6409 = vmatpush1.msra.mxu0 0.0
        %6410 = vmatprep.subr.mxu0 0.0
        %6411 = vmatpush1.msra.mxu0 0.0
        %6412 = vmatprep.subr.mxu0 0.0
        %6413 = vmatpush1.msra.mxu0 0.0
        %6414 = vmatprep.subr.mxu0 0.0
        %6415 = vmatpush1.msra.mxu0 0.0
        %6416 = vmatprep.subr.mxu0 0.0
        %6417 = vmatpush1.msra.mxu0 0.0
        %6418 = vmatprep.subr.mxu0 0.0
        %6419 = vmatpush1.msra.mxu0 0.0
        %6420 = vmatprep.subr.mxu0 0.0
        %6421 = vmatpush1.msra.mxu0 0.0
        %6422 = vmatprep.subr.mxu0 0.0
        %6423 = vmatpush1.msra.mxu0 0.0
        %6424 = vmatprep.subr.mxu0 0.0
        %6425 = vmatpush1.msra.mxu0 0.0
        %6426 = vmatprep.subr.mxu0 0.0
        %6427 = vmatpush1.msra.mxu0 0.0
        %6428 = vmatprep.subr.mxu0 0.0
        %6429 = vmatpush1.msra.mxu0 0.0
        %6430 = vmatprep.subr.mxu0 0.0
        %6431 = vmatpush1.msra.mxu0 0.0
        %6432 = vmatprep.subr.mxu0 0.0
        %6433 = vmatpush1.msra.mxu0 0.0
        %6434 = vmatprep.mubr.f32.mxu0 0.0
        %v6435 = vand.u32 %v5973, 4294901760
        %6436 = vmatmul.mubr.f32.gmra.mrb[0].mxu0 %v6435
        %v6437 = vpop.f32.mrb[0].mxu0
        %v6438 = vadd.f32 %v6364, %v6437
        %v6439 = vpop.f32.mrb[0].mxu0
        %v6440 = vadd.f32 %v6366, %v6439
        %6441 = vdwg.mxu0
        %v6442 = vmax.f32 %v6438, 0.0
        %v6443 = vmax.f32 %v6440, 0.0
        %v6444 = vld [vmem:[%s6] sm:$0xff]
        %v6445 = vld [vmem:[%s6 + $0x8] sm:$0xff]
        %v6446 = vld [vmem:[%s6 + $0x10] sm:$0xff]
        %v6447 = vld [vmem:[%s6 + $0x18] sm:$0xff]
        %v6449 = vsel %vm5971, %v6444, 0
        %v6452 = vsel %vm5971, %v6445, 0
        %v6455 = vsel %vm5971, %v6446, 0
        %v6458 = vsel %vm5971, %v6447, 0
        %v6461 = vsel %vm5961, %v6442, 0
        %v6464 = vsel %vm5961, %v6443, 0
        %v6466 = vand.u32 %v6464, 4294901760
        %6467 = vmatprep.subr.mxu0 %v6466
        %v6468 = vand.u32 %v6461, 4294901760
        %6469 = vmatpush1.msra.mxu0 %v6468
        %6470 = vmatprep.subr.mxu0 0.0
        %6471 = vmatpush1.msra.mxu0 0.0
        %6472 = vmatprep.subr.mxu0 0.0
        %6473 = vmatpush1.msra.mxu0 0.0
        %6474 = vmatprep.subr.mxu0 0.0
        %6475 = vmatpush1.msra.mxu0 0.0
        %6476 = vmatprep.subr.mxu0 0.0
        %6477 = vmatpush1.msra.mxu0 0.0
        %6478 = vmatprep.subr.mxu0 0.0
        %6479 = vmatpush1.msra.mxu0 0.0
        %6480 = vmatprep.subr.mxu0 0.0
        %6481 = vmatpush1.msra.mxu0 0.0
        %6482 = vmatprep.subr.mxu0 0.0
        %6483 = vmatpush1.msra.mxu0 0.0
        %6484 = vmatprep.subr.mxu0 0.0
        %6485 = vmatpush1.msra.mxu0 0.0
        %6486 = vmatprep.subr.mxu0 0.0
        %6487 = vmatpush1.msra.mxu0 0.0
        %6488 = vmatprep.subr.mxu0 0.0
        %6489 = vmatpush1.msra.mxu0 0.0
        %6490 = vmatprep.subr.mxu0 0.0
        %6491 = vmatpush1.msra.mxu0 0.0
        %6492 = vmatprep.subr.mxu0 0.0
        %6493 = vmatpush1.msra.mxu0 0.0
        %6494 = vmatprep.subr.mxu0 0.0
        %6495 = vmatpush1.msra.mxu0 0.0
        %6496 = vmatprep.subr.mxu0 0.0
        %6497 = vmatpush1.msra.mxu0 0.0
        %6498 = vmatprep.subr.mxu0 0.0
        %6499 = vmatpush1.msra.mxu0 0.0
        %6500 = vmatprep.subr.mxu0 0.0
        %6501 = vmatpush1.msra.mxu0 0.0
        %6502 = vmatprep.subr.mxu0 0.0
        %6503 = vmatpush1.msra.mxu0 0.0
        %6504 = vmatprep.subr.mxu0 0.0
        %6505 = vmatpush1.msra.mxu0 0.0
        %6506 = vmatprep.subr.mxu0 0.0
        %6507 = vmatpush1.msra.mxu0 0.0
        %6508 = vmatprep.subr.mxu0 0.0
        %6509 = vmatpush1.msra.mxu0 0.0
        %6510 = vmatprep.subr.mxu0 0.0
        %6511 = vmatpush1.msra.mxu0 0.0
        %6512 = vmatprep.subr.mxu0 0.0
        %6513 = vmatpush1.msra.mxu0 0.0
        %6514 = vmatprep.subr.mxu0 0.0
        %6515 = vmatpush1.msra.mxu0 0.0
        %6516 = vmatprep.subr.mxu0 0.0
        %6517 = vmatpush1.msra.mxu0 0.0
        %6518 = vmatprep.subr.mxu0 0.0
        %6519 = vmatpush1.msra.mxu0 0.0
        %6520 = vmatprep.subr.mxu0 0.0
        %6521 = vmatpush1.msra.mxu0 0.0
        %6522 = vmatprep.subr.mxu0 0.0
        %6523 = vmatpush1.msra.mxu0 0.0
        %6524 = vmatprep.subr.mxu0 0.0
        %6525 = vmatpush1.msra.mxu0 0.0
        %6526 = vmatprep.subr.mxu0 0.0
        %6527 = vmatpush1.msra.mxu0 0.0
        %6528 = vmatprep.subr.mxu0 0.0
        %6529 = vmatpush1.msra.mxu0 0.0
        %6530 = vmatprep.subr.mxu0 0.0
        %6531 = vmatpush1.msra.mxu0 0.0
        %6532 = vmatprep.mubr.f32.mxu0 0.0
        %v6533 = vand.u32 %v6449, 4294901760
        %v6534 = vsub.f32 %v6449, %v6533
        %v6535 = vand.u32 %v6534, 4294901760
        %v6536 = vsub.f32 %v6534, %v6535
        %v6537 = vand.u32 %v6536, 4294901760
        %6538 = vmatmul.mubr.f32.gmra.mrb[0].mxu0 %v6537
        %v6539 = vpop.f32.mrb[0].mxu0
        %v6540 = vadd.f32 0.0, %v6539
        %v6541 = vpop.f32.mrb[0].mxu0
        %v6542 = vadd.f32 0.0, %v6541
        %6543 = vmatprep.mubr.f32.mxu0 0.0
        %v6544 = vand.u32 %v6452, 4294901760
        %v6545 = vsub.f32 %v6452, %v6544
        %v6546 = vand.u32 %v6545, 4294901760
        %v6547 = vsub.f32 %v6545, %v6546
        %v6548 = vand.u32 %v6547, 4294901760
        %6549 = vmatmul.mubr.f32.gmra.mrb[0].mxu0 %v6548
        %v6550 = vpop.f32.mrb[0].mxu0
        %v6551 = vadd.f32 0.0, %v6550
        %v6552 = vpop.f32.mrb[0].mxu0
        %v6553 = vadd.f32 0.0, %v6552
        %6554 = vmatprep.mubr.f32.mxu0 0.0
        %v6555 = vand.u32 %v6455, 4294901760
        %v6556 = vsub.f32 %v6455, %v6555
        %v6557 = vand.u32 %v6556, 4294901760
        %v6558 = vsub.f32 %v6556, %v6557
        %v6559 = vand.u32 %v6558, 4294901760
        %6560 = vmatmul.mubr.f32.gmra.mrb[0].mxu0 %v6559
        %v6561 = vpop.f32.mrb[0].mxu0
        %v6562 = vadd.f32 0.0, %v6561
        %v6563 = vpop.f32.mrb[0].mxu0
        %v6564 = vadd.f32 0.0, %v6563
        %6565 = vmatprep.mubr.f32.mxu0 0.0
        %v6566 = vand.u32 %v6458, 4294901760
        %v6567 = vsub.f32 %v6458, %v6566
        %v6568 = vand.u32 %v6567, 4294901760
        %v6569 = vsub.f32 %v6567, %v6568
        %v6570 = vand.u32 %v6569, 4294901760
        %6571 = vmatmul.mubr.f32.gmra.mrb[0].mxu0 %v6570
        %v6572 = vpop.f32.mrb[0].mxu0
        %v6573 = vadd.f32 0.0, %v6572
        %v6574 = vpop.f32.mrb[0].mxu0
        %v6575 = vadd.f32 0.0, %v6574
        %6576 = vdwg.mxu0
        %v6577 = vand.u32 %v6464, 4294901760
        %v6578 = vsub.f32 %v6464, %v6577
        %v6579 = vand.u32 %v6578, 4294901760
        %v6580 = vsub.f32 %v6578, %v6579
        %v6581 = vand.u32 %v6580, 4294901760
        %6582 = vmatprep.subr.mxu0 %v6581
        %v6583 = vand.u32 %v6461, 4294901760
        %v6584 = vsub.f32 %v6461, %v6583
        %v6585 = vand.u32 %v6584, 4294901760
        %v6586 = vsub.f32 %v6584, %v6585
        %v6587 = vand.u32 %v6586, 4294901760
        %6588 = vmatpush1.msra.mxu0 %v6587
        %6589 = vmatprep.subr.mxu0 0.0
        %6590 = vmatpush1.msra.mxu0 0.0
        %6591 = vmatprep.subr.mxu0 0.0
        %6592 = vmatpush1.msra.mxu0 0.0
        %6593 = vmatprep.subr.mxu0 0.0
        %6594 = vmatpush1.msra.mxu0 0.0
        %6595 = vmatprep.subr.mxu0 0.0
        %6596 = vmatpush1.msra.mxu0 0.0
        %6597 = vmatprep.subr.mxu0 0.0
        %6598 = vmatpush1.msra.mxu0 0.0
        %6599 = vmatprep.subr.mxu0 0.0
        %6600 = vmatpush1.msra.mxu0 0.0
        %6601 = vmatprep.subr.mxu0 0.0
        %6602 = vmatpush1.msra.mxu0 0.0
        %6603 = vmatprep.subr.mxu0 0.0
        %6604 = vmatpush1.msra.mxu0 0.0
        %6605 = vmatprep.subr.mxu0 0.0
        %6606 = vmatpush1.msra.mxu0 0.0
        %6607 = vmatprep.subr.mxu0 0.0
        %6608 = vmatpush1.msra.mxu0 0.0
        %6609 = vmatprep.subr.mxu0 0.0
        %6610 = vmatpush1.msra.mxu0 0.0
        %6611 = vmatprep.subr.mxu0 0.0
        %6612 = vmatpush1.msra.mxu0 0.0
        %6613 = vmatprep.subr.mxu0 0.0
        %6614 = vmatpush1.msra.mxu0 0.0
        %6615 = vmatprep.subr.mxu0 0.0
        %6616 = vmatpush1.msra.mxu0 0.0
        %6617 = vmatprep.subr.mxu0 0.0
        %6618 = vmatpush1.msra.mxu0 0.0
        %6619 = vmatprep.subr.mxu0 0.0
        %6620 = vmatpush1.msra.mxu0 0.0
        %6621 = vmatprep.subr.mxu0 0.0
        %6622 = vmatpush1.msra.mxu0 0.0
        %6623 = vmatprep.subr.mxu0 0.0
        %6624 = vmatpush1.msra.mxu0 0.0
        %6625 = vmatprep.subr.mxu0 0.0
        %6626 = vmatpush1.msra.mxu0 0.0
        %6627 = vmatprep.subr.mxu0 0.0
        %6628 = vmatpush1.msra.mxu0 0.0
        %6629 = vmatprep.subr.mxu0 0.0
        %6630 = vmatpush1.msra.mxu0 0.0
        %6631 = vmatprep.subr.mxu0 0.0
        %6632 = vmatpush1.msra.mxu0 0.0
        %6633 = vmatprep.subr.mxu0 0.0
        %6634 = vmatpush1.msra.mxu0 0.0
        %6635 = vmatprep.subr.mxu0 0.0
        %6636 = vmatpush1.msra.mxu0 0.0
        %6637 = vmatprep.subr.mxu0 0.0
        %6638 = vmatpush1.msra.mxu0 0.0
        %6639 = vmatprep.subr.mxu0 0.0
        %6640 = vmatpush1.msra.mxu0 0.0
        %6641 = vmatprep.subr.mxu0 0.0
        %6642 = vmatpush1.msra.mxu0 0.0
        %6643 = vmatprep.subr.mxu0 0.0
        %6644 = vmatpush1.msra.mxu0 0.0
        %6645 = vmatprep.subr.mxu0 0.0
        %6646 = vmatpush1.msra.mxu0 0.0
        %6647 = vmatprep.subr.mxu0 0.0
        %6648 = vmatpush1.msra.mxu0 0.0
        %6649 = vmatprep.subr.mxu0 0.0
        %6650 = vmatpush1.msra.mxu0 0.0
        %6651 = vmatprep.mubr.f32.mxu0 0.0
        %v6652 = vand.u32 %v6449, 4294901760
        %6653 = vmatmul.mubr.f32.gmra.mrb[0].mxu0 %v6652
        %v6654 = vpop.f32.mrb[0].mxu0
        %v6655 = vadd.f32 %v6540, %v6654
        %v6656 = vpop.f32.mrb[0].mxu0
        %v6657 = vadd.f32 %v6542, %v6656
        %6658 = vmatprep.mubr.f32.mxu0 0.0
        %v6659 = vand.u32 %v6452, 4294901760
        %6660 = vmatmul.mubr.f32.gmra.mrb[0].mxu0 %v6659
        %v6661 = vpop.f32.mrb[0].mxu0
        %v6662 = vadd.f32 %v6551, %v6661
        %v6663 = vpop.f32.mrb[0].mxu0
        %v6664 = vadd.f32 %v6553, %v6663
        %6665 = vmatprep.mubr.f32.mxu0 0.0
        %v6666 = vand.u32 %v6455, 4294901760
        %6667 = vmatmul.mubr.f32.gmra.mrb[0].mxu0 %v6666
        %v6668 = vpop.f32.mrb[0].mxu0
        %v6669 = vadd.f32 %v6562, %v6668
        %v6670 = vpop.f32.mrb[0].mxu0
        %v6671 = vadd.f32 %v6564, %v6670
        %6672 = vmatprep.mubr.f32.mxu0 0.0
        %v6673 = vand.u32 %v6458, 4294901760
        %6674 = vmatmul.mubr.f32.gmra.mrb[0].mxu0 %v6673
        %v6675 = vpop.f32.mrb[0].mxu0
        %v6676 = vadd.f32 %v6573, %v6675
        %v6677 = vpop.f32.mrb[0].mxu0
        %v6678 = vadd.f32 %v6575, %v6677
        %6679 = vdwg.mxu0
        %v6680 = vand.u32 %v6464, 4294901760
        %v6681 = vsub.f32 %v6464, %v6680
        %6682 = vmatprep.subr.mxu0 %v6681
        %v6683 = vand.u32 %v6461, 4294901760
        %v6684 = vsub.f32 %v6461, %v6683
        %6685 = vmatpush1.msra.mxu0 %v6684
        %6686 = vmatprep.subr.mxu0 0.0
        %6687 = vmatpush1.msra.mxu0 0.0
        %6688 = vmatprep.subr.mxu0 0.0
        %6689 = vmatpush1.msra.mxu0 0.0
        %6690 = vmatprep.subr.mxu0 0.0
        %6691 = vmatpush1.msra.mxu0 0.0
        %6692 = vmatprep.subr.mxu0 0.0
        %6693 = vmatpush1.msra.mxu0 0.0
        %6694 = vmatprep.subr.mxu0 0.0
        %6695 = vmatpush1.msra.mxu0 0.0
        %6696 = vmatprep.subr.mxu0 0.0
        %6697 = vmatpush1.msra.mxu0 0.0
        %6698 = vmatprep.subr.mxu0 0.0
        %6699 = vmatpush1.msra.mxu0 0.0
        %6700 = vmatprep.subr.mxu0 0.0
        %6701 = vmatpush1.msra.mxu0 0.0
        %6702 = vmatprep.subr.mxu0 0.0
        %6703 = vmatpush1.msra.mxu0 0.0
        %6704 = vmatprep.subr.mxu0 0.0
        %6705 = vmatpush1.msra.mxu0 0.0
        %6706 = vmatprep.subr.mxu0 0.0
        %6707 = vmatpush1.msra.mxu0 0.0
        %6708 = vmatprep.subr.mxu0 0.0
        %6709 = vmatpush1.msra.mxu0 0.0
        %6710 = vmatprep.subr.mxu0 0.0
        %6711 = vmatpush1.msra.mxu0 0.0
        %6712 = vmatprep.subr.mxu0 0.0
        %6713 = vmatpush1.msra.mxu0 0.0
        %6714 = vmatprep.subr.mxu0 0.0
        %6715 = vmatpush1.msra.mxu0 0.0
        %6716 = vmatprep.subr.mxu0 0.0
        %6717 = vmatpush1.msra.mxu0 0.0
        %6718 = vmatprep.subr.mxu0 0.0
        %6719 = vmatpush1.msra.mxu0 0.0
        %6720 = vmatprep.subr.mxu0 0.0
        %6721 = vmatpush1.msra.mxu0 0.0
        %6722 = vmatprep.subr.mxu0 0.0
        %6723 = vmatpush1.msra.mxu0 0.0
        %6724 = vmatprep.subr.mxu0 0.0
        %6725 = vmatpush1.msra.mxu0 0.0
        %6726 = vmatprep.subr.mxu0 0.0
        %6727 = vmatpush1.msra.mxu0 0.0
        %6728 = vmatprep.subr.mxu0 0.0
        %6729 = vmatpush1.msra.mxu0 0.0
        %6730 = vmatprep.subr.mxu0 0.0
        %6731 = vmatpush1.msra.mxu0 0.0
        %6732 = vmatprep.subr.mxu0 0.0
        %6733 = vmatpush1.msra.mxu0 0.0
        %6734 = vmatprep.subr.mxu0 0.0
        %6735 = vmatpush1.msra.mxu0 0.0
        %6736 = vmatprep.subr.mxu0 0.0
        %6737 = vmatpush1.msra.mxu0 0.0
        %6738 = vmatprep.subr.mxu0 0.0
        %6739 = vmatpush1.msra.mxu0 0.0
        %6740 = vmatprep.subr.mxu0 0.0
        %6741 = vmatpush1.msra.mxu0 0.0
        %6742 = vmatprep.subr.mxu0 0.0
        %6743 = vmatpush1.msra.mxu0 0.0
        %6744 = vmatprep.subr.mxu0 0.0
        %6745 = vmatpush1.msra.mxu0 0.0
        %6746 = vmatprep.subr.mxu0 0.0
        %6747 = vmatpush1.msra.mxu0 0.0
        %6748 = vmatprep.mubr.f32.mxu0 0.0
        %v6749 = vand.u32 %v6449, 4294901760
        %v6750 = vsub.f32 %v6449, %v6749
        %6751 = vmatmul.mubr.f32.gmra.mrb[0].mxu0 %v6750
        %v6752 = vpop.f32.mrb[0].mxu0
        %v6753 = vadd.f32 %v6655, %v6752
        %v6754 = vpop.f32.mrb[0].mxu0
        %v6755 = vadd.f32 %v6657, %v6754
        %6756 = vmatprep.mubr.f32.mxu0 0.0
        %v6757 = vand.u32 %v6452, 4294901760
        %v6758 = vsub.f32 %v6452, %v6757
        %6759 = vmatmul.mubr.f32.gmra.mrb[0].mxu0 %v6758
        %v6760 = vpop.f32.mrb[0].mxu0
        %v6761 = vadd.f32 %v6662, %v6760
        %v6762 = vpop.f32.mrb[0].mxu0
        %v6763 = vadd.f32 %v6664, %v6762
        %6764 = vmatprep.mubr.f32.mxu0 0.0
        %v6765 = vand.u32 %v6455, 4294901760
        %v6766 = vsub.f32 %v6455, %v6765
        %6767 = vmatmul.mubr.f32.gmra.mrb[0].mxu0 %v6766
        %v6768 = vpop.f32.mrb[0].mxu0
        %v6769 = vadd.f32 %v6669, %v6768
        %v6770 = vpop.f32.mrb[0].mxu0
        %v6771 = vadd.f32 %v6671, %v6770
        %6772 = vmatprep.mubr.f32.mxu0 0.0
        %v6773 = vand.u32 %v6458, 4294901760
        %v6774 = vsub.f32 %v6458, %v6773
        %6775 = vmatmul.mubr.f32.gmra.mrb[0].mxu0 %v6774
        %v6776 = vpop.f32.mrb[0].mxu0
        %v6777 = vadd.f32 %v6676, %v6776
        %v6778 = vpop.f32.mrb[0].mxu0
        %v6779 = vadd.f32 %v6678, %v6778
        %6780 = vdwg.mxu0
        %v6781 = vand.u32 %v6464, 4294901760
        %6782 = vmatprep.subr.mxu0 %v6781
        %v6783 = vand.u32 %v6461, 4294901760
        %6784 = vmatpush1.msra.mxu0 %v6783
        %6785 = vmatprep.subr.mxu0 0.0
        %6786 = vmatpush1.msra.mxu0 0.0
        %6787 = vmatprep.subr.mxu0 0.0
        %6788 = vmatpush1.msra.mxu0 0.0
        %6789 = vmatprep.subr.mxu0 0.0
        %6790 = vmatpush1.msra.mxu0 0.0
        %6791 = vmatprep.subr.mxu0 0.0
        %6792 = vmatpush1.msra.mxu0 0.0
        %6793 = vmatprep.subr.mxu0 0.0
        %6794 = vmatpush1.msra.mxu0 0.0
        %6795 = vmatprep.subr.mxu0 0.0
        %6796 = vmatpush1.msra.mxu0 0.0
        %6797 = vmatprep.subr.mxu0 0.0
        %6798 = vmatpush1.msra.mxu0 0.0
        %6799 = vmatprep.subr.mxu0 0.0
        %6800 = vmatpush1.msra.mxu0 0.0
        %6801 = vmatprep.subr.mxu0 0.0
        %6802 = vmatpush1.msra.mxu0 0.0
        %6803 = vmatprep.subr.mxu0 0.0
        %6804 = vmatpush1.msra.mxu0 0.0
        %6805 = vmatprep.subr.mxu0 0.0
        %6806 = vmatpush1.msra.mxu0 0.0
        %6807 = vmatprep.subr.mxu0 0.0
        %6808 = vmatpush1.msra.mxu0 0.0
        %6809 = vmatprep.subr.mxu0 0.0
        %6810 = vmatpush1.msra.mxu0 0.0
        %6811 = vmatprep.subr.mxu0 0.0
        %6812 = vmatpush1.msra.mxu0 0.0
        %6813 = vmatprep.subr.mxu0 0.0
        %6814 = vmatpush1.msra.mxu0 0.0
        %6815 = vmatprep.subr.mxu0 0.0
        %6816 = vmatpush1.msra.mxu0 0.0
        %6817 = vmatprep.subr.mxu0 0.0
        %6818 = vmatpush1.msra.mxu0 0.0
        %6819 = vmatprep.subr.mxu0 0.0
        %6820 = vmatpush1.msra.mxu0 0.0
        %6821 = vmatprep.subr.mxu0 0.0
        %6822 = vmatpush1.msra.mxu0 0.0
        %6823 = vmatprep.subr.mxu0 0.0
        %6824 = vmatpush1.msra.mxu0 0.0
        %6825 = vmatprep.subr.mxu0 0.0
        %6826 = vmatpush1.msra.mxu0 0.0
        %6827 = vmatprep.subr.mxu0 0.0
        %6828 = vmatpush1.msra.mxu0 0.0
        %6829 = vmatprep.subr.mxu0 0.0
        %6830 = vmatpush1.msra.mxu0 0.0
        %6831 = vmatprep.subr.mxu0 0.0
        %6832 = vmatpush1.msra.mxu0 0.0
        %6833 = vmatprep.subr.mxu0 0.0
        %6834 = vmatpush1.msra.mxu0 0.0
        %6835 = vmatprep.subr.mxu0 0.0
        %6836 = vmatpush1.msra.mxu0 0.0
        %6837 = vmatprep.subr.mxu0 0.0
        %6838 = vmatpush1.msra.mxu0 0.0
        %6839 = vmatprep.subr.mxu0 0.0
        %6840 = vmatpush1.msra.mxu0 0.0
        %6841 = vmatprep.subr.mxu0 0.0
        %6842 = vmatpush1.msra.mxu0 0.0
        %6843 = vmatprep.subr.mxu0 0.0
        %6844 = vmatpush1.msra.mxu0 0.0
        %6845 = vmatprep.subr.mxu0 0.0
        %6846 = vmatpush1.msra.mxu0 0.0
        %6847 = vmatprep.mubr.f32.mxu0 0.0
        %v6848 = vand.u32 %v6449, 4294901760
        %v6849 = vsub.f32 %v6449, %v6848
        %v6850 = vand.u32 %v6849, 4294901760
        %6851 = vmatmul.mubr.f32.gmra.mrb[0].mxu0 %v6850
        %v6852 = vpop.f32.mrb[0].mxu0
        %v6853 = vadd.f32 %v6753, %v6852
        %v6854 = vpop.f32.mrb[0].mxu0
        %v6855 = vadd.f32 %v6755, %v6854
        %6856 = vmatprep.mubr.f32.mxu0 0.0
        %v6857 = vand.u32 %v6452, 4294901760
        %v6858 = vsub.f32 %v6452, %v6857
        %v6859 = vand.u32 %v6858, 4294901760
        %6860 = vmatmul.mubr.f32.gmra.mrb[0].mxu0 %v6859
        %v6861 = vpop.f32.mrb[0].mxu0
        %v6862 = vadd.f32 %v6761, %v6861
        %v6863 = vpop.f32.mrb[0].mxu0
        %v6864 = vadd.f32 %v6763, %v6863
        %6865 = vmatprep.mubr.f32.mxu0 0.0
        %v6866 = vand.u32 %v6455, 4294901760
        %v6867 = vsub.f32 %v6455, %v6866
        %v6868 = vand.u32 %v6867, 4294901760
        %6869 = vmatmul.mubr.f32.gmra.mrb[0].mxu0 %v6868
        %v6870 = vpop.f32.mrb[0].mxu0
        %v6871 = vadd.f32 %v6769, %v6870
        %v6872 = vpop.f32.mrb[0].mxu0
        %v6873 = vadd.f32 %v6771, %v6872
        %6874 = vmatprep.mubr.f32.mxu0 0.0
        %v6875 = vand.u32 %v6458, 4294901760
        %v6876 = vsub.f32 %v6458, %v6875
        %v6877 = vand.u32 %v6876, 4294901760
        %6878 = vmatmul.mubr.f32.gmra.mrb[0].mxu0 %v6877
        %v6879 = vpop.f32.mrb[0].mxu0
        %v6880 = vadd.f32 %v6777, %v6879
        %v6881 = vpop.f32.mrb[0].mxu0
        %v6882 = vadd.f32 %v6779, %v6881
        %6883 = vdwg.mxu0
        %v6884 = vand.u32 %v6464, 4294901760
        %v6885 = vsub.f32 %v6464, %v6884
        %v6886 = vand.u32 %v6885, 4294901760
        %6887 = vmatprep.subr.mxu0 %v6886
        %v6888 = vand.u32 %v6461, 4294901760
        %v6889 = vsub.f32 %v6461, %v6888
        %v6890 = vand.u32 %v6889, 4294901760
        %6891 = vmatpush1.msra.mxu0 %v6890
        %6892 = vmatprep.subr.mxu0 0.0
        %6893 = vmatpush1.msra.mxu0 0.0
        %6894 = vmatprep.subr.mxu0 0.0
        %6895 = vmatpush1.msra.mxu0 0.0
        %6896 = vmatprep.subr.mxu0 0.0
        %6897 = vmatpush1.msra.mxu0 0.0
        %6898 = vmatprep.subr.mxu0 0.0
        %6899 = vmatpush1.msra.mxu0 0.0
        %6900 = vmatprep.subr.mxu0 0.0
        %6901 = vmatpush1.msra.mxu0 0.0
        %6902 = vmatprep.subr.mxu0 0.0
        %6903 = vmatpush1.msra.mxu0 0.0
        %6904 = vmatprep.subr.mxu0 0.0
        %6905 = vmatpush1.msra.mxu0 0.0
        %6906 = vmatprep.subr.mxu0 0.0
        %6907 = vmatpush1.msra.mxu0 0.0
        %6908 = vmatprep.subr.mxu0 0.0
        %6909 = vmatpush1.msra.mxu0 0.0
        %6910 = vmatprep.subr.mxu0 0.0
        %6911 = vmatpush1.msra.mxu0 0.0
        %6912 = vmatprep.subr.mxu0 0.0
        %6913 = vmatpush1.msra.mxu0 0.0
        %6914 = vmatprep.subr.mxu0 0.0
        %6915 = vmatpush1.msra.mxu0 0.0
        %6916 = vmatprep.subr.mxu0 0.0
        %6917 = vmatpush1.msra.mxu0 0.0
        %6918 = vmatprep.subr.mxu0 0.0
        %6919 = vmatpush1.msra.mxu0 0.0
        %6920 = vmatprep.subr.mxu0 0.0
        %6921 = vmatpush1.msra.mxu0 0.0
        %6922 = vmatprep.subr.mxu0 0.0
        %6923 = vmatpush1.msra.mxu0 0.0
        %6924 = vmatprep.subr.mxu0 0.0
        %6925 = vmatpush1.msra.mxu0 0.0
        %6926 = vmatprep.subr.mxu0 0.0
        %6927 = vmatpush1.msra.mxu0 0.0
        %6928 = vmatprep.subr.mxu0 0.0
        %6929 = vmatpush1.msra.mxu0 0.0
        %6930 = vmatprep.subr.mxu0 0.0
        %6931 = vmatpush1.msra.mxu0 0.0
        %6932 = vmatprep.subr.mxu0 0.0
        %6933 = vmatpush1.msra.mxu0 0.0
        %6934 = vmatprep.subr.mxu0 0.0
        %6935 = vmatpush1.msra.mxu0 0.0
        %6936 = vmatprep.subr.mxu0 0.0
        %6937 = vmatpush1.msra.mxu0 0.0
        %6938 = vmatprep.subr.mxu0 0.0
        %6939 = vmatpush1.msra.mxu0 0.0
        %6940 = vmatprep.subr.mxu0 0.0
        %6941 = vmatpush1.msra.mxu0 0.0
        %6942 = vmatprep.subr.mxu0 0.0
        %6943 = vmatpush1.msra.mxu0 0.0
        %6944 = vmatprep.subr.mxu0 0.0
        %6945 = vmatpush1.msra.mxu0 0.0
        %6946 = vmatprep.subr.mxu0 0.0
        %6947 = vmatpush1.msra.mxu0 0.0
        %6948 = vmatprep.subr.mxu0 0.0
        %6949 = vmatpush1.msra.mxu0 0.0
        %6950 = vmatprep.subr.mxu0 0.0
        %6951 = vmatpush1.msra.mxu0 0.0
        %6952 = vmatprep.subr.mxu0 0.0
        %6953 = vmatpush1.msra.mxu0 0.0
        %6954 = vmatprep.mubr.f32.mxu0 0.0
        %v6955 = vand.u32 %v6449, 4294901760
        %6956 = vmatmul.mubr.f32.gmra.mrb[0].mxu0 %v6955
        %v6957 = vpop.f32.mrb[0].mxu0
        %v6958 = vadd.f32 %v6853, %v6957
        %v6959 = vpop.f32.mrb[0].mxu0
        %v6960 = vadd.f32 %v6855, %v6959
        %6961 = vmatprep.mubr.f32.mxu0 0.0
        %v6962 = vand.u32 %v6452, 4294901760
        %6963 = vmatmul.mubr.f32.gmra.mrb[0].mxu0 %v6962
        %v6964 = vpop.f32.mrb[0].mxu0
        %v6965 = vadd.f32 %v6862, %v6964
        %v6966 = vpop.f32.mrb[0].mxu0
        %v6967 = vadd.f32 %v6864, %v6966
        %6968 = vmatprep.mubr.f32.mxu0 0.0
        %v6969 = vand.u32 %v6455, 4294901760
        %6970 = vmatmul.mubr.f32.gmra.mrb[0].mxu0 %v6969
        %v6971 = vpop.f32.mrb[0].mxu0
        %v6972 = vadd.f32 %v6871, %v6971
        %v6973 = vpop.f32.mrb[0].mxu0
        %v6974 = vadd.f32 %v6873, %v6973
        %6975 = vmatprep.mubr.f32.mxu0 0.0
        %v6976 = vand.u32 %v6458, 4294901760
        %6977 = vmatmul.mubr.f32.gmra.mrb[0].mxu0 %v6976
        %v6978 = vpop.f32.mrb[0].mxu0
        %v6979 = vadd.f32 %v6880, %v6978
        %v6980 = vpop.f32.mrb[0].mxu0
        %v6981 = vadd.f32 %v6882, %v6980
        %6982 = vdwg.mxu0
        %v6983 = vand.u32 %v6464, 4294901760
        %6984 = vmatprep.subr.mxu0 %v6983
        %v6985 = vand.u32 %v6461, 4294901760
        %6986 = vmatpush1.msra.mxu0 %v6985
        %6987 = vmatprep.subr.mxu0 0.0
        %6988 = vmatpush1.msra.mxu0 0.0
        %6989 = vmatprep.subr.mxu0 0.0
        %6990 = vmatpush1.msra.mxu0 0.0
        %6991 = vmatprep.subr.mxu0 0.0
        %6992 = vmatpush1.msra.mxu0 0.0
        %6993 = vmatprep.subr.mxu0 0.0
        %6994 = vmatpush1.msra.mxu0 0.0
        %6995 = vmatprep.subr.mxu0 0.0
        %6996 = vmatpush1.msra.mxu0 0.0
        %6997 = vmatprep.subr.mxu0 0.0
        %6998 = vmatpush1.msra.mxu0 0.0
        %6999 = vmatprep.subr.mxu0 0.0
        %7000 = vmatpush1.msra.mxu0 0.0
        %7001 = vmatprep.subr.mxu0 0.0
        %7002 = vmatpush1.msra.mxu0 0.0
        %7003 = vmatprep.subr.mxu0 0.0
        %7004 = vmatpush1.msra.mxu0 0.0
        %7005 = vmatprep.subr.mxu0 0.0
        %7006 = vmatpush1.msra.mxu0 0.0
        %7007 = vmatprep.subr.mxu0 0.0
        %7008 = vmatpush1.msra.mxu0 0.0
        %7009 = vmatprep.subr.mxu0 0.0
        %7010 = vmatpush1.msra.mxu0 0.0
        %7011 = vmatprep.subr.mxu0 0.0
        %7012 = vmatpush1.msra.mxu0 0.0
        %7013 = vmatprep.subr.mxu0 0.0
        %7014 = vmatpush1.msra.mxu0 0.0
        %7015 = vmatprep.subr.mxu0 0.0
        %7016 = vmatpush1.msra.mxu0 0.0
        %7017 = vmatprep.subr.mxu0 0.0
        %7018 = vmatpush1.msra.mxu0 0.0
        %7019 = vmatprep.subr.mxu0 0.0
        %7020 = vmatpush1.msra.mxu0 0.0
        %7021 = vmatprep.subr.mxu0 0.0
        %7022 = vmatpush1.msra.mxu0 0.0
        %7023 = vmatprep.subr.mxu0 0.0
        %7024 = vmatpush1.msra.mxu0 0.0
        %7025 = vmatprep.subr.mxu0 0.0
        %7026 = vmatpush1.msra.mxu0 0.0
        %7027 = vmatprep.subr.mxu0 0.0
        %7028 = vmatpush1.msra.mxu0 0.0
        %7029 = vmatprep.subr.mxu0 0.0
        %7030 = vmatpush1.msra.mxu0 0.0
        %7031 = vmatprep.subr.mxu0 0.0
        %7032 = vmatpush1.msra.mxu0 0.0
        %7033 = vmatprep.subr.mxu0 0.0
        %7034 = vmatpush1.msra.mxu0 0.0
        %7035 = vmatprep.subr.mxu0 0.0
        %7036 = vmatpush1.msra.mxu0 0.0
        %7037 = vmatprep.subr.mxu0 0.0
        %7038 = vmatpush1.msra.mxu0 0.0
        %7039 = vmatprep.subr.mxu0 0.0
        %7040 = vmatpush1.msra.mxu0 0.0
        %7041 = vmatprep.subr.mxu0 0.0
        %7042 = vmatpush1.msra.mxu0 0.0
        %7043 = vmatprep.subr.mxu0 0.0
        %7044 = vmatpush1.msra.mxu0 0.0
        %7045 = vmatprep.subr.mxu0 0.0
        %7046 = vmatpush1.msra.mxu0 0.0
        %7047 = vmatprep.subr.mxu0 0.0
        %7048 = vmatpush1.msra.mxu0 0.0
        %7049 = vmatprep.mubr.f32.mxu0 0.0
        %v7050 = vand.u32 %v6449, 4294901760
        %7051 = vmatmul.mubr.f32.gmra.mrb[0].mxu0 %v7050
        %v7052 = vpop.f32.mrb[0].mxu0
        %v7053 = vadd.f32 %v6958, %v7052
        %v7054 = vpop.f32.mrb[0].mxu0
        %v7055 = vadd.f32 %v6960, %v7054
        %7056 = vmatprep.mubr.f32.mxu0 0.0
        %v7057 = vand.u32 %v6452, 4294901760
        %7058 = vmatmul.mubr.f32.gmra.mrb[0].mxu0 %v7057
        %v7059 = vpop.f32.mrb[0].mxu0
        %v7060 = vadd.f32 %v6965, %v7059
        %v7061 = vpop.f32.mrb[0].mxu0
        %v7062 = vadd.f32 %v6967, %v7061
        %7063 = vmatprep.mubr.f32.mxu0 0.0
        %v7064 = vand.u32 %v6455, 4294901760
        %7065 = vmatmul.mubr.f32.gmra.mrb[0].mxu0 %v7064
        %v7066 = vpop.f32.mrb[0].mxu0
        %v7067 = vadd.f32 %v6972, %v7066
        %v7068 = vpop.f32.mrb[0].mxu0
        %v7069 = vadd.f32 %v6974, %v7068
        %7070 = vmatprep.mubr.f32.mxu0 0.0
        %v7071 = vand.u32 %v6458, 4294901760
        %7072 = vmatmul.mubr.f32.gmra.mrb[0].mxu0 %v7071
        %v7073 = vpop.f32.mrb[0].mxu0
        %v7074 = vadd.f32 %v6979, %v7073
        %v7075 = vpop.f32.mrb[0].mxu0
        %v7076 = vadd.f32 %v6981, %v7075
        %7077 = vdwg.mxu0
        %v7078 = vxor.u32 %v7053, 2147483648
        %v7079 = vxor.u32 %v7055, 2147483648
        %v7080 = vxor.u32 %v7060, 2147483648
        %v7081 = vxor.u32 %v7062, 2147483648
        %v7082 = vxor.u32 %v7067, 2147483648
        %v7083 = vxor.u32 %v7069, 2147483648
        %v7084 = vxor.u32 %v7074, 2147483648
        %v7085 = vxor.u32 %v7076, 2147483648
        %v7086 = vmul.f32 %v7078, 1.442695
        %v7087 = vpow.pop %v7086
        %v7088 = vmul.f32 %v7079, 1.442695
        %v7089 = vpow.pop %v7088
        %v7090 = vmul.f32 %v7080, 1.442695
        %v7091 = vpow.pop %v7090
        %v7092 = vmul.f32 %v7081, 1.442695
        %v7093 = vpow.pop %v7092
        %v7094 = vmul.f32 %v7082, 1.442695
        %v7095 = vpow.pop %v7094
        %v7096 = vmul.f32 %v7083, 1.442695
        %v7097 = vpow.pop %v7096
        %v7098 = vmul.f32 %v7084, 1.442695
        %v7099 = vpow.pop %v7098
        %v7100 = vmul.f32 %v7085, 1.442695
        %v7101 = vpow.pop %v7100
        %v7102 = vadd.f32 %v7087, 1.0
        %v7103 = vadd.f32 %v7089, 1.0
        %v7104 = vadd.f32 %v7091, 1.0
        %v7105 = vadd.f32 %v7093, 1.0
        %v7106 = vadd.f32 %v7095, 1.0
        %v7107 = vadd.f32 %v7097, 1.0
        %v7108 = vadd.f32 %v7099, 1.0
        %v7109 = vadd.f32 %v7101, 1.0
        %v7110 = vrcp.pop %v7102
        %v7111 = vmul.f32 1.0, %v7110
        %v7112 = vrcp.pop %v7103
        %v7113 = vmul.f32 1.0, %v7112
        %v7114 = vrcp.pop %v7104
        %v7115 = vmul.f32 1.0, %v7114
        %v7116 = vrcp.pop %v7105
        %v7117 = vmul.f32 1.0, %v7116
        %v7118 = vrcp.pop %v7106
        %v7119 = vmul.f32 1.0, %v7118
        %v7120 = vrcp.pop %v7107
        %v7121 = vmul.f32 1.0, %v7120
        %v7122 = vrcp.pop %v7108
        %v7123 = vmul.f32 1.0, %v7122
        %v7124 = vrcp.pop %v7109
        %v7125 = vmul.f32 1.0, %v7124
        %v7126 = vmul.f32 %v7111, %v468
        %v7127 = vmul.f32 %v7113, %v469
        %v7128 = vmul.f32 %v7115, %v470
        %v7129 = vmul.f32 %v7117, %v471
        %v7130 = vmul.f32 %v7119, %v472
        %v7131 = vmul.f32 %v7121, %v473
        %v7132 = vmul.f32 %v7123, %v474
        %v7133 = vmul.f32 %v7125, %v475
        %7134 = vst [vmem:[#allocation3] sm:$0xff] 0.0
        %v7135 = vadd.f32 %v7126, %v7128
        %v7136 = vadd.f32 %v7135, %v7130
        %v7137 = vadd.f32 %v7136, %v7132
        %v7138 = vrot.slane %v7137, 4
        %v7139 = vadd.f32 %v7137, %v7138
        %v7140 = vrot.slane %v7139, 2
        %v7141 = vadd.f32 %v7139, %v7140
        %v7142 = vrot.slane %v7141, 1
        %v7143 = vadd.f32 %v7141, %v7142
        %v7144 = vadd.f32 %v7127, %v7129
        %v7145 = vadd.f32 %v7144, %v7131
        %v7146 = vadd.f32 %v7145, %v7133
        %v7147 = vrot.slane %v7146, 4
        %v7148 = vadd.f32 %v7146, %v7147
        %v7149 = vrot.slane %v7148, 2
        %v7150 = vadd.f32 %v7148, %v7149
        %v7151 = vrot.slane %v7150, 1
        %v7152 = vadd.f32 %v7150, %v7151
        %v7153 = vrcp.pop 32.0
        %v7154 = vmul.f32 %v7143, %v7153
        %v7155 = vmul.f32 %v7152, %v7153
        %v7158 = vcombine.low %v7154, %v7155
        %v7160 = vunpack.c.l.s4 1966171168
        %v7161 = vunpack.c.0.s8 %v7160
        %v7162 = vlaneseq
        %v7163 = vshrl.u32 %v7162, 7
        %v7164 = vsub.s32 %v7161, %v7163
        %v7165 = vrot.slane %v7158, %v7164
        %v7167 = vunpack.c.l.s4 1966171168
        %v7168 = vunpack.c.0.s8 %v7167
        %v7169 = vlaneseq
        %v7170 = vshrl.u32 %v7169, 7
        %v7171 = vsub.s32 %v7168, %v7170
        %v7172 = vrot.slane %v7165, %v7171
        %v7174 = vlaneseq
        %vm7175 = vcmp.ge.s32.totalorder %v7174, 0
        %vm7176 = vcmp.lt.s32.totalorder %v7174, 256
        %vm7177 = vmand %vm7175, %vm7176
        %s7178 = scalar_lea.vmem [#allocation3], 2
        %7179 = vst.msk [vmem:[%s7178] ss:$2 sm:$0x3] %vm7177, %v7172
        %v7180 = vmax.f32 %v7126, %v7130
        %v7181 = vmax.f32 %v7128, %v7132
        %v7182 = vmax.f32 %v7180, %v7181
        %v7183 = vrot.slane %v7182, 4
        %v7184 = vmax.f32 %v7182, %v7183
        %v7185 = vrot.slane %v7184, 2
        %v7186 = vmax.f32 %v7184, %v7185
        %v7187 = vrot.slane %v7186, 1
        %v7188 = vmax.f32 %v7186, %v7187
        %v7189 = vmax.f32 %v7127, %v7131
        %v7190 = vmax.f32 %v7129, %v7133
        %v7191 = vmax.f32 %v7189, %v7190
        %v7192 = vrot.slane %v7191, 4
        %v7193 = vmax.f32 %v7191, %v7192
        %v7194 = vrot.slane %v7193, 2
        %v7195 = vmax.f32 %v7193, %v7194
        %v7196 = vrot.slane %v7195, 1
        %v7197 = vmax.f32 %v7195, %v7196
        %v7200 = vcombine.low %v7188, %v7197
        %v7202 = vunpack.c.l.s4 1966171168
        %v7203 = vunpack.c.0.s8 %v7202
        %v7204 = vlaneseq
        %v7205 = vshrl.u32 %v7204, 7
        %v7206 = vsub.s32 %v7203, %v7205
        %v7207 = vrot.slane %v7200, %v7206
        %v7209 = vunpack.c.l.s4 1966171168
        %v7210 = vunpack.c.0.s8 %v7209
        %v7211 = vlaneseq
        %v7212 = vshrl.u32 %v7211, 7
        %v7213 = vsub.s32 %v7210, %v7212
        %v7214 = vrot.slane %v7207, %v7213
        %s7216 = scalar_lea.vmem [#allocation3], 3
        %7217 = vst.msk [vmem:[%s7216] ss:$2 sm:$0x3] %vm7177, %v7214
        %v7218 = vld [vmem:[#allocation3] sm:$0x3f]
        %s7219 = sld [smem:[#allocation4]]
        %v7220 = vstv %s7219
        %v7221 = vmul.f32 %v7220, %v7218
        %s7222 = sld [smem:[#allocation4 + $0x80]]
        %v7223 = vstv %s7222
        %v7224 = vmul.f32 %v7223, %v7218
        %v7226 = vrot.slane %v7224, 7
        %v7227 = vrot.slane %v7226, 2
        %v7229 = vadd.f32 %v7221, %v7227
        %v7232 = vcombine.low %v513, %v514
        %v7234 = vunpack.c.l.s4 1983009808
        %v7235 = vunpack.c.0.s8 %v7234
        %v7236 = vlaneseq
        %v7237 = vshrl.u32 %v7236, 7
        %v7238 = vsub.s32 %v7235, %v7237
        %v7239 = vrot.slane %v7232, %v7238
        %7240 = vrot.lane.b32.xlu0 %v7239, 77
        %v7241 = vpop.permute.xlu0 %7240
        %v7242 = vrot.slane %v7241, 6
        %vm7243 = vcmask 629760
        %v7244 = vsel %vm7243, %v7242, %v7241
        %v7246 = vmul.f32 %v7229, %v7244
        %v7247 = vadd.f32 %v7246, 0.0
        %v7248 = vld [vmem:[#allocation3] sm:$0x3f]
        %s7249 = sld [smem:[#allocation4 + $0x1]]
        %v7250 = vstv %s7249
        %v7251 = vmul.f32 %v7250, %v7248
        %s7252 = sld [smem:[#allocation4 + $0x81]]
        %v7253 = vstv %s7252
        %v7254 = vmul.f32 %v7253, %v7248
        %v7256 = vrot.slane %v7254, 7
        %v7257 = vrot.slane %v7256, 2
        %v7259 = vadd.f32 %v7251, %v7257
        %v7262 = vcombine.low %v525, %v526
        %v7264 = vunpack.c.l.s4 1983009808
        %v7265 = vunpack.c.0.s8 %v7264
        %v7266 = vlaneseq
        %v7267 = vshrl.u32 %v7266, 7
        %v7268 = vsub.s32 %v7265, %v7267
        %v7269 = vrot.slane %v7262, %v7268
        %7270 = vrot.lane.b32.xlu0 %v7269, 78
        %v7271 = vpop.permute.xlu0 %7270
        %v7272 = vrot.slane %v7271, 6
        %vm7273 = vcmask 637952
        %v7274 = vsel %vm7273, %v7272, %v7271
        %v7276 = vmul.f32 %v7259, %v7274
        %7278 = vrot.lane.b32.xlu0 %v7276, 127
        %v7279 = vpop.permute.xlu0 %7278
        %v7280 = vrot.slane %v7279, 2
        %v7281 = vsel %vm3602, %v7279, %v7280
        %v7283 = vadd.f32 %v7247, %v7281
        %v7284 = vld [vmem:[#allocation3] sm:$0x3f]
        %s7285 = sld [smem:[#allocation4 + $0x2]]
        %v7286 = vstv %s7285
        %v7287 = vmul.f32 %v7286, %v7284
        %s7288 = sld [smem:[#allocation4 + $0x82]]
        %v7289 = vstv %s7288
        %v7290 = vmul.f32 %v7289, %v7284
        %v7292 = vrot.slane %v7290, 7
        %v7293 = vrot.slane %v7292, 2
        %v7295 = vadd.f32 %v7287, %v7293
        %v7298 = vcombine.low %v537, %v538
        %v7300 = vunpack.c.l.s4 1983009808
        %v7301 = vunpack.c.0.s8 %v7300
        %v7302 = vlaneseq
        %v7303 = vshrl.u32 %v7302, 7
        %v7304 = vsub.s32 %v7301, %v7303
        %v7305 = vrot.slane %v7298, %v7304
        %7306 = vrot.lane.b32.xlu0 %v7305, 79
        %v7307 = vpop.permute.xlu0 %7306
        %v7308 = vrot.slane %v7307, 6
        %vm7309 = vcmask 646144
        %v7310 = vsel %vm7309, %v7308, %v7307
        %v7312 = vmul.f32 %v7295, %v7310
        %7314 = vrot.lane.b32.xlu0 %v7312, 126
        %v7315 = vpop.permute.xlu0 %7314
        %v7316 = vrot.slane %v7315, 2
        %vm7317 = vcmask 1031168
        %v7318 = vsel %vm7317, %v7315, %v7316
        %v7320 = vadd.f32 %v7283, %v7318
        %v7321 = vld [vmem:[#allocation3] sm:$0x3f]
        %s7322 = sld [smem:[#allocation4 + $0x3]]
        %v7323 = vstv %s7322
        %v7324 = vmul.f32 %v7323, %v7321
        %s7325 = sld [smem:[#allocation4 + $0x83]]
        %v7326 = vstv %s7325
        %v7327 = vmul.f32 %v7326, %v7321
        %v7329 = vrot.slane %v7327, 7
        %v7330 = vrot.slane %v7329, 2
        %v7332 = vadd.f32 %v7324, %v7330
        %v7335 = vcombine.low %v547, %v548
        %v7337 = vunpack.c.l.s4 1983009808
        %v7338 = vunpack.c.0.s8 %v7337
        %v7339 = vlaneseq
        %v7340 = vshrl.u32 %v7339, 7
        %v7341 = vsub.s32 %v7338, %v7340
        %v7342 = vrot.slane %v7335, %v7341
        %7343 = vrot.lane.b32.xlu0 %v7342, 80
        %v7344 = vpop.permute.xlu0 %7343
        %v7345 = vrot.slane %v7344, 6
        %vm7346 = vcmask 654336
        %v7347 = vsel %vm7346, %v7345, %v7344
        %v7349 = vmul.f32 %v7332, %v7347
        %7351 = vrot.lane.b32.xlu0 %v7349, 125
        %v7352 = vpop.permute.xlu0 %7351
        %v7353 = vrot.slane %v7352, 2
        %vm7354 = vcmask 1022976
        %v7355 = vsel %vm7354, %v7352, %v7353
        %v7357 = vadd.f32 %v7320, %v7355
        %v7358 = vld [vmem:[#allocation3] sm:$0x3f]
        %s7359 = sld [smem:[#allocation4 + $0x4]]
        %v7360 = vstv %s7359
        %v7361 = vmul.f32 %v7360, %v7358
        %s7362 = sld [smem:[#allocation4 + $0x84]]
        %v7363 = vstv %s7362
        %v7364 = vmul.f32 %v7363, %v7358
        %v7366 = vrot.slane %v7364, 7
        %v7367 = vrot.slane %v7366, 2
        %v7369 = vadd.f32 %v7361, %v7367
        %v7372 = vcombine.low %v559, %v560
        %v7374 = vunpack.c.l.s4 1983009808
        %v7375 = vunpack.c.0.s8 %v7374
        %v7376 = vlaneseq
        %v7377 = vshrl.u32 %v7376, 7
        %v7378 = vsub.s32 %v7375, %v7377
        %v7379 = vrot.slane %v7372, %v7378
        %7380 = vrot.lane.b32.xlu0 %v7379, 81
        %v7381 = vpop.permute.xlu0 %7380
        %v7382 = vrot.slane %v7381, 6
        %vm7383 = vcmask 662528
        %v7384 = vsel %vm7383, %v7382, %v7381
        %v7386 = vmul.f32 %v7369, %v7384
        %7388 = vrot.lane.b32.xlu0 %v7386, 124
        %v7389 = vpop.permute.xlu0 %7388
        %v7390 = vrot.slane %v7389, 2
        %vm7391 = vcmask 1014784
        %v7392 = vsel %vm7391, %v7389, %v7390
        %v7394 = vadd.f32 %v7357, %v7392
        %v7395 = vld [vmem:[#allocation3] sm:$0x3f]
        %s7396 = sld [smem:[#allocation4 + $0x5]]
        %v7397 = vstv %s7396
        %v7398 = vmul.f32 %v7397, %v7395
        %s7399 = sld [smem:[#allocation4 + $0x85]]
        %v7400 = vstv %s7399
        %v7401 = vmul.f32 %v7400, %v7395
        %v7403 = vrot.slane %v7401, 7
        %v7404 = vrot.slane %v7403, 2
        %v7406 = vadd.f32 %v7398, %v7404
        %v7409 = vcombine.low %v571, %v572
        %v7411 = vunpack.c.l.s4 1983009808
        %v7412 = vunpack.c.0.s8 %v7411
        %v7413 = vlaneseq
        %v7414 = vshrl.u32 %v7413, 7
        %v7415 = vsub.s32 %v7412, %v7414
        %v7416 = vrot.slane %v7409, %v7415
        %7417 = vrot.lane.b32.xlu0 %v7416, 82
        %v7418 = vpop.permute.xlu0 %7417
        %v7419 = vrot.slane %v7418, 6
        %vm7420 = vcmask 670720
        %v7421 = vsel %vm7420, %v7419, %v7418
        %v7423 = vmul.f32 %v7406, %v7421
        %7425 = vrot.lane.b32.xlu0 %v7423, 123
        %v7426 = vpop.permute.xlu0 %7425
        %v7427 = vrot.slane %v7426, 2
        %vm7428 = vcmask 1006592
        %v7429 = vsel %vm7428, %v7426, %v7427
        %v7431 = vadd.f32 %v7394, %v7429
        %v7432 = vld [vmem:[#allocation3] sm:$0x3f]
        %s7433 = sld [smem:[#allocation4 + $0x6]]
        %v7434 = vstv %s7433
        %v7435 = vmul.f32 %v7434, %v7432
        %s7436 = sld [smem:[#allocation4 + $0x86]]
        %v7437 = vstv %s7436
        %v7438 = vmul.f32 %v7437, %v7432
        %v7440 = vrot.slane %v7438, 7
        %v7441 = vrot.slane %v7440, 2
        %v7443 = vadd.f32 %v7435, %v7441
        %v7446 = vcombine.low %v583, %v584
        %v7448 = vunpack.c.l.s4 1983009808
        %v7449 = vunpack.c.0.s8 %v7448
        %v7450 = vlaneseq
        %v7451 = vshrl.u32 %v7450, 7
        %v7452 = vsub.s32 %v7449, %v7451
        %v7453 = vrot.slane %v7446, %v7452
        %7454 = vrot.lane.b32.xlu0 %v7453, 83
        %v7455 = vpop.permute.xlu0 %7454
        %v7456 = vrot.slane %v7455, 6
        %vm7457 = vcmask 678912
        %v7458 = vsel %vm7457, %v7456, %v7455
        %v7460 = vmul.f32 %v7443, %v7458
        %7462 = vrot.lane.b32.xlu0 %v7460, 122
        %v7463 = vpop.permute.xlu0 %7462
        %v7464 = vrot.slane %v7463, 2
        %vm7465 = vcmask 998400
        %v7466 = vsel %vm7465, %v7463, %v7464
        %v7468 = vadd.f32 %v7431, %v7466
        %v7469 = vld [vmem:[#allocation3] sm:$0x3f]
        %s7470 = sld [smem:[#allocation4 + $0x7]]
        %v7471 = vstv %s7470
        %v7472 = vmul.f32 %v7471, %v7469
        %s7473 = sld [smem:[#allocation4 + $0x87]]
        %v7474 = vstv %s7473
        %v7475 = vmul.f32 %v7474, %v7469
        %v7477 = vrot.slane %v7475, 7
        %v7478 = vrot.slane %v7477, 2
        %v7480 = vadd.f32 %v7472, %v7478
        %7481 = vrot.lane.b32.xlu0 %v7239, 93
        %v7482 = vpop.permute.xlu0 %7481
        %v7483 = vrot.slane %v7482, 6
        %vm7484 = vcmask 760832
        %v7485 = vsel %vm7484, %v7483, %v7482
        %v7487 = vmul.f32 %v7480, %v7485
        %7489 = vrot.lane.b32.xlu0 %v7487, 112
        %v7490 = vpop.permute.xlu0 %7489
        %v7491 = vrot.slane %v7490, 2
        %v7492 = vsel %vm4786, %v7490, %v7491
        %v7494 = vadd.f32 %v7468, %v7492
        %v7495 = vld [vmem:[#allocation3] sm:$0x3f]
        %s7496 = sld [smem:[#allocation4 + $0x8]]
        %v7497 = vstv %s7496
        %v7498 = vmul.f32 %v7497, %v7495
        %s7499 = sld [smem:[#allocation4 + $0x88]]
        %v7500 = vstv %s7499
        %v7501 = vmul.f32 %v7500, %v7495
        %v7503 = vrot.slane %v7501, 7
        %v7504 = vrot.slane %v7503, 2
        %v7506 = vadd.f32 %v7498, %v7504
        %7507 = vrot.lane.b32.xlu0 %v7269, 94
        %v7508 = vpop.permute.xlu0 %7507
        %v7509 = vrot.slane %v7508, 6
        %vm7510 = vcmask 769024
        %v7511 = vsel %vm7510, %v7509, %v7508
        %v7513 = vmul.f32 %v7506, %v7511
        %7515 = vrot.lane.b32.xlu0 %v7513, 111
        %v7516 = vpop.permute.xlu0 %7515
        %v7517 = vrot.slane %v7516, 2
        %v7518 = vsel %vm5378, %v7516, %v7517
        %v7520 = vadd.f32 %v7494, %v7518
        %v7521 = vld [vmem:[#allocation3] sm:$0x3f]
        %s7522 = sld [smem:[#allocation4 + $0x9]]
        %v7523 = vstv %s7522
        %v7524 = vmul.f32 %v7523, %v7521
        %s7525 = sld [smem:[#allocation4 + $0x89]]
        %v7526 = vstv %s7525
        %v7527 = vmul.f32 %v7526, %v7521
        %v7529 = vrot.slane %v7527, 7
        %v7530 = vrot.slane %v7529, 2
        %v7532 = vadd.f32 %v7524, %v7530
        %7533 = vrot.lane.b32.xlu0 %v7305, 95
        %v7534 = vpop.permute.xlu0 %7533
        %v7535 = vrot.slane %v7534, 6
        %vm7536 = vcmask 777216
        %v7537 = vsel %vm7536, %v7535, %v7534
        %v7539 = vmul.f32 %v7532, %v7537
        %7541 = vrot.lane.b32.xlu0 %v7539, 110
        %v7542 = vpop.permute.xlu0 %7541
        %v7543 = vrot.slane %v7542, 2
        %vm7544 = vcmask 900096
        %v7545 = vsel %vm7544, %v7542, %v7543
        %v7547 = vadd.f32 %v7520, %v7545
        %v7548 = vld [vmem:[#allocation3] sm:$0x3f]
        %s7549 = sld [smem:[#allocation4 + $0xa]]
        %v7550 = vstv %s7549
        %v7551 = vmul.f32 %v7550, %v7548
        %s7552 = sld [smem:[#allocation4 + $0x8a]]
        %v7553 = vstv %s7552
        %v7554 = vmul.f32 %v7553, %v7548
        %v7556 = vrot.slane %v7554, 7
        %v7557 = vrot.slane %v7556, 2
        %v7559 = vadd.f32 %v7551, %v7557
        %7560 = vrot.lane.b32.xlu0 %v7342, 96
        %v7561 = vpop.permute.xlu0 %7560
        %v7562 = vrot.slane %v7561, 6
        %vm7563 = vcmask 785408
        %v7564 = vsel %vm7563, %v7562, %v7561
        %v7566 = vmul.f32 %v7559, %v7564
        %7568 = vrot.lane.b32.xlu0 %v7566, 109
        %v7569 = vpop.permute.xlu0 %7568
        %v7570 = vrot.slane %v7569, 2
        %vm7571 = vcmask 891904
        %v7572 = vsel %vm7571, %v7569, %v7570
        %v7574 = vadd.f32 %v7547, %v7572
        %v7575 = vld [vmem:[#allocation3] sm:$0x3f]
        %s7576 = sld [smem:[#allocation4 + $0xb]]
        %v7577 = vstv %s7576
        %v7578 = vmul.f32 %v7577, %v7575
        %s7579 = sld [smem:[#allocation4 + $0x8b]]
        %v7580 = vstv %s7579
        %v7581 = vmul.f32 %v7580, %v7575
        %v7583 = vrot.slane %v7581, 7
        %v7584 = vrot.slane %v7583, 2
        %v7586 = vadd.f32 %v7578, %v7584
        %7587 = vrot.lane.b32.xlu0 %v7379, 97
        %v7588 = vpop.permute.xlu0 %7587
        %v7589 = vrot.slane %v7588, 6
        %vm7590 = vcmask 793600
        %v7591 = vsel %vm7590, %v7589, %v7588
        %v7593 = vmul.f32 %v7586, %v7591
        %7595 = vrot.lane.b32.xlu0 %v7593, 108
        %v7596 = vpop.permute.xlu0 %7595
        %v7597 = vrot.slane %v7596, 2
        %vm7598 = vcmask 883712
        %v7599 = vsel %vm7598, %v7596, %v7597
        %v7601 = vadd.f32 %v7574, %v7599
        %v7602 = vld [vmem:[#allocation3] sm:$0x3f]
        %s7603 = sld [smem:[#allocation4 + $0xc]]
        %v7604 = vstv %s7603
        %v7605 = vmul.f32 %v7604, %v7602
        %s7606 = sld [smem:[#allocation4 + $0x8c]]
        %v7607 = vstv %s7606
        %v7608 = vmul.f32 %v7607, %v7602
        %v7610 = vrot.slane %v7608, 7
        %v7611 = vrot.slane %v7610, 2
        %v7613 = vadd.f32 %v7605, %v7611
        %7614 = vrot.lane.b32.xlu0 %v7416, 98
        %v7615 = vpop.permute.xlu0 %7614
        %v7616 = vrot.slane %v7615, 6
        %vm7617 = vcmask 801792
        %v7618 = vsel %vm7617, %v7616, %v7615
        %v7620 = vmul.f32 %v7613, %v7618
        %7622 = vrot.lane.b32.xlu0 %v7620, 107
        %v7623 = vpop.permute.xlu0 %7622
        %v7624 = vrot.slane %v7623, 2
        %vm7625 = vcmask 875520
        %v7626 = vsel %vm7625, %v7623, %v7624
        %v7628 = vadd.f32 %v7601, %v7626
        %v7629 = vld [vmem:[#allocation3] sm:$0x3f]
        %s7630 = sld [smem:[#allocation4 + $0xd]]
        %v7631 = vstv %s7630
        %v7632 = vmul.f32 %v7631, %v7629
        %s7633 = sld [smem:[#allocation4 + $0x8d]]
        %v7634 = vstv %s7633
        %v7635 = vmul.f32 %v7634, %v7629
        %v7637 = vrot.slane %v7635, 7
        %v7638 = vrot.slane %v7637, 2
        %v7640 = vadd.f32 %v7632, %v7638
        %7641 = vrot.lane.b32.xlu0 %v7453, 99
        %v7642 = vpop.permute.xlu0 %7641
        %v7643 = vrot.slane %v7642, 6
        %vm7644 = vcmask 809984
        %v7645 = vsel %vm7644, %v7643, %v7642
        %v7647 = vmul.f32 %v7640, %v7645
        %7649 = vrot.lane.b32.xlu0 %v7647, 106
        %v7650 = vpop.permute.xlu0 %7649
        %v7651 = vrot.slane %v7650, 2
        %vm7652 = vcmask 867328
        %v7653 = vsel %vm7652, %v7650, %v7651
        %v7655 = vadd.f32 %v7628, %v7653
        %v7656 = vld [vmem:[#allocation3] sm:$0x3f]
        %s7657 = sld [smem:[#allocation4 + $0xe]]
        %v7658 = vstv %s7657
        %v7659 = vmul.f32 %v7658, %v7656
        %s7660 = sld [smem:[#allocation4 + $0x8e]]
        %v7661 = vstv %s7660
        %v7662 = vmul.f32 %v7661, %v7656
        %v7664 = vrot.slane %v7662, 7
        %v7665 = vrot.slane %v7664, 2
        %v7667 = vadd.f32 %v7659, %v7665
        %7668 = vrot.lane.b32.xlu0 %v7239, 109
        %v7669 = vpop.permute.xlu0 %7668
        %v7670 = vrot.slane %v7669, 6
        %v7671 = vsel %vm7571, %v7670, %v7669
        %v7673 = vmul.f32 %v7667, %v7671
        %7675 = vrot.lane.b32.xlu0 %v7673, 96
        %v7676 = vpop.permute.xlu0 %7675
        %v7677 = vrot.slane %v7676, 2
        %v7678 = vsel %vm7563, %v7676, %v7677
        %v7680 = vadd.f32 %v7655, %v7678
        %v7681 = vld [vmem:[#allocation3] sm:$0x3f]
        %s7682 = sld [smem:[#allocation4 + $0xf]]
        %v7683 = vstv %s7682
        %v7684 = vmul.f32 %v7683, %v7681
        %s7685 = sld [smem:[#allocation4 + $0x8f]]
        %v7686 = vstv %s7685
        %v7687 = vmul.f32 %v7686, %v7681
        %v7689 = vrot.slane %v7687, 7
        %v7690 = vrot.slane %v7689, 2
        %v7692 = vadd.f32 %v7684, %v7690
        %7693 = vrot.lane.b32.xlu0 %v7269, 110
        %v7694 = vpop.permute.xlu0 %7693
        %v7695 = vrot.slane %v7694, 6
        %v7696 = vsel %vm7544, %v7695, %v7694
        %v7698 = vmul.f32 %v7692, %v7696
        %7700 = vrot.lane.b32.xlu0 %v7698, 95
        %v7701 = vpop.permute.xlu0 %7700
        %v7702 = vrot.slane %v7701, 2
        %v7703 = vsel %vm7536, %v7701, %v7702
        %v7705 = vadd.f32 %v7680, %v7703
        %v7706 = vld [vmem:[#allocation3] sm:$0x3f]
        %s7707 = sld [smem:[#allocation4 + $0x10]]
        %v7708 = vstv %s7707
        %v7709 = vmul.f32 %v7708, %v7706
        %s7710 = sld [smem:[#allocation4 + $0x90]]
        %v7711 = vstv %s7710
        %v7712 = vmul.f32 %v7711, %v7706
        %v7714 = vrot.slane %v7712, 7
        %v7715 = vrot.slane %v7714, 2
        %v7717 = vadd.f32 %v7709, %v7715
        %7718 = vrot.lane.b32.xlu0 %v7305, 111
        %v7719 = vpop.permute.xlu0 %7718
        %v7720 = vrot.slane %v7719, 6
        %v7721 = vsel %vm5378, %v7720, %v7719
        %v7723 = vmul.f32 %v7717, %v7721
        %7725 = vrot.lane.b32.xlu0 %v7723, 94
        %v7726 = vpop.permute.xlu0 %7725
        %v7727 = vrot.slane %v7726, 2
        %v7728 = vsel %vm7510, %v7726, %v7727
        %v7730 = vadd.f32 %v7705, %v7728
        %v7731 = vld [vmem:[#allocation3] sm:$0x3f]
        %s7732 = sld [smem:[#allocation4 + $0x11]]
        %v7733 = vstv %s7732
        %v7734 = vmul.f32 %v7733, %v7731
        %s7735 = sld [smem:[#allocation4 + $0x91]]
        %v7736 = vstv %s7735
        %v7737 = vmul.f32 %v7736, %v7731
        %v7739 = vrot.slane %v7737, 7
        %v7740 = vrot.slane %v7739, 2
        %v7742 = vadd.f32 %v7734, %v7740
        %7743 = vrot.lane.b32.xlu0 %v7342, 112
        %v7744 = vpop.permute.xlu0 %7743
        %v7745 = vrot.slane %v7744, 6
        %v7746 = vsel %vm4786, %v7745, %v7744
        %v7748 = vmul.f32 %v7742, %v7746
        %7750 = vrot.lane.b32.xlu0 %v7748, 93
        %v7751 = vpop.permute.xlu0 %7750
        %v7752 = vrot.slane %v7751, 2
        %v7753 = vsel %vm7484, %v7751, %v7752
        %v7755 = vadd.f32 %v7730, %v7753
        %v7756 = vld [vmem:[#allocation3] sm:$0x3f]
        %s7757 = sld [smem:[#allocation4 + $0x12]]
        %v7758 = vstv %s7757
        %v7759 = vmul.f32 %v7758, %v7756
        %s7760 = sld [smem:[#allocation4 + $0x92]]
        %v7761 = vstv %s7760
        %v7762 = vmul.f32 %v7761, %v7756
        %v7764 = vrot.slane %v7762, 7
        %v7765 = vrot.slane %v7764, 2
        %v7767 = vadd.f32 %v7759, %v7765
        %7768 = vrot.lane.b32.xlu0 %v7379, 113
        %v7769 = vpop.permute.xlu0 %7768
        %v7770 = vrot.slane %v7769, 6
        %v7771 = vsel %vm4194, %v7770, %v7769
        %v7773 = vmul.f32 %v7767, %v7771
        %7775 = vrot.lane.b32.xlu0 %v7773, 92
        %v7776 = vpop.permute.xlu0 %7775
        %v7777 = vrot.slane %v7776, 2
        %vm7778 = vcmask 752640
        %v7779 = vsel %vm7778, %v7776, %v7777
        %v7781 = vadd.f32 %v7755, %v7779
        %v7782 = vld [vmem:[#allocation3] sm:$0x3f]
        %s7783 = sld [smem:[#allocation4 + $0x13]]
        %v7784 = vstv %s7783
        %v7785 = vmul.f32 %v7784, %v7782
        %s7786 = sld [smem:[#allocation4 + $0x93]]
        %v7787 = vstv %s7786
        %v7788 = vmul.f32 %v7787, %v7782
        %v7790 = vrot.slane %v7788, 7
        %v7791 = vrot.slane %v7790, 2
        %v7793 = vadd.f32 %v7785, %v7791
        %7794 = vrot.lane.b32.xlu0 %v7416, 114
        %v7795 = vpop.permute.xlu0 %7794
        %v7796 = vrot.slane %v7795, 6
        %vm7797 = vcmask 932864
        %v7798 = vsel %vm7797, %v7796, %v7795
        %v7800 = vmul.f32 %v7793, %v7798
        %7802 = vrot.lane.b32.xlu0 %v7800, 91
        %v7803 = vpop.permute.xlu0 %7802
        %v7804 = vrot.slane %v7803, 2
        %vm7805 = vcmask 744448
        %v7806 = vsel %vm7805, %v7803, %v7804
        %v7808 = vadd.f32 %v7781, %v7806
        %v7809 = vld [vmem:[#allocation3] sm:$0x3f]
        %s7810 = sld [smem:[#allocation4 + $0x14]]
        %v7811 = vstv %s7810
        %v7812 = vmul.f32 %v7811, %v7809
        %s7813 = sld [smem:[#allocation4 + $0x94]]
        %v7814 = vstv %s7813
        %v7815 = vmul.f32 %v7814, %v7809
        %v7817 = vrot.slane %v7815, 7
        %v7818 = vrot.slane %v7817, 2
        %v7820 = vadd.f32 %v7812, %v7818
        %7821 = vrot.lane.b32.xlu0 %v7453, 115
        %v7822 = vpop.permute.xlu0 %7821
        %v7823 = vrot.slane %v7822, 6
        %vm7824 = vcmask 941056
        %v7825 = vsel %vm7824, %v7823, %v7822
        %v7827 = vmul.f32 %v7820, %v7825
        %7829 = vrot.lane.b32.xlu0 %v7827, 90
        %v7830 = vpop.permute.xlu0 %7829
        %v7831 = vrot.slane %v7830, 2
        %vm7832 = vcmask 736256
        %v7833 = vsel %vm7832, %v7830, %v7831
        %v7835 = vadd.f32 %v7808, %v7833
        %v7836 = vld [vmem:[#allocation3] sm:$0x3f]
        %s7837 = sld [smem:[#allocation4 + $0x15]]
        %v7838 = vstv %s7837
        %v7839 = vmul.f32 %v7838, %v7836
        %s7840 = sld [smem:[#allocation4 + $0x95]]
        %v7841 = vstv %s7840
        %v7842 = vmul.f32 %v7841, %v7836
        %v7844 = vrot.slane %v7842, 7
        %v7845 = vrot.slane %v7844, 2
        %v7847 = vadd.f32 %v7839, %v7845
        %7848 = vrot.lane.b32.xlu0 %v7239, 125
        %v7849 = vpop.permute.xlu0 %7848
        %v7850 = vrot.slane %v7849, 6
        %v7851 = vsel %vm7354, %v7850, %v7849
        %v7853 = vmul.f32 %v7847, %v7851
        %7855 = vrot.lane.b32.xlu0 %v7853, 80
        %v7856 = vpop.permute.xlu0 %7855
        %v7857 = vrot.slane %v7856, 2
        %v7858 = vsel %vm7346, %v7856, %v7857
        %v7860 = vadd.f32 %v7835, %v7858
        %v7861 = vld [vmem:[#allocation3] sm:$0x3f]
        %s7862 = sld [smem:[#allocation4 + $0x16]]
        %v7863 = vstv %s7862
        %v7864 = vmul.f32 %v7863, %v7861
        %s7865 = sld [smem:[#allocation4 + $0x96]]
        %v7866 = vstv %s7865
        %v7867 = vmul.f32 %v7866, %v7861
        %v7869 = vrot.slane %v7867, 7
        %v7870 = vrot.slane %v7869, 2
        %v7872 = vadd.f32 %v7864, %v7870
        %7873 = vrot.lane.b32.xlu0 %v7269, 126
        %v7874 = vpop.permute.xlu0 %7873
        %v7875 = vrot.slane %v7874, 6
        %v7876 = vsel %vm7317, %v7875, %v7874
        %v7878 = vmul.f32 %v7872, %v7876
        %7880 = vrot.lane.b32.xlu0 %v7878, 79
        %v7881 = vpop.permute.xlu0 %7880
        %v7882 = vrot.slane %v7881, 2
        %v7883 = vsel %vm7309, %v7881, %v7882
        %v7885 = vadd.f32 %v7860, %v7883
        %v7886 = vld [vmem:[#allocation3] sm:$0x3f]
        %s7887 = sld [smem:[#allocation4 + $0x17]]
        %v7888 = vstv %s7887
        %v7889 = vmul.f32 %v7888, %v7886
        %s7890 = sld [smem:[#allocation4 + $0x97]]
        %v7891 = vstv %s7890
        %v7892 = vmul.f32 %v7891, %v7886
        %v7894 = vrot.slane %v7892, 7
        %v7895 = vrot.slane %v7894, 2
        %v7897 = vadd.f32 %v7889, %v7895
        %7898 = vrot.lane.b32.xlu0 %v7305, 127
        %v7899 = vpop.permute.xlu0 %7898
        %v7900 = vrot.slane %v7899, 6
        %v7901 = vsel %vm3602, %v7900, %v7899
        %v7903 = vmul.f32 %v7897, %v7901
        %7905 = vrot.lane.b32.xlu0 %v7903, 78
        %v7906 = vpop.permute.xlu0 %7905
        %v7907 = vrot.slane %v7906, 2
        %v7908 = vsel %vm7273, %v7906, %v7907
        %v7910 = vadd.f32 %v7885, %v7908
        %v7911 = vld [vmem:[#allocation3 + $0x2] sm:$0xf]
        %s7912 = sld [smem:[#allocation4 + $0x18]]
        %v7913 = vstv %s7912
        %v7914 = vmul.f32 %v7913, %v7911
        %s7915 = sld [smem:[#allocation4 + $0x98]]
        %v7916 = vstv %s7915
        %v7917 = vmul.f32 %v7916, %v7911
        %v7919 = vrot.slane %v7917, 7
        %v7920 = vrot.slane %v7919, 2
        %v7922 = vadd.f32 %v7914, %v7920
        %v7924 = vmul.f32 %v7922, %v7342
        %7926 = vrot.lane.b32.xlu0 %v7924, 77
        %v7927 = vpop.permute.xlu0 %7926
        %v7928 = vrot.slane %v7927, 6
        %v7929 = vsel %vm7243, %v7928, %v7927
        %v7931 = vadd.f32 %v7910, %v7929
        %v7932 = vld [vmem:[#allocation3 + $0x2] sm:$0x3f]
        %s7933 = sld [smem:[#allocation4 + $0x19]]
        %v7934 = vstv %s7933
        %v7935 = vmul.f32 %v7934, %v7932
        %s7936 = sld [smem:[#allocation4 + $0x99]]
        %v7937 = vstv %s7936
        %v7938 = vmul.f32 %v7937, %v7932
        %v7940 = vrot.slane %v7938, 7
        %v7941 = vrot.slane %v7940, 2
        %v7943 = vadd.f32 %v7935, %v7941
        %7944 = vrot.lane.b32.xlu0 %v7379, 1
        %v7945 = vpop.permute.xlu0 %7944
        %v7946 = vrot.slane %v7945, 6
        %v7947 = vsel %vm2435, %v7946, %v7945
        %v7949 = vmul.f32 %v7943, %v7947
        %7951 = vrot.lane.b32.xlu0 %v7949, 76
        %v7952 = vpop.permute.xlu0 %7951
        %v7953 = vrot.slane %v7952, 6
        %vm7954 = vcmask 621568
        %v7955 = vsel %vm7954, %v7953, %v7952
        %v7957 = vadd.f32 %v7931, %v7955
        %v7958 = vld [vmem:[#allocation3 + $0x2] sm:$0x3f]
        %s7959 = sld [smem:[#allocation4 + $0x1a]]
        %v7960 = vstv %s7959
        %v7961 = vmul.f32 %v7960, %v7958
        %s7962 = sld [smem:[#allocation4 + $0x9a]]
        %v7963 = vstv %s7962
        %v7964 = vmul.f32 %v7963, %v7958
        %v7966 = vrot.slane %v7964, 7
        %v7967 = vrot.slane %v7966, 2
        %v7969 = vadd.f32 %v7961, %v7967
        %7970 = vrot.lane.b32.xlu0 %v7416, 2
        %v7971 = vpop.permute.xlu0 %7970
        %v7972 = vrot.slane %v7971, 6
        %v7973 = vsel %vm5971, %v7972, %v7971
        %v7975 = vmul.f32 %v7969, %v7973
        %7977 = vrot.lane.b32.xlu0 %v7975, 75
        %v7978 = vpop.permute.xlu0 %7977
        %v7979 = vrot.slane %v7978, 6
        %vm7980 = vcmask 613376
        %v7981 = vsel %vm7980, %v7979, %v7978
        %v7983 = vadd.f32 %v7957, %v7981
        %v7984 = vld [vmem:[#allocation3 + $0x2] sm:$0x3f]
        %s7985 = sld [smem:[#allocation4 + $0x1b]]
        %v7986 = vstv %s7985
        %v7987 = vmul.f32 %v7986, %v7984
        %s7988 = sld [smem:[#allocation4 + $0x9b]]
        %v7989 = vstv %s7988
        %v7990 = vmul.f32 %v7989, %v7984
        %v7992 = vrot.slane %v7990, 7
        %v7993 = vrot.slane %v7992, 2
        %v7995 = vadd.f32 %v7987, %v7993
        %7996 = vrot.lane.b32.xlu0 %v7453, 3
        %v7997 = vpop.permute.xlu0 %7996
        %v7998 = vrot.slane %v7997, 6
        %vm7999 = vcmask 23552
        %v8000 = vsel %vm7999, %v7998, %v7997
        %v8002 = vmul.f32 %v7995, %v8000
        %8004 = vrot.lane.b32.xlu0 %v8002, 74
        %v8005 = vpop.permute.xlu0 %8004
        %v8006 = vrot.slane %v8005, 6
        %vm8007 = vcmask 605184
        %v8008 = vsel %vm8007, %v8006, %v8005
        %v8010 = vadd.f32 %v7983, %v8008
        %v8011 = vld [vmem:[#allocation3 + $0x2] sm:$0x3f]
        %s8012 = sld [smem:[#allocation4 + $0x1c]]
        %v8013 = vstv %s8012
        %v8014 = vmul.f32 %v8013, %v8011
        %s8015 = sld [smem:[#allocation4 + $0x9c]]
        %v8016 = vstv %s8015
        %v8017 = vmul.f32 %v8016, %v8011
        %v8019 = vrot.slane %v8017, 7
        %v8020 = vrot.slane %v8019, 2
        %v8022 = vadd.f32 %v8014, %v8020
        %8023 = vrot.lane.b32.xlu0 %v7239, 13
        %v8024 = vpop.permute.xlu0 %8023
        %v8025 = vrot.slane %v8024, 6
        %vm8026 = vcmask 105472
        %v8027 = vsel %vm8026, %v8025, %v8024
        %v8029 = vmul.f32 %v8022, %v8027
        %8031 = vrot.lane.b32.xlu0 %v8029, 64
        %v8032 = vpop.permute.xlu0 %8031
        %v8033 = vrot.slane %v8032, 6
        %vm8034 = vcmask 523264
        %v8035 = vsel %vm8034, %v8033, %v8032
        %v8037 = vadd.f32 %v8010, %v8035
        %v8038 = vld [vmem:[#allocation3 + $0x2] sm:$0x3f]
        %s8039 = sld [smem:[#allocation4 + $0x1d]]
        %v8040 = vstv %s8039
        %v8041 = vmul.f32 %v8040, %v8038
        %s8042 = sld [smem:[#allocation4 + $0x9d]]
        %v8043 = vstv %s8042
        %v8044 = vmul.f32 %v8043, %v8038
        %v8046 = vrot.slane %v8044, 7
        %v8047 = vrot.slane %v8046, 2
        %v8049 = vadd.f32 %v8041, %v8047
        %8050 = vrot.lane.b32.xlu0 %v7269, 14
        %v8051 = vpop.permute.xlu0 %8050
        %v8052 = vrot.slane %v8051, 6
        %vm8053 = vcmask 113664
        %v8054 = vsel %vm8053, %v8052, %v8051
        %v8056 = vmul.f32 %v8049, %v8054
        %8058 = vrot.lane.b32.xlu0 %v8056, 63
        %v8059 = vpop.permute.xlu0 %8058
        %v8060 = vrot.slane %v8059, 6
        %vm8061 = vcmask 515072
        %v8062 = vsel %vm8061, %v8060, %v8059
        %v8064 = vadd.f32 %v8037, %v8062
        %v8065 = vld [vmem:[#allocation3 + $0x2] sm:$0x3f]
        %s8066 = sld [smem:[#allocation4 + $0x1e]]
        %v8067 = vstv %s8066
        %v8068 = vmul.f32 %v8067, %v8065
        %s8069 = sld [smem:[#allocation4 + $0x9e]]
        %v8070 = vstv %s8069
        %v8071 = vmul.f32 %v8070, %v8065
        %v8073 = vrot.slane %v8071, 7
        %v8074 = vrot.slane %v8073, 2
        %v8076 = vadd.f32 %v8068, %v8074
        %8077 = vrot.lane.b32.xlu0 %v7305, 15
        %v8078 = vpop.permute.xlu0 %8077
        %v8079 = vrot.slane %v8078, 6
        %v8080 = vsel %vm1843, %v8079, %v8078
        %v8082 = vmul.f32 %v8076, %v8080
        %8084 = vrot.lane.b32.xlu0 %v8082, 62
        %v8085 = vpop.permute.xlu0 %8084
        %v8086 = vrot.slane %v8085, 6
        %vm8087 = vcmask 506880
        %v8088 = vsel %vm8087, %v8086, %v8085
        %v8090 = vadd.f32 %v8064, %v8088
        %v8091 = vld [vmem:[#allocation3 + $0x2] sm:$0x3f]
        %s8092 = sld [smem:[#allocation4 + $0x1f]]
        %v8093 = vstv %s8092
        %v8094 = vmul.f32 %v8093, %v8091
        %s8095 = sld [smem:[#allocation4 + $0x9f]]
        %v8096 = vstv %s8095
        %v8097 = vmul.f32 %v8096, %v8091
        %v8099 = vrot.slane %v8097, 7
        %v8100 = vrot.slane %v8099, 2
        %v8102 = vadd.f32 %v8094, %v8100
        %8103 = vrot.lane.b32.xlu0 %v7342, 16
        %v8104 = vpop.permute.xlu0 %8103
        %v8105 = vrot.slane %v8104, 6
        %v8106 = vsel %vm1251, %v8105, %v8104
        %v8108 = vmul.f32 %v8102, %v8106
        %8110 = vrot.lane.b32.xlu0 %v8108, 61
        %v8111 = vpop.permute.xlu0 %8110
        %v8112 = vrot.slane %v8111, 6
        %vm8113 = vcmask 498688
        %v8114 = vsel %vm8113, %v8112, %v8111
        %v8116 = vadd.f32 %v8090, %v8114
        %v8117 = vld [vmem:[#allocation3 + $0x2] sm:$0x3f]
        %s8118 = sld [smem:[#allocation4 + $0x20]]
        %v8119 = vstv %s8118
        %v8120 = vmul.f32 %v8119, %v8117
        %s8121 = sld [smem:[#allocation4 + $0xa0]]
        %v8122 = vstv %s8121
        %v8123 = vmul.f32 %v8122, %v8117
        %v8125 = vrot.slane %v8123, 7
        %v8126 = vrot.slane %v8125, 2
        %v8128 = vadd.f32 %v8120, %v8126
        %8129 = vrot.lane.b32.xlu0 %v7379, 17
        %v8130 = vpop.permute.xlu0 %8129
        %v8131 = vrot.slane %v8130, 6
        %v8132 = vsel %vm658, %v8131, %v8130
        %v8134 = vmul.f32 %v8128, %v8132
        %8136 = vrot.lane.b32.xlu0 %v8134, 60
        %v8137 = vpop.permute.xlu0 %8136
        %v8138 = vrot.slane %v8137, 6
        %vm8139 = vcmask 490496
        %v8140 = vsel %vm8139, %v8138, %v8137
        %v8142 = vadd.f32 %v8116, %v8140
        %v8143 = vld [vmem:[#allocation3 + $0x2] sm:$0x3f]
        %s8144 = sld [smem:[#allocation4 + $0x21]]
        %v8145 = vstv %s8144
        %v8146 = vmul.f32 %v8145, %v8143
        %s8147 = sld [smem:[#allocation4 + $0xa1]]
        %v8148 = vstv %s8147
        %v8149 = vmul.f32 %v8148, %v8143
        %v8151 = vrot.slane %v8149, 7
        %v8152 = vrot.slane %v8151, 2
        %v8154 = vadd.f32 %v8146, %v8152
        %8155 = vrot.lane.b32.xlu0 %v7416, 18
        %v8156 = vpop.permute.xlu0 %8155
        %v8157 = vrot.slane %v8156, 6
        %vm8158 = vcmask 146432
        %v8159 = vsel %vm8158, %v8157, %v8156
        %v8161 = vmul.f32 %v8154, %v8159
        %8163 = vrot.lane.b32.xlu0 %v8161, 59
        %v8164 = vpop.permute.xlu0 %8163
        %v8165 = vrot.slane %v8164, 6
        %vm8166 = vcmask 482304
        %v8167 = vsel %vm8166, %v8165, %v8164
        %v8169 = vadd.f32 %v8142, %v8167
        %v8170 = vld [vmem:[#allocation3 + $0x2] sm:$0x3f]
        %s8171 = sld [smem:[#allocation4 + $0x22]]
        %v8172 = vstv %s8171
        %v8173 = vmul.f32 %v8172, %v8170
        %s8174 = sld [smem:[#allocation4 + $0xa2]]
        %v8175 = vstv %s8174
        %v8176 = vmul.f32 %v8175, %v8170
        %v8178 = vrot.slane %v8176, 7
        %v8179 = vrot.slane %v8178, 2
        %v8181 = vadd.f32 %v8173, %v8179
        %8182 = vrot.lane.b32.xlu0 %v7453, 19
        %v8183 = vpop.permute.xlu0 %8182
        %v8184 = vrot.slane %v8183, 6
        %vm8185 = vcmask 154624
        %v8186 = vsel %vm8185, %v8184, %v8183
        %v8188 = vmul.f32 %v8181, %v8186
        %8190 = vrot.lane.b32.xlu0 %v8188, 58
        %v8191 = vpop.permute.xlu0 %8190
        %v8192 = vrot.slane %v8191, 6
        %vm8193 = vcmask 474112
        %v8194 = vsel %vm8193, %v8192, %v8191
        %v8196 = vadd.f32 %v8169, %v8194
        %v8197 = vld [vmem:[#allocation3 + $0x2] sm:$0x3f]
        %s8198 = sld [smem:[#allocation4 + $0x23]]
        %v8199 = vstv %s8198
        %v8200 = vmul.f32 %v8199, %v8197
        %s8201 = sld [smem:[#allocation4 + $0xa3]]
        %v8202 = vstv %s8201
        %v8203 = vmul.f32 %v8202, %v8197
        %v8205 = vrot.slane %v8203, 7
        %v8206 = vrot.slane %v8205, 2
        %v8208 = vadd.f32 %v8200, %v8206
        %8209 = vrot.lane.b32.xlu0 %v7239, 29
        %v8210 = vpop.permute.xlu0 %8209
        %v8211 = vrot.slane %v8210, 6
        %vm8212 = vcmask 236544
        %v8213 = vsel %vm8212, %v8211, %v8210
        %v8215 = vmul.f32 %v8208, %v8213
        %8217 = vrot.lane.b32.xlu0 %v8215, 48
        %v8218 = vpop.permute.xlu0 %8217
        %v8219 = vrot.slane %v8218, 6
        %vm8220 = vcmask 392192
        %v8221 = vsel %vm8220, %v8219, %v8218
        %v8223 = vadd.f32 %v8196, %v8221
        %v8224 = vld [vmem:[#allocation3 + $0x2] sm:$0x3f]
        %s8225 = sld [smem:[#allocation4 + $0x24]]
        %v8226 = vstv %s8225
        %v8227 = vmul.f32 %v8226, %v8224
        %s8228 = sld [smem:[#allocation4 + $0xa4]]
        %v8229 = vstv %s8228
        %v8230 = vmul.f32 %v8229, %v8224
        %v8232 = vrot.slane %v8230, 7
        %v8233 = vrot.slane %v8232, 2
        %v8235 = vadd.f32 %v8227, %v8233
        %8236 = vrot.lane.b32.xlu0 %v7269, 30
        %v8237 = vpop.permute.xlu0 %8236
        %v8238 = vrot.slane %v8237, 6
        %vm8239 = vcmask 244736
        %v8240 = vsel %vm8239, %v8238, %v8237
        %v8242 = vmul.f32 %v8235, %v8240
        %8244 = vrot.lane.b32.xlu0 %v8242, 47
        %v8245 = vpop.permute.xlu0 %8244
        %v8246 = vrot.slane %v8245, 6
        %vm8247 = vcmask 384000
        %v8248 = vsel %vm8247, %v8246, %v8245
        %v8250 = vadd.f32 %v8223, %v8248
        %v8251 = vld [vmem:[#allocation3 + $0x2] sm:$0x3f]
        %s8252 = sld [smem:[#allocation4 + $0x25]]
        %v8253 = vstv %s8252
        %v8254 = vmul.f32 %v8253, %v8251
        %s8255 = sld [smem:[#allocation4 + $0xa5]]
        %v8256 = vstv %s8255
        %v8257 = vmul.f32 %v8256, %v8251
        %v8259 = vrot.slane %v8257, 7
        %v8260 = vrot.slane %v8259, 2
        %v8262 = vadd.f32 %v8254, %v8260
        %8263 = vrot.lane.b32.xlu0 %v7305, 31
        %v8264 = vpop.permute.xlu0 %8263
        %v8265 = vrot.slane %v8264, 6
        %vm8266 = vcmask 252928
        %v8267 = vsel %vm8266, %v8265, %v8264
        %v8269 = vmul.f32 %v8262, %v8267
        %8271 = vrot.lane.b32.xlu0 %v8269, 46
        %v8272 = vpop.permute.xlu0 %8271
        %v8273 = vrot.slane %v8272, 6
        %vm8274 = vcmask 375808
        %v8275 = vsel %vm8274, %v8273, %v8272
        %v8277 = vadd.f32 %v8250, %v8275
        %v8278 = vld [vmem:[#allocation3 + $0x2] sm:$0x3f]
        %s8279 = sld [smem:[#allocation4 + $0x26]]
        %v8280 = vstv %s8279
        %v8281 = vmul.f32 %v8280, %v8278
        %s8282 = sld [smem:[#allocation4 + $0xa6]]
        %v8283 = vstv %s8282
        %v8284 = vmul.f32 %v8283, %v8278
        %v8286 = vrot.slane %v8284, 7
        %v8287 = vrot.slane %v8286, 2
        %v8289 = vadd.f32 %v8281, %v8287
        %8290 = vrot.lane.b32.xlu0 %v7342, 32
        %v8291 = vpop.permute.xlu0 %8290
        %v8292 = vrot.slane %v8291, 6
        %v8293 = vsel %vm675, %v8292, %v8291
        %v8295 = vmul.f32 %v8289, %v8293
        %8297 = vrot.lane.b32.xlu0 %v8295, 45
        %v8298 = vpop.permute.xlu0 %8297
        %v8299 = vrot.slane %v8298, 6
        %vm8300 = vcmask 367616
        %v8301 = vsel %vm8300, %v8299, %v8298
        %v8303 = vadd.f32 %v8277, %v8301
        %v8304 = vld [vmem:[#allocation3 + $0x2] sm:$0x3f]
        %s8305 = sld [smem:[#allocation4 + $0x27]]
        %v8306 = vstv %s8305
        %v8307 = vmul.f32 %v8306, %v8304
        %s8308 = sld [smem:[#allocation4 + $0xa7]]
        %v8309 = vstv %s8308
        %v8310 = vmul.f32 %v8309, %v8304
        %v8312 = vrot.slane %v8310, 7
        %v8313 = vrot.slane %v8312, 2
        %v8315 = vadd.f32 %v8307, %v8313
        %8316 = vrot.lane.b32.xlu0 %v7379, 33
        %v8317 = vpop.permute.xlu0 %8316
        %v8318 = vrot.slane %v8317, 6
        %vm8319 = vcmask 269312
        %v8320 = vsel %vm8319, %v8318, %v8317
        %v8322 = vmul.f32 %v8315, %v8320
        %8324 = vrot.lane.b32.xlu0 %v8322, 44
        %v8325 = vpop.permute.xlu0 %8324
        %v8326 = vrot.slane %v8325, 6
        %vm8327 = vcmask 359424
        %v8328 = vsel %vm8327, %v8326, %v8325
        %v8330 = vadd.f32 %v8303, %v8328
        %v8331 = vld [vmem:[#allocation3 + $0x2] sm:$0x3f]
        %s8332 = sld [smem:[#allocation4 + $0x28]]
        %v8333 = vstv %s8332
        %v8334 = vmul.f32 %v8333, %v8331
        %s8335 = sld [smem:[#allocation4 + $0xa8]]
        %v8336 = vstv %s8335
        %v8337 = vmul.f32 %v8336, %v8331
        %v8339 = vrot.slane %v8337, 7
        %v8340 = vrot.slane %v8339, 2
        %v8342 = vadd.f32 %v8334, %v8340
        %8343 = vrot.lane.b32.xlu0 %v7416, 34
        %v8344 = vpop.permute.xlu0 %8343
        %v8345 = vrot.slane %v8344, 6
        %vm8346 = vcmask 277504
        %v8347 = vsel %vm8346, %v8345, %v8344
        %v8349 = vmul.f32 %v8342, %v8347
        %8351 = vrot.lane.b32.xlu0 %v8349, 43
        %v8352 = vpop.permute.xlu0 %8351
        %v8353 = vrot.slane %v8352, 6
        %vm8354 = vcmask 351232
        %v8355 = vsel %vm8354, %v8353, %v8352
        %v8357 = vadd.f32 %v8330, %v8355
        %v8358 = vld [vmem:[#allocation3 + $0x2] sm:$0x3f]
        %s8359 = sld [smem:[#allocation4 + $0x29]]
        %v8360 = vstv %s8359
        %v8361 = vmul.f32 %v8360, %v8358
        %s8362 = sld [smem:[#allocation4 + $0xa9]]
        %v8363 = vstv %s8362
        %v8364 = vmul.f32 %v8363, %v8358
        %v8366 = vrot.slane %v8364, 7
        %v8367 = vrot.slane %v8366, 2
        %v8369 = vadd.f32 %v8361, %v8367
        %8370 = vrot.lane.b32.xlu0 %v7453, 35
        %v8371 = vpop.permute.xlu0 %8370
        %v8372 = vrot.slane %v8371, 6
        %vm8373 = vcmask 285696
        %v8374 = vsel %vm8373, %v8372, %v8371
        %v8376 = vmul.f32 %v8369, %v8374
        %8378 = vrot.lane.b32.xlu0 %v8376, 42
        %v8379 = vpop.permute.xlu0 %8378
        %v8380 = vrot.slane %v8379, 6
        %vm8381 = vcmask 343040
        %v8382 = vsel %vm8381, %v8380, %v8379
        %v8384 = vadd.f32 %v8357, %v8382
        %v8385 = vld [vmem:[#allocation3 + $0x2] sm:$0x3f]
        %s8386 = sld [smem:[#allocation4 + $0x2a]]
        %v8387 = vstv %s8386
        %v8388 = vmul.f32 %v8387, %v8385
        %s8389 = sld [smem:[#allocation4 + $0xaa]]
        %v8390 = vstv %s8389
        %v8391 = vmul.f32 %v8390, %v8385
        %v8393 = vrot.slane %v8391, 7
        %v8394 = vrot.slane %v8393, 2
        %v8396 = vadd.f32 %v8388, %v8394
        %8397 = vrot.lane.b32.xlu0 %v7239, 45
        %v8398 = vpop.permute.xlu0 %8397
        %v8399 = vrot.slane %v8398, 6
        %v8400 = vsel %vm8300, %v8399, %v8398
        %v8402 = vmul.f32 %v8396, %v8400
        %8404 = vrot.lane.b32.xlu0 %v8402, 32
        %v8405 = vpop.permute.xlu0 %8404
        %v8406 = vrot.slane %v8405, 6
        %v8407 = vsel %vm675, %v8406, %v8405
        %v8409 = vadd.f32 %v8384, %v8407
        %v8410 = vld [vmem:[#allocation3 + $0x2] sm:$0x3f]
        %s8411 = sld [smem:[#allocation4 + $0x2b]]
        %v8412 = vstv %s8411
        %v8413 = vmul.f32 %v8412, %v8410
        %s8414 = sld [smem:[#allocation4 + $0xab]]
        %v8415 = vstv %s8414
        %v8416 = vmul.f32 %v8415, %v8410
        %v8418 = vrot.slane %v8416, 7
        %v8419 = vrot.slane %v8418, 2
        %v8421 = vadd.f32 %v8413, %v8419
        %8422 = vrot.lane.b32.xlu0 %v7269, 46
        %v8423 = vpop.permute.xlu0 %8422
        %v8424 = vrot.slane %v8423, 6
        %v8425 = vsel %vm8274, %v8424, %v8423
        %v8427 = vmul.f32 %v8421, %v8425
        %8429 = vrot.lane.b32.xlu0 %v8427, 31
        %v8430 = vpop.permute.xlu0 %8429
        %v8431 = vrot.slane %v8430, 6
        %v8432 = vsel %vm8266, %v8431, %v8430
        %v8434 = vadd.f32 %v8409, %v8432
        %v8435 = vld [vmem:[#allocation3 + $0x2] sm:$0x3f]
        %s8436 = sld [smem:[#allocation4 + $0x2c]]
        %v8437 = vstv %s8436
        %v8438 = vmul.f32 %v8437, %v8435
        %s8439 = sld [smem:[#allocation4 + $0xac]]
        %v8440 = vstv %s8439
        %v8441 = vmul.f32 %v8440, %v8435
        %v8443 = vrot.slane %v8441, 7
        %v8444 = vrot.slane %v8443, 2
        %v8446 = vadd.f32 %v8438, %v8444
        %8447 = vrot.lane.b32.xlu0 %v7305, 47
        %v8448 = vpop.permute.xlu0 %8447
        %v8449 = vrot.slane %v8448, 6
        %v8450 = vsel %vm8247, %v8449, %v8448
        %v8452 = vmul.f32 %v8446, %v8450
        %8454 = vrot.lane.b32.xlu0 %v8452, 30
        %v8455 = vpop.permute.xlu0 %8454
        %v8456 = vrot.slane %v8455, 6
        %v8457 = vsel %vm8239, %v8456, %v8455
        %v8459 = vadd.f32 %v8434, %v8457
        %v8460 = vld [vmem:[#allocation3 + $0x2] sm:$0x3f]
        %s8461 = sld [smem:[#allocation4 + $0x2d]]
        %v8462 = vstv %s8461
        %v8463 = vmul.f32 %v8462, %v8460
        %s8464 = sld [smem:[#allocation4 + $0xad]]
        %v8465 = vstv %s8464
        %v8466 = vmul.f32 %v8465, %v8460
        %v8468 = vrot.slane %v8466, 7
        %v8469 = vrot.slane %v8468, 2
        %v8471 = vadd.f32 %v8463, %v8469
        %8472 = vrot.lane.b32.xlu0 %v7342, 48
        %v8473 = vpop.permute.xlu0 %8472
        %v8474 = vrot.slane %v8473, 6
        %v8475 = vsel %vm8220, %v8474, %v8473
        %v8477 = vmul.f32 %v8471, %v8475
        %8479 = vrot.lane.b32.xlu0 %v8477, 29
        %v8480 = vpop.permute.xlu0 %8479
        %v8481 = vrot.slane %v8480, 6
        %v8482 = vsel %vm8212, %v8481, %v8480
        %v8484 = vadd.f32 %v8459, %v8482
        %v8485 = vld [vmem:[#allocation3 + $0x2] sm:$0x3f]
        %s8486 = sld [smem:[#allocation4 + $0x2e]]
        %v8487 = vstv %s8486
        %v8488 = vmul.f32 %v8487, %v8485
        %s8489 = sld [smem:[#allocation4 + $0xae]]
        %v8490 = vstv %s8489
        %v8491 = vmul.f32 %v8490, %v8485
        %v8493 = vrot.slane %v8491, 7
        %v8494 = vrot.slane %v8493, 2
        %v8496 = vadd.f32 %v8488, %v8494
        %8497 = vrot.lane.b32.xlu0 %v7379, 49
        %v8498 = vpop.permute.xlu0 %8497
        %v8499 = vrot.slane %v8498, 6
        %vm8500 = vcmask 400384
        %v8501 = vsel %vm8500, %v8499, %v8498
        %v8503 = vmul.f32 %v8496, %v8501
        %8505 = vrot.lane.b32.xlu0 %v8503, 28
        %v8506 = vpop.permute.xlu0 %8505
        %v8507 = vrot.slane %v8506, 6
        %vm8508 = vcmask 228352
        %v8509 = vsel %vm8508, %v8507, %v8506
        %v8511 = vadd.f32 %v8484, %v8509
        %v8512 = vld [vmem:[#allocation3 + $0x2] sm:$0x3f]
        %s8513 = sld [smem:[#allocation4 + $0x2f]]
        %v8514 = vstv %s8513
        %v8515 = vmul.f32 %v8514, %v8512
        %s8516 = sld [smem:[#allocation4 + $0xaf]]
        %v8517 = vstv %s8516
        %v8518 = vmul.f32 %v8517, %v8512
        %v8520 = vrot.slane %v8518, 7
        %v8521 = vrot.slane %v8520, 2
        %v8523 = vadd.f32 %v8515, %v8521
        %8524 = vrot.lane.b32.xlu0 %v7416, 50
        %v8525 = vpop.permute.xlu0 %8524
        %v8526 = vrot.slane %v8525, 6
        %vm8527 = vcmask 408576
        %v8528 = vsel %vm8527, %v8526, %v8525
        %v8530 = vmul.f32 %v8523, %v8528
        %8532 = vrot.lane.b32.xlu0 %v8530, 27
        %v8533 = vpop.permute.xlu0 %8532
        %v8534 = vrot.slane %v8533, 6
        %vm8535 = vcmask 220160
        %v8536 = vsel %vm8535, %v8534, %v8533
        %v8538 = vadd.f32 %v8511, %v8536
        %v8539 = vld [vmem:[#allocation3 + $0x2] sm:$0x3f]
        %s8540 = sld [smem:[#allocation4 + $0x30]]
        %v8541 = vstv %s8540
        %v8542 = vmul.f32 %v8541, %v8539
        %s8543 = sld [smem:[#allocation4 + $0xb0]]
        %v8544 = vstv %s8543
        %v8545 = vmul.f32 %v8544, %v8539
        %v8547 = vrot.slane %v8545, 7
        %v8548 = vrot.slane %v8547, 2
        %v8550 = vadd.f32 %v8542, %v8548
        %8551 = vrot.lane.b32.xlu0 %v7453, 51
        %v8552 = vpop.permute.xlu0 %8551
        %v8553 = vrot.slane %v8552, 6
        %vm8554 = vcmask 416768
        %v8555 = vsel %vm8554, %v8553, %v8552
        %v8557 = vmul.f32 %v8550, %v8555
        %8559 = vrot.lane.b32.xlu0 %v8557, 26
        %v8560 = vpop.permute.xlu0 %8559
        %v8561 = vrot.slane %v8560, 6
        %vm8562 = vcmask 211968
        %v8563 = vsel %vm8562, %v8561, %v8560
        %v8565 = vadd.f32 %v8538, %v8563
        %v8566 = vxor.u32 %v8565, 2147483648
        %v8567 = vmul.f32 %v8566, 1.442695
        %v8568 = vpow.pop %v8567
        %v8569 = vadd.f32 %v8568, 1.0
        %v8570 = vrcp.pop %v8569
        %v8571 = vmul.f32 1.0, %v8570
        %v8573 = vlaneseq
        %v8574 = vshrl.u32 %v8573, 7
        %v8575 = vsub.s32 0, %v8574
        %v8576 = vrot.slane %v8571, %v8575
        %v8577 = vlaneseq
        %v8578 = vshrl.u32 %v8577, 7
        %v8579 = vsub.s32 2, %v8578
        %v8580 = vrot.slane %v8571, %v8579
        %v8581 = vlaneseq
        %v8582 = vshrl.u32 %v8581, 7
        %v8583 = vsub.s32 4, %v8582
        %v8584 = vrot.slane %v8571, %v8583
        %v8588 = vlaneseq
        %v8589 = vshrl.u32 %v8588, 7
        %v8590 = vsub.s32 0, %v8589
        %v8591 = vrot.slane %v8576, %v8590
        %v8592 = vlaneseq
        %v8593 = vshrl.u32 %v8592, 7
        %v8594 = vsub.s32 0, %v8593
        %v8595 = vrot.slane %v8580, %v8594
        %v8596 = vlaneseq
        %v8597 = vshrl.u32 %v8596, 7
        %v8598 = vsub.s32 0, %v8597
        %v8599 = vrot.slane %v8584, %v8598
        %8608 = vrot.lane.b32.xlu0 %v7126, 77
        %v8609 = vpop.permute.xlu0 %8608
        %8610 = vrot.lane.b32.xlu0 %v7127, 77
        %v8611 = vpop.permute.xlu0 %8610
        %8612 = vrot.lane.b32.xlu0 %v7128, 77
        %v8613 = vpop.permute.xlu0 %8612
        %8614 = vrot.lane.b32.xlu0 %v7129, 77
        %v8615 = vpop.permute.xlu0 %8614
        %8616 = vrot.lane.b32.xlu0 %v7130, 77
        %v8617 = vpop.permute.xlu0 %8616
        %8618 = vrot.lane.b32.xlu0 %v7131, 77
        %v8619 = vpop.permute.xlu0 %8618
        %8620 = vrot.lane.b32.xlu0 %v7132, 77
        %v8621 = vpop.permute.xlu0 %8620
        %8622 = vrot.lane.b32.xlu0 %v7133, 77
        %v8623 = vpop.permute.xlu0 %8622
        %v8624 = vsel %vm7243, %v8609, %v8611
        %v8625 = vsel %vm7243, %v8613, %v8615
        %v8626 = vsel %vm7243, %v8617, %v8619
        %v8627 = vsel %vm7243, %v8621, %v8623
        %v8640 = vmul.f32 %v8591, %v8609
        %v8641 = vmul.f32 %v8595, %v8624
        %v8642 = vmul.f32 %v8599, %v8611
        %v8643 = vmul.f32 %v8591, %v8613
        %v8644 = vmul.f32 %v8595, %v8625
        %v8645 = vmul.f32 %v8599, %v8615
        %v8646 = vmul.f32 %v8591, %v8617
        %v8647 = vmul.f32 %v8595, %v8626
        %v8648 = vmul.f32 %v8599, %v8619
        %v8649 = vmul.f32 %v8591, %v8621
        %v8650 = vmul.f32 %v8595, %v8627
        %v8651 = vmul.f32 %v8599, %v8623
        %8664 = vrot.lane.b32.xlu0 %v8640, 51
        %v8665 = vpop.permute.xlu0 %8664
        %8666 = vrot.lane.b32.xlu0 %v8641, 51
        %v8667 = vpop.permute.xlu0 %8666
        %8668 = vrot.lane.b32.xlu0 %v8642, 51
        %v8669 = vpop.permute.xlu0 %8668
        %8670 = vrot.lane.b32.xlu0 %v8643, 51
        %v8671 = vpop.permute.xlu0 %8670
        %8672 = vrot.lane.b32.xlu0 %v8644, 51
        %v8673 = vpop.permute.xlu0 %8672
        %8674 = vrot.lane.b32.xlu0 %v8645, 51
        %v8675 = vpop.permute.xlu0 %8674
        %8676 = vrot.lane.b32.xlu0 %v8646, 51
        %v8677 = vpop.permute.xlu0 %8676
        %8678 = vrot.lane.b32.xlu0 %v8647, 51
        %v8679 = vpop.permute.xlu0 %8678
        %8680 = vrot.lane.b32.xlu0 %v8648, 51
        %v8681 = vpop.permute.xlu0 %8680
        %8682 = vrot.lane.b32.xlu0 %v8649, 51
        %v8683 = vpop.permute.xlu0 %8682
        %8684 = vrot.lane.b32.xlu0 %v8650, 51
        %v8685 = vpop.permute.xlu0 %8684
        %8686 = vrot.lane.b32.xlu0 %v8651, 51
        %v8687 = vpop.permute.xlu0 %8686
        %v8688 = vsel %vm8554, %v8665, %v8667
        %v8689 = vsel %vm8554, %v8667, %v8669
        %v8690 = vsel %vm8554, %v8671, %v8673
        %v8691 = vsel %vm8554, %v8673, %v8675
        %v8692 = vsel %vm8554, %v8677, %v8679
        %v8693 = vsel %vm8554, %v8679, %v8681
        %v8694 = vsel %vm8554, %v8683, %v8685
        %v8695 = vsel %vm8554, %v8685, %v8687
        %v8704 = vadd.f32 %v468, %v8688
        %v8705 = vadd.f32 %v469, %v8689
        %v8706 = vadd.f32 %v470, %v8690
        %v8707 = vadd.f32 %v471, %v8691
        %v8708 = vadd.f32 %v472, %v8692
        %v8709 = vadd.f32 %v473, %v8693
        %v8710 = vadd.f32 %v474, %v8694
        %v8711 = vadd.f32 %v475, %v8695
        %8712 = vst [vmem:[%s339] sm:$0xff] %v8704
        %8713 = vst [vmem:[%s339 + $0x8] sm:$0xff] %v8705
        %8714 = vst [vmem:[%s339 + $0x10] sm:$0xff] %v8706
        %8715 = vst [vmem:[%s339 + $0x18] sm:$0xff] %v8707
        %8716 = vst [vmem:[%s339 + $0x20] sm:$0xff] %v8708
        %8717 = vst [vmem:[%s339 + $0x28] sm:$0xff] %v8709
        %8718 = vst [vmem:[%s339 + $0x30] sm:$0xff] %v8710
        %8719 = vst [vmem:[%s339 + $0x38] sm:$0xff] %v8711
        %p8720 = scmp.lt.s32.totalorder %s20, 1
        %s8721 = scalar_select %p8720, %s20, 1
        %s8722 = smul.addr %s8721, 8
        %s8723 = smul.addr %s8722, 8
        %s8724 = scalar_lea.vmem %s8, %s8723
        // Predicated region
        $region57: #{cbam_cross_our.1} parent=51 // pred_check
          %p8725 = pneg %p216
        $region58: #{cbam_cross_our.1} parent=51 // pred_check_branch
          %8727 = sbr.rel (%p8725) target = $region60
        $region59: #{cbam_cross_our.1} parent=51 // pred_region
          _
        $region60: #{cbam_cross_our.1} parent=51 // pred_fallthru
          _
      $region52: #{cbam_cross_our.1} parent=5 // pred_fallthru
        _
      %p8728 = scmp.le.s32.totalorder 2, %s15
      // Predicated region
      $region61: #{cbam_cross_our.1} parent=5 // pred_check
        %p8729 = pneg %p8728
      $region62: #{cbam_cross_our.1} parent=5 // pred_check_branch
        %8731 = sbr.rel (%p8729) target = $region64
      $region63: #{cbam_cross_our.1} parent=5 // pred_region
        %s8732 = ssub.s32 %s15, 2
        // Predicated region
        $region65: #{cbam_cross_our.1} parent=63 // pred_check
          %p8733 = pneg %p222
        $region66: #{cbam_cross_our.1} parent=63 // pred_check_branch
          %8735 = sbr.rel (%p8733) target = $region68
        $region67: #{cbam_cross_our.1} parent=63 // pred_region
          %p8736 = scmp.lt.s32.totalorder %s21, 1
          %s8737 = scalar_select %p8736, %s21, 1
          %s8738 = smul.addr %s8737, 8
          %s8739 = smul.addr %s8738, 8
          %s8740 = scalar_lea.vmem %s8, %s8739
        $region68: #{cbam_cross_our.1} parent=63 // pred_fallthru
          _
      $region64: #{cbam_cross_our.1} parent=5 // pred_fallthru
        _
    $region6: #{cbam_cross_our.1} parent=1 // loop_footer
      %s19 = sadd.s32 1, %s15
    $region7: #{cbam_cross_our.1} parent=1 // loop_footer_branch
      %14 = sbr.rel target = $region3
    $region8: #{cbam_cross_our.1} parent=1 // loop_exit
      _
    %8741 = vsyncpa [#allocation5], 1
    %s8742 = scalar_lea.sflag [#allocation5], 1
    %8743 = vsyncpa %s8742, 1

</llo_original>
